<compile_context>
chip_gen: v7x
topology: tpu7x:2x2x1
jax: 0.10.0
libtpu: 0.0.40
codegen_flags: <defaults>
</compile_context>

<pallas_src>
import functools

import jax
import jax.numpy as jnp
from jax.experimental import pallas as pl
from jax.experimental.pallas import tpu as pltpu


def _round_up(x, m):
    return (x + m - 1) // m * m


def basic_block_kernel(x_ref, w1_ref, s1_ref, b1_ref, w2_ref, s2_ref, b2_ref,
                       out_ref,
                       xpack_ref, ypack_ref, acc1_ref, acc2_ref,
                       *, tile_len, work_len, win_len, margin, halo, Wp, H, W, Cp):
    # x_ref    : (1, E, Cp)  f32     zero-margined, width/channel-padded, flattened image
    # w*_ref   : (3, 3*Cp, Cp)       per-kh weights; the 3 kw taps are packed along K
    # s*/b*_ref: (1, Cp)     f32     folded inference BatchNorm scale / bias
    # out_ref  : (1, 1, tile_len, Cp) f32
    # xpack_ref: (win_len, 3*Cp)     input window; lane group g holds x[row + g - 1]
    # ypack_ref: (work_len, 3*Cp)    conv1 activation window, same kw packing
    # acc*_ref : f32 accumulators in VMEM
    f32 = jnp.float32
    t = pl.program_id(1)
    q_out = pl.multiple_of(margin + t * tile_len, 8)   # first conv2-output row (ext. coords)
    q_win = pl.multiple_of(q_out - 2 * halo, 8)        # first row of the conv1 input window

    # ---- Build the kw-packed input window: exactly two sublane-shifted copies per
    # tile (g = 0 and g = 2); every later matmul slice is a static, aligned slice.
    for g in range(3):
        xpack_ref[:, g * Cp:(g + 1) * Cp] = (
            x_ref[0, pl.ds(q_win + (g - 1), win_len), :].astype(xpack_ref.dtype))

    # ---- conv1: one K = 3*Cp matmul per kh row -> 3 accumulator updates (not 9).
    for kh, dh in enumerate((-1, 0, 1)):
        base = halo + dh * Wp                          # static, tile-aligned row offset
        part = jnp.dot(xpack_ref[base:base + work_len, :], w1_ref[kh],
                       preferred_element_type=f32)
        if kh == 0:
            acc1_ref[...] = part
        else:
            acc1_ref[...] += part

    # ---- bn1 + relu.  Interior mask computed on the VPU from an iota (no mask
    # input / DMA stream); zeroing halo & pad rows is exactly conv2's zero padding.
    j = jax.lax.broadcasted_iota(jnp.int32, (work_len, Cp), 0)
    row = (t * tile_len - halo + j).astype(f32)        # row index inside the padded image
    ph = jnp.floor((row + 0.5) * (1.0 / Wp))           # exact floor(row / Wp) at these sizes
    pw = row - ph * Wp
    mask = ((ph >= 1) & (ph <= H) & (pw >= 1) & (pw <= W)).astype(f32)
    y = jnp.maximum(acc1_ref[...] * s1_ref[...] + b1_ref[...], 0.0) * mask

    # ---- Build the kw-packed activation window.  The two shifted lane groups are
    # written with one partial store each; the single uninitialized edge row of each
    # group (row 0 / row work_len-1) is never read because halo - Wp >= 8.
    ypack_ref[:, Cp:2 * Cp] = y.astype(ypack_ref.dtype)                          # y[row]
    ypack_ref[1:work_len, 0:Cp] = y[0:work_len - 1].astype(ypack_ref.dtype)      # y[row-1]
    ypack_ref[0:work_len - 1, 2 * Cp:3 * Cp] = y[1:work_len].astype(ypack_ref.dtype)  # y[row+1]

    # ---- conv2: one K = 3*Cp matmul per kh row.
    for kh, dh in enumerate((-1, 0, 1)):
        base = halo + dh * Wp
        part = jnp.dot(ypack_ref[base:base + tile_len, :], w2_ref[kh],
                       preferred_element_type=f32)
        if kh == 0:
            acc2_ref[...] = part
        else:
            acc2_ref[...] += part

    # ---- bn2 + identity residual (exact f32, aligned slice of resident input) + relu.
    res = x_ref[0, pl.ds(q_out, tile_len), :]
    out = acc2_ref[...] * s2_ref[...] + b2_ref[...] + res
    out_ref[0, 0] = jnp.maximum(out, 0.0).astype(out_ref.dtype)


def basic_block_forward(x_nchw, params, *, eps=1e-5,
                        compute_dtype=jnp.bfloat16, n_row_tiles=1):
    """Fused BasicBlock forward (inference BatchNorm).

    n_row_tiles=1 for single-TensorCore chips (v5e/v6e); use >=2 on v7x so both
    TensorCores get a grid axis to split even at small batch.
    """
    (w1, g1, b1, m1, v1, w2, g2, b2, m2, v2) = params
    N, C, H, W = x_nchw.shape
    Cout = w1.shape[0]
    assert w1.shape == (Cout, C, 3, 3) and w2.shape == (Cout, Cout, 3, 3)
    assert Cout == C, "identity residual path requires inplanes == planes, stride=1"

    f32 = jnp.float32
    itemsize = jnp.dtype(compute_dtype).itemsize
    ralign = 8 * (4 // itemsize)           # sublane-tile alignment: 8 (f32), 16 (bf16)

    Hp = H + 2                              # conv zero pad (top / bottom)
    Wp = _round_up(W + 2, ralign)           # padded row length; multiple of ralign so
                                            # every kh shift keeps matmul slices aligned
    P = Hp * Wp
    halo = _round_up(Wp + 1, ralign)        # aligned rows of context for a 3x3 tap
    Cp = _round_up(max(C, Cout, 128), 128)  # lane-dense channel padding
    tile_len = _round_up(-(-P // n_row_tiles), ralign)
    P_pad = tile_len * n_row_tiles
    margin = 2 * halo + ralign              # zero margin: every window load stays in bounds
    E = margin + P_pad + margin
    work_len = tile_len + 2 * halo          # conv1 output rows per tile (tile + conv2 halo)
    win_len = work_len + 2 * halo           # conv1 input window rows per tile

    # NCHW -> NHWC -> pad (1 row top/bottom, 1 col left, Wp-W-1 cols right)
    # -> flatten spatial -> row margin + channel pad.
    x_nhwc = jnp.transpose(x_nchw, (0, 2, 3, 1)).astype(f32)
    x_pad = jnp.pad(x_nhwc, ((0, 0), (1, 1), (1, Wp - W - 1), (0, 0)))
    x_ext = jnp.pad(x_pad.reshape(N, P, C),
                    ((0, 0), (margin, E - margin - P), (0, Cp - C)))

    # torch conv weight (Cout, Cin, 3, 3) -> per-kh (3*Cp, Cp) matrices with the three
    # kw taps packed along K, matching the lane packing of xpack/ypack.
    def prep_w(w):
        wt = jnp.transpose(w, (2, 3, 1, 0))                    # (kh, kw, Cin, Cout)
        wp = jnp.zeros((3, 3, Cp, Cp), f32).at[:, :, :C, :Cout].set(wt)
        return wp.reshape(3, 3 * Cp, Cp).astype(compute_dtype)

    w1p, w2p = prep_w(w1), prep_w(w2)

    # Fold inference BatchNorm (running stats) into per-channel scale / bias (f32).
    def prep_bn(g, b, m, v):
        inv = g / jnp.sqrt(v + eps)
        sc = jnp.zeros((1, Cp), f32).at[0, :Cout].set(inv)
        sh = jnp.zeros((1, Cp), f32).at[0, :Cout].set(b - m * inv)
        return sc, sh

    s1p, b1p = prep_bn(g1, b1, m1, v1)
    s2p, b2p = prep_bn(g2, b2, m2, v2)

    kernel = functools.partial(
        basic_block_kernel, tile_len=tile_len, work_len=work_len, win_len=win_len,
        margin=margin, halo=halo, Wp=Wp, H=H, W=W, Cp=Cp)

    out = pl.pallas_call(
        kernel,
        out_shape=jax.ShapeDtypeStruct((N, n_row_tiles, tile_len, Cp), f32),
        grid=(N, n_row_tiles),
        in_specs=[
            # whole (margined) image stays resident across the row-tile axis
            pl.BlockSpec((1, E, Cp), lambda n, t: (n, 0, 0)),
            pl.BlockSpec((3, 3 * Cp, Cp), lambda n, t: (0, 0, 0)),
            pl.BlockSpec((1, Cp), lambda n, t: (0, 0)),
            pl.BlockSpec((1, Cp), lambda n, t: (0, 0)),
            pl.BlockSpec((3, 3 * Cp, Cp), lambda n, t: (0, 0, 0)),
            pl.BlockSpec((1, Cp), lambda n, t: (0, 0)),
            pl.BlockSpec((1, Cp), lambda n, t: (0, 0)),
        ],
        out_specs=pl.BlockSpec((1, 1, tile_len, Cp), lambda n, t: (n, t, 0, 0)),
        scratch_shapes=[
            pltpu.VMEM((win_len, 3 * Cp), compute_dtype),   # kw-packed input window
            pltpu.VMEM((work_len, 3 * Cp), compute_dtype),  # kw-packed conv1 activation
            pltpu.VMEM((work_len, Cp), f32),                # conv1 accumulator
            pltpu.VMEM((tile_len, Cp), f32),                # conv2 accumulator
        ],
        compiler_params=pltpu.CompilerParams(
            dimension_semantics=("parallel", "parallel")),
    )(x_ext, w1p, s1p, b1p, w2p, s2p, b2p)

    # (N, n_tiles, tile_len, Cp) -> NCHW, dropping row pad / spatial halo / channel pad.
    out = out.reshape(N, P_pad, Cp)[:, :P, :C].reshape(N, Hp, Wp, C)
    out = out[:, 1:H + 1, 1:W + 1, :]
    return jnp.transpose(out, (0, 3, 1, 2))


def reference_basic_block(x_nchw, params, eps=1e-5):
    (w1, g1, b1, m1, v1, w2, g2, b2, m2, v2) = params

    def conv(x, w):
        return jax.lax.conv_general_dilated(
            x, w, window_strides=(1, 1), padding=((1, 1), (1, 1)),
            dimension_numbers=("NCHW", "OIHW", "NCHW"),
            precision=jax.lax.Precision.HIGHEST)

    def bn(x, g, b, m, v):
        sc = (g / jnp.sqrt(v + eps))[None, :, None, None]
        sh = (b - m * g / jnp.sqrt(v + eps))[None, :, None, None]
        return x * sc + sh

    out = jax.nn.relu(bn(conv(x_nchw, w1), g1, b1, m1, v1))
    out = bn(conv(out, w2), g2, b2, m2, v2)
    return jax.nn.relu(out + x_nchw)


if __name__ == "__main__":
    key = jax.random.PRNGKey(0)
    keys = jax.random.split(key, 11)
    N, C, H, W = 2, 4, 16, 16            # inplanes = planes = 4, stride = 1

    x = jax.random.normal(keys[0], (N, C, H, W), jnp.float32)

    # conv weights: (out_planes, in_planes, 3, 3), no bias
    w1 = 0.2 * jax.random.normal(keys[1], (C, C, 3, 3), jnp.float32)
    w2 = 0.2 * jax.random.normal(keys[2], (C, C, 3, 3), jnp.float32)
    # BatchNorm params (gamma, beta, running_mean, running_var) per layer
    g1 = 1.0 + 0.1 * jax.random.normal(keys[3], (C,), jnp.float32)
    b1 = 0.1 * jax.random.normal(keys[4], (C,), jnp.float32)
    m1 = 0.1 * jax.random.normal(keys[5], (C,), jnp.float32)
    v1 = 1.0 + 0.1 * jnp.abs(jax.random.normal(keys[6], (C,), jnp.float32))
    g2 = 1.0 + 0.1 * jax.random.normal(keys[7], (C,), jnp.float32)
    b2 = 0.1 * jax.random.normal(keys[8], (C,), jnp.float32)
    m2 = 0.1 * jax.random.normal(keys[9], (C,), jnp.float32)
    v2 = 1.0 + 0.1 * jnp.abs(jax.random.normal(keys[10], (C,), jnp.float32))
    params = (w1, g1, b1, m1, v1, w2, g2, b2, m2, v2)

    ref = jax.block_until_ready(reference_basic_block(x, params))

    # f32 matmul operands, single row tile: tight check against the XLA reference.
    out_f32 = jax.block_until_ready(
        basic_block_forward(x, params, compute_dtype=jnp.float32, n_row_tiles=1))
    assert out_f32.shape == (N, C, H, W), out_f32.shape
    err_f32 = float(jnp.max(jnp.abs(out_f32 - ref)))
    assert err_f32 < 5e-2, f"f32 max abs error too large: {err_f32}"

    # bf16 matmul operands (v6e/v7x MXU fast path), default single row tile
    # (v5e/v6e single-TensorCore configuration); f32 accumulation / BN / residual.
    out_bf16 = jax.block_until_ready(
        basic_block_forward(x, params, compute_dtype=jnp.bfloat16))
    err_bf16 = float(jnp.max(jnp.abs(out_bf16 - ref)))
    assert err_bf16 < 1.5e-1, f"bf16 max abs error too large: {err_bf16}"

    # bf16 with two row tiles: the v7x (two-TensorCore) configuration.
    out_bf16_t2 = jax.block_until_ready(
        basic_block_forward(x, params, compute_dtype=jnp.bfloat16, n_row_tiles=2))
    err_t2 = float(jnp.max(jnp.abs(out_bf16_t2 - ref)))
    assert err_t2 < 1.5e-1, f"bf16/2-tile max abs error too large: {err_t2}"

    print("KERNEL_OK")
</pallas_src>

<mosaic_0001>
module attributes {stable_mosaic.version = 11 : i64} {
  func.func @basic_block_kernel(%arg0: i32, %arg1: i32, %arg2: memref<1x576x128xf32, #tpu.memory_space<vmem>>, %arg3: memref<3x384x128xf32, #tpu.memory_space<vmem>>, %arg4: memref<1x128xf32, #tpu.memory_space<vmem>>, %arg5: memref<1x128xf32, #tpu.memory_space<vmem>>, %arg6: memref<3x384x128xf32, #tpu.memory_space<vmem>>, %arg7: memref<1x128xf32, #tpu.memory_space<vmem>>, %arg8: memref<1x128xf32, #tpu.memory_space<vmem>>, %arg9: memref<1x1x432x128xf32, #tpu.memory_space<vmem>>, %arg10: memref<560x384xf32, #tpu.memory_space<vmem>>, %arg11: memref<496x384xf32, #tpu.memory_space<vmem>>, %arg12: memref<496x128xf32, #tpu.memory_space<vmem>>, %arg13: memref<432x128xf32, #tpu.memory_space<vmem>>) attributes {dimension_semantics = [#tpu.dimension_semantics<parallel>, #tpu.dimension_semantics<parallel>], iteration_bounds = array<i64: 2, 1>, scalar_prefetch = 0 : i64, scratch_operands = 4 : i64, tpu.core_type = #tpu.core_type<tc>, window_params = [{transform_indices = @transform_0, window_bounds = array<i64: 1, 576, 128>}, {pipeline_mode = #tpu.pipeline_mode<synchronous>, transform_indices = @transform_1, window_bounds = array<i64: 3, 384, 128>}, {pipeline_mode = #tpu.pipeline_mode<synchronous>, transform_indices = @transform_2, window_bounds = array<i64: 1, 128>}, {pipeline_mode = #tpu.pipeline_mode<synchronous>, transform_indices = @transform_3, window_bounds = array<i64: 1, 128>}, {pipeline_mode = #tpu.pipeline_mode<synchronous>, transform_indices = @transform_4, window_bounds = array<i64: 3, 384, 128>}, {pipeline_mode = #tpu.pipeline_mode<synchronous>, transform_indices = @transform_5, window_bounds = array<i64: 1, 128>}, {pipeline_mode = #tpu.pipeline_mode<synchronous>, transform_indices = @transform_6, window_bounds = array<i64: 1, 128>}, {transform_indices = @transform_7, window_bounds = array<i64: 1, 1, 432, 128>}]} {
    %c432_i32 = arith.constant 432 : i32
    %0 = arith.muli %arg1, %c432_i32 : i32
    %c72_i32 = arith.constant 72 : i32
    %1 = arith.addi %c72_i32, %0 : i32
    %2 = tpu.assume_multiple %1, 8 : i32
    %c64_i32 = arith.constant 64 : i32
    %3 = arith.subi %2, %c64_i32 : i32
    %4 = tpu.assume_multiple %3, 8 : i32
    %c-1_i32 = arith.constant -1 : i32
    %5 = arith.addi %4, %c-1_i32 : i32
    %c0 = arith.constant 0 : index
    %6 = arith.index_cast %5 : i32 to index
    %c0_0 = arith.constant 0 : index
    %7 = vector.load %arg2[%c0, %6, %c0_0] : memref<1x576x128xf32, #tpu.memory_space<vmem>>, vector<1x560x128xf32>
    %8 = vector.shape_cast %7 : vector<1x560x128xf32> to vector<560x128xf32>
    %c0_1 = arith.constant 0 : index
    %c0_2 = arith.constant 0 : index
    %9 = vector.load %arg10[%c0_1, %c0_2] : memref<560x384xf32, #tpu.memory_space<vmem>>, vector<560x128xf32>
    tpu.vector_store %arg10[%c0_1, %c0_2], %8 {strides = array<i32>} : memref<560x384xf32, #tpu.memory_space<vmem>>, vector<560x128xf32>,
    %c0_i32 = arith.constant 0 : i32
    %10 = arith.addi %4, %c0_i32 : i32
    %c0_3 = arith.constant 0 : index
    %11 = arith.index_cast %10 : i32 to index
    %c0_4 = arith.constant 0 : index
    %12 = vector.load %arg2[%c0_3, %11, %c0_4] : memref<1x576x128xf32, #tpu.memory_space<vmem>>, vector<1x560x128xf32>
    %13 = vector.shape_cast %12 : vector<1x560x128xf32> to vector<560x128xf32>
    %c0_5 = arith.constant 0 : index
    %c128 = arith.constant 128 : index
    %14 = vector.load %arg10[%c0_5, %c128] : memref<560x384xf32, #tpu.memory_space<vmem>>, vector<560x128xf32>
    tpu.vector_store %arg10[%c0_5, %c128], %13 {strides = array<i32>} : memref<560x384xf32, #tpu.memory_space<vmem>>, vector<560x128xf32>,
    %c1_i32 = arith.constant 1 : i32
    %15 = arith.addi %4, %c1_i32 : i32
    %c0_6 = arith.constant 0 : index
    %16 = arith.index_cast %15 : i32 to index
    %c0_7 = arith.constant 0 : index
    %17 = vector.load %arg2[%c0_6, %16, %c0_7] : memref<1x576x128xf32, #tpu.memory_space<vmem>>, vector<1x560x128xf32>
    %18 = vector.shape_cast %17 : vector<1x560x128xf32> to vector<560x128xf32>
    %c0_8 = arith.constant 0 : index
    %c256 = arith.constant 256 : index
    %19 = vector.load %arg10[%c0_8, %c256] : memref<560x384xf32, #tpu.memory_space<vmem>>, vector<560x128xf32>
    tpu.vector_store %arg10[%c0_8, %c256], %18 {strides = array<i32>} : memref<560x384xf32, #tpu.memory_space<vmem>>, vector<560x128xf32>,
    %c8 = arith.constant 8 : index
    %c0_9 = arith.constant 0 : index
    %20 = vector.load %arg10[%c8, %c0_9] : memref<560x384xf32, #tpu.memory_space<vmem>>, vector<496x384xf32>
    %c0_10 = arith.constant 0 : index
    %c0_11 = arith.constant 0 : index
    %c0_12 = arith.constant 0 : index
    %21 = vector.load %arg3[%c0_10, %c0_11, %c0_12] : memref<3x384x128xf32, #tpu.memory_space<vmem>>, vector<1x384x128xf32>
    %22 = vector.shape_cast %21 : vector<1x384x128xf32> to vector<384x128xf32>
    %cst = arith.constant dense<0.000000e+00> : vector<496x128xf32>
    %23 = tpu.matmul %20, %22, %cst {dimension_numbers = #tpu.dot_dimension_numbers<[1], [0], [0], [1], [0, 0, 1, 1], [], []>} : vector<496x384xf32>, vector<384x128xf32>, vector<496x128xf32> -> vector<496x128xf32>
    %c0_13 = arith.constant 0 : index
    %c0_14 = arith.constant 0 : index
    %24 = vector.load %arg12[%c0_13, %c0_14] : memref<496x128xf32, #tpu.memory_space<vmem>>, vector<496x128xf32>
    tpu.vector_store %arg12[%c0_13, %c0_14], %23 {strides = array<i32>} : memref<496x128xf32, #tpu.memory_space<vmem>>, vector<496x128xf32>,
    %c32 = arith.constant 32 : index
    %c0_15 = arith.constant 0 : index
    %25 = vector.load %arg10[%c32, %c0_15] : memref<560x384xf32, #tpu.memory_space<vmem>>, vector<496x384xf32>
    %c1 = arith.constant 1 : index
    %c0_16 = arith.constant 0 : index
    %c0_17 = arith.constant 0 : index
    %26 = vector.load %arg3[%c1, %c0_16, %c0_17] : memref<3x384x128xf32, #tpu.memory_space<vmem>>, vector<1x384x128xf32>
    %27 = vector.shape_cast %26 : vector<1x384x128xf32> to vector<384x128xf32>
    %cst_18 = arith.constant dense<0.000000e+00> : vector<496x128xf32>
    %28 = tpu.matmul %25, %27, %cst_18 {dimension_numbers = #tpu.dot_dimension_numbers<[1], [0], [0], [1], [0, 0, 1, 1], [], []>} : vector<496x384xf32>, vector<384x128xf32>, vector<496x128xf32> -> vector<496x128xf32>
    %c0_19 = arith.constant 0 : index
    %c0_20 = arith.constant 0 : index
    %29 = vector.load %arg12[%c0_19, %c0_20] : memref<496x128xf32, #tpu.memory_space<vmem>>, vector<496x128xf32>
    %30 = arith.addf %29, %28 : vector<496x128xf32>
    %c0_21 = arith.constant 0 : index
    %c0_22 = arith.constant 0 : index
    %31 = vector.load %arg12[%c0_21, %c0_22] : memref<496x128xf32, #tpu.memory_space<vmem>>, vector<496x128xf32>
    tpu.vector_store %arg12[%c0_21, %c0_22], %30 {strides = array<i32>} : memref<496x128xf32, #tpu.memory_space<vmem>>, vector<496x128xf32>,
    %c56 = arith.constant 56 : index
    %c0_23 = arith.constant 0 : index
    %32 = vector.load %arg10[%c56, %c0_23] : memref<560x384xf32, #tpu.memory_space<vmem>>, vector<496x384xf32>
    %c2 = arith.constant 2 : index
    %c0_24 = arith.constant 0 : index
    %c0_25 = arith.constant 0 : index
    %33 = vector.load %arg3[%c2, %c0_24, %c0_25] : memref<3x384x128xf32, #tpu.memory_space<vmem>>, vector<1x384x128xf32>
    %34 = vector.shape_cast %33 : vector<1x384x128xf32> to vector<384x128xf32>
    %cst_26 = arith.constant dense<0.000000e+00> : vector<496x128xf32>
    %35 = tpu.matmul %32, %34, %cst_26 {dimension_numbers = #tpu.dot_dimension_numbers<[1], [0], [0], [1], [0, 0, 1, 1], [], []>} : vector<496x384xf32>, vector<384x128xf32>, vector<496x128xf32> -> vector<496x128xf32>
    %c0_27 = arith.constant 0 : index
    %c0_28 = arith.constant 0 : index
    %36 = vector.load %arg12[%c0_27, %c0_28] : memref<496x128xf32, #tpu.memory_space<vmem>>, vector<496x128xf32>
    %37 = arith.addf %36, %35 : vector<496x128xf32>
    %c0_29 = arith.constant 0 : index
    %c0_30 = arith.constant 0 : index
    %38 = vector.load %arg12[%c0_29, %c0_30] : memref<496x128xf32, #tpu.memory_space<vmem>>, vector<496x128xf32>
    tpu.vector_store %arg12[%c0_29, %c0_30], %37 {strides = array<i32>} : memref<496x128xf32, #tpu.memory_space<vmem>>, vector<496x128xf32>,
    %39 = tpu.iota {dimensions = array<i32: 0>} : vector<496x128xi32>
    %c432_i32_31 = arith.constant 432 : i32
    %40 = arith.muli %arg1, %c432_i32_31 : i32
    %c32_i32 = arith.constant 32 : i32
    %41 = arith.subi %40, %c32_i32 : i32
    %42 = vector.broadcast %41 : i32 to vector<496x128xi32>
    %43 = arith.addi %42, %39 : vector<496x128xi32>
    %44 = arith.sitofp %43 : vector<496x128xi32> to vector<496x128xf32>
    %cst_32 = arith.constant 5.000000e-01 : f32
    %45 = vector.broadcast %cst_32 : f32 to vector<496x128xf32>
    %46 = arith.addf %44, %45 : vector<496x128xf32>
    %cst_33 = arith.constant 0.0416666679 : f32
    %47 = vector.broadcast %cst_33 : f32 to vector<496x128xf32>
    %48 = arith.mulf %46, %47 : vector<496x128xf32>
    %49 = math.floor %48 : vector<496x128xf32>
    %cst_34 = arith.constant 2.400000e+01 : f32
    %50 = vector.broadcast %cst_34 : f32 to vector<496x128xf32>
    %51 = arith.mulf %49, %50 : vector<496x128xf32>
    %52 = arith.subf %44, %51 : vector<496x128xf32>
    %cst_35 = arith.constant 1.000000e+00 : f32
    %53 = vector.broadcast %cst_35 : f32 to vector<496x128xf32>
    %54 = arith.cmpf oge, %49, %53 : vector<496x128xf32>
    %cst_36 = arith.constant 1.600000e+01 : f32
    %55 = vector.broadcast %cst_36 : f32 to vector<496x128xf32>
    %56 = arith.cmpf ole, %49, %55 : vector<496x128xf32>
    %57 = arith.andi %54, %56 : vector<496x128xi1>
    %cst_37 = arith.constant 1.000000e+00 : f32
    %58 = vector.broadcast %cst_37 : f32 to vector<496x128xf32>
    %59 = arith.cmpf oge, %52, %58 : vector<496x128xf32>
    %60 = arith.andi %57, %59 : vector<496x128xi1>
    %cst_38 = arith.constant 1.600000e+01 : f32
    %61 = vector.broadcast %cst_38 : f32 to vector<496x128xf32>
    %62 = arith.cmpf ole, %52, %61 : vector<496x128xf32>
    %63 = arith.andi %60, %62 : vector<496x128xi1>
    %64 = arith.extui %63 : vector<496x128xi1> to vector<496x128xi32>
    %65 = arith.sitofp %64 : vector<496x128xi32> to vector<496x128xf32>
    %c0_39 = arith.constant 0 : index
    %c0_40 = arith.constant 0 : index
    %66 = vector.load %arg12[%c0_39, %c0_40] : memref<496x128xf32, #tpu.memory_space<vmem>>, vector<496x128xf32>
    %c0_41 = arith.constant 0 : index
    %c0_42 = arith.constant 0 : index
    %67 = vector.load %arg4[%c0_41, %c0_42] : memref<1x128xf32, #tpu.memory_space<vmem>>, vector<1x128xf32>
    %68 = vector.broadcast %67 : vector<1x128xf32> to vector<496x128xf32>
    %69 = arith.mulf %66, %68 : vector<496x128xf32>
    %c0_43 = arith.constant 0 : index
    %c0_44 = arith.constant 0 : index
    %70 = vector.load %arg5[%c0_43, %c0_44] : memref<1x128xf32, #tpu.memory_space<vmem>>, vector<1x128xf32>
    %71 = vector.broadcast %70 : vector<1x128xf32> to vector<496x128xf32>
    %72 = arith.addf %69, %71 : vector<496x128xf32>
    %cst_45 = arith.constant 0.000000e+00 : f32
    %73 = vector.broadcast %cst_45 : f32 to vector<496x128xf32>
    %74 = arith.maximumf %72, %73 : vector<496x128xf32>
    %75 = arith.mulf %74, %65 : vector<496x128xf32>
    %c0_46 = arith.constant 0 : index
    %c128_47 = arith.constant 128 : index
    %76 = vector.load %arg11[%c0_46, %c128_47] : memref<496x384xf32, #tpu.memory_space<vmem>>, vector<496x128xf32>
    tpu.vector_store %arg11[%c0_46, %c128_47], %75 {strides = array<i32>} : memref<496x384xf32, #tpu.memory_space<vmem>>, vector<496x128xf32>,
    %77 = vector.extract_strided_slice %75 {offsets = [0, 0], sizes = [495, 128], strides = [1, 1]} : vector<496x128xf32> to vector<495x128xf32>
    %c1_48 = arith.constant 1 : index
    %c0_49 = arith.constant 0 : index
    %78 = vector.load %arg11[%c1_48, %c0_49] : memref<496x384xf32, #tpu.memory_space<vmem>>, vector<495x128xf32>
    tpu.vector_store %arg11[%c1_48, %c0_49], %77 {strides = array<i32>} : memref<496x384xf32, #tpu.memory_space<vmem>>, vector<495x128xf32>,
    %79 = vector.extract_strided_slice %75 {offsets = [1, 0], sizes = [495, 128], strides = [1, 1]} : vector<496x128xf32> to vector<495x128xf32>
    %c0_50 = arith.constant 0 : index
    %c256_51 = arith.constant 256 : index
    %80 = vector.load %arg11[%c0_50, %c256_51] : memref<496x384xf32, #tpu.memory_space<vmem>>, vector<495x128xf32>
    tpu.vector_store %arg11[%c0_50, %c256_51], %79 {strides = array<i32>} : memref<496x384xf32, #tpu.memory_space<vmem>>, vector<495x128xf32>,
    %c8_52 = arith.constant 8 : index
    %c0_53 = arith.constant 0 : index
    %81 = vector.load %arg11[%c8_52, %c0_53] : memref<496x384xf32, #tpu.memory_space<vmem>>, vector<432x384xf32>
    %c0_54 = arith.constant 0 : index
    %c0_55 = arith.constant 0 : index
    %c0_56 = arith.constant 0 : index
    %82 = vector.load %arg6[%c0_54, %c0_55, %c0_56] : memref<3x384x128xf32, #tpu.memory_space<vmem>>, vector<1x384x128xf32>
    %83 = vector.shape_cast %82 : vector<1x384x128xf32> to vector<384x128xf32>
    %cst_57 = arith.constant dense<0.000000e+00> : vector<432x128xf32>
    %84 = tpu.matmul %81, %83, %cst_57 {dimension_numbers = #tpu.dot_dimension_numbers<[1], [0], [0], [1], [0, 0, 1, 1], [], []>} : vector<432x384xf32>, vector<384x128xf32>, vector<432x128xf32> -> vector<432x128xf32>
    %c0_58 = arith.constant 0 : index
    %c0_59 = arith.constant 0 : index
    %85 = vector.load %arg13[%c0_58, %c0_59] : memref<432x128xf32, #tpu.memory_space<vmem>>, vector<432x128xf32>
    tpu.vector_store %arg13[%c0_58, %c0_59], %84 {strides = array<i32>} : memref<432x128xf32, #tpu.memory_space<vmem>>, vector<432x128xf32>,
    %c32_60 = arith.constant 32 : index
    %c0_61 = arith.constant 0 : index
    %86 = vector.load %arg11[%c32_60, %c0_61] : memref<496x384xf32, #tpu.memory_space<vmem>>, vector<432x384xf32>
    %c1_62 = arith.constant 1 : index
    %c0_63 = arith.constant 0 : index
    %c0_64 = arith.constant 0 : index
    %87 = vector.load %arg6[%c1_62, %c0_63, %c0_64] : memref<3x384x128xf32, #tpu.memory_space<vmem>>, vector<1x384x128xf32>
    %88 = vector.shape_cast %87 : vector<1x384x128xf32> to vector<384x128xf32>
    %cst_65 = arith.constant dense<0.000000e+00> : vector<432x128xf32>
    %89 = tpu.matmul %86, %88, %cst_65 {dimension_numbers = #tpu.dot_dimension_numbers<[1], [0], [0], [1], [0, 0, 1, 1], [], []>} : vector<432x384xf32>, vector<384x128xf32>, vector<432x128xf32> -> vector<432x128xf32>
    %c0_66 = arith.constant 0 : index
    %c0_67 = arith.constant 0 : index
    %90 = vector.load %arg13[%c0_66, %c0_67] : memref<432x128xf32, #tpu.memory_space<vmem>>, vector<432x128xf32>
    %91 = arith.addf %90, %89 : vector<432x128xf32>
    %c0_68 = arith.constant 0 : index
    %c0_69 = arith.constant 0 : index
    %92 = vector.load %arg13[%c0_68, %c0_69] : memref<432x128xf32, #tpu.memory_space<vmem>>, vector<432x128xf32>
    tpu.vector_store %arg13[%c0_68, %c0_69], %91 {strides = array<i32>} : memref<432x128xf32, #tpu.memory_space<vmem>>, vector<432x128xf32>,
    %c56_70 = arith.constant 56 : index
    %c0_71 = arith.constant 0 : index
    %93 = vector.load %arg11[%c56_70, %c0_71] : memref<496x384xf32, #tpu.memory_space<vmem>>, vector<432x384xf32>
    %c2_72 = arith.constant 2 : index
    %c0_73 = arith.constant 0 : index
    %c0_74 = arith.constant 0 : index
    %94 = vector.load %arg6[%c2_72, %c0_73, %c0_74] : memref<3x384x128xf32, #tpu.memory_space<vmem>>, vector<1x384x128xf32>
    %95 = vector.shape_cast %94 : vector<1x384x128xf32> to vector<384x128xf32>
    %cst_75 = arith.constant dense<0.000000e+00> : vector<432x128xf32>
    %96 = tpu.matmul %93, %95, %cst_75 {dimension_numbers = #tpu.dot_dimension_numbers<[1], [0], [0], [1], [0, 0, 1, 1], [], []>} : vector<432x384xf32>, vector<384x128xf32>, vector<432x128xf32> -> vector<432x128xf32>
    %c0_76 = arith.constant 0 : index
    %c0_77 = arith.constant 0 : index
    %97 = vector.load %arg13[%c0_76, %c0_77] : memref<432x128xf32, #tpu.memory_space<vmem>>, vector<432x128xf32>
    %98 = arith.addf %97, %96 : vector<432x128xf32>
    %c0_78 = arith.constant 0 : index
    %c0_79 = arith.constant 0 : index
    %99 = vector.load %arg13[%c0_78, %c0_79] : memref<432x128xf32, #tpu.memory_space<vmem>>, vector<432x128xf32>
    tpu.vector_store %arg13[%c0_78, %c0_79], %98 {strides = array<i32>} : memref<432x128xf32, #tpu.memory_space<vmem>>, vector<432x128xf32>,
    %c0_80 = arith.constant 0 : index
    %100 = arith.index_cast %2 : i32 to index
    %c0_81 = arith.constant 0 : index
    %101 = vector.load %arg2[%c0_80, %100, %c0_81] : memref<1x576x128xf32, #tpu.memory_space<vmem>>, vector<1x432x128xf32>
    %102 = vector.shape_cast %101 : vector<1x432x128xf32> to vector<432x128xf32>
    %c0_82 = arith.constant 0 : index
    %c0_83 = arith.constant 0 : index
    %103 = vector.load %arg13[%c0_82, %c0_83] : memref<432x128xf32, #tpu.memory_space<vmem>>, vector<432x128xf32>
    %c0_84 = arith.constant 0 : index
    %c0_85 = arith.constant 0 : index
    %104 = vector.load %arg7[%c0_84, %c0_85] : memref<1x128xf32, #tpu.memory_space<vmem>>, vector<1x128xf32>
    %105 = vector.broadcast %104 : vector<1x128xf32> to vector<432x128xf32>
    %106 = arith.mulf %103, %105 : vector<432x128xf32>
    %c0_86 = arith.constant 0 : index
    %c0_87 = arith.constant 0 : index
    %107 = vector.load %arg8[%c0_86, %c0_87] : memref<1x128xf32, #tpu.memory_space<vmem>>, vector<1x128xf32>
    %108 = vector.broadcast %107 : vector<1x128xf32> to vector<432x128xf32>
    %109 = arith.addf %106, %108 : vector<432x128xf32>
    %110 = arith.addf %109, %102 : vector<432x128xf32>
    %cst_88 = arith.constant 0.000000e+00 : f32
    %111 = vector.broadcast %cst_88 : f32 to vector<432x128xf32>
    %112 = arith.maximumf %110, %111 : vector<432x128xf32>
    %c0_89 = arith.constant 0 : index
    %c0_90 = arith.constant 0 : index
    %c0_91 = arith.constant 0 : index
    %c0_92 = arith.constant 0 : index
    %113 = vector.load %arg9[%c0_89, %c0_90, %c0_91, %c0_92] : memref<1x1x432x128xf32, #tpu.memory_space<vmem>>, vector<1x1x432x128xf32>
    %114 = vector.shape_cast %113 : vector<1x1x432x128xf32> to vector<432x128xf32>
    %115 = vector.shape_cast %112 : vector<432x128xf32> to vector<1x1x432x128xf32>
    tpu.vector_store %arg9[%c0_89, %c0_90, %c0_91, %c0_92], %115 {strides = array<i32>} : memref<1x1x432x128xf32, #tpu.memory_space<vmem>>, vector<1x1x432x128xf32>,
    return
  }
  func.func @transform_0(%arg0: i32, %arg1: i32) -> (i32, i32, i32) {
    %c0_i32 = arith.constant 0 : i32
    %c0_i32_0 = arith.constant 0 : i32
    %c0_i32_1 = arith.constant 0 : i32
    return %arg0, %c0_i32, %c0_i32_0 : i32, i32, i32
  }
  func.func @transform_1(%arg0: i32, %arg1: i32) -> (i32, i32, i32) {
    %c0_i32 = arith.constant 0 : i32
    %c0_i32_0 = arith.constant 0 : i32
    %c0_i32_1 = arith.constant 0 : i32
    %c0_i32_2 = arith.constant 0 : i32
    return %c0_i32, %c0_i32_0, %c0_i32_1 : i32, i32, i32
  }
  func.func @transform_2(%arg0: i32, %arg1: i32) -> (i32, i32) {
    %c0_i32 = arith.constant 0 : i32
    %c0_i32_0 = arith.constant 0 : i32
    %c0_i32_1 = arith.constant 0 : i32
    return %c0_i32, %c0_i32_0 : i32, i32
  }
  func.func @transform_3(%arg0: i32, %arg1: i32) -> (i32, i32) {
    %c0_i32 = arith.constant 0 : i32
    %c0_i32_0 = arith.constant 0 : i32
    %c0_i32_1 = arith.constant 0 : i32
    return %c0_i32, %c0_i32_0 : i32, i32
  }
  func.func @transform_4(%arg0: i32, %arg1: i32) -> (i32, i32, i32) {
    %c0_i32 = arith.constant 0 : i32
    %c0_i32_0 = arith.constant 0 : i32
    %c0_i32_1 = arith.constant 0 : i32
    %c0_i32_2 = arith.constant 0 : i32
    return %c0_i32, %c0_i32_0, %c0_i32_1 : i32, i32, i32
  }
  func.func @transform_5(%arg0: i32, %arg1: i32) -> (i32, i32) {
    %c0_i32 = arith.constant 0 : i32
    %c0_i32_0 = arith.constant 0 : i32
    %c0_i32_1 = arith.constant 0 : i32
    return %c0_i32, %c0_i32_0 : i32, i32
  }
  func.func @transform_6(%arg0: i32, %arg1: i32) -> (i32, i32) {
    %c0_i32 = arith.constant 0 : i32
    %c0_i32_0 = arith.constant 0 : i32
    %c0_i32_1 = arith.constant 0 : i32
    return %c0_i32, %c0_i32_0 : i32, i32
  }
  func.func @transform_7(%arg0: i32, %arg1: i32) -> (i32, i32, i32, i32) {
    %c0_i32 = arith.constant 0 : i32
    %c0_i32_0 = arith.constant 0 : i32
    %c0_i32_1 = arith.constant 0 : i32
    return %arg0, %arg1, %c0_i32, %c0_i32_0 : i32, i32, i32, i32
  }
}

</mosaic_0001>

<llo_original>
// kernel: tpu_custom_call.1
$region0: #{tpu_custom_call.1}
  #allocation0 [shape = 'u32[]', space=smem, size = 0x4, offset = 0x4, fixed_abs, tag = 'smem constant byte address 0x4 - core index']
  #allocation1 [shape = 'u32[144,128]{1,0:T(1,128)}', space=vmem, size = 0x12000, scoped, tag = 'internal scratch']
  #allocation2 [shape = 'f32[560,384]{1,0:T(8,128)}', space=vmem, size = 0xd2000, scoped, tag = 'scratch operand']
  #allocation3 [shape = 'f32[496,384]{1,0:T(8,128)}', space=vmem, size = 0xba000, scoped, tag = 'scratch operand']
  #allocation4 [shape = 'f32[496,128]{1,0:T(8,128)}', space=vmem, size = 0x3e000, scoped, tag = 'scratch operand']
  #allocation5 [shape = 'f32[432,128]{1,0:T(8,128)}', space=vmem, size = 0x36000, scoped, tag = 'scratch operand']
  %s0 = inlined_call_operand.hbm [shape: f32[2,576,128], index: 0, kind: input, shape index: {}]
  %s1 = inlined_call_operand.hbm [shape: f32[3,384,128], index: 1, kind: input, shape index: {}]
  %s2 = inlined_call_operand.vmem [shape: f32[1,128], index: 2, kind: input, shape index: {}]
  %s3 = inlined_call_operand.vmem [shape: f32[1,128], index: 3, kind: input, shape index: {}]
  %s4 = inlined_call_operand.hbm [shape: f32[3,384,128], index: 4, kind: input, shape index: {}]
  %s5 = inlined_call_operand.vmem [shape: f32[1,128], index: 5, kind: input, shape index: {}]
  %s6 = inlined_call_operand.vmem [shape: f32[1,128], index: 6, kind: input, shape index: {}]
  %s7 = inlined_call_operand.hbm [shape: f32[2,1,432,128], index: 7, kind: output, shape index: {}]
  %s8 = sld [smem:[#allocation0]]
  $region73: #{tpu_custom_call.1} parent=0
    _
  %s10 = ssub.s32 1, %s8
  %s11 = scalar_select 0, %s10, %s8
  $region1: #{tpu_custom_call.1} parent=0
    #allocation6 [shape = 'u8[589824]{0}', space=vmem, size = 0x90000, scoped, tag = 'input window, operand 0']
    #allocation7 [shape = 's32[2]{0}', space=sflag, size = 0x8, scoped, tag = 'scoped memory for tpu_custom_call.1']
    #allocation8 [shape = 's32[2]{0}', space=sflag, size = 0x8, scoped, tag = 'scoped memory for tpu_custom_call.1']
    #allocation9 [shape = 'u8[589824]{0}', space=vmem, size = 0x90000, scoped, tag = 'input window, operand 1, single buffered']
    #allocation10 [shape = 's32[1]{0}', space=sflag, size = 0x4, scoped, tag = 'scoped memory for tpu_custom_call.1']
    #allocation11 [shape = 'u8[589824]{0}', space=vmem, size = 0x90000, scoped, tag = 'input window, operand 4, single buffered']
    #allocation12 [shape = 'u8[442368]{0}', space=vmem, size = 0x6c000, scoped, tag = 'output window, operand 0']
    %12 = vsyncpa [#allocation7], 0
    %s13 = scalar_lea.sflag [#allocation7], 1
    %14 = vsyncpa %s13, 0
    %15 = vsyncpa [#allocation10], 0
    %16 = vsyncpa [#allocation8], 0
    %s17 = scalar_lea.sflag [#allocation8], 1
    %18 = vsyncpa %s17, 0
    loop: start=0, step=1, limit=4
    $region2: #{tpu_custom_call.1} parent=1 // loop_pre_header
      _
    $region3: #{tpu_custom_call.1} parent=1 // loop_header
      %s20 = sphi 0, %s24
      %p21 = scmp.ge.s32.totalorder %s20, 4
      %s27 = sphi 0, %s39
      %s28 = sphi 0, %s35
      %s29 = sphi 0, %s27
      %s30 = sphi 0, %s28
      %s31 = sphi 0, %s29
      %s32 = sphi 0, %s30
      %s42 = sphi 0, %s44
      %s45 = sphi 0, %s42
      %s46 = sphi 0, %s45
      %s62 = sphi 0, %s46
      %s66 = sphi 0, %s66
      %s68 = sphi 0, %s66
      %s69 = sphi 0, %s68
      %s83 = sphi 0, %s69
      %s87 = sphi 0, %s87
      %s89 = sphi 0, %s87
      %s90 = sphi 0, %s89
      %s104 = sphi 0, %s90
      %s108 = sphi 0, %s108
      %s110 = sphi 0, %s108
      %s111 = sphi 0, %s110
      %s125 = sphi 0, %s111
      %s129 = sphi 0, %s129
      %s131 = sphi 0, %s129
      %s132 = sphi 0, %s131
      %s146 = sphi 0, %s132
      %s150 = sphi 0, %s150
      %s152 = sphi 0, %s150
      %s153 = sphi 0, %s152
      %s167 = sphi 0, %s153
      %s171 = sphi 0, %s171
      %s173 = sphi 0, %s171
      %s174 = sphi 0, %s173
      %s188 = sphi 0, %s174
      %s196 = sphi 0, %s198
      %s199 = sphi 0, %s196
      %s200 = sphi 0, %s199
      %s216 = sphi 0, %s200
    $region4: #{tpu_custom_call.1} parent=1 // loop_header_branch
      %23 = sbr.rel (%p21) target = $region8
    $region5: #{tpu_custom_call.1} parent=1 // loop_body
      %s25 = ssub.s32 %s20, 1
      %s26 = ssub.s32 %s20, 2
      %s33 = sadd.s32 1, %s28
      %p34 = scmp.ge.s32.totalorder %s33, 1
      %s35 = scalar_select %p34, 0, %s33
      %s36 = sadd.s32 1, %s27
      %s37 = scalar_select %p34, %s36, %s27
      %p38 = scmp.ge.s32.totalorder %s37, 2
      %s39 = scalar_select %p38, 0, %s37
      %s40 = ssub.s32 %s27, %s39
      %p41 = scmp.eq.s32.totalorder %s40, 0
      %s43 = sadd.s32 %s42, 1
      %s44 = scalar_select %p41, %s42, %s43
      %p47 = pneg %p41
      %p48 = scmp.eq.s32.totalorder %s20, 1
      %p49 = por %p47, %p48
      %p50 = scmp.ne.s32.totalorder %s42, %s45
      %p51 = scmp.eq.s32.totalorder %s20, 0
      %p52 = por %p50, %p51
      %p53 = scmp.ne.s32.totalorder %s42, %s45
      %p54 = scmp.eq.s32.totalorder %s25, 1
      %p55 = por %p53, %p54
      %p56 = scmp.ne.s32.totalorder %s45, %s46
      %p57 = scmp.eq.s32.totalorder %s25, 0
      %p58 = por %p56, %p57
      %p59 = scmp.ne.s32.totalorder %s45, %s46
      %p60 = scmp.eq.s32.totalorder %s26, 1
      %p61 = por %p59, %p60
      %p63 = scmp.ne.s32.totalorder %s46, %s62
      %p64 = scmp.eq.s32.totalorder %s26, 0
      %p65 = por %p63, %p64
      %s67 = sadd.s32 %s66, 1
      %p70 = scmp.eq.s32.totalorder %s20, 1
      %p71 = scmp.ne.s32.totalorder %s66, %s68
      %p72 = scmp.eq.s32.totalorder %s20, 0
      %p73 = por %p71, %p72
      %p74 = scmp.ne.s32.totalorder %s66, %s68
      %p75 = scmp.eq.s32.totalorder %s25, 1
      %p76 = por %p74, %p75
      %p77 = scmp.ne.s32.totalorder %s68, %s69
      %p78 = scmp.eq.s32.totalorder %s25, 0
      %p79 = por %p77, %p78
      %p80 = scmp.ne.s32.totalorder %s68, %s69
      %p81 = scmp.eq.s32.totalorder %s26, 1
      %p82 = por %p80, %p81
      %p84 = scmp.ne.s32.totalorder %s69, %s83
      %p85 = scmp.eq.s32.totalorder %s26, 0
      %p86 = por %p84, %p85
      %s88 = sadd.s32 %s87, 1
      %p91 = scmp.eq.s32.totalorder %s20, 1
      %p92 = scmp.ne.s32.totalorder %s87, %s89
      %p93 = scmp.eq.s32.totalorder %s20, 0
      %p94 = por %p92, %p93
      %p95 = scmp.ne.s32.totalorder %s87, %s89
      %p96 = scmp.eq.s32.totalorder %s25, 1
      %p97 = por %p95, %p96
      %p98 = scmp.ne.s32.totalorder %s89, %s90
      %p99 = scmp.eq.s32.totalorder %s25, 0
      %p100 = por %p98, %p99
      %p101 = scmp.ne.s32.totalorder %s89, %s90
      %p102 = scmp.eq.s32.totalorder %s26, 1
      %p103 = por %p101, %p102
      %p105 = scmp.ne.s32.totalorder %s90, %s104
      %p106 = scmp.eq.s32.totalorder %s26, 0
      %p107 = por %p105, %p106
      %s109 = sadd.s32 %s108, 1
      %p112 = scmp.eq.s32.totalorder %s20, 1
      %p113 = scmp.ne.s32.totalorder %s108, %s110
      %p114 = scmp.eq.s32.totalorder %s20, 0
      %p115 = por %p113, %p114
      %p116 = scmp.ne.s32.totalorder %s108, %s110
      %p117 = scmp.eq.s32.totalorder %s25, 1
      %p118 = por %p116, %p117
      %p119 = scmp.ne.s32.totalorder %s110, %s111
      %p120 = scmp.eq.s32.totalorder %s25, 0
      %p121 = por %p119, %p120
      %p122 = scmp.ne.s32.totalorder %s110, %s111
      %p123 = scmp.eq.s32.totalorder %s26, 1
      %p124 = por %p122, %p123
      %p126 = scmp.ne.s32.totalorder %s111, %s125
      %p127 = scmp.eq.s32.totalorder %s26, 0
      %p128 = por %p126, %p127
      %s130 = sadd.s32 %s129, 1
      %p133 = scmp.eq.s32.totalorder %s20, 1
      %p134 = scmp.ne.s32.totalorder %s129, %s131
      %p135 = scmp.eq.s32.totalorder %s20, 0
      %p136 = por %p134, %p135
      %p137 = scmp.ne.s32.totalorder %s129, %s131
      %p138 = scmp.eq.s32.totalorder %s25, 1
      %p139 = por %p137, %p138
      %p140 = scmp.ne.s32.totalorder %s131, %s132
      %p141 = scmp.eq.s32.totalorder %s25, 0
      %p142 = por %p140, %p141
      %p143 = scmp.ne.s32.totalorder %s131, %s132
      %p144 = scmp.eq.s32.totalorder %s26, 1
      %p145 = por %p143, %p144
      %p147 = scmp.ne.s32.totalorder %s132, %s146
      %p148 = scmp.eq.s32.totalorder %s26, 0
      %p149 = por %p147, %p148
      %s151 = sadd.s32 %s150, 1
      %p154 = scmp.eq.s32.totalorder %s20, 1
      %p155 = scmp.ne.s32.totalorder %s150, %s152
      %p156 = scmp.eq.s32.totalorder %s20, 0
      %p157 = por %p155, %p156
      %p158 = scmp.ne.s32.totalorder %s150, %s152
      %p159 = scmp.eq.s32.totalorder %s25, 1
      %p160 = por %p158, %p159
      %p161 = scmp.ne.s32.totalorder %s152, %s153
      %p162 = scmp.eq.s32.totalorder %s25, 0
      %p163 = por %p161, %p162
      %p164 = scmp.ne.s32.totalorder %s152, %s153
      %p165 = scmp.eq.s32.totalorder %s26, 1
      %p166 = por %p164, %p165
      %p168 = scmp.ne.s32.totalorder %s153, %s167
      %p169 = scmp.eq.s32.totalorder %s26, 0
      %p170 = por %p168, %p169
      %s172 = sadd.s32 %s171, 1
      %p175 = scmp.eq.s32.totalorder %s20, 1
      %p176 = scmp.ne.s32.totalorder %s171, %s173
      %p177 = scmp.eq.s32.totalorder %s20, 0
      %p178 = por %p176, %p177
      %p179 = scmp.ne.s32.totalorder %s171, %s173
      %p180 = scmp.eq.s32.totalorder %s25, 1
      %p181 = por %p179, %p180
      %p182 = scmp.ne.s32.totalorder %s173, %s174
      %p183 = scmp.eq.s32.totalorder %s25, 0
      %p184 = por %p182, %p183
      %p185 = scmp.ne.s32.totalorder %s173, %s174
      %p186 = scmp.eq.s32.totalorder %s26, 1
      %p187 = por %p185, %p186
      %p189 = scmp.ne.s32.totalorder %s174, %s188
      %p190 = scmp.eq.s32.totalorder %s26, 0
      %p191 = por %p189, %p190
      %s192 = ssub.s32 %s27, %s39
      %s193 = ssub.s32 %s28, %s35
      %s194 = sor.u32 %s192, %s193
      %p195 = scmp.eq.s32.totalorder %s194, 0
      %s197 = sadd.s32 %s196, 1
      %s198 = scalar_select %p195, %s196, %s197
      %p201 = pneg %p195
      %p202 = scmp.eq.s32.totalorder %s20, 1
      %p203 = por %p201, %p202
      %p204 = scmp.ne.s32.totalorder %s196, %s199
      %p205 = scmp.eq.s32.totalorder %s20, 0
      %p206 = por %p204, %p205
      %p207 = scmp.ne.s32.totalorder %s196, %s199
      %p208 = scmp.eq.s32.totalorder %s25, 1
      %p209 = por %p207, %p208
      %p210 = scmp.ne.s32.totalorder %s199, %s200
      %p211 = scmp.eq.s32.totalorder %s25, 0
      %p212 = por %p210, %p211
      %p213 = scmp.ne.s32.totalorder %s199, %s200
      %p214 = scmp.eq.s32.totalorder %s26, 1
      %p215 = por %p213, %p214
      %p217 = scmp.ne.s32.totalorder %s200, %s216
      %p218 = scmp.eq.s32.totalorder %s26, 0
      %p219 = por %p217, %p218
      %p220 = scmp.le.s32.totalorder 1, %s20
      %p221 = scmp.lt.s32.totalorder %s20, 3
      %p222 = pnand %p220, %p221
      %p223 = pneg %p222
      // Predicated region
      $region9: #{tpu_custom_call.1} parent=5 // pred_check
        _
      $region10: #{tpu_custom_call.1} parent=5 // pred_check_branch
        %225 = sbr.rel (%p222) target = $region12
      $region11: #{tpu_custom_call.1} parent=5 // pred_region
        %s226 = ssub.s32 %s20, 1
        // Predicated region
        $region13: #{tpu_custom_call.1} parent=11 // pred_check
          %p227 = pneg %p79
        $region14: #{tpu_custom_call.1} parent=11 // pred_check_branch
          %229 = sbr.rel (%p227) target = $region16
        $region15: #{tpu_custom_call.1} parent=11 // pred_region
          %s231 = ssub.s32 18432, 18432
          %232 = vsyncadd [#allocation10], %s231
          %s233 = sshll.u32 [#allocation9], 4
          %s234 = int_to_ptr.vmem [resolvable:$true] %s233
          %239 = dma.hbm_to_vmem [thread:$0]  %s1, 18432, %s234, [#allocation10], 128, 128, 8
        $region16: #{tpu_custom_call.1} parent=11 // pred_fallthru
          _
        // Predicated region
        $region17: #{tpu_custom_call.1} parent=11 // pred_check
          %p240 = pneg %p100
        $region18: #{tpu_custom_call.1} parent=11 // pred_check_branch
          %242 = sbr.rel (%p240) target = $region20
        $region19: #{tpu_custom_call.1} parent=11 // pred_region
          _
        $region20: #{tpu_custom_call.1} parent=11 // pred_fallthru
          _
        // Predicated region
        $region21: #{tpu_custom_call.1} parent=11 // pred_check
          %p243 = pneg %p121
        $region22: #{tpu_custom_call.1} parent=11 // pred_check_branch
          %245 = sbr.rel (%p243) target = $region24
        $region23: #{tpu_custom_call.1} parent=11 // pred_region
          _
        $region24: #{tpu_custom_call.1} parent=11 // pred_fallthru
          _
        // Predicated region
        $region25: #{tpu_custom_call.1} parent=11 // pred_check
          %p246 = pneg %p142
        $region26: #{tpu_custom_call.1} parent=11 // pred_check_branch
          %248 = sbr.rel (%p246) target = $region28
        $region27: #{tpu_custom_call.1} parent=11 // pred_region
          %s250 = ssub.s32 18432, 18432
          %251 = vsyncadd [#allocation10], %s250
          %s252 = sshll.u32 [#allocation11], 4
          %s253 = int_to_ptr.vmem [resolvable:$true] %s252
          %258 = dma.hbm_to_vmem [thread:$0]  %s4, 18432, %s253, [#allocation10], 128, 128, 8
        $region28: #{tpu_custom_call.1} parent=11 // pred_fallthru
          _
        // Predicated region
        $region29: #{tpu_custom_call.1} parent=11 // pred_check
          %p259 = pneg %p163
        $region30: #{tpu_custom_call.1} parent=11 // pred_check_branch
          %261 = sbr.rel (%p259) target = $region32
        $region31: #{tpu_custom_call.1} parent=11 // pred_region
          _
        $region32: #{tpu_custom_call.1} parent=11 // pred_fallthru
          _
        // Predicated region
        $region33: #{tpu_custom_call.1} parent=11 // pred_check
          %p262 = pneg %p184
        $region34: #{tpu_custom_call.1} parent=11 // pred_check_branch
          %264 = sbr.rel (%p262) target = $region36
        $region35: #{tpu_custom_call.1} parent=11 // pred_region
          _
        $region36: #{tpu_custom_call.1} parent=11 // pred_fallthru
          _
      $region12: #{tpu_custom_call.1} parent=5 // pred_fallthru
        _
      %p265 = scmp.lt.s32.totalorder %s20, 2
      // Predicated region
      $region37: #{tpu_custom_call.1} parent=5 // pred_check
        %p266 = pneg %p265
      $region38: #{tpu_custom_call.1} parent=5 // pred_check_branch
        %268 = sbr.rel (%p266) target = $region40
      $region39: #{tpu_custom_call.1} parent=5 // pred_region
        // Predicated region
        $region41: #{tpu_custom_call.1} parent=39 // pred_check
          %p269 = pneg %p52
        $region42: #{tpu_custom_call.1} parent=39 // pred_check_branch
          %271 = sbr.rel (%p269) target = $region44
        $region43: #{tpu_custom_call.1} parent=39 // pred_region
          %s272 = sand.u32 %s42, 1
          %s273 = scalar_lea.sflag [#allocation7], %s272
          %s274 = sand.u32 %s42, 1
          %s275 = smul.addr %s274, 576
          %s276 = scalar_lea.vmem [#allocation6], %s275
          %s278 = ssub.s32 9216, 9216
          %279 = vsyncadd %s273, %s278
          %s280 = smul.addr %s27, 72
          %s281 = smul.addr %s280, 128
          %s282 = scalar_lea.hbm %s0, %s281
          %s283 = sshll.u32 %s276, 4
          %s284 = int_to_ptr.vmem [resolvable:$true] %s283
          %289 = dma.hbm_to_vmem [thread:$0]  %s282, 9216, %s284, %s273, 128, 128, 8
        $region44: #{tpu_custom_call.1} parent=39 // pred_fallthru
          _
      $region40: #{tpu_custom_call.1} parent=5 // pred_fallthru
        _
      %p290 = scmp.le.s32.totalorder 1, %s20
      %p291 = scmp.lt.s32.totalorder %s20, 3
      %p292 = pnand %p290, %p291
      %p293 = pneg %p292
      // Predicated region
      $region45: #{tpu_custom_call.1} parent=5 // pred_check
        _
      $region46: #{tpu_custom_call.1} parent=5 // pred_check_branch
        %295 = sbr.rel (%p292) target = $region48
      $region47: #{tpu_custom_call.1} parent=5 // pred_region
        %s296 = ssub.s32 %s20, 1
        %s297 = sand.u32 %s45, 1
        %s298 = scalar_lea.sflag [#allocation7], %s297
        %s299 = sand.u32 %s45, 1
        %s300 = smul.addr %s299, 576
        %s301 = scalar_lea.vmem [#allocation6], %s300
        // Predicated region
        $region49: #{tpu_custom_call.1} parent=47 // pred_check
          %p302 = pneg %p58
        $region50: #{tpu_custom_call.1} parent=47 // pred_check_branch
          %304 = sbr.rel (%p302) target = $region52
        $region51: #{tpu_custom_call.1} parent=47 // pred_region
          %305 = dma.done %s298, 9216
        $region52: #{tpu_custom_call.1} parent=47 // pred_fallthru
          _
        // Predicated region
        $region53: #{tpu_custom_call.1} parent=47 // pred_check
          %p306 = pneg %p79
        $region54: #{tpu_custom_call.1} parent=47 // pred_check_branch
          %308 = sbr.rel (%p306) target = $region56
        $region55: #{tpu_custom_call.1} parent=47 // pred_region
          %309 = dma.done [#allocation10], 18432
        $region56: #{tpu_custom_call.1} parent=47 // pred_fallthru
          _
        // Predicated region
        $region57: #{tpu_custom_call.1} parent=47 // pred_check
          %p310 = pneg %p142
        $region58: #{tpu_custom_call.1} parent=47 // pred_check_branch
          %312 = sbr.rel (%p310) target = $region60
        $region59: #{tpu_custom_call.1} parent=47 // pred_region
          %313 = dma.done [#allocation10], 18432
        $region60: #{tpu_custom_call.1} parent=47 // pred_fallthru
          _
        %s314 = sand.u32 %s45, 1
        %s315 = scalar_lea.sflag [#allocation7], %s314
        %s316 = sand.u32 %s45, 1
        %s317 = smul.addr %s316, 576
        %s318 = scalar_lea.vmem [#allocation6], %s317
        %p319 = pneg %p58
        %p320 = pneg %p55
        %p321 = pneg %p79
        %p322 = pneg %p76
        %p323 = pneg %p100
        %p324 = pneg %p97
        %p325 = pneg %p121
        %p326 = pneg %p118
        %p327 = pneg %p142
        %p328 = pneg %p139
        %p329 = pneg %p163
        %p330 = pneg %p160
        %p331 = pneg %p184
        %p332 = pneg %p181
        %p333 = pneg %p212
        %p334 = pneg %p209
        %s335 = sand.u32 %s199, 1
        %s336 = scalar_lea.sflag [#allocation8], %s335
        %s337 = sand.u32 %s199, 1
        %s338 = smul.addr %s337, 432
        %s339 = scalar_lea.vmem [#allocation12], %s338
        %s340 = smul.u32 %s30, 432
        %s341 = sadd.s32 %s340, 72
        %s342 = ssub.s32 %s341, 64
        %s343 = sadd.s32 %s342, 4294967295
        %s344 = scalar_lea.vmem %s301, %s343 [#allocation6]
        %v345 = vld [vmem:[%s344] sm:$0xff]
        %v346 = vld [vmem:[%s344 + $0x8] sm:$0xff]
        %v347 = vld [vmem:[%s344 + $0x10] sm:$0xff]
        %v348 = vld [vmem:[%s344 + $0x18] sm:$0xff]
        %v349 = vld [vmem:[%s344 + $0x20] sm:$0xff]
        %v350 = vld [vmem:[%s344 + $0x28] sm:$0xff]
        %v351 = vld [vmem:[%s344 + $0x30] sm:$0xff]
        %v352 = vld [vmem:[%s344 + $0x38] sm:$0xff]
        %v353 = vld [vmem:[%s344 + $0x40] sm:$0xff]
        %v354 = vld [vmem:[%s344 + $0x48] sm:$0xff]
        %v355 = vld [vmem:[%s344 + $0x50] sm:$0xff]
        %v356 = vld [vmem:[%s344 + $0x58] sm:$0xff]
        %v357 = vld [vmem:[%s344 + $0x60] sm:$0xff]
        %v358 = vld [vmem:[%s344 + $0x68] sm:$0xff]
        %v359 = vld [vmem:[%s344 + $0x70] sm:$0xff]
        %v360 = vld [vmem:[%s344 + $0x78] sm:$0xff]
        %v361 = vld [vmem:[%s344 + $0x80] sm:$0xff]
        %v362 = vld [vmem:[%s344 + $0x88] sm:$0xff]
        %v363 = vld [vmem:[%s344 + $0x90] sm:$0xff]
        %v364 = vld [vmem:[%s344 + $0x98] sm:$0xff]
        %v365 = vld [vmem:[%s344 + $0xa0] sm:$0xff]
        %v366 = vld [vmem:[%s344 + $0xa8] sm:$0xff]
        %v367 = vld [vmem:[%s344 + $0xb0] sm:$0xff]
        %v368 = vld [vmem:[%s344 + $0xb8] sm:$0xff]
        %v369 = vld [vmem:[%s344 + $0xc0] sm:$0xff]
        %v370 = vld [vmem:[%s344 + $0xc8] sm:$0xff]
        %v371 = vld [vmem:[%s344 + $0xd0] sm:$0xff]
        %v372 = vld [vmem:[%s344 + $0xd8] sm:$0xff]
        %v373 = vld [vmem:[%s344 + $0xe0] sm:$0xff]
        %v374 = vld [vmem:[%s344 + $0xe8] sm:$0xff]
        %v375 = vld [vmem:[%s344 + $0xf0] sm:$0xff]
        %v376 = vld [vmem:[%s344 + $0xf8] sm:$0xff]
        %v377 = vld [vmem:[%s344 + $0x100] sm:$0xff]
        %v378 = vld [vmem:[%s344 + $0x108] sm:$0xff]
        %v379 = vld [vmem:[%s344 + $0x110] sm:$0xff]
        %v380 = vld [vmem:[%s344 + $0x118] sm:$0xff]
        %v381 = vld [vmem:[%s344 + $0x120] sm:$0xff]
        %v382 = vld [vmem:[%s344 + $0x128] sm:$0xff]
        %v383 = vld [vmem:[%s344 + $0x130] sm:$0xff]
        %v384 = vld [vmem:[%s344 + $0x138] sm:$0xff]
        %v385 = vld [vmem:[%s344 + $0x140] sm:$0xff]
        %v386 = vld [vmem:[%s344 + $0x148] sm:$0xff]
        %v387 = vld [vmem:[%s344 + $0x150] sm:$0xff]
        %v388 = vld [vmem:[%s344 + $0x158] sm:$0xff]
        %v389 = vld [vmem:[%s344 + $0x160] sm:$0xff]
        %v390 = vld [vmem:[%s344 + $0x168] sm:$0xff]
        %v391 = vld [vmem:[%s344 + $0x170] sm:$0xff]
        %v392 = vld [vmem:[%s344 + $0x178] sm:$0xff]
        %v393 = vld [vmem:[%s344 + $0x180] sm:$0xff]
        %v394 = vld [vmem:[%s344 + $0x188] sm:$0xff]
        %v395 = vld [vmem:[%s344 + $0x190] sm:$0xff]
        %v396 = vld [vmem:[%s344 + $0x198] sm:$0xff]
        %v397 = vld [vmem:[%s344 + $0x1a0] sm:$0xff]
        %v398 = vld [vmem:[%s344 + $0x1a8] sm:$0xff]
        %v399 = vld [vmem:[%s344 + $0x1b0] sm:$0xff]
        %v400 = vld [vmem:[%s344 + $0x1b8] sm:$0xff]
        %v401 = vld [vmem:[%s344 + $0x1c0] sm:$0xff]
        %v402 = vld [vmem:[%s344 + $0x1c8] sm:$0xff]
        %v403 = vld [vmem:[%s344 + $0x1d0] sm:$0xff]
        %v404 = vld [vmem:[%s344 + $0x1d8] sm:$0xff]
        %v405 = vld [vmem:[%s344 + $0x1e0] sm:$0xff]
        %v406 = vld [vmem:[%s344 + $0x1e8] sm:$0xff]
        %v407 = vld [vmem:[%s344 + $0x1f0] sm:$0xff]
        %v408 = vld [vmem:[%s344 + $0x1f8] sm:$0xff]
        %v409 = vld [vmem:[%s344 + $0x200] sm:$0xff]
        %v410 = vld [vmem:[%s344 + $0x208] sm:$0xff]
        %v411 = vld [vmem:[%s344 + $0x210] sm:$0xff]
        %v412 = vld [vmem:[%s344 + $0x218] sm:$0xff]
        %v413 = vld [vmem:[%s344 + $0x220] sm:$0xff]
        %v414 = vld [vmem:[%s344 + $0x228] sm:$0xff]
        %415 = vst [vmem:[#allocation2] sm:$0xff] %v345
        %416 = vst [vmem:[#allocation2 + $0x18] sm:$0xff] %v346
        %417 = vst [vmem:[#allocation2 + $0x30] sm:$0xff] %v347
        %418 = vst [vmem:[#allocation2 + $0x48] sm:$0xff] %v348
        %419 = vst [vmem:[#allocation2 + $0x60] sm:$0xff] %v349
        %420 = vst [vmem:[#allocation2 + $0x78] sm:$0xff] %v350
        %421 = vst [vmem:[#allocation2 + $0x90] sm:$0xff] %v351
        %422 = vst [vmem:[#allocation2 + $0xa8] sm:$0xff] %v352
        %423 = vst [vmem:[#allocation2 + $0xc0] sm:$0xff] %v353
        %424 = vst [vmem:[#allocation2 + $0xd8] sm:$0xff] %v354
        %425 = vst [vmem:[#allocation2 + $0xf0] sm:$0xff] %v355
        %426 = vst [vmem:[#allocation2 + $0x108] sm:$0xff] %v356
        %427 = vst [vmem:[#allocation2 + $0x120] sm:$0xff] %v357
        %428 = vst [vmem:[#allocation2 + $0x138] sm:$0xff] %v358
        %429 = vst [vmem:[#allocation2 + $0x150] sm:$0xff] %v359
        %430 = vst [vmem:[#allocation2 + $0x168] sm:$0xff] %v360
        %431 = vst [vmem:[#allocation2 + $0x180] sm:$0xff] %v361
        %432 = vst [vmem:[#allocation2 + $0x198] sm:$0xff] %v362
        %433 = vst [vmem:[#allocation2 + $0x1b0] sm:$0xff] %v363
        %434 = vst [vmem:[#allocation2 + $0x1c8] sm:$0xff] %v364
        %435 = vst [vmem:[#allocation2 + $0x1e0] sm:$0xff] %v365
        %436 = vst [vmem:[#allocation2 + $0x1f8] sm:$0xff] %v366
        %437 = vst [vmem:[#allocation2 + $0x210] sm:$0xff] %v367
        %438 = vst [vmem:[#allocation2 + $0x228] sm:$0xff] %v368
        %439 = vst [vmem:[#allocation2 + $0x240] sm:$0xff] %v369
        %440 = vst [vmem:[#allocation2 + $0x258] sm:$0xff] %v370
        %441 = vst [vmem:[#allocation2 + $0x270] sm:$0xff] %v371
        %442 = vst [vmem:[#allocation2 + $0x288] sm:$0xff] %v372
        %443 = vst [vmem:[#allocation2 + $0x2a0] sm:$0xff] %v373
        %444 = vst [vmem:[#allocation2 + $0x2b8] sm:$0xff] %v374
        %445 = vst [vmem:[#allocation2 + $0x2d0] sm:$0xff] %v375
        %446 = vst [vmem:[#allocation2 + $0x2e8] sm:$0xff] %v376
        %447 = vst [vmem:[#allocation2 + $0x300] sm:$0xff] %v377
        %448 = vst [vmem:[#allocation2 + $0x318] sm:$0xff] %v378
        %449 = vst [vmem:[#allocation2 + $0x330] sm:$0xff] %v379
        %450 = vst [vmem:[#allocation2 + $0x348] sm:$0xff] %v380
        %451 = vst [vmem:[#allocation2 + $0x360] sm:$0xff] %v381
        %452 = vst [vmem:[#allocation2 + $0x378] sm:$0xff] %v382
        %453 = vst [vmem:[#allocation2 + $0x390] sm:$0xff] %v383
        %454 = vst [vmem:[#allocation2 + $0x3a8] sm:$0xff] %v384
        %455 = vst [vmem:[#allocation2 + $0x3c0] sm:$0xff] %v385
        %456 = vst [vmem:[#allocation2 + $0x3d8] sm:$0xff] %v386
        %457 = vst [vmem:[#allocation2 + $0x3f0] sm:$0xff] %v387
        %458 = vst [vmem:[#allocation2 + $0x408] sm:$0xff] %v388
        %459 = vst [vmem:[#allocation2 + $0x420] sm:$0xff] %v389
        %460 = vst [vmem:[#allocation2 + $0x438] sm:$0xff] %v390
        %461 = vst [vmem:[#allocation2 + $0x450] sm:$0xff] %v391
        %462 = vst [vmem:[#allocation2 + $0x468] sm:$0xff] %v392
        %463 = vst [vmem:[#allocation2 + $0x480] sm:$0xff] %v393
        %464 = vst [vmem:[#allocation2 + $0x498] sm:$0xff] %v394
        %465 = vst [vmem:[#allocation2 + $0x4b0] sm:$0xff] %v395
        %466 = vst [vmem:[#allocation2 + $0x4c8] sm:$0xff] %v396
        %467 = vst [vmem:[#allocation2 + $0x4e0] sm:$0xff] %v397
        %468 = vst [vmem:[#allocation2 + $0x4f8] sm:$0xff] %v398
        %469 = vst [vmem:[#allocation2 + $0x510] sm:$0xff] %v399
        %470 = vst [vmem:[#allocation2 + $0x528] sm:$0xff] %v400
        %471 = vst [vmem:[#allocation2 + $0x540] sm:$0xff] %v401
        %472 = vst [vmem:[#allocation2 + $0x558] sm:$0xff] %v402
        %473 = vst [vmem:[#allocation2 + $0x570] sm:$0xff] %v403
        %474 = vst [vmem:[#allocation2 + $0x588] sm:$0xff] %v404
        %475 = vst [vmem:[#allocation2 + $0x5a0] sm:$0xff] %v405
        %476 = vst [vmem:[#allocation2 + $0x5b8] sm:$0xff] %v406
        %477 = vst [vmem:[#allocation2 + $0x5d0] sm:$0xff] %v407
        %478 = vst [vmem:[#allocation2 + $0x5e8] sm:$0xff] %v408
        %479 = vst [vmem:[#allocation2 + $0x600] sm:$0xff] %v409
        %480 = vst [vmem:[#allocation2 + $0x618] sm:$0xff] %v410
        %481 = vst [vmem:[#allocation2 + $0x630] sm:$0xff] %v411
        %482 = vst [vmem:[#allocation2 + $0x648] sm:$0xff] %v412
        %483 = vst [vmem:[#allocation2 + $0x660] sm:$0xff] %v413
        %484 = vst [vmem:[#allocation2 + $0x678] sm:$0xff] %v414
        %s485 = scalar_lea.vmem %s301, %s342 [#allocation6]
        %v486 = vld [vmem:[%s485] sm:$0xff]
        %v487 = vld [vmem:[%s485 + $0x8] sm:$0xff]
        %v488 = vld [vmem:[%s485 + $0x10] sm:$0xff]
        %v489 = vld [vmem:[%s485 + $0x18] sm:$0xff]
        %v490 = vld [vmem:[%s485 + $0x20] sm:$0xff]
        %v491 = vld [vmem:[%s485 + $0x28] sm:$0xff]
        %v492 = vld [vmem:[%s485 + $0x30] sm:$0xff]
        %v493 = vld [vmem:[%s485 + $0x38] sm:$0xff]
        %v494 = vld [vmem:[%s485 + $0x40] sm:$0xff]
        %v495 = vld [vmem:[%s485 + $0x48] sm:$0xff]
        %v496 = vld [vmem:[%s485 + $0x50] sm:$0xff]
        %v497 = vld [vmem:[%s485 + $0x58] sm:$0xff]
        %v498 = vld [vmem:[%s485 + $0x60] sm:$0xff]
        %v499 = vld [vmem:[%s485 + $0x68] sm:$0xff]
        %v500 = vld [vmem:[%s485 + $0x70] sm:$0xff]
        %v501 = vld [vmem:[%s485 + $0x78] sm:$0xff]
        %v502 = vld [vmem:[%s485 + $0x80] sm:$0xff]
        %v503 = vld [vmem:[%s485 + $0x88] sm:$0xff]
        %v504 = vld [vmem:[%s485 + $0x90] sm:$0xff]
        %v505 = vld [vmem:[%s485 + $0x98] sm:$0xff]
        %v506 = vld [vmem:[%s485 + $0xa0] sm:$0xff]
        %v507 = vld [vmem:[%s485 + $0xa8] sm:$0xff]
        %v508 = vld [vmem:[%s485 + $0xb0] sm:$0xff]
        %v509 = vld [vmem:[%s485 + $0xb8] sm:$0xff]
        %v510 = vld [vmem:[%s485 + $0xc0] sm:$0xff]
        %v511 = vld [vmem:[%s485 + $0xc8] sm:$0xff]
        %v512 = vld [vmem:[%s485 + $0xd0] sm:$0xff]
        %v513 = vld [vmem:[%s485 + $0xd8] sm:$0xff]
        %v514 = vld [vmem:[%s485 + $0xe0] sm:$0xff]
        %v515 = vld [vmem:[%s485 + $0xe8] sm:$0xff]
        %v516 = vld [vmem:[%s485 + $0xf0] sm:$0xff]
        %v517 = vld [vmem:[%s485 + $0xf8] sm:$0xff]
        %v518 = vld [vmem:[%s485 + $0x100] sm:$0xff]
        %v519 = vld [vmem:[%s485 + $0x108] sm:$0xff]
        %v520 = vld [vmem:[%s485 + $0x110] sm:$0xff]
        %v521 = vld [vmem:[%s485 + $0x118] sm:$0xff]
        %v522 = vld [vmem:[%s485 + $0x120] sm:$0xff]
        %v523 = vld [vmem:[%s485 + $0x128] sm:$0xff]
        %v524 = vld [vmem:[%s485 + $0x130] sm:$0xff]
        %v525 = vld [vmem:[%s485 + $0x138] sm:$0xff]
        %v526 = vld [vmem:[%s485 + $0x140] sm:$0xff]
        %v527 = vld [vmem:[%s485 + $0x148] sm:$0xff]
        %v528 = vld [vmem:[%s485 + $0x150] sm:$0xff]
        %v529 = vld [vmem:[%s485 + $0x158] sm:$0xff]
        %v530 = vld [vmem:[%s485 + $0x160] sm:$0xff]
        %v531 = vld [vmem:[%s485 + $0x168] sm:$0xff]
        %v532 = vld [vmem:[%s485 + $0x170] sm:$0xff]
        %v533 = vld [vmem:[%s485 + $0x178] sm:$0xff]
        %v534 = vld [vmem:[%s485 + $0x180] sm:$0xff]
        %v535 = vld [vmem:[%s485 + $0x188] sm:$0xff]
        %v536 = vld [vmem:[%s485 + $0x190] sm:$0xff]
        %v537 = vld [vmem:[%s485 + $0x198] sm:$0xff]
        %v538 = vld [vmem:[%s485 + $0x1a0] sm:$0xff]
        %v539 = vld [vmem:[%s485 + $0x1a8] sm:$0xff]
        %v540 = vld [vmem:[%s485 + $0x1b0] sm:$0xff]
        %v541 = vld [vmem:[%s485 + $0x1b8] sm:$0xff]
        %v542 = vld [vmem:[%s485 + $0x1c0] sm:$0xff]
        %v543 = vld [vmem:[%s485 + $0x1c8] sm:$0xff]
        %v544 = vld [vmem:[%s485 + $0x1d0] sm:$0xff]
        %v545 = vld [vmem:[%s485 + $0x1d8] sm:$0xff]
        %v546 = vld [vmem:[%s485 + $0x1e0] sm:$0xff]
        %v547 = vld [vmem:[%s485 + $0x1e8] sm:$0xff]
        %v548 = vld [vmem:[%s485 + $0x1f0] sm:$0xff]
        %v549 = vld [vmem:[%s485 + $0x1f8] sm:$0xff]
        %v550 = vld [vmem:[%s485 + $0x200] sm:$0xff]
        %v551 = vld [vmem:[%s485 + $0x208] sm:$0xff]
        %v552 = vld [vmem:[%s485 + $0x210] sm:$0xff]
        %v553 = vld [vmem:[%s485 + $0x218] sm:$0xff]
        %v554 = vld [vmem:[%s485 + $0x220] sm:$0xff]
        %v555 = vld [vmem:[%s485 + $0x228] sm:$0xff]
        %556 = vst [vmem:[#allocation2 + $0x8] sm:$0xff] %v486
        %557 = vst [vmem:[#allocation2 + $0x20] sm:$0xff] %v487
        %558 = vst [vmem:[#allocation2 + $0x38] sm:$0xff] %v488
        %559 = vst [vmem:[#allocation2 + $0x50] sm:$0xff] %v489
        %560 = vst [vmem:[#allocation2 + $0x68] sm:$0xff] %v490
        %561 = vst [vmem:[#allocation2 + $0x80] sm:$0xff] %v491
        %562 = vst [vmem:[#allocation2 + $0x98] sm:$0xff] %v492
        %563 = vst [vmem:[#allocation2 + $0xb0] sm:$0xff] %v493
        %564 = vst [vmem:[#allocation2 + $0xc8] sm:$0xff] %v494
        %565 = vst [vmem:[#allocation2 + $0xe0] sm:$0xff] %v495
        %566 = vst [vmem:[#allocation2 + $0xf8] sm:$0xff] %v496
        %567 = vst [vmem:[#allocation2 + $0x110] sm:$0xff] %v497
        %568 = vst [vmem:[#allocation2 + $0x128] sm:$0xff] %v498
        %569 = vst [vmem:[#allocation2 + $0x140] sm:$0xff] %v499
        %570 = vst [vmem:[#allocation2 + $0x158] sm:$0xff] %v500
        %571 = vst [vmem:[#allocation2 + $0x170] sm:$0xff] %v501
        %572 = vst [vmem:[#allocation2 + $0x188] sm:$0xff] %v502
        %573 = vst [vmem:[#allocation2 + $0x1a0] sm:$0xff] %v503
        %574 = vst [vmem:[#allocation2 + $0x1b8] sm:$0xff] %v504
        %575 = vst [vmem:[#allocation2 + $0x1d0] sm:$0xff] %v505
        %576 = vst [vmem:[#allocation2 + $0x1e8] sm:$0xff] %v506
        %577 = vst [vmem:[#allocation2 + $0x200] sm:$0xff] %v507
        %578 = vst [vmem:[#allocation2 + $0x218] sm:$0xff] %v508
        %579 = vst [vmem:[#allocation2 + $0x230] sm:$0xff] %v509
        %580 = vst [vmem:[#allocation2 + $0x248] sm:$0xff] %v510
        %581 = vst [vmem:[#allocation2 + $0x260] sm:$0xff] %v511
        %582 = vst [vmem:[#allocation2 + $0x278] sm:$0xff] %v512
        %583 = vst [vmem:[#allocation2 + $0x290] sm:$0xff] %v513
        %584 = vst [vmem:[#allocation2 + $0x2a8] sm:$0xff] %v514
        %585 = vst [vmem:[#allocation2 + $0x2c0] sm:$0xff] %v515
        %586 = vst [vmem:[#allocation2 + $0x2d8] sm:$0xff] %v516
        %587 = vst [vmem:[#allocation2 + $0x2f0] sm:$0xff] %v517
        %588 = vst [vmem:[#allocation2 + $0x308] sm:$0xff] %v518
        %589 = vst [vmem:[#allocation2 + $0x320] sm:$0xff] %v519
        %590 = vst [vmem:[#allocation2 + $0x338] sm:$0xff] %v520
        %591 = vst [vmem:[#allocation2 + $0x350] sm:$0xff] %v521
        %592 = vst [vmem:[#allocation2 + $0x368] sm:$0xff] %v522
        %593 = vst [vmem:[#allocation2 + $0x380] sm:$0xff] %v523
        %594 = vst [vmem:[#allocation2 + $0x398] sm:$0xff] %v524
        %595 = vst [vmem:[#allocation2 + $0x3b0] sm:$0xff] %v525
        %596 = vst [vmem:[#allocation2 + $0x3c8] sm:$0xff] %v526
        %597 = vst [vmem:[#allocation2 + $0x3e0] sm:$0xff] %v527
        %598 = vst [vmem:[#allocation2 + $0x3f8] sm:$0xff] %v528
        %599 = vst [vmem:[#allocation2 + $0x410] sm:$0xff] %v529
        %600 = vst [vmem:[#allocation2 + $0x428] sm:$0xff] %v530
        %601 = vst [vmem:[#allocation2 + $0x440] sm:$0xff] %v531
        %602 = vst [vmem:[#allocation2 + $0x458] sm:$0xff] %v532
        %603 = vst [vmem:[#allocation2 + $0x470] sm:$0xff] %v533
        %604 = vst [vmem:[#allocation2 + $0x488] sm:$0xff] %v534
        %605 = vst [vmem:[#allocation2 + $0x4a0] sm:$0xff] %v535
        %606 = vst [vmem:[#allocation2 + $0x4b8] sm:$0xff] %v536
        %607 = vst [vmem:[#allocation2 + $0x4d0] sm:$0xff] %v537
        %608 = vst [vmem:[#allocation2 + $0x4e8] sm:$0xff] %v538
        %609 = vst [vmem:[#allocation2 + $0x500] sm:$0xff] %v539
        %610 = vst [vmem:[#allocation2 + $0x518] sm:$0xff] %v540
        %611 = vst [vmem:[#allocation2 + $0x530] sm:$0xff] %v541
        %612 = vst [vmem:[#allocation2 + $0x548] sm:$0xff] %v542
        %613 = vst [vmem:[#allocation2 + $0x560] sm:$0xff] %v543
        %614 = vst [vmem:[#allocation2 + $0x578] sm:$0xff] %v544
        %615 = vst [vmem:[#allocation2 + $0x590] sm:$0xff] %v545
        %616 = vst [vmem:[#allocation2 + $0x5a8] sm:$0xff] %v546
        %617 = vst [vmem:[#allocation2 + $0x5c0] sm:$0xff] %v547
        %618 = vst [vmem:[#allocation2 + $0x5d8] sm:$0xff] %v548
        %619 = vst [vmem:[#allocation2 + $0x5f0] sm:$0xff] %v549
        %620 = vst [vmem:[#allocation2 + $0x608] sm:$0xff] %v550
        %621 = vst [vmem:[#allocation2 + $0x620] sm:$0xff] %v551
        %622 = vst [vmem:[#allocation2 + $0x638] sm:$0xff] %v552
        %623 = vst [vmem:[#allocation2 + $0x650] sm:$0xff] %v553
        %624 = vst [vmem:[#allocation2 + $0x668] sm:$0xff] %v554
        %625 = vst [vmem:[#allocation2 + $0x680] sm:$0xff] %v555
        %s626 = sadd.s32 %s342, 1
        %s627 = scalar_lea.vmem %s301, %s626 [#allocation6]
        %v628 = vld [vmem:[%s627] sm:$0xff]
        %v629 = vld [vmem:[%s627 + $0x8] sm:$0xff]
        %v630 = vld [vmem:[%s627 + $0x10] sm:$0xff]
        %v631 = vld [vmem:[%s627 + $0x18] sm:$0xff]
        %v632 = vld [vmem:[%s627 + $0x20] sm:$0xff]
        %v633 = vld [vmem:[%s627 + $0x28] sm:$0xff]
        %v634 = vld [vmem:[%s627 + $0x30] sm:$0xff]
        %v635 = vld [vmem:[%s627 + $0x38] sm:$0xff]
        %v636 = vld [vmem:[%s627 + $0x40] sm:$0xff]
        %v637 = vld [vmem:[%s627 + $0x48] sm:$0xff]
        %v638 = vld [vmem:[%s627 + $0x50] sm:$0xff]
        %v639 = vld [vmem:[%s627 + $0x58] sm:$0xff]
        %v640 = vld [vmem:[%s627 + $0x60] sm:$0xff]
        %v641 = vld [vmem:[%s627 + $0x68] sm:$0xff]
        %v642 = vld [vmem:[%s627 + $0x70] sm:$0xff]
        %v643 = vld [vmem:[%s627 + $0x78] sm:$0xff]
        %v644 = vld [vmem:[%s627 + $0x80] sm:$0xff]
        %v645 = vld [vmem:[%s627 + $0x88] sm:$0xff]
        %v646 = vld [vmem:[%s627 + $0x90] sm:$0xff]
        %v647 = vld [vmem:[%s627 + $0x98] sm:$0xff]
        %v648 = vld [vmem:[%s627 + $0xa0] sm:$0xff]
        %v649 = vld [vmem:[%s627 + $0xa8] sm:$0xff]
        %v650 = vld [vmem:[%s627 + $0xb0] sm:$0xff]
        %v651 = vld [vmem:[%s627 + $0xb8] sm:$0xff]
        %v652 = vld [vmem:[%s627 + $0xc0] sm:$0xff]
        %v653 = vld [vmem:[%s627 + $0xc8] sm:$0xff]
        %v654 = vld [vmem:[%s627 + $0xd0] sm:$0xff]
        %v655 = vld [vmem:[%s627 + $0xd8] sm:$0xff]
        %v656 = vld [vmem:[%s627 + $0xe0] sm:$0xff]
        %v657 = vld [vmem:[%s627 + $0xe8] sm:$0xff]
        %v658 = vld [vmem:[%s627 + $0xf0] sm:$0xff]
        %v659 = vld [vmem:[%s627 + $0xf8] sm:$0xff]
        %v660 = vld [vmem:[%s627 + $0x100] sm:$0xff]
        %v661 = vld [vmem:[%s627 + $0x108] sm:$0xff]
        %v662 = vld [vmem:[%s627 + $0x110] sm:$0xff]
        %v663 = vld [vmem:[%s627 + $0x118] sm:$0xff]
        %v664 = vld [vmem:[%s627 + $0x120] sm:$0xff]
        %v665 = vld [vmem:[%s627 + $0x128] sm:$0xff]
        %v666 = vld [vmem:[%s627 + $0x130] sm:$0xff]
        %v667 = vld [vmem:[%s627 + $0x138] sm:$0xff]
        %v668 = vld [vmem:[%s627 + $0x140] sm:$0xff]
        %v669 = vld [vmem:[%s627 + $0x148] sm:$0xff]
        %v670 = vld [vmem:[%s627 + $0x150] sm:$0xff]
        %v671 = vld [vmem:[%s627 + $0x158] sm:$0xff]
        %v672 = vld [vmem:[%s627 + $0x160] sm:$0xff]
        %v673 = vld [vmem:[%s627 + $0x168] sm:$0xff]
        %v674 = vld [vmem:[%s627 + $0x170] sm:$0xff]
        %v675 = vld [vmem:[%s627 + $0x178] sm:$0xff]
        %v676 = vld [vmem:[%s627 + $0x180] sm:$0xff]
        %v677 = vld [vmem:[%s627 + $0x188] sm:$0xff]
        %v678 = vld [vmem:[%s627 + $0x190] sm:$0xff]
        %v679 = vld [vmem:[%s627 + $0x198] sm:$0xff]
        %v680 = vld [vmem:[%s627 + $0x1a0] sm:$0xff]
        %v681 = vld [vmem:[%s627 + $0x1a8] sm:$0xff]
        %v682 = vld [vmem:[%s627 + $0x1b0] sm:$0xff]
        %v683 = vld [vmem:[%s627 + $0x1b8] sm:$0xff]
        %v684 = vld [vmem:[%s627 + $0x1c0] sm:$0xff]
        %v685 = vld [vmem:[%s627 + $0x1c8] sm:$0xff]
        %v686 = vld [vmem:[%s627 + $0x1d0] sm:$0xff]
        %v687 = vld [vmem:[%s627 + $0x1d8] sm:$0xff]
        %v688 = vld [vmem:[%s627 + $0x1e0] sm:$0xff]
        %v689 = vld [vmem:[%s627 + $0x1e8] sm:$0xff]
        %v690 = vld [vmem:[%s627 + $0x1f0] sm:$0xff]
        %v691 = vld [vmem:[%s627 + $0x1f8] sm:$0xff]
        %v692 = vld [vmem:[%s627 + $0x200] sm:$0xff]
        %v693 = vld [vmem:[%s627 + $0x208] sm:$0xff]
        %v694 = vld [vmem:[%s627 + $0x210] sm:$0xff]
        %v695 = vld [vmem:[%s627 + $0x218] sm:$0xff]
        %v696 = vld [vmem:[%s627 + $0x220] sm:$0xff]
        %v697 = vld [vmem:[%s627 + $0x228] sm:$0xff]
        %698 = vst [vmem:[#allocation2 + $0x10] sm:$0xff] %v628
        %699 = vst [vmem:[#allocation2 + $0x28] sm:$0xff] %v629
        %700 = vst [vmem:[#allocation2 + $0x40] sm:$0xff] %v630
        %701 = vst [vmem:[#allocation2 + $0x58] sm:$0xff] %v631
        %702 = vst [vmem:[#allocation2 + $0x70] sm:$0xff] %v632
        %703 = vst [vmem:[#allocation2 + $0x88] sm:$0xff] %v633
        %704 = vst [vmem:[#allocation2 + $0xa0] sm:$0xff] %v634
        %705 = vst [vmem:[#allocation2 + $0xb8] sm:$0xff] %v635
        %706 = vst [vmem:[#allocation2 + $0xd0] sm:$0xff] %v636
        %707 = vst [vmem:[#allocation2 + $0xe8] sm:$0xff] %v637
        %708 = vst [vmem:[#allocation2 + $0x100] sm:$0xff] %v638
        %709 = vst [vmem:[#allocation2 + $0x118] sm:$0xff] %v639
        %710 = vst [vmem:[#allocation2 + $0x130] sm:$0xff] %v640
        %711 = vst [vmem:[#allocation2 + $0x148] sm:$0xff] %v641
        %712 = vst [vmem:[#allocation2 + $0x160] sm:$0xff] %v642
        %713 = vst [vmem:[#allocation2 + $0x178] sm:$0xff] %v643
        %714 = vst [vmem:[#allocation2 + $0x190] sm:$0xff] %v644
        %715 = vst [vmem:[#allocation2 + $0x1a8] sm:$0xff] %v645
        %716 = vst [vmem:[#allocation2 + $0x1c0] sm:$0xff] %v646
        %717 = vst [vmem:[#allocation2 + $0x1d8] sm:$0xff] %v647
        %718 = vst [vmem:[#allocation2 + $0x1f0] sm:$0xff] %v648
        %719 = vst [vmem:[#allocation2 + $0x208] sm:$0xff] %v649
        %720 = vst [vmem:[#allocation2 + $0x220] sm:$0xff] %v650
        %721 = vst [vmem:[#allocation2 + $0x238] sm:$0xff] %v651
        %722 = vst [vmem:[#allocation2 + $0x250] sm:$0xff] %v652
        %723 = vst [vmem:[#allocation2 + $0x268] sm:$0xff] %v653
        %724 = vst [vmem:[#allocation2 + $0x280] sm:$0xff] %v654
        %725 = vst [vmem:[#allocation2 + $0x298] sm:$0xff] %v655
        %726 = vst [vmem:[#allocation2 + $0x2b0] sm:$0xff] %v656
        %727 = vst [vmem:[#allocation2 + $0x2c8] sm:$0xff] %v657
        %728 = vst [vmem:[#allocation2 + $0x2e0] sm:$0xff] %v658
        %729 = vst [vmem:[#allocation2 + $0x2f8] sm:$0xff] %v659
        %730 = vst [vmem:[#allocation2 + $0x310] sm:$0xff] %v660
        %731 = vst [vmem:[#allocation2 + $0x328] sm:$0xff] %v661
        %732 = vst [vmem:[#allocation2 + $0x340] sm:$0xff] %v662
        %733 = vst [vmem:[#allocation2 + $0x358] sm:$0xff] %v663
        %734 = vst [vmem:[#allocation2 + $0x370] sm:$0xff] %v664
        %735 = vst [vmem:[#allocation2 + $0x388] sm:$0xff] %v665
        %736 = vst [vmem:[#allocation2 + $0x3a0] sm:$0xff] %v666
        %737 = vst [vmem:[#allocation2 + $0x3b8] sm:$0xff] %v667
        %738 = vst [vmem:[#allocation2 + $0x3d0] sm:$0xff] %v668
        %739 = vst [vmem:[#allocation2 + $0x3e8] sm:$0xff] %v669
        %740 = vst [vmem:[#allocation2 + $0x400] sm:$0xff] %v670
        %741 = vst [vmem:[#allocation2 + $0x418] sm:$0xff] %v671
        %742 = vst [vmem:[#allocation2 + $0x430] sm:$0xff] %v672
        %743 = vst [vmem:[#allocation2 + $0x448] sm:$0xff] %v673
        %744 = vst [vmem:[#allocation2 + $0x460] sm:$0xff] %v674
        %745 = vst [vmem:[#allocation2 + $0x478] sm:$0xff] %v675
        %746 = vst [vmem:[#allocation2 + $0x490] sm:$0xff] %v676
        %747 = vst [vmem:[#allocation2 + $0x4a8] sm:$0xff] %v677
        %748 = vst [vmem:[#allocation2 + $0x4c0] sm:$0xff] %v678
        %749 = vst [vmem:[#allocation2 + $0x4d8] sm:$0xff] %v679
        %750 = vst [vmem:[#allocation2 + $0x4f0] sm:$0xff] %v680
        %751 = vst [vmem:[#allocation2 + $0x508] sm:$0xff] %v681
        %752 = vst [vmem:[#allocation2 + $0x520] sm:$0xff] %v682
        %753 = vst [vmem:[#allocation2 + $0x538] sm:$0xff] %v683
        %754 = vst [vmem:[#allocation2 + $0x550] sm:$0xff] %v684
        %755 = vst [vmem:[#allocation2 + $0x568] sm:$0xff] %v685
        %756 = vst [vmem:[#allocation2 + $0x580] sm:$0xff] %v686
        %757 = vst [vmem:[#allocation2 + $0x598] sm:$0xff] %v687
        %758 = vst [vmem:[#allocation2 + $0x5b0] sm:$0xff] %v688
        %759 = vst [vmem:[#allocation2 + $0x5c8] sm:$0xff] %v689
        %760 = vst [vmem:[#allocation2 + $0x5e0] sm:$0xff] %v690
        %761 = vst [vmem:[#allocation2 + $0x5f8] sm:$0xff] %v691
        %762 = vst [vmem:[#allocation2 + $0x610] sm:$0xff] %v692
        %763 = vst [vmem:[#allocation2 + $0x628] sm:$0xff] %v693
        %764 = vst [vmem:[#allocation2 + $0x640] sm:$0xff] %v694
        %765 = vst [vmem:[#allocation2 + $0x658] sm:$0xff] %v695
        %766 = vst [vmem:[#allocation2 + $0x670] sm:$0xff] %v696
        %767 = vst [vmem:[#allocation2 + $0x688] sm:$0xff] %v697
        %v768 = vld [vmem:[#allocation2 + $0x18] sm:$0xff]
        %v769 = vld [vmem:[#allocation2 + $0x20] sm:$0xff]
        %v770 = vld [vmem:[#allocation2 + $0x28] sm:$0xff]
        %v771 = vld [vmem:[#allocation2 + $0x30] sm:$0xff]
        %v772 = vld [vmem:[#allocation2 + $0x38] sm:$0xff]
        %v773 = vld [vmem:[#allocation2 + $0x40] sm:$0xff]
        %v774 = vld [vmem:[#allocation2 + $0x48] sm:$0xff]
        %v775 = vld [vmem:[#allocation2 + $0x50] sm:$0xff]
        %v776 = vld [vmem:[#allocation2 + $0x58] sm:$0xff]
        %v777 = vld [vmem:[#allocation2 + $0x60] sm:$0xff]
        %v778 = vld [vmem:[#allocation2 + $0x68] sm:$0xff]
        %v779 = vld [vmem:[#allocation2 + $0x70] sm:$0xff]
        %v780 = vld [vmem:[#allocation2 + $0x78] sm:$0xff]
        %v781 = vld [vmem:[#allocation2 + $0x80] sm:$0xff]
        %v782 = vld [vmem:[#allocation2 + $0x88] sm:$0xff]
        %v783 = vld [vmem:[#allocation2 + $0x90] sm:$0xff]
        %v784 = vld [vmem:[#allocation2 + $0x98] sm:$0xff]
        %v785 = vld [vmem:[#allocation2 + $0xa0] sm:$0xff]
        %v786 = vld [vmem:[#allocation2 + $0xa8] sm:$0xff]
        %v787 = vld [vmem:[#allocation2 + $0xb0] sm:$0xff]
        %v788 = vld [vmem:[#allocation2 + $0xb8] sm:$0xff]
        %v789 = vld [vmem:[#allocation2 + $0xc0] sm:$0xff]
        %v790 = vld [vmem:[#allocation2 + $0xc8] sm:$0xff]
        %v791 = vld [vmem:[#allocation2 + $0xd0] sm:$0xff]
        %v792 = vld [vmem:[#allocation2 + $0xd8] sm:$0xff]
        %v793 = vld [vmem:[#allocation2 + $0xe0] sm:$0xff]
        %v794 = vld [vmem:[#allocation2 + $0xe8] sm:$0xff]
        %v795 = vld [vmem:[#allocation2 + $0xf0] sm:$0xff]
        %v796 = vld [vmem:[#allocation2 + $0xf8] sm:$0xff]
        %v797 = vld [vmem:[#allocation2 + $0x100] sm:$0xff]
        %v798 = vld [vmem:[#allocation2 + $0x108] sm:$0xff]
        %v799 = vld [vmem:[#allocation2 + $0x110] sm:$0xff]
        %v800 = vld [vmem:[#allocation2 + $0x118] sm:$0xff]
        %v801 = vld [vmem:[#allocation2 + $0x120] sm:$0xff]
        %v802 = vld [vmem:[#allocation2 + $0x128] sm:$0xff]
        %v803 = vld [vmem:[#allocation2 + $0x130] sm:$0xff]
        %v804 = vld [vmem:[#allocation2 + $0x138] sm:$0xff]
        %v805 = vld [vmem:[#allocation2 + $0x140] sm:$0xff]
        %v806 = vld [vmem:[#allocation2 + $0x148] sm:$0xff]
        %v807 = vld [vmem:[#allocation2 + $0x150] sm:$0xff]
        %v808 = vld [vmem:[#allocation2 + $0x158] sm:$0xff]
        %v809 = vld [vmem:[#allocation2 + $0x160] sm:$0xff]
        %v810 = vld [vmem:[#allocation2 + $0x168] sm:$0xff]
        %v811 = vld [vmem:[#allocation2 + $0x170] sm:$0xff]
        %v812 = vld [vmem:[#allocation2 + $0x178] sm:$0xff]
        %v813 = vld [vmem:[#allocation2 + $0x180] sm:$0xff]
        %v814 = vld [vmem:[#allocation2 + $0x188] sm:$0xff]
        %v815 = vld [vmem:[#allocation2 + $0x190] sm:$0xff]
        %v816 = vld [vmem:[#allocation2 + $0x198] sm:$0xff]
        %v817 = vld [vmem:[#allocation2 + $0x1a0] sm:$0xff]
        %v818 = vld [vmem:[#allocation2 + $0x1a8] sm:$0xff]
        %v819 = vld [vmem:[#allocation2 + $0x1b0] sm:$0xff]
        %v820 = vld [vmem:[#allocation2 + $0x1b8] sm:$0xff]
        %v821 = vld [vmem:[#allocation2 + $0x1c0] sm:$0xff]
        %v822 = vld [vmem:[#allocation2 + $0x1c8] sm:$0xff]
        %v823 = vld [vmem:[#allocation2 + $0x1d0] sm:$0xff]
        %v824 = vld [vmem:[#allocation2 + $0x1d8] sm:$0xff]
        %v825 = vld [vmem:[#allocation2 + $0x1e0] sm:$0xff]
        %v826 = vld [vmem:[#allocation2 + $0x1e8] sm:$0xff]
        %v827 = vld [vmem:[#allocation2 + $0x1f0] sm:$0xff]
        %v828 = vld [vmem:[#allocation2 + $0x1f8] sm:$0xff]
        %v829 = vld [vmem:[#allocation2 + $0x200] sm:$0xff]
        %v830 = vld [vmem:[#allocation2 + $0x208] sm:$0xff]
        %v831 = vld [vmem:[#allocation2 + $0x210] sm:$0xff]
        %v832 = vld [vmem:[#allocation2 + $0x218] sm:$0xff]
        %v833 = vld [vmem:[#allocation2 + $0x220] sm:$0xff]
        %v834 = vld [vmem:[#allocation2 + $0x228] sm:$0xff]
        %v835 = vld [vmem:[#allocation2 + $0x230] sm:$0xff]
        %v836 = vld [vmem:[#allocation2 + $0x238] sm:$0xff]
        %v837 = vld [vmem:[#allocation2 + $0x240] sm:$0xff]
        %v838 = vld [vmem:[#allocation2 + $0x248] sm:$0xff]
        %v839 = vld [vmem:[#allocation2 + $0x250] sm:$0xff]
        %v840 = vld [vmem:[#allocation2 + $0x258] sm:$0xff]
        %v841 = vld [vmem:[#allocation2 + $0x260] sm:$0xff]
        %v842 = vld [vmem:[#allocation2 + $0x268] sm:$0xff]
        %v843 = vld [vmem:[#allocation2 + $0x270] sm:$0xff]
        %v844 = vld [vmem:[#allocation2 + $0x278] sm:$0xff]
        %v845 = vld [vmem:[#allocation2 + $0x280] sm:$0xff]
        %v846 = vld [vmem:[#allocation2 + $0x288] sm:$0xff]
        %v847 = vld [vmem:[#allocation2 + $0x290] sm:$0xff]
        %v848 = vld [vmem:[#allocation2 + $0x298] sm:$0xff]
        %v849 = vld [vmem:[#allocation2 + $0x2a0] sm:$0xff]
        %v850 = vld [vmem:[#allocation2 + $0x2a8] sm:$0xff]
        %v851 = vld [vmem:[#allocation2 + $0x2b0] sm:$0xff]
        %v852 = vld [vmem:[#allocation2 + $0x2b8] sm:$0xff]
        %v853 = vld [vmem:[#allocation2 + $0x2c0] sm:$0xff]
        %v854 = vld [vmem:[#allocation2 + $0x2c8] sm:$0xff]
        %v855 = vld [vmem:[#allocation2 + $0x2d0] sm:$0xff]
        %v856 = vld [vmem:[#allocation2 + $0x2d8] sm:$0xff]
        %v857 = vld [vmem:[#allocation2 + $0x2e0] sm:$0xff]
        %v858 = vld [vmem:[#allocation2 + $0x2e8] sm:$0xff]
        %v859 = vld [vmem:[#allocation2 + $0x2f0] sm:$0xff]
        %v860 = vld [vmem:[#allocation2 + $0x2f8] sm:$0xff]
        %v861 = vld [vmem:[#allocation2 + $0x300] sm:$0xff]
        %v862 = vld [vmem:[#allocation2 + $0x308] sm:$0xff]
        %v863 = vld [vmem:[#allocation2 + $0x310] sm:$0xff]
        %v864 = vld [vmem:[#allocation2 + $0x318] sm:$0xff]
        %v865 = vld [vmem:[#allocation2 + $0x320] sm:$0xff]
        %v866 = vld [vmem:[#allocation2 + $0x328] sm:$0xff]
        %v867 = vld [vmem:[#allocation2 + $0x330] sm:$0xff]
        %v868 = vld [vmem:[#allocation2 + $0x338] sm:$0xff]
        %v869 = vld [vmem:[#allocation2 + $0x340] sm:$0xff]
        %v870 = vld [vmem:[#allocation2 + $0x348] sm:$0xff]
        %v871 = vld [vmem:[#allocation2 + $0x350] sm:$0xff]
        %v872 = vld [vmem:[#allocation2 + $0x358] sm:$0xff]
        %v873 = vld [vmem:[#allocation2 + $0x360] sm:$0xff]
        %v874 = vld [vmem:[#allocation2 + $0x368] sm:$0xff]
        %v875 = vld [vmem:[#allocation2 + $0x370] sm:$0xff]
        %v876 = vld [vmem:[#allocation2 + $0x378] sm:$0xff]
        %v877 = vld [vmem:[#allocation2 + $0x380] sm:$0xff]
        %v878 = vld [vmem:[#allocation2 + $0x388] sm:$0xff]
        %v879 = vld [vmem:[#allocation2 + $0x390] sm:$0xff]
        %v880 = vld [vmem:[#allocation2 + $0x398] sm:$0xff]
        %v881 = vld [vmem:[#allocation2 + $0x3a0] sm:$0xff]
        %v882 = vld [vmem:[#allocation2 + $0x3a8] sm:$0xff]
        %v883 = vld [vmem:[#allocation2 + $0x3b0] sm:$0xff]
        %v884 = vld [vmem:[#allocation2 + $0x3b8] sm:$0xff]
        %v885 = vld [vmem:[#allocation2 + $0x3c0] sm:$0xff]
        %v886 = vld [vmem:[#allocation2 + $0x3c8] sm:$0xff]
        %v887 = vld [vmem:[#allocation2 + $0x3d0] sm:$0xff]
        %v888 = vld [vmem:[#allocation2 + $0x3d8] sm:$0xff]
        %v889 = vld [vmem:[#allocation2 + $0x3e0] sm:$0xff]
        %v890 = vld [vmem:[#allocation2 + $0x3e8] sm:$0xff]
        %v891 = vld [vmem:[#allocation2 + $0x3f0] sm:$0xff]
        %v892 = vld [vmem:[#allocation2 + $0x3f8] sm:$0xff]
        %v893 = vld [vmem:[#allocation2 + $0x400] sm:$0xff]
        %v894 = vld [vmem:[#allocation2 + $0x408] sm:$0xff]
        %v895 = vld [vmem:[#allocation2 + $0x410] sm:$0xff]
        %v896 = vld [vmem:[#allocation2 + $0x418] sm:$0xff]
        %v897 = vld [vmem:[#allocation2 + $0x420] sm:$0xff]
        %v898 = vld [vmem:[#allocation2 + $0x428] sm:$0xff]
        %v899 = vld [vmem:[#allocation2 + $0x430] sm:$0xff]
        %v900 = vld [vmem:[#allocation2 + $0x438] sm:$0xff]
        %v901 = vld [vmem:[#allocation2 + $0x440] sm:$0xff]
        %v902 = vld [vmem:[#allocation2 + $0x448] sm:$0xff]
        %v903 = vld [vmem:[#allocation2 + $0x450] sm:$0xff]
        %v904 = vld [vmem:[#allocation2 + $0x458] sm:$0xff]
        %v905 = vld [vmem:[#allocation2 + $0x460] sm:$0xff]
        %v906 = vld [vmem:[#allocation2 + $0x468] sm:$0xff]
        %v907 = vld [vmem:[#allocation2 + $0x470] sm:$0xff]
        %v908 = vld [vmem:[#allocation2 + $0x478] sm:$0xff]
        %v909 = vld [vmem:[#allocation2 + $0x480] sm:$0xff]
        %v910 = vld [vmem:[#allocation2 + $0x488] sm:$0xff]
        %v911 = vld [vmem:[#allocation2 + $0x490] sm:$0xff]
        %v912 = vld [vmem:[#allocation2 + $0x498] sm:$0xff]
        %v913 = vld [vmem:[#allocation2 + $0x4a0] sm:$0xff]
        %v914 = vld [vmem:[#allocation2 + $0x4a8] sm:$0xff]
        %v915 = vld [vmem:[#allocation2 + $0x4b0] sm:$0xff]
        %v916 = vld [vmem:[#allocation2 + $0x4b8] sm:$0xff]
        %v917 = vld [vmem:[#allocation2 + $0x4c0] sm:$0xff]
        %v918 = vld [vmem:[#allocation2 + $0x4c8] sm:$0xff]
        %v919 = vld [vmem:[#allocation2 + $0x4d0] sm:$0xff]
        %v920 = vld [vmem:[#allocation2 + $0x4d8] sm:$0xff]
        %v921 = vld [vmem:[#allocation2 + $0x4e0] sm:$0xff]
        %v922 = vld [vmem:[#allocation2 + $0x4e8] sm:$0xff]
        %v923 = vld [vmem:[#allocation2 + $0x4f0] sm:$0xff]
        %v924 = vld [vmem:[#allocation2 + $0x4f8] sm:$0xff]
        %v925 = vld [vmem:[#allocation2 + $0x500] sm:$0xff]
        %v926 = vld [vmem:[#allocation2 + $0x508] sm:$0xff]
        %v927 = vld [vmem:[#allocation2 + $0x510] sm:$0xff]
        %v928 = vld [vmem:[#allocation2 + $0x518] sm:$0xff]
        %v929 = vld [vmem:[#allocation2 + $0x520] sm:$0xff]
        %v930 = vld [vmem:[#allocation2 + $0x528] sm:$0xff]
        %v931 = vld [vmem:[#allocation2 + $0x530] sm:$0xff]
        %v932 = vld [vmem:[#allocation2 + $0x538] sm:$0xff]
        %v933 = vld [vmem:[#allocation2 + $0x540] sm:$0xff]
        %v934 = vld [vmem:[#allocation2 + $0x548] sm:$0xff]
        %v935 = vld [vmem:[#allocation2 + $0x550] sm:$0xff]
        %v936 = vld [vmem:[#allocation2 + $0x558] sm:$0xff]
        %v937 = vld [vmem:[#allocation2 + $0x560] sm:$0xff]
        %v938 = vld [vmem:[#allocation2 + $0x568] sm:$0xff]
        %v939 = vld [vmem:[#allocation2 + $0x570] sm:$0xff]
        %v940 = vld [vmem:[#allocation2 + $0x578] sm:$0xff]
        %v941 = vld [vmem:[#allocation2 + $0x580] sm:$0xff]
        %v942 = vld [vmem:[#allocation2 + $0x588] sm:$0xff]
        %v943 = vld [vmem:[#allocation2 + $0x590] sm:$0xff]
        %v944 = vld [vmem:[#allocation2 + $0x598] sm:$0xff]
        %v945 = vld [vmem:[#allocation2 + $0x5a0] sm:$0xff]
        %v946 = vld [vmem:[#allocation2 + $0x5a8] sm:$0xff]
        %v947 = vld [vmem:[#allocation2 + $0x5b0] sm:$0xff]
        %v948 = vld [vmem:[#allocation2 + $0x5b8] sm:$0xff]
        %v949 = vld [vmem:[#allocation2 + $0x5c0] sm:$0xff]
        %v950 = vld [vmem:[#allocation2 + $0x5c8] sm:$0xff]
        %v951 = vld [vmem:[#allocation2 + $0x5d0] sm:$0xff]
        %v952 = vld [vmem:[#allocation2 + $0x5d8] sm:$0xff]
        %v953 = vld [vmem:[#allocation2 + $0x5e0] sm:$0xff]
        %v954 = vld [vmem:[#allocation9] sm:$0xff]
        %v955 = vld [vmem:[#allocation9 + $0x8] sm:$0xff]
        %v956 = vld [vmem:[#allocation9 + $0x10] sm:$0xff]
        %v957 = vld [vmem:[#allocation9 + $0x18] sm:$0xff]
        %v958 = vld [vmem:[#allocation9 + $0x20] sm:$0xff]
        %v959 = vld [vmem:[#allocation9 + $0x28] sm:$0xff]
        %v960 = vld [vmem:[#allocation9 + $0x30] sm:$0xff]
        %v961 = vld [vmem:[#allocation9 + $0x38] sm:$0xff]
        %v962 = vld [vmem:[#allocation9 + $0x40] sm:$0xff]
        %v963 = vld [vmem:[#allocation9 + $0x48] sm:$0xff]
        %v964 = vld [vmem:[#allocation9 + $0x50] sm:$0xff]
        %v965 = vld [vmem:[#allocation9 + $0x58] sm:$0xff]
        %v966 = vld [vmem:[#allocation9 + $0x60] sm:$0xff]
        %v967 = vld [vmem:[#allocation9 + $0x68] sm:$0xff]
        %v968 = vld [vmem:[#allocation9 + $0x70] sm:$0xff]
        %v969 = vld [vmem:[#allocation9 + $0x78] sm:$0xff]
        %v970 = vld [vmem:[#allocation9 + $0x80] sm:$0xff]
        %v971 = vld [vmem:[#allocation9 + $0x88] sm:$0xff]
        %v972 = vld [vmem:[#allocation9 + $0x90] sm:$0xff]
        %v973 = vld [vmem:[#allocation9 + $0x98] sm:$0xff]
        %v974 = vld [vmem:[#allocation9 + $0xa0] sm:$0xff]
        %v975 = vld [vmem:[#allocation9 + $0xa8] sm:$0xff]
        %v976 = vld [vmem:[#allocation9 + $0xb0] sm:$0xff]
        %v977 = vld [vmem:[#allocation9 + $0xb8] sm:$0xff]
        %v978 = vld [vmem:[#allocation9 + $0xc0] sm:$0xff]
        %v979 = vld [vmem:[#allocation9 + $0xc8] sm:$0xff]
        %v980 = vld [vmem:[#allocation9 + $0xd0] sm:$0xff]
        %v981 = vld [vmem:[#allocation9 + $0xd8] sm:$0xff]
        %v982 = vld [vmem:[#allocation9 + $0xe0] sm:$0xff]
        %v983 = vld [vmem:[#allocation9 + $0xe8] sm:$0xff]
        %v984 = vld [vmem:[#allocation9 + $0xf0] sm:$0xff]
        %v985 = vld [vmem:[#allocation9 + $0xf8] sm:$0xff]
        %v986 = vld [vmem:[#allocation9 + $0x100] sm:$0xff]
        %v987 = vld [vmem:[#allocation9 + $0x108] sm:$0xff]
        %v988 = vld [vmem:[#allocation9 + $0x110] sm:$0xff]
        %v989 = vld [vmem:[#allocation9 + $0x118] sm:$0xff]
        %v990 = vld [vmem:[#allocation9 + $0x120] sm:$0xff]
        %v991 = vld [vmem:[#allocation9 + $0x128] sm:$0xff]
        %v992 = vld [vmem:[#allocation9 + $0x130] sm:$0xff]
        %v993 = vld [vmem:[#allocation9 + $0x138] sm:$0xff]
        %v994 = vld [vmem:[#allocation9 + $0x140] sm:$0xff]
        %v995 = vld [vmem:[#allocation9 + $0x148] sm:$0xff]
        %v996 = vld [vmem:[#allocation9 + $0x150] sm:$0xff]
        %v997 = vld [vmem:[#allocation9 + $0x158] sm:$0xff]
        %v998 = vld [vmem:[#allocation9 + $0x160] sm:$0xff]
        %v999 = vld [vmem:[#allocation9 + $0x168] sm:$0xff]
        %v1000 = vld [vmem:[#allocation9 + $0x170] sm:$0xff]
        %v1001 = vld [vmem:[#allocation9 + $0x178] sm:$0xff]
        %1002 = vmatprep.subr.mxu0 0.0
        %1003 = vmatpush1.msra.mxu0 %v954
        %1004 = vmatprep.subr.mxu0 0.0
        %1005 = vmatpush1.msra.mxu0 %v955
        %1006 = vmatprep.subr.mxu0 0.0
        %1007 = vmatpush1.msra.mxu0 %v956
        %1008 = vmatprep.subr.mxu0 0.0
        %1009 = vmatpush1.msra.mxu0 %v957
        %1010 = vmatprep.subr.mxu0 0.0
        %1011 = vmatpush1.msra.mxu0 %v958
        %1012 = vmatprep.subr.mxu0 0.0
        %1013 = vmatpush1.msra.mxu0 %v959
        %1014 = vmatprep.subr.mxu0 0.0
        %1015 = vmatpush1.msra.mxu0 %v960
        %1016 = vmatprep.subr.mxu0 0.0
        %1017 = vmatpush1.msra.mxu0 %v961
        %1018 = vmatprep.subr.mxu0 0.0
        %1019 = vmatpush1.msra.mxu0 %v962
        %1020 = vmatprep.subr.mxu0 0.0
        %1021 = vmatpush1.msra.mxu0 %v963
        %1022 = vmatprep.subr.mxu0 0.0
        %1023 = vmatpush1.msra.mxu0 %v964
        %1024 = vmatprep.subr.mxu0 0.0
        %1025 = vmatpush1.msra.mxu0 %v965
        %1026 = vmatprep.subr.mxu0 0.0
        %1027 = vmatpush1.msra.mxu0 %v966
        %1028 = vmatprep.subr.mxu0 0.0
        %1029 = vmatpush1.msra.mxu0 %v967
        %1030 = vmatprep.subr.mxu0 0.0
        %1031 = vmatpush1.msra.mxu0 %v968
        %1032 = vmatprep.subr.mxu0 0.0
        %1033 = vmatpush1.msra.mxu0 %v969
        %1034 = vmatprep.subr.mxu0 0.0
        %1035 = vmatpush1.msra.mxu0 %v970
        %1036 = vmatprep.subr.mxu0 0.0
        %1037 = vmatpush1.msra.mxu0 %v971
        %1038 = vmatprep.subr.mxu0 0.0
        %1039 = vmatpush1.msra.mxu0 %v972
        %1040 = vmatprep.subr.mxu0 0.0
        %1041 = vmatpush1.msra.mxu0 %v973
        %1042 = vmatprep.subr.mxu0 0.0
        %1043 = vmatpush1.msra.mxu0 %v974
        %1044 = vmatprep.subr.mxu0 0.0
        %1045 = vmatpush1.msra.mxu0 %v975
        %1046 = vmatprep.subr.mxu0 0.0
        %1047 = vmatpush1.msra.mxu0 %v976
        %1048 = vmatprep.subr.mxu0 0.0
        %1049 = vmatpush1.msra.mxu0 %v977
        %1050 = vmatprep.subr.mxu0 0.0
        %1051 = vmatpush1.msra.mxu0 %v978
        %1052 = vmatprep.subr.mxu0 0.0
        %1053 = vmatpush1.msra.mxu0 %v979
        %1054 = vmatprep.subr.mxu0 0.0
        %1055 = vmatpush1.msra.mxu0 %v980
        %1056 = vmatprep.subr.mxu0 0.0
        %1057 = vmatpush1.msra.mxu0 %v981
        %1058 = vmatprep.subr.mxu0 0.0
        %1059 = vmatpush1.msra.mxu0 %v982
        %1060 = vmatprep.subr.mxu0 0.0
        %1061 = vmatpush1.msra.mxu0 %v983
        %1062 = vmatprep.subr.mxu0 0.0
        %1063 = vmatpush1.msra.mxu0 %v984
        %1064 = vmatprep.subr.mxu0 0.0
        %1065 = vmatpush1.msra.mxu0 %v985
        %1066 = vmatprep.mubr.f32.mxu0 %v769
        %1067 = vmatmul.mubr.f32.gmra.mrb[0].mxu0 %v768
        %v1068 = vpop.f32.mrb[0].mxu0
        %v1069 = vadd.f32 0.0, %v1068
        %v1070 = vpop.f32.mrb[0].mxu0
        %1071 = vmatprep.mubr.f32.mxu0 %v772
        %1072 = vmatmul.mubr.f32.gmra.mrb[0].mxu0 %v771
        %v1073 = vpop.f32.mrb[0].mxu0
        %v1074 = vadd.f32 0.0, %v1073
        %v1075 = vpop.f32.mrb[0].mxu0
        %1076 = vmatprep.mubr.f32.mxu0 %v775
        %1077 = vmatmul.mubr.f32.gmra.mrb[0].mxu0 %v774
        %v1078 = vpop.f32.mrb[0].mxu0
        %v1079 = vadd.f32 0.0, %v1078
        %v1080 = vpop.f32.mrb[0].mxu0
        %1081 = vmatprep.mubr.f32.mxu0 %v778
        %1082 = vmatmul.mubr.f32.gmra.mrb[0].mxu0 %v777
        %v1083 = vpop.f32.mrb[0].mxu0
        %v1084 = vadd.f32 0.0, %v1083
        %v1085 = vpop.f32.mrb[0].mxu0
        %1086 = vmatprep.mubr.f32.mxu0 %v781
        %1087 = vmatmul.mubr.f32.gmra.mrb[0].mxu0 %v780
        %v1088 = vpop.f32.mrb[0].mxu0
        %v1089 = vadd.f32 0.0, %v1088
        %v1090 = vpop.f32.mrb[0].mxu0
        %1091 = vmatprep.mubr.f32.mxu0 %v784
        %1092 = vmatmul.mubr.f32.gmra.mrb[0].mxu0 %v783
        %v1093 = vpop.f32.mrb[0].mxu0
        %v1094 = vadd.f32 0.0, %v1093
        %v1095 = vpop.f32.mrb[0].mxu0
        %1096 = vmatprep.mubr.f32.mxu0 %v787
        %1097 = vmatmul.mubr.f32.gmra.mrb[0].mxu0 %v786
        %v1098 = vpop.f32.mrb[0].mxu0
        %v1099 = vadd.f32 0.0, %v1098
        %v1100 = vpop.f32.mrb[0].mxu0
        %1101 = vmatprep.mubr.f32.mxu0 %v790
        %1102 = vmatmul.mubr.f32.gmra.mrb[0].mxu0 %v789
        %v1103 = vpop.f32.mrb[0].mxu0
        %v1104 = vadd.f32 0.0, %v1103
        %v1105 = vpop.f32.mrb[0].mxu0
        %1106 = vmatprep.mubr.f32.mxu0 %v793
        %1107 = vmatmul.mubr.f32.gmra.mrb[0].mxu0 %v792
        %v1108 = vpop.f32.mrb[0].mxu0
        %v1109 = vadd.f32 0.0, %v1108
        %v1110 = vpop.f32.mrb[0].mxu0
        %1111 = vmatprep.mubr.f32.mxu0 %v796
        %1112 = vmatmul.mubr.f32.gmra.mrb[0].mxu0 %v795
        %v1113 = vpop.f32.mrb[0].mxu0
        %v1114 = vadd.f32 0.0, %v1113
        %v1115 = vpop.f32.mrb[0].mxu0
        %1116 = vmatprep.mubr.f32.mxu0 %v799
        %1117 = vmatmul.mubr.f32.gmra.mrb[0].mxu0 %v798
        %v1118 = vpop.f32.mrb[0].mxu0
        %v1119 = vadd.f32 0.0, %v1118
        %v1120 = vpop.f32.mrb[0].mxu0
        %1121 = vmatprep.mubr.f32.mxu0 %v802
        %1122 = vmatmul.mubr.f32.gmra.mrb[0].mxu0 %v801
        %v1123 = vpop.f32.mrb[0].mxu0
        %v1124 = vadd.f32 0.0, %v1123
        %v1125 = vpop.f32.mrb[0].mxu0
        %1126 = vmatprep.mubr.f32.mxu0 %v805
        %1127 = vmatmul.mubr.f32.gmra.mrb[0].mxu0 %v804
        %v1128 = vpop.f32.mrb[0].mxu0
        %v1129 = vadd.f32 0.0, %v1128
        %v1130 = vpop.f32.mrb[0].mxu0
        %1131 = vmatprep.mubr.f32.mxu0 %v808
        %1132 = vmatmul.mubr.f32.gmra.mrb[0].mxu0 %v807
        %v1133 = vpop.f32.mrb[0].mxu0
        %v1134 = vadd.f32 0.0, %v1133
        %v1135 = vpop.f32.mrb[0].mxu0
        %1136 = vmatprep.mubr.f32.mxu0 %v811
        %1137 = vmatmul.mubr.f32.gmra.mrb[0].mxu0 %v810
        %v1138 = vpop.f32.mrb[0].mxu0
        %v1139 = vadd.f32 0.0, %v1138
        %v1140 = vpop.f32.mrb[0].mxu0
        %1141 = vmatprep.mubr.f32.mxu0 %v814
        %1142 = vmatmul.mubr.f32.gmra.mrb[0].mxu0 %v813
        %v1143 = vpop.f32.mrb[0].mxu0
        %v1144 = vadd.f32 0.0, %v1143
        %v1145 = vpop.f32.mrb[0].mxu0
        %1146 = vmatprep.mubr.f32.mxu0 %v817
        %1147 = vmatmul.mubr.f32.gmra.mrb[0].mxu0 %v816
        %v1148 = vpop.f32.mrb[0].mxu0
        %v1149 = vadd.f32 0.0, %v1148
        %v1150 = vpop.f32.mrb[0].mxu0
        %1151 = vmatprep.mubr.f32.mxu0 %v820
        %1152 = vmatmul.mubr.f32.gmra.mrb[0].mxu0 %v819
        %v1153 = vpop.f32.mrb[0].mxu0
        %v1154 = vadd.f32 0.0, %v1153
        %v1155 = vpop.f32.mrb[0].mxu0
        %1156 = vmatprep.mubr.f32.mxu0 %v823
        %1157 = vmatmul.mubr.f32.gmra.mrb[0].mxu0 %v822
        %v1158 = vpop.f32.mrb[0].mxu0
        %v1159 = vadd.f32 0.0, %v1158
        %v1160 = vpop.f32.mrb[0].mxu0
        %1161 = vmatprep.mubr.f32.mxu0 %v826
        %1162 = vmatmul.mubr.f32.gmra.mrb[0].mxu0 %v825
        %v1163 = vpop.f32.mrb[0].mxu0
        %v1164 = vadd.f32 0.0, %v1163
        %v1165 = vpop.f32.mrb[0].mxu0
        %1166 = vmatprep.mubr.f32.mxu0 %v829
        %1167 = vmatmul.mubr.f32.gmra.mrb[0].mxu0 %v828
        %v1168 = vpop.f32.mrb[0].mxu0
        %v1169 = vadd.f32 0.0, %v1168
        %v1170 = vpop.f32.mrb[0].mxu0
        %1171 = vmatprep.mubr.f32.mxu0 %v832
        %1172 = vmatmul.mubr.f32.gmra.mrb[0].mxu0 %v831
        %v1173 = vpop.f32.mrb[0].mxu0
        %v1174 = vadd.f32 0.0, %v1173
        %v1175 = vpop.f32.mrb[0].mxu0
        %1176 = vmatprep.mubr.f32.mxu0 %v835
        %1177 = vmatmul.mubr.f32.gmra.mrb[0].mxu0 %v834
        %v1178 = vpop.f32.mrb[0].mxu0
        %v1179 = vadd.f32 0.0, %v1178
        %v1180 = vpop.f32.mrb[0].mxu0
        %1181 = vmatprep.mubr.f32.mxu0 %v838
        %1182 = vmatmul.mubr.f32.gmra.mrb[0].mxu0 %v837
        %v1183 = vpop.f32.mrb[0].mxu0
        %v1184 = vadd.f32 0.0, %v1183
        %v1185 = vpop.f32.mrb[0].mxu0
        %1186 = vmatprep.mubr.f32.mxu0 %v841
        %1187 = vmatmul.mubr.f32.gmra.mrb[0].mxu0 %v840
        %v1188 = vpop.f32.mrb[0].mxu0
        %v1189 = vadd.f32 0.0, %v1188
        %v1190 = vpop.f32.mrb[0].mxu0
        %1191 = vmatprep.mubr.f32.mxu0 %v844
        %1192 = vmatmul.mubr.f32.gmra.mrb[0].mxu0 %v843
        %v1193 = vpop.f32.mrb[0].mxu0
        %v1194 = vadd.f32 0.0, %v1193
        %v1195 = vpop.f32.mrb[0].mxu0
        %1196 = vmatprep.mubr.f32.mxu0 %v847
        %1197 = vmatmul.mubr.f32.gmra.mrb[0].mxu0 %v846
        %v1198 = vpop.f32.mrb[0].mxu0
        %v1199 = vadd.f32 0.0, %v1198
        %v1200 = vpop.f32.mrb[0].mxu0
        %1201 = vmatprep.mubr.f32.mxu0 %v850
        %1202 = vmatmul.mubr.f32.gmra.mrb[0].mxu0 %v849
        %v1203 = vpop.f32.mrb[0].mxu0
        %v1204 = vadd.f32 0.0, %v1203
        %v1205 = vpop.f32.mrb[0].mxu0
        %1206 = vmatprep.mubr.f32.mxu0 %v853
        %1207 = vmatmul.mubr.f32.gmra.mrb[0].mxu0 %v852
        %v1208 = vpop.f32.mrb[0].mxu0
        %v1209 = vadd.f32 0.0, %v1208
        %v1210 = vpop.f32.mrb[0].mxu0
        %1211 = vmatprep.mubr.f32.mxu0 %v856
        %1212 = vmatmul.mubr.f32.gmra.mrb[0].mxu0 %v855
        %v1213 = vpop.f32.mrb[0].mxu0
        %v1214 = vadd.f32 0.0, %v1213
        %v1215 = vpop.f32.mrb[0].mxu0
        %1216 = vmatprep.mubr.f32.mxu0 %v859
        %1217 = vmatmul.mubr.f32.gmra.mrb[0].mxu0 %v858
        %v1218 = vpop.f32.mrb[0].mxu0
        %v1219 = vadd.f32 0.0, %v1218
        %v1220 = vpop.f32.mrb[0].mxu0
        %1221 = vmatprep.mubr.f32.mxu0 %v862
        %1222 = vmatmul.mubr.f32.gmra.mrb[0].mxu0 %v861
        %v1223 = vpop.f32.mrb[0].mxu0
        %v1224 = vadd.f32 0.0, %v1223
        %v1225 = vpop.f32.mrb[0].mxu0
        %1226 = vmatprep.mubr.f32.mxu0 %v865
        %1227 = vmatmul.mubr.f32.gmra.mrb[0].mxu0 %v864
        %v1228 = vpop.f32.mrb[0].mxu0
        %v1229 = vadd.f32 0.0, %v1228
        %v1230 = vpop.f32.mrb[0].mxu0
        %1231 = vmatprep.mubr.f32.mxu0 %v868
        %1232 = vmatmul.mubr.f32.gmra.mrb[0].mxu0 %v867
        %v1233 = vpop.f32.mrb[0].mxu0
        %v1234 = vadd.f32 0.0, %v1233
        %v1235 = vpop.f32.mrb[0].mxu0
        %1236 = vmatprep.mubr.f32.mxu0 %v871
        %1237 = vmatmul.mubr.f32.gmra.mrb[0].mxu0 %v870
        %v1238 = vpop.f32.mrb[0].mxu0
        %v1239 = vadd.f32 0.0, %v1238
        %v1240 = vpop.f32.mrb[0].mxu0
        %1241 = vmatprep.mubr.f32.mxu0 %v874
        %1242 = vmatmul.mubr.f32.gmra.mrb[0].mxu0 %v873
        %v1243 = vpop.f32.mrb[0].mxu0
        %v1244 = vadd.f32 0.0, %v1243
        %v1245 = vpop.f32.mrb[0].mxu0
        %1246 = vmatprep.mubr.f32.mxu0 %v877
        %1247 = vmatmul.mubr.f32.gmra.mrb[0].mxu0 %v876
        %v1248 = vpop.f32.mrb[0].mxu0
        %v1249 = vadd.f32 0.0, %v1248
        %v1250 = vpop.f32.mrb[0].mxu0
        %1251 = vmatprep.mubr.f32.mxu0 %v880
        %1252 = vmatmul.mubr.f32.gmra.mrb[0].mxu0 %v879
        %v1253 = vpop.f32.mrb[0].mxu0
        %v1254 = vadd.f32 0.0, %v1253
        %v1255 = vpop.f32.mrb[0].mxu0
        %1256 = vmatprep.mubr.f32.mxu0 %v883
        %1257 = vmatmul.mubr.f32.gmra.mrb[0].mxu0 %v882
        %v1258 = vpop.f32.mrb[0].mxu0
        %v1259 = vadd.f32 0.0, %v1258
        %v1260 = vpop.f32.mrb[0].mxu0
        %1261 = vmatprep.mubr.f32.mxu0 %v886
        %1262 = vmatmul.mubr.f32.gmra.mrb[0].mxu0 %v885
        %v1263 = vpop.f32.mrb[0].mxu0
        %v1264 = vadd.f32 0.0, %v1263
        %v1265 = vpop.f32.mrb[0].mxu0
        %1266 = vmatprep.mubr.f32.mxu0 %v889
        %1267 = vmatmul.mubr.f32.gmra.mrb[0].mxu0 %v888
        %v1268 = vpop.f32.mrb[0].mxu0
        %v1269 = vadd.f32 0.0, %v1268
        %v1270 = vpop.f32.mrb[0].mxu0
        %1271 = vmatprep.mubr.f32.mxu0 %v892
        %1272 = vmatmul.mubr.f32.gmra.mrb[0].mxu0 %v891
        %v1273 = vpop.f32.mrb[0].mxu0
        %v1274 = vadd.f32 0.0, %v1273
        %v1275 = vpop.f32.mrb[0].mxu0
        %1276 = vmatprep.mubr.f32.mxu0 %v895
        %1277 = vmatmul.mubr.f32.gmra.mrb[0].mxu0 %v894
        %v1278 = vpop.f32.mrb[0].mxu0
        %v1279 = vadd.f32 0.0, %v1278
        %v1280 = vpop.f32.mrb[0].mxu0
        %1281 = vmatprep.mubr.f32.mxu0 %v898
        %1282 = vmatmul.mubr.f32.gmra.mrb[0].mxu0 %v897
        %v1283 = vpop.f32.mrb[0].mxu0
        %v1284 = vadd.f32 0.0, %v1283
        %v1285 = vpop.f32.mrb[0].mxu0
        %1286 = vmatprep.mubr.f32.mxu0 %v901
        %1287 = vmatmul.mubr.f32.gmra.mrb[0].mxu0 %v900
        %v1288 = vpop.f32.mrb[0].mxu0
        %v1289 = vadd.f32 0.0, %v1288
        %v1290 = vpop.f32.mrb[0].mxu0
        %1291 = vmatprep.mubr.f32.mxu0 %v904
        %1292 = vmatmul.mubr.f32.gmra.mrb[0].mxu0 %v903
        %v1293 = vpop.f32.mrb[0].mxu0
        %v1294 = vadd.f32 0.0, %v1293
        %v1295 = vpop.f32.mrb[0].mxu0
        %1296 = vmatprep.mubr.f32.mxu0 %v907
        %1297 = vmatmul.mubr.f32.gmra.mrb[0].mxu0 %v906
        %v1298 = vpop.f32.mrb[0].mxu0
        %v1299 = vadd.f32 0.0, %v1298
        %v1300 = vpop.f32.mrb[0].mxu0
        %1301 = vmatprep.mubr.f32.mxu0 %v910
        %1302 = vmatmul.mubr.f32.gmra.mrb[0].mxu0 %v909
        %v1303 = vpop.f32.mrb[0].mxu0
        %v1304 = vadd.f32 0.0, %v1303
        %v1305 = vpop.f32.mrb[0].mxu0
        %1306 = vmatprep.mubr.f32.mxu0 %v913
        %1307 = vmatmul.mubr.f32.gmra.mrb[0].mxu0 %v912
        %v1308 = vpop.f32.mrb[0].mxu0
        %v1309 = vadd.f32 0.0, %v1308
        %v1310 = vpop.f32.mrb[0].mxu0
        %1311 = vmatprep.mubr.f32.mxu0 %v916
        %1312 = vmatmul.mubr.f32.gmra.mrb[0].mxu0 %v915
        %v1313 = vpop.f32.mrb[0].mxu0
        %v1314 = vadd.f32 0.0, %v1313
        %v1315 = vpop.f32.mrb[0].mxu0
        %1316 = vmatprep.mubr.f32.mxu0 %v919
        %1317 = vmatmul.mubr.f32.gmra.mrb[0].mxu0 %v918
        %v1318 = vpop.f32.mrb[0].mxu0
        %v1319 = vadd.f32 0.0, %v1318
        %v1320 = vpop.f32.mrb[0].mxu0
        %1321 = vmatprep.mubr.f32.mxu0 %v922
        %1322 = vmatmul.mubr.f32.gmra.mrb[0].mxu0 %v921
        %v1323 = vpop.f32.mrb[0].mxu0
        %v1324 = vadd.f32 0.0, %v1323
        %v1325 = vpop.f32.mrb[0].mxu0
        %1326 = vmatprep.mubr.f32.mxu0 %v925
        %1327 = vmatmul.mubr.f32.gmra.mrb[0].mxu0 %v924
        %v1328 = vpop.f32.mrb[0].mxu0
        %v1329 = vadd.f32 0.0, %v1328
        %v1330 = vpop.f32.mrb[0].mxu0
        %1331 = vmatprep.mubr.f32.mxu0 %v928
        %1332 = vmatmul.mubr.f32.gmra.mrb[0].mxu0 %v927
        %v1333 = vpop.f32.mrb[0].mxu0
        %v1334 = vadd.f32 0.0, %v1333
        %v1335 = vpop.f32.mrb[0].mxu0
        %1336 = vmatprep.mubr.f32.mxu0 %v931
        %1337 = vmatmul.mubr.f32.gmra.mrb[0].mxu0 %v930
        %v1338 = vpop.f32.mrb[0].mxu0
        %v1339 = vadd.f32 0.0, %v1338
        %v1340 = vpop.f32.mrb[0].mxu0
        %1341 = vmatprep.mubr.f32.mxu0 %v934
        %1342 = vmatmul.mubr.f32.gmra.mrb[0].mxu0 %v933
        %v1343 = vpop.f32.mrb[0].mxu0
        %v1344 = vadd.f32 0.0, %v1343
        %v1345 = vpop.f32.mrb[0].mxu0
        %1346 = vmatprep.mubr.f32.mxu0 %v937
        %1347 = vmatmul.mubr.f32.gmra.mrb[0].mxu0 %v936
        %v1348 = vpop.f32.mrb[0].mxu0
        %v1349 = vadd.f32 0.0, %v1348
        %v1350 = vpop.f32.mrb[0].mxu0
        %1351 = vmatprep.mubr.f32.mxu0 %v940
        %1352 = vmatmul.mubr.f32.gmra.mrb[0].mxu0 %v939
        %v1353 = vpop.f32.mrb[0].mxu0
        %v1354 = vadd.f32 0.0, %v1353
        %v1355 = vpop.f32.mrb[0].mxu0
        %1356 = vmatprep.mubr.f32.mxu0 %v943
        %1357 = vmatmul.mubr.f32.gmra.mrb[0].mxu0 %v942
        %v1358 = vpop.f32.mrb[0].mxu0
        %v1359 = vadd.f32 0.0, %v1358
        %v1360 = vpop.f32.mrb[0].mxu0
        %1361 = vmatprep.mubr.f32.mxu0 %v946
        %1362 = vmatmul.mubr.f32.gmra.mrb[0].mxu0 %v945
        %v1363 = vpop.f32.mrb[0].mxu0
        %v1364 = vadd.f32 0.0, %v1363
        %v1365 = vpop.f32.mrb[0].mxu0
        %1366 = vmatprep.mubr.f32.mxu0 %v949
        %1367 = vmatmul.mubr.f32.gmra.mrb[0].mxu0 %v948
        %v1368 = vpop.f32.mrb[0].mxu0
        %v1369 = vadd.f32 0.0, %v1368
        %v1370 = vpop.f32.mrb[0].mxu0
        %1371 = vmatprep.mubr.f32.mxu0 %v952
        %1372 = vmatmul.mubr.f32.gmra.mrb[0].mxu0 %v951
        %v1373 = vpop.f32.mrb[0].mxu0
        %v1374 = vadd.f32 0.0, %v1373
        %v1375 = vpop.f32.mrb[0].mxu0
        %1376 = vdwg.mxu0
        %1377 = vmatprep.subr.mxu0 0.0
        %1378 = vmatpush1.msra.mxu0 %v986
        %1379 = vmatprep.subr.mxu0 0.0
        %1380 = vmatpush1.msra.mxu0 %v987
        %1381 = vmatprep.subr.mxu0 0.0
        %1382 = vmatpush1.msra.mxu0 %v988
        %1383 = vmatprep.subr.mxu0 0.0
        %1384 = vmatpush1.msra.mxu0 %v989
        %1385 = vmatprep.subr.mxu0 0.0
        %1386 = vmatpush1.msra.mxu0 %v990
        %1387 = vmatprep.subr.mxu0 0.0
        %1388 = vmatpush1.msra.mxu0 %v991
        %1389 = vmatprep.subr.mxu0 0.0
        %1390 = vmatpush1.msra.mxu0 %v992
        %1391 = vmatprep.subr.mxu0 0.0
        %1392 = vmatpush1.msra.mxu0 %v993
        %1393 = vmatprep.subr.mxu0 0.0
        %1394 = vmatpush1.msra.mxu0 %v994
        %1395 = vmatprep.subr.mxu0 0.0
        %1396 = vmatpush1.msra.mxu0 %v995
        %1397 = vmatprep.subr.mxu0 0.0
        %1398 = vmatpush1.msra.mxu0 %v996
        %1399 = vmatprep.subr.mxu0 0.0
        %1400 = vmatpush1.msra.mxu0 %v997
        %1401 = vmatprep.subr.mxu0 0.0
        %1402 = vmatpush1.msra.mxu0 %v998
        %1403 = vmatprep.subr.mxu0 0.0
        %1404 = vmatpush1.msra.mxu0 %v999
        %1405 = vmatprep.subr.mxu0 0.0
        %1406 = vmatpush1.msra.mxu0 %v1000
        %1407 = vmatprep.subr.mxu0 0.0
        %1408 = vmatpush1.msra.mxu0 %v1001
        %1409 = vmatprep.subr.mxu0 0.0
        %1410 = vmatpush1.msra.mxu0 0.0
        %1411 = vmatprep.subr.mxu0 0.0
        %1412 = vmatpush1.msra.mxu0 0.0
        %1413 = vmatprep.subr.mxu0 0.0
        %1414 = vmatpush1.msra.mxu0 0.0
        %1415 = vmatprep.subr.mxu0 0.0
        %1416 = vmatpush1.msra.mxu0 0.0
        %1417 = vmatprep.subr.mxu0 0.0
        %1418 = vmatpush1.msra.mxu0 0.0
        %1419 = vmatprep.subr.mxu0 0.0
        %1420 = vmatpush1.msra.mxu0 0.0
        %1421 = vmatprep.subr.mxu0 0.0
        %1422 = vmatpush1.msra.mxu0 0.0
        %1423 = vmatprep.subr.mxu0 0.0
        %1424 = vmatpush1.msra.mxu0 0.0
        %1425 = vmatprep.subr.mxu0 0.0
        %1426 = vmatpush1.msra.mxu0 0.0
        %1427 = vmatprep.subr.mxu0 0.0
        %1428 = vmatpush1.msra.mxu0 0.0
        %1429 = vmatprep.subr.mxu0 0.0
        %1430 = vmatpush1.msra.mxu0 0.0
        %1431 = vmatprep.subr.mxu0 0.0
        %1432 = vmatpush1.msra.mxu0 0.0
        %1433 = vmatprep.subr.mxu0 0.0
        %1434 = vmatpush1.msra.mxu0 0.0
        %1435 = vmatprep.subr.mxu0 0.0
        %1436 = vmatpush1.msra.mxu0 0.0
        %1437 = vmatprep.subr.mxu0 0.0
        %1438 = vmatpush1.msra.mxu0 0.0
        %1439 = vmatprep.subr.mxu0 0.0
        %1440 = vmatpush1.msra.mxu0 0.0
        %1441 = vmatprep.mubr.f32.mxu0 0.0
        %1442 = vmatmul.mubr.f32.gmra.mrb[0].mxu0 %v770
        %v1443 = vpop.f32.mrb[0].mxu0
        %v1444 = vadd.f32 %v1069, %v1443
        %v1445 = vpop.f32.mrb[0].mxu0
        %1446 = vmatprep.mubr.f32.mxu0 0.0
        %1447 = vmatmul.mubr.f32.gmra.mrb[0].mxu0 %v773
        %v1448 = vpop.f32.mrb[0].mxu0
        %v1449 = vadd.f32 %v1074, %v1448
        %v1450 = vpop.f32.mrb[0].mxu0
        %1451 = vmatprep.mubr.f32.mxu0 0.0
        %1452 = vmatmul.mubr.f32.gmra.mrb[0].mxu0 %v776
        %v1453 = vpop.f32.mrb[0].mxu0
        %v1454 = vadd.f32 %v1079, %v1453
        %v1455 = vpop.f32.mrb[0].mxu0
        %1456 = vmatprep.mubr.f32.mxu0 0.0
        %1457 = vmatmul.mubr.f32.gmra.mrb[0].mxu0 %v779
        %v1458 = vpop.f32.mrb[0].mxu0
        %v1459 = vadd.f32 %v1084, %v1458
        %v1460 = vpop.f32.mrb[0].mxu0
        %1461 = vmatprep.mubr.f32.mxu0 0.0
        %1462 = vmatmul.mubr.f32.gmra.mrb[0].mxu0 %v782
        %v1463 = vpop.f32.mrb[0].mxu0
        %v1464 = vadd.f32 %v1089, %v1463
        %v1465 = vpop.f32.mrb[0].mxu0
        %1466 = vmatprep.mubr.f32.mxu0 0.0
        %1467 = vmatmul.mubr.f32.gmra.mrb[0].mxu0 %v785
        %v1468 = vpop.f32.mrb[0].mxu0
        %v1469 = vadd.f32 %v1094, %v1468
        %v1470 = vpop.f32.mrb[0].mxu0
        %1471 = vmatprep.mubr.f32.mxu0 0.0
        %1472 = vmatmul.mubr.f32.gmra.mrb[0].mxu0 %v788
        %v1473 = vpop.f32.mrb[0].mxu0
        %v1474 = vadd.f32 %v1099, %v1473
        %v1475 = vpop.f32.mrb[0].mxu0
        %1476 = vmatprep.mubr.f32.mxu0 0.0
        %1477 = vmatmul.mubr.f32.gmra.mrb[0].mxu0 %v791
        %v1478 = vpop.f32.mrb[0].mxu0
        %v1479 = vadd.f32 %v1104, %v1478
        %v1480 = vpop.f32.mrb[0].mxu0
        %1481 = vmatprep.mubr.f32.mxu0 0.0
        %1482 = vmatmul.mubr.f32.gmra.mrb[0].mxu0 %v794
        %v1483 = vpop.f32.mrb[0].mxu0
        %v1484 = vadd.f32 %v1109, %v1483
        %v1485 = vpop.f32.mrb[0].mxu0
        %1486 = vmatprep.mubr.f32.mxu0 0.0
        %1487 = vmatmul.mubr.f32.gmra.mrb[0].mxu0 %v797
        %v1488 = vpop.f32.mrb[0].mxu0
        %v1489 = vadd.f32 %v1114, %v1488
        %v1490 = vpop.f32.mrb[0].mxu0
        %1491 = vmatprep.mubr.f32.mxu0 0.0
        %1492 = vmatmul.mubr.f32.gmra.mrb[0].mxu0 %v800
        %v1493 = vpop.f32.mrb[0].mxu0
        %v1494 = vadd.f32 %v1119, %v1493
        %v1495 = vpop.f32.mrb[0].mxu0
        %1496 = vmatprep.mubr.f32.mxu0 0.0
        %1497 = vmatmul.mubr.f32.gmra.mrb[0].mxu0 %v803
        %v1498 = vpop.f32.mrb[0].mxu0
        %v1499 = vadd.f32 %v1124, %v1498
        %v1500 = vpop.f32.mrb[0].mxu0
        %1501 = vmatprep.mubr.f32.mxu0 0.0
        %1502 = vmatmul.mubr.f32.gmra.mrb[0].mxu0 %v806
        %v1503 = vpop.f32.mrb[0].mxu0
        %v1504 = vadd.f32 %v1129, %v1503
        %v1505 = vpop.f32.mrb[0].mxu0
        %1506 = vmatprep.mubr.f32.mxu0 0.0
        %1507 = vmatmul.mubr.f32.gmra.mrb[0].mxu0 %v809
        %v1508 = vpop.f32.mrb[0].mxu0
        %v1509 = vadd.f32 %v1134, %v1508
        %v1510 = vpop.f32.mrb[0].mxu0
        %1511 = vmatprep.mubr.f32.mxu0 0.0
        %1512 = vmatmul.mubr.f32.gmra.mrb[0].mxu0 %v812
        %v1513 = vpop.f32.mrb[0].mxu0
        %v1514 = vadd.f32 %v1139, %v1513
        %v1515 = vpop.f32.mrb[0].mxu0
        %1516 = vmatprep.mubr.f32.mxu0 0.0
        %1517 = vmatmul.mubr.f32.gmra.mrb[0].mxu0 %v815
        %v1518 = vpop.f32.mrb[0].mxu0
        %v1519 = vadd.f32 %v1144, %v1518
        %v1520 = vpop.f32.mrb[0].mxu0
        %1521 = vmatprep.mubr.f32.mxu0 0.0
        %1522 = vmatmul.mubr.f32.gmra.mrb[0].mxu0 %v818
        %v1523 = vpop.f32.mrb[0].mxu0
        %v1524 = vadd.f32 %v1149, %v1523
        %v1525 = vpop.f32.mrb[0].mxu0
        %1526 = vmatprep.mubr.f32.mxu0 0.0
        %1527 = vmatmul.mubr.f32.gmra.mrb[0].mxu0 %v821
        %v1528 = vpop.f32.mrb[0].mxu0
        %v1529 = vadd.f32 %v1154, %v1528
        %v1530 = vpop.f32.mrb[0].mxu0
        %1531 = vmatprep.mubr.f32.mxu0 0.0
        %1532 = vmatmul.mubr.f32.gmra.mrb[0].mxu0 %v824
        %v1533 = vpop.f32.mrb[0].mxu0
        %v1534 = vadd.f32 %v1159, %v1533
        %v1535 = vpop.f32.mrb[0].mxu0
        %1536 = vmatprep.mubr.f32.mxu0 0.0
        %1537 = vmatmul.mubr.f32.gmra.mrb[0].mxu0 %v827
        %v1538 = vpop.f32.mrb[0].mxu0
        %v1539 = vadd.f32 %v1164, %v1538
        %v1540 = vpop.f32.mrb[0].mxu0
        %1541 = vmatprep.mubr.f32.mxu0 0.0
        %1542 = vmatmul.mubr.f32.gmra.mrb[0].mxu0 %v830
        %v1543 = vpop.f32.mrb[0].mxu0
        %v1544 = vadd.f32 %v1169, %v1543
        %v1545 = vpop.f32.mrb[0].mxu0
        %1546 = vmatprep.mubr.f32.mxu0 0.0
        %1547 = vmatmul.mubr.f32.gmra.mrb[0].mxu0 %v833
        %v1548 = vpop.f32.mrb[0].mxu0
        %v1549 = vadd.f32 %v1174, %v1548
        %v1550 = vpop.f32.mrb[0].mxu0
        %1551 = vmatprep.mubr.f32.mxu0 0.0
        %1552 = vmatmul.mubr.f32.gmra.mrb[0].mxu0 %v836
        %v1553 = vpop.f32.mrb[0].mxu0
        %v1554 = vadd.f32 %v1179, %v1553
        %v1555 = vpop.f32.mrb[0].mxu0
        %1556 = vmatprep.mubr.f32.mxu0 0.0
        %1557 = vmatmul.mubr.f32.gmra.mrb[0].mxu0 %v839
        %v1558 = vpop.f32.mrb[0].mxu0
        %v1559 = vadd.f32 %v1184, %v1558
        %v1560 = vpop.f32.mrb[0].mxu0
        %1561 = vmatprep.mubr.f32.mxu0 0.0
        %1562 = vmatmul.mubr.f32.gmra.mrb[0].mxu0 %v842
        %v1563 = vpop.f32.mrb[0].mxu0
        %v1564 = vadd.f32 %v1189, %v1563
        %v1565 = vpop.f32.mrb[0].mxu0
        %1566 = vmatprep.mubr.f32.mxu0 0.0
        %1567 = vmatmul.mubr.f32.gmra.mrb[0].mxu0 %v845
        %v1568 = vpop.f32.mrb[0].mxu0
        %v1569 = vadd.f32 %v1194, %v1568
        %v1570 = vpop.f32.mrb[0].mxu0
        %1571 = vmatprep.mubr.f32.mxu0 0.0
        %1572 = vmatmul.mubr.f32.gmra.mrb[0].mxu0 %v848
        %v1573 = vpop.f32.mrb[0].mxu0
        %v1574 = vadd.f32 %v1199, %v1573
        %v1575 = vpop.f32.mrb[0].mxu0
        %1576 = vmatprep.mubr.f32.mxu0 0.0
        %1577 = vmatmul.mubr.f32.gmra.mrb[0].mxu0 %v851
        %v1578 = vpop.f32.mrb[0].mxu0
        %v1579 = vadd.f32 %v1204, %v1578
        %v1580 = vpop.f32.mrb[0].mxu0
        %1581 = vmatprep.mubr.f32.mxu0 0.0
        %1582 = vmatmul.mubr.f32.gmra.mrb[0].mxu0 %v854
        %v1583 = vpop.f32.mrb[0].mxu0
        %v1584 = vadd.f32 %v1209, %v1583
        %v1585 = vpop.f32.mrb[0].mxu0
        %1586 = vmatprep.mubr.f32.mxu0 0.0
        %1587 = vmatmul.mubr.f32.gmra.mrb[0].mxu0 %v857
        %v1588 = vpop.f32.mrb[0].mxu0
        %v1589 = vadd.f32 %v1214, %v1588
        %v1590 = vpop.f32.mrb[0].mxu0
        %1591 = vmatprep.mubr.f32.mxu0 0.0
        %1592 = vmatmul.mubr.f32.gmra.mrb[0].mxu0 %v860
        %v1593 = vpop.f32.mrb[0].mxu0
        %v1594 = vadd.f32 %v1219, %v1593
        %v1595 = vpop.f32.mrb[0].mxu0
        %1596 = vmatprep.mubr.f32.mxu0 0.0
        %1597 = vmatmul.mubr.f32.gmra.mrb[0].mxu0 %v863
        %v1598 = vpop.f32.mrb[0].mxu0
        %v1599 = vadd.f32 %v1224, %v1598
        %v1600 = vpop.f32.mrb[0].mxu0
        %1601 = vmatprep.mubr.f32.mxu0 0.0
        %1602 = vmatmul.mubr.f32.gmra.mrb[0].mxu0 %v866
        %v1603 = vpop.f32.mrb[0].mxu0
        %v1604 = vadd.f32 %v1229, %v1603
        %v1605 = vpop.f32.mrb[0].mxu0
        %1606 = vmatprep.mubr.f32.mxu0 0.0
        %1607 = vmatmul.mubr.f32.gmra.mrb[0].mxu0 %v869
        %v1608 = vpop.f32.mrb[0].mxu0
        %v1609 = vadd.f32 %v1234, %v1608
        %v1610 = vpop.f32.mrb[0].mxu0
        %1611 = vmatprep.mubr.f32.mxu0 0.0
        %1612 = vmatmul.mubr.f32.gmra.mrb[0].mxu0 %v872
        %v1613 = vpop.f32.mrb[0].mxu0
        %v1614 = vadd.f32 %v1239, %v1613
        %v1615 = vpop.f32.mrb[0].mxu0
        %1616 = vmatprep.mubr.f32.mxu0 0.0
        %1617 = vmatmul.mubr.f32.gmra.mrb[0].mxu0 %v875
        %v1618 = vpop.f32.mrb[0].mxu0
        %v1619 = vadd.f32 %v1244, %v1618
        %v1620 = vpop.f32.mrb[0].mxu0
        %1621 = vmatprep.mubr.f32.mxu0 0.0
        %1622 = vmatmul.mubr.f32.gmra.mrb[0].mxu0 %v878
        %v1623 = vpop.f32.mrb[0].mxu0
        %v1624 = vadd.f32 %v1249, %v1623
        %v1625 = vpop.f32.mrb[0].mxu0
        %1626 = vmatprep.mubr.f32.mxu0 0.0
        %1627 = vmatmul.mubr.f32.gmra.mrb[0].mxu0 %v881
        %v1628 = vpop.f32.mrb[0].mxu0
        %v1629 = vadd.f32 %v1254, %v1628
        %v1630 = vpop.f32.mrb[0].mxu0
        %1631 = vmatprep.mubr.f32.mxu0 0.0
        %1632 = vmatmul.mubr.f32.gmra.mrb[0].mxu0 %v884
        %v1633 = vpop.f32.mrb[0].mxu0
        %v1634 = vadd.f32 %v1259, %v1633
        %v1635 = vpop.f32.mrb[0].mxu0
        %1636 = vmatprep.mubr.f32.mxu0 0.0
        %1637 = vmatmul.mubr.f32.gmra.mrb[0].mxu0 %v887
        %v1638 = vpop.f32.mrb[0].mxu0
        %v1639 = vadd.f32 %v1264, %v1638
        %v1640 = vpop.f32.mrb[0].mxu0
        %1641 = vmatprep.mubr.f32.mxu0 0.0
        %1642 = vmatmul.mubr.f32.gmra.mrb[0].mxu0 %v890
        %v1643 = vpop.f32.mrb[0].mxu0
        %v1644 = vadd.f32 %v1269, %v1643
        %v1645 = vpop.f32.mrb[0].mxu0
        %1646 = vmatprep.mubr.f32.mxu0 0.0
        %1647 = vmatmul.mubr.f32.gmra.mrb[0].mxu0 %v893
        %v1648 = vpop.f32.mrb[0].mxu0
        %v1649 = vadd.f32 %v1274, %v1648
        %v1650 = vpop.f32.mrb[0].mxu0
        %1651 = vmatprep.mubr.f32.mxu0 0.0
        %1652 = vmatmul.mubr.f32.gmra.mrb[0].mxu0 %v896
        %v1653 = vpop.f32.mrb[0].mxu0
        %v1654 = vadd.f32 %v1279, %v1653
        %v1655 = vpop.f32.mrb[0].mxu0
        %1656 = vmatprep.mubr.f32.mxu0 0.0
        %1657 = vmatmul.mubr.f32.gmra.mrb[0].mxu0 %v899
        %v1658 = vpop.f32.mrb[0].mxu0
        %v1659 = vadd.f32 %v1284, %v1658
        %v1660 = vpop.f32.mrb[0].mxu0
        %1661 = vmatprep.mubr.f32.mxu0 0.0
        %1662 = vmatmul.mubr.f32.gmra.mrb[0].mxu0 %v902
        %v1663 = vpop.f32.mrb[0].mxu0
        %v1664 = vadd.f32 %v1289, %v1663
        %v1665 = vpop.f32.mrb[0].mxu0
        %1666 = vmatprep.mubr.f32.mxu0 0.0
        %1667 = vmatmul.mubr.f32.gmra.mrb[0].mxu0 %v905
        %v1668 = vpop.f32.mrb[0].mxu0
        %v1669 = vadd.f32 %v1294, %v1668
        %v1670 = vpop.f32.mrb[0].mxu0
        %1671 = vmatprep.mubr.f32.mxu0 0.0
        %1672 = vmatmul.mubr.f32.gmra.mrb[0].mxu0 %v908
        %v1673 = vpop.f32.mrb[0].mxu0
        %v1674 = vadd.f32 %v1299, %v1673
        %v1675 = vpop.f32.mrb[0].mxu0
        %1676 = vmatprep.mubr.f32.mxu0 0.0
        %1677 = vmatmul.mubr.f32.gmra.mrb[0].mxu0 %v911
        %v1678 = vpop.f32.mrb[0].mxu0
        %v1679 = vadd.f32 %v1304, %v1678
        %v1680 = vpop.f32.mrb[0].mxu0
        %1681 = vmatprep.mubr.f32.mxu0 0.0
        %1682 = vmatmul.mubr.f32.gmra.mrb[0].mxu0 %v914
        %v1683 = vpop.f32.mrb[0].mxu0
        %v1684 = vadd.f32 %v1309, %v1683
        %v1685 = vpop.f32.mrb[0].mxu0
        %1686 = vmatprep.mubr.f32.mxu0 0.0
        %1687 = vmatmul.mubr.f32.gmra.mrb[0].mxu0 %v917
        %v1688 = vpop.f32.mrb[0].mxu0
        %v1689 = vadd.f32 %v1314, %v1688
        %v1690 = vpop.f32.mrb[0].mxu0
        %1691 = vmatprep.mubr.f32.mxu0 0.0
        %1692 = vmatmul.mubr.f32.gmra.mrb[0].mxu0 %v920
        %v1693 = vpop.f32.mrb[0].mxu0
        %v1694 = vadd.f32 %v1319, %v1693
        %v1695 = vpop.f32.mrb[0].mxu0
        %1696 = vmatprep.mubr.f32.mxu0 0.0
        %1697 = vmatmul.mubr.f32.gmra.mrb[0].mxu0 %v923
        %v1698 = vpop.f32.mrb[0].mxu0
        %v1699 = vadd.f32 %v1324, %v1698
        %v1700 = vpop.f32.mrb[0].mxu0
        %1701 = vmatprep.mubr.f32.mxu0 0.0
        %1702 = vmatmul.mubr.f32.gmra.mrb[0].mxu0 %v926
        %v1703 = vpop.f32.mrb[0].mxu0
        %v1704 = vadd.f32 %v1329, %v1703
        %v1705 = vpop.f32.mrb[0].mxu0
        %1706 = vmatprep.mubr.f32.mxu0 0.0
        %1707 = vmatmul.mubr.f32.gmra.mrb[0].mxu0 %v929
        %v1708 = vpop.f32.mrb[0].mxu0
        %v1709 = vadd.f32 %v1334, %v1708
        %v1710 = vpop.f32.mrb[0].mxu0
        %1711 = vmatprep.mubr.f32.mxu0 0.0
        %1712 = vmatmul.mubr.f32.gmra.mrb[0].mxu0 %v932
        %v1713 = vpop.f32.mrb[0].mxu0
        %v1714 = vadd.f32 %v1339, %v1713
        %v1715 = vpop.f32.mrb[0].mxu0
        %1716 = vmatprep.mubr.f32.mxu0 0.0
        %1717 = vmatmul.mubr.f32.gmra.mrb[0].mxu0 %v935
        %v1718 = vpop.f32.mrb[0].mxu0
        %v1719 = vadd.f32 %v1344, %v1718
        %v1720 = vpop.f32.mrb[0].mxu0
        %1721 = vmatprep.mubr.f32.mxu0 0.0
        %1722 = vmatmul.mubr.f32.gmra.mrb[0].mxu0 %v938
        %v1723 = vpop.f32.mrb[0].mxu0
        %v1724 = vadd.f32 %v1349, %v1723
        %v1725 = vpop.f32.mrb[0].mxu0
        %1726 = vmatprep.mubr.f32.mxu0 0.0
        %1727 = vmatmul.mubr.f32.gmra.mrb[0].mxu0 %v941
        %v1728 = vpop.f32.mrb[0].mxu0
        %v1729 = vadd.f32 %v1354, %v1728
        %v1730 = vpop.f32.mrb[0].mxu0
        %1731 = vmatprep.mubr.f32.mxu0 0.0
        %1732 = vmatmul.mubr.f32.gmra.mrb[0].mxu0 %v944
        %v1733 = vpop.f32.mrb[0].mxu0
        %v1734 = vadd.f32 %v1359, %v1733
        %v1735 = vpop.f32.mrb[0].mxu0
        %1736 = vmatprep.mubr.f32.mxu0 0.0
        %1737 = vmatmul.mubr.f32.gmra.mrb[0].mxu0 %v947
        %v1738 = vpop.f32.mrb[0].mxu0
        %v1739 = vadd.f32 %v1364, %v1738
        %v1740 = vpop.f32.mrb[0].mxu0
        %1741 = vmatprep.mubr.f32.mxu0 0.0
        %1742 = vmatmul.mubr.f32.gmra.mrb[0].mxu0 %v950
        %v1743 = vpop.f32.mrb[0].mxu0
        %v1744 = vadd.f32 %v1369, %v1743
        %v1745 = vpop.f32.mrb[0].mxu0
        %1746 = vmatprep.mubr.f32.mxu0 0.0
        %1747 = vmatmul.mubr.f32.gmra.mrb[0].mxu0 %v953
        %v1748 = vpop.f32.mrb[0].mxu0
        %v1749 = vadd.f32 %v1374, %v1748
        %v1750 = vpop.f32.mrb[0].mxu0
        %1751 = vdwg.mxu0
        %1752 = vst [vmem:[#allocation4] sm:$0xff] %v1444
        %1753 = vst [vmem:[#allocation4 + $0x8] sm:$0xff] %v1449
        %1754 = vst [vmem:[#allocation4 + $0x10] sm:$0xff] %v1454
        %1755 = vst [vmem:[#allocation4 + $0x18] sm:$0xff] %v1459
        %1756 = vst [vmem:[#allocation4 + $0x20] sm:$0xff] %v1464
        %1757 = vst [vmem:[#allocation4 + $0x28] sm:$0xff] %v1469
        %1758 = vst [vmem:[#allocation4 + $0x30] sm:$0xff] %v1474
        %1759 = vst [vmem:[#allocation4 + $0x38] sm:$0xff] %v1479
        %1760 = vst [vmem:[#allocation4 + $0x40] sm:$0xff] %v1484
        %1761 = vst [vmem:[#allocation4 + $0x48] sm:$0xff] %v1489
        %1762 = vst [vmem:[#allocation4 + $0x50] sm:$0xff] %v1494
        %1763 = vst [vmem:[#allocation4 + $0x58] sm:$0xff] %v1499
        %1764 = vst [vmem:[#allocation4 + $0x60] sm:$0xff] %v1504
        %1765 = vst [vmem:[#allocation4 + $0x68] sm:$0xff] %v1509
        %1766 = vst [vmem:[#allocation4 + $0x70] sm:$0xff] %v1514
        %1767 = vst [vmem:[#allocation4 + $0x78] sm:$0xff] %v1519
        %1768 = vst [vmem:[#allocation4 + $0x80] sm:$0xff] %v1524
        %1769 = vst [vmem:[#allocation4 + $0x88] sm:$0xff] %v1529
        %1770 = vst [vmem:[#allocation4 + $0x90] sm:$0xff] %v1534
        %1771 = vst [vmem:[#allocation4 + $0x98] sm:$0xff] %v1539
        %1772 = vst [vmem:[#allocation4 + $0xa0] sm:$0xff] %v1544
        %1773 = vst [vmem:[#allocation4 + $0xa8] sm:$0xff] %v1549
        %1774 = vst [vmem:[#allocation4 + $0xb0] sm:$0xff] %v1554
        %1775 = vst [vmem:[#allocation4 + $0xb8] sm:$0xff] %v1559
        %1776 = vst [vmem:[#allocation4 + $0xc0] sm:$0xff] %v1564
        %1777 = vst [vmem:[#allocation4 + $0xc8] sm:$0xff] %v1569
        %1778 = vst [vmem:[#allocation4 + $0xd0] sm:$0xff] %v1574
        %1779 = vst [vmem:[#allocation4 + $0xd8] sm:$0xff] %v1579
        %1780 = vst [vmem:[#allocation4 + $0xe0] sm:$0xff] %v1584
        %1781 = vst [vmem:[#allocation4 + $0xe8] sm:$0xff] %v1589
        %1782 = vst [vmem:[#allocation4 + $0xf0] sm:$0xff] %v1594
        %1783 = vst [vmem:[#allocation4 + $0xf8] sm:$0xff] %v1599
        %1784 = vst [vmem:[#allocation4 + $0x100] sm:$0xff] %v1604
        %1785 = vst [vmem:[#allocation4 + $0x108] sm:$0xff] %v1609
        %1786 = vst [vmem:[#allocation4 + $0x110] sm:$0xff] %v1614
        %1787 = vst [vmem:[#allocation4 + $0x118] sm:$0xff] %v1619
        %1788 = vst [vmem:[#allocation4 + $0x120] sm:$0xff] %v1624
        %1789 = vst [vmem:[#allocation4 + $0x128] sm:$0xff] %v1629
        %1790 = vst [vmem:[#allocation4 + $0x130] sm:$0xff] %v1634
        %1791 = vst [vmem:[#allocation4 + $0x138] sm:$0xff] %v1639
        %1792 = vst [vmem:[#allocation4 + $0x140] sm:$0xff] %v1644
        %1793 = vst [vmem:[#allocation4 + $0x148] sm:$0xff] %v1649
        %1794 = vst [vmem:[#allocation4 + $0x150] sm:$0xff] %v1654
        %1795 = vst [vmem:[#allocation4 + $0x158] sm:$0xff] %v1659
        %1796 = vst [vmem:[#allocation4 + $0x160] sm:$0xff] %v1664
        %1797 = vst [vmem:[#allocation4 + $0x168] sm:$0xff] %v1669
        %1798 = vst [vmem:[#allocation4 + $0x170] sm:$0xff] %v1674
        %1799 = vst [vmem:[#allocation4 + $0x178] sm:$0xff] %v1679
        %1800 = vst [vmem:[#allocation4 + $0x180] sm:$0xff] %v1684
        %1801 = vst [vmem:[#allocation4 + $0x188] sm:$0xff] %v1689
        %1802 = vst [vmem:[#allocation4 + $0x190] sm:$0xff] %v1694
        %1803 = vst [vmem:[#allocation4 + $0x198] sm:$0xff] %v1699
        %1804 = vst [vmem:[#allocation4 + $0x1a0] sm:$0xff] %v1704
        %1805 = vst [vmem:[#allocation4 + $0x1a8] sm:$0xff] %v1709
        %1806 = vst [vmem:[#allocation4 + $0x1b0] sm:$0xff] %v1714
        %1807 = vst [vmem:[#allocation4 + $0x1b8] sm:$0xff] %v1719
        %1808 = vst [vmem:[#allocation4 + $0x1c0] sm:$0xff] %v1724
        %1809 = vst [vmem:[#allocation4 + $0x1c8] sm:$0xff] %v1729
        %1810 = vst [vmem:[#allocation4 + $0x1d0] sm:$0xff] %v1734
        %1811 = vst [vmem:[#allocation4 + $0x1d8] sm:$0xff] %v1739
        %1812 = vst [vmem:[#allocation4 + $0x1e0] sm:$0xff] %v1744
        %1813 = vst [vmem:[#allocation4 + $0x1e8] sm:$0xff] %v1749
        %v1814 = vld [vmem:[#allocation2 + $0x60] sm:$0xff]
        %v1815 = vld [vmem:[#allocation2 + $0x68] sm:$0xff]
        %v1816 = vld [vmem:[#allocation2 + $0x70] sm:$0xff]
        %v1817 = vld [vmem:[#allocation2 + $0x78] sm:$0xff]
        %v1818 = vld [vmem:[#allocation2 + $0x80] sm:$0xff]
        %v1819 = vld [vmem:[#allocation2 + $0x88] sm:$0xff]
        %v1820 = vld [vmem:[#allocation2 + $0x90] sm:$0xff]
        %v1821 = vld [vmem:[#allocation2 + $0x98] sm:$0xff]
        %v1822 = vld [vmem:[#allocation2 + $0xa0] sm:$0xff]
        %v1823 = vld [vmem:[#allocation2 + $0xa8] sm:$0xff]
        %v1824 = vld [vmem:[#allocation2 + $0xb0] sm:$0xff]
        %v1825 = vld [vmem:[#allocation2 + $0xb8] sm:$0xff]
        %v1826 = vld [vmem:[#allocation2 + $0xc0] sm:$0xff]
        %v1827 = vld [vmem:[#allocation2 + $0xc8] sm:$0xff]
        %v1828 = vld [vmem:[#allocation2 + $0xd0] sm:$0xff]
        %v1829 = vld [vmem:[#allocation2 + $0xd8] sm:$0xff]
        %v1830 = vld [vmem:[#allocation2 + $0xe0] sm:$0xff]
        %v1831 = vld [vmem:[#allocation2 + $0xe8] sm:$0xff]
        %v1832 = vld [vmem:[#allocation2 + $0xf0] sm:$0xff]
        %v1833 = vld [vmem:[#allocation2 + $0xf8] sm:$0xff]
        %v1834 = vld [vmem:[#allocation2 + $0x100] sm:$0xff]
        %v1835 = vld [vmem:[#allocation2 + $0x108] sm:$0xff]
        %v1836 = vld [vmem:[#allocation2 + $0x110] sm:$0xff]
        %v1837 = vld [vmem:[#allocation2 + $0x118] sm:$0xff]
        %v1838 = vld [vmem:[#allocation2 + $0x120] sm:$0xff]
        %v1839 = vld [vmem:[#allocation2 + $0x128] sm:$0xff]
        %v1840 = vld [vmem:[#allocation2 + $0x130] sm:$0xff]
        %v1841 = vld [vmem:[#allocation2 + $0x138] sm:$0xff]
        %v1842 = vld [vmem:[#allocation2 + $0x140] sm:$0xff]
        %v1843 = vld [vmem:[#allocation2 + $0x148] sm:$0xff]
        %v1844 = vld [vmem:[#allocation2 + $0x150] sm:$0xff]
        %v1845 = vld [vmem:[#allocation2 + $0x158] sm:$0xff]
        %v1846 = vld [vmem:[#allocation2 + $0x160] sm:$0xff]
        %v1847 = vld [vmem:[#allocation2 + $0x168] sm:$0xff]
        %v1848 = vld [vmem:[#allocation2 + $0x170] sm:$0xff]
        %v1849 = vld [vmem:[#allocation2 + $0x178] sm:$0xff]
        %v1850 = vld [vmem:[#allocation2 + $0x180] sm:$0xff]
        %v1851 = vld [vmem:[#allocation2 + $0x188] sm:$0xff]
        %v1852 = vld [vmem:[#allocation2 + $0x190] sm:$0xff]
        %v1853 = vld [vmem:[#allocation2 + $0x198] sm:$0xff]
        %v1854 = vld [vmem:[#allocation2 + $0x1a0] sm:$0xff]
        %v1855 = vld [vmem:[#allocation2 + $0x1a8] sm:$0xff]
        %v1856 = vld [vmem:[#allocation2 + $0x1b0] sm:$0xff]
        %v1857 = vld [vmem:[#allocation2 + $0x1b8] sm:$0xff]
        %v1858 = vld [vmem:[#allocation2 + $0x1c0] sm:$0xff]
        %v1859 = vld [vmem:[#allocation2 + $0x1c8] sm:$0xff]
        %v1860 = vld [vmem:[#allocation2 + $0x1d0] sm:$0xff]
        %v1861 = vld [vmem:[#allocation2 + $0x1d8] sm:$0xff]
        %v1862 = vld [vmem:[#allocation2 + $0x1e0] sm:$0xff]
        %v1863 = vld [vmem:[#allocation2 + $0x1e8] sm:$0xff]
        %v1864 = vld [vmem:[#allocation2 + $0x1f0] sm:$0xff]
        %v1865 = vld [vmem:[#allocation2 + $0x1f8] sm:$0xff]
        %v1866 = vld [vmem:[#allocation2 + $0x200] sm:$0xff]
        %v1867 = vld [vmem:[#allocation2 + $0x208] sm:$0xff]
        %v1868 = vld [vmem:[#allocation2 + $0x210] sm:$0xff]
        %v1869 = vld [vmem:[#allocation2 + $0x218] sm:$0xff]
        %v1870 = vld [vmem:[#allocation2 + $0x220] sm:$0xff]
        %v1871 = vld [vmem:[#allocation2 + $0x228] sm:$0xff]
        %v1872 = vld [vmem:[#allocation2 + $0x230] sm:$0xff]
        %v1873 = vld [vmem:[#allocation2 + $0x238] sm:$0xff]
        %v1874 = vld [vmem:[#allocation2 + $0x240] sm:$0xff]
        %v1875 = vld [vmem:[#allocation2 + $0x248] sm:$0xff]
        %v1876 = vld [vmem:[#allocation2 + $0x250] sm:$0xff]
        %v1877 = vld [vmem:[#allocation2 + $0x258] sm:$0xff]
        %v1878 = vld [vmem:[#allocation2 + $0x260] sm:$0xff]
        %v1879 = vld [vmem:[#allocation2 + $0x268] sm:$0xff]
        %v1880 = vld [vmem:[#allocation2 + $0x270] sm:$0xff]
        %v1881 = vld [vmem:[#allocation2 + $0x278] sm:$0xff]
        %v1882 = vld [vmem:[#allocation2 + $0x280] sm:$0xff]
        %v1883 = vld [vmem:[#allocation2 + $0x288] sm:$0xff]
        %v1884 = vld [vmem:[#allocation2 + $0x290] sm:$0xff]
        %v1885 = vld [vmem:[#allocation2 + $0x298] sm:$0xff]
        %v1886 = vld [vmem:[#allocation2 + $0x2a0] sm:$0xff]
        %v1887 = vld [vmem:[#allocation2 + $0x2a8] sm:$0xff]
        %v1888 = vld [vmem:[#allocation2 + $0x2b0] sm:$0xff]
        %v1889 = vld [vmem:[#allocation2 + $0x2b8] sm:$0xff]
        %v1890 = vld [vmem:[#allocation2 + $0x2c0] sm:$0xff]
        %v1891 = vld [vmem:[#allocation2 + $0x2c8] sm:$0xff]
        %v1892 = vld [vmem:[#allocation2 + $0x2d0] sm:$0xff]
        %v1893 = vld [vmem:[#allocation2 + $0x2d8] sm:$0xff]
        %v1894 = vld [vmem:[#allocation2 + $0x2e0] sm:$0xff]
        %v1895 = vld [vmem:[#allocation2 + $0x2e8] sm:$0xff]
        %v1896 = vld [vmem:[#allocation2 + $0x2f0] sm:$0xff]
        %v1897 = vld [vmem:[#allocation2 + $0x2f8] sm:$0xff]
        %v1898 = vld [vmem:[#allocation2 + $0x300] sm:$0xff]
        %v1899 = vld [vmem:[#allocation2 + $0x308] sm:$0xff]
        %v1900 = vld [vmem:[#allocation2 + $0x310] sm:$0xff]
        %v1901 = vld [vmem:[#allocation2 + $0x318] sm:$0xff]
        %v1902 = vld [vmem:[#allocation2 + $0x320] sm:$0xff]
        %v1903 = vld [vmem:[#allocation2 + $0x328] sm:$0xff]
        %v1904 = vld [vmem:[#allocation2 + $0x330] sm:$0xff]
        %v1905 = vld [vmem:[#allocation2 + $0x338] sm:$0xff]
        %v1906 = vld [vmem:[#allocation2 + $0x340] sm:$0xff]
        %v1907 = vld [vmem:[#allocation2 + $0x348] sm:$0xff]
        %v1908 = vld [vmem:[#allocation2 + $0x350] sm:$0xff]
        %v1909 = vld [vmem:[#allocation2 + $0x358] sm:$0xff]
        %v1910 = vld [vmem:[#allocation2 + $0x360] sm:$0xff]
        %v1911 = vld [vmem:[#allocation2 + $0x368] sm:$0xff]
        %v1912 = vld [vmem:[#allocation2 + $0x370] sm:$0xff]
        %v1913 = vld [vmem:[#allocation2 + $0x378] sm:$0xff]
        %v1914 = vld [vmem:[#allocation2 + $0x380] sm:$0xff]
        %v1915 = vld [vmem:[#allocation2 + $0x388] sm:$0xff]
        %v1916 = vld [vmem:[#allocation2 + $0x390] sm:$0xff]
        %v1917 = vld [vmem:[#allocation2 + $0x398] sm:$0xff]
        %v1918 = vld [vmem:[#allocation2 + $0x3a0] sm:$0xff]
        %v1919 = vld [vmem:[#allocation2 + $0x3a8] sm:$0xff]
        %v1920 = vld [vmem:[#allocation2 + $0x3b0] sm:$0xff]
        %v1921 = vld [vmem:[#allocation2 + $0x3b8] sm:$0xff]
        %v1922 = vld [vmem:[#allocation2 + $0x3c0] sm:$0xff]
        %v1923 = vld [vmem:[#allocation2 + $0x3c8] sm:$0xff]
        %v1924 = vld [vmem:[#allocation2 + $0x3d0] sm:$0xff]
        %v1925 = vld [vmem:[#allocation2 + $0x3d8] sm:$0xff]
        %v1926 = vld [vmem:[#allocation2 + $0x3e0] sm:$0xff]
        %v1927 = vld [vmem:[#allocation2 + $0x3e8] sm:$0xff]
        %v1928 = vld [vmem:[#allocation2 + $0x3f0] sm:$0xff]
        %v1929 = vld [vmem:[#allocation2 + $0x3f8] sm:$0xff]
        %v1930 = vld [vmem:[#allocation2 + $0x400] sm:$0xff]
        %v1931 = vld [vmem:[#allocation2 + $0x408] sm:$0xff]
        %v1932 = vld [vmem:[#allocation2 + $0x410] sm:$0xff]
        %v1933 = vld [vmem:[#allocation2 + $0x418] sm:$0xff]
        %v1934 = vld [vmem:[#allocation2 + $0x420] sm:$0xff]
        %v1935 = vld [vmem:[#allocation2 + $0x428] sm:$0xff]
        %v1936 = vld [vmem:[#allocation2 + $0x430] sm:$0xff]
        %v1937 = vld [vmem:[#allocation2 + $0x438] sm:$0xff]
        %v1938 = vld [vmem:[#allocation2 + $0x440] sm:$0xff]
        %v1939 = vld [vmem:[#allocation2 + $0x448] sm:$0xff]
        %v1940 = vld [vmem:[#allocation2 + $0x450] sm:$0xff]
        %v1941 = vld [vmem:[#allocation2 + $0x458] sm:$0xff]
        %v1942 = vld [vmem:[#allocation2 + $0x460] sm:$0xff]
        %v1943 = vld [vmem:[#allocation2 + $0x468] sm:$0xff]
        %v1944 = vld [vmem:[#allocation2 + $0x470] sm:$0xff]
        %v1945 = vld [vmem:[#allocation2 + $0x478] sm:$0xff]
        %v1946 = vld [vmem:[#allocation2 + $0x480] sm:$0xff]
        %v1947 = vld [vmem:[#allocation2 + $0x488] sm:$0xff]
        %v1948 = vld [vmem:[#allocation2 + $0x490] sm:$0xff]
        %v1949 = vld [vmem:[#allocation2 + $0x498] sm:$0xff]
        %v1950 = vld [vmem:[#allocation2 + $0x4a0] sm:$0xff]
        %v1951 = vld [vmem:[#allocation2 + $0x4a8] sm:$0xff]
        %v1952 = vld [vmem:[#allocation2 + $0x4b0] sm:$0xff]
        %v1953 = vld [vmem:[#allocation2 + $0x4b8] sm:$0xff]
        %v1954 = vld [vmem:[#allocation2 + $0x4c0] sm:$0xff]
        %v1955 = vld [vmem:[#allocation2 + $0x4c8] sm:$0xff]
        %v1956 = vld [vmem:[#allocation2 + $0x4d0] sm:$0xff]
        %v1957 = vld [vmem:[#allocation2 + $0x4d8] sm:$0xff]
        %v1958 = vld [vmem:[#allocation2 + $0x4e0] sm:$0xff]
        %v1959 = vld [vmem:[#allocation2 + $0x4e8] sm:$0xff]
        %v1960 = vld [vmem:[#allocation2 + $0x4f0] sm:$0xff]
        %v1961 = vld [vmem:[#allocation2 + $0x4f8] sm:$0xff]
        %v1962 = vld [vmem:[#allocation2 + $0x500] sm:$0xff]
        %v1963 = vld [vmem:[#allocation2 + $0x508] sm:$0xff]
        %v1964 = vld [vmem:[#allocation2 + $0x510] sm:$0xff]
        %v1965 = vld [vmem:[#allocation2 + $0x518] sm:$0xff]
        %v1966 = vld [vmem:[#allocation2 + $0x520] sm:$0xff]
        %v1967 = vld [vmem:[#allocation2 + $0x528] sm:$0xff]
        %v1968 = vld [vmem:[#allocation2 + $0x530] sm:$0xff]
        %v1969 = vld [vmem:[#allocation2 + $0x538] sm:$0xff]
        %v1970 = vld [vmem:[#allocation2 + $0x540] sm:$0xff]
        %v1971 = vld [vmem:[#allocation2 + $0x548] sm:$0xff]
        %v1972 = vld [vmem:[#allocation2 + $0x550] sm:$0xff]
        %v1973 = vld [vmem:[#allocation2 + $0x558] sm:$0xff]
        %v1974 = vld [vmem:[#allocation2 + $0x560] sm:$0xff]
        %v1975 = vld [vmem:[#allocation2 + $0x568] sm:$0xff]
        %v1976 = vld [vmem:[#allocation2 + $0x570] sm:$0xff]
        %v1977 = vld [vmem:[#allocation2 + $0x578] sm:$0xff]
        %v1978 = vld [vmem:[#allocation2 + $0x580] sm:$0xff]
        %v1979 = vld [vmem:[#allocation2 + $0x588] sm:$0xff]
        %v1980 = vld [vmem:[#allocation2 + $0x590] sm:$0xff]
        %v1981 = vld [vmem:[#allocation2 + $0x598] sm:$0xff]
        %v1982 = vld [vmem:[#allocation2 + $0x5a0] sm:$0xff]
        %v1983 = vld [vmem:[#allocation2 + $0x5a8] sm:$0xff]
        %v1984 = vld [vmem:[#allocation2 + $0x5b0] sm:$0xff]
        %v1985 = vld [vmem:[#allocation2 + $0x5b8] sm:$0xff]
        %v1986 = vld [vmem:[#allocation2 + $0x5c0] sm:$0xff]
        %v1987 = vld [vmem:[#allocation2 + $0x5c8] sm:$0xff]
        %v1988 = vld [vmem:[#allocation2 + $0x5d0] sm:$0xff]
        %v1989 = vld [vmem:[#allocation2 + $0x5d8] sm:$0xff]
        %v1990 = vld [vmem:[#allocation2 + $0x5e0] sm:$0xff]
        %v1991 = vld [vmem:[#allocation2 + $0x5e8] sm:$0xff]
        %v1992 = vld [vmem:[#allocation2 + $0x5f0] sm:$0xff]
        %v1993 = vld [vmem:[#allocation2 + $0x5f8] sm:$0xff]
        %v1994 = vld [vmem:[#allocation2 + $0x600] sm:$0xff]
        %v1995 = vld [vmem:[#allocation2 + $0x608] sm:$0xff]
        %v1996 = vld [vmem:[#allocation2 + $0x610] sm:$0xff]
        %v1997 = vld [vmem:[#allocation2 + $0x618] sm:$0xff]
        %v1998 = vld [vmem:[#allocation2 + $0x620] sm:$0xff]
        %v1999 = vld [vmem:[#allocation2 + $0x628] sm:$0xff]
        %s2000 = scalar_lea.vmem [#allocation9], 384
        %v2001 = vld [vmem:[%s2000] sm:$0xff]
        %v2002 = vld [vmem:[%s2000 + $0x8] sm:$0xff]
        %v2003 = vld [vmem:[%s2000 + $0x10] sm:$0xff]
        %v2004 = vld [vmem:[%s2000 + $0x18] sm:$0xff]
        %v2005 = vld [vmem:[%s2000 + $0x20] sm:$0xff]
        %v2006 = vld [vmem:[%s2000 + $0x28] sm:$0xff]
        %v2007 = vld [vmem:[%s2000 + $0x30] sm:$0xff]
        %v2008 = vld [vmem:[%s2000 + $0x38] sm:$0xff]
        %v2009 = vld [vmem:[%s2000 + $0x40] sm:$0xff]
        %v2010 = vld [vmem:[%s2000 + $0x48] sm:$0xff]
        %v2011 = vld [vmem:[%s2000 + $0x50] sm:$0xff]
        %v2012 = vld [vmem:[%s2000 + $0x58] sm:$0xff]
        %v2013 = vld [vmem:[%s2000 + $0x60] sm:$0xff]
        %v2014 = vld [vmem:[%s2000 + $0x68] sm:$0xff]
        %v2015 = vld [vmem:[%s2000 + $0x70] sm:$0xff]
        %v2016 = vld [vmem:[%s2000 + $0x78] sm:$0xff]
        %v2017 = vld [vmem:[%s2000 + $0x80] sm:$0xff]
        %v2018 = vld [vmem:[%s2000 + $0x88] sm:$0xff]
        %v2019 = vld [vmem:[%s2000 + $0x90] sm:$0xff]
        %v2020 = vld [vmem:[%s2000 + $0x98] sm:$0xff]
        %v2021 = vld [vmem:[%s2000 + $0xa0] sm:$0xff]
        %v2022 = vld [vmem:[%s2000 + $0xa8] sm:$0xff]
        %v2023 = vld [vmem:[%s2000 + $0xb0] sm:$0xff]
        %v2024 = vld [vmem:[%s2000 + $0xb8] sm:$0xff]
        %v2025 = vld [vmem:[%s2000 + $0xc0] sm:$0xff]
        %v2026 = vld [vmem:[%s2000 + $0xc8] sm:$0xff]
        %v2027 = vld [vmem:[%s2000 + $0xd0] sm:$0xff]
        %v2028 = vld [vmem:[%s2000 + $0xd8] sm:$0xff]
        %v2029 = vld [vmem:[%s2000 + $0xe0] sm:$0xff]
        %v2030 = vld [vmem:[%s2000 + $0xe8] sm:$0xff]
        %v2031 = vld [vmem:[%s2000 + $0xf0] sm:$0xff]
        %v2032 = vld [vmem:[%s2000 + $0xf8] sm:$0xff]
        %v2033 = vld [vmem:[%s2000 + $0x100] sm:$0xff]
        %v2034 = vld [vmem:[%s2000 + $0x108] sm:$0xff]
        %v2035 = vld [vmem:[%s2000 + $0x110] sm:$0xff]
        %v2036 = vld [vmem:[%s2000 + $0x118] sm:$0xff]
        %v2037 = vld [vmem:[%s2000 + $0x120] sm:$0xff]
        %v2038 = vld [vmem:[%s2000 + $0x128] sm:$0xff]
        %v2039 = vld [vmem:[%s2000 + $0x130] sm:$0xff]
        %v2040 = vld [vmem:[%s2000 + $0x138] sm:$0xff]
        %v2041 = vld [vmem:[%s2000 + $0x140] sm:$0xff]
        %v2042 = vld [vmem:[%s2000 + $0x148] sm:$0xff]
        %v2043 = vld [vmem:[%s2000 + $0x150] sm:$0xff]
        %v2044 = vld [vmem:[%s2000 + $0x158] sm:$0xff]
        %v2045 = vld [vmem:[%s2000 + $0x160] sm:$0xff]
        %v2046 = vld [vmem:[%s2000 + $0x168] sm:$0xff]
        %v2047 = vld [vmem:[%s2000 + $0x170] sm:$0xff]
        %v2048 = vld [vmem:[%s2000 + $0x178] sm:$0xff]
        %2049 = vmatprep.subr.mxu0 0.0
        %2050 = vmatpush1.msra.mxu0 %v2001
        %2051 = vmatprep.subr.mxu0 0.0
        %2052 = vmatpush1.msra.mxu0 %v2002
        %2053 = vmatprep.subr.mxu0 0.0
        %2054 = vmatpush1.msra.mxu0 %v2003
        %2055 = vmatprep.subr.mxu0 0.0
        %2056 = vmatpush1.msra.mxu0 %v2004
        %2057 = vmatprep.subr.mxu0 0.0
        %2058 = vmatpush1.msra.mxu0 %v2005
        %2059 = vmatprep.subr.mxu0 0.0
        %2060 = vmatpush1.msra.mxu0 %v2006
        %2061 = vmatprep.subr.mxu0 0.0
        %2062 = vmatpush1.msra.mxu0 %v2007
        %2063 = vmatprep.subr.mxu0 0.0
        %2064 = vmatpush1.msra.mxu0 %v2008
        %2065 = vmatprep.subr.mxu0 0.0
        %2066 = vmatpush1.msra.mxu0 %v2009
        %2067 = vmatprep.subr.mxu0 0.0
        %2068 = vmatpush1.msra.mxu0 %v2010
        %2069 = vmatprep.subr.mxu0 0.0
        %2070 = vmatpush1.msra.mxu0 %v2011
        %2071 = vmatprep.subr.mxu0 0.0
        %2072 = vmatpush1.msra.mxu0 %v2012
        %2073 = vmatprep.subr.mxu0 0.0
        %2074 = vmatpush1.msra.mxu0 %v2013
        %2075 = vmatprep.subr.mxu0 0.0
        %2076 = vmatpush1.msra.mxu0 %v2014
        %2077 = vmatprep.subr.mxu0 0.0
        %2078 = vmatpush1.msra.mxu0 %v2015
        %2079 = vmatprep.subr.mxu0 0.0
        %2080 = vmatpush1.msra.mxu0 %v2016
        %2081 = vmatprep.subr.mxu0 0.0
        %2082 = vmatpush1.msra.mxu0 %v2017
        %2083 = vmatprep.subr.mxu0 0.0
        %2084 = vmatpush1.msra.mxu0 %v2018
        %2085 = vmatprep.subr.mxu0 0.0
        %2086 = vmatpush1.msra.mxu0 %v2019
        %2087 = vmatprep.subr.mxu0 0.0
        %2088 = vmatpush1.msra.mxu0 %v2020
        %2089 = vmatprep.subr.mxu0 0.0
        %2090 = vmatpush1.msra.mxu0 %v2021
        %2091 = vmatprep.subr.mxu0 0.0
        %2092 = vmatpush1.msra.mxu0 %v2022
        %2093 = vmatprep.subr.mxu0 0.0
        %2094 = vmatpush1.msra.mxu0 %v2023
        %2095 = vmatprep.subr.mxu0 0.0
        %2096 = vmatpush1.msra.mxu0 %v2024
        %2097 = vmatprep.subr.mxu0 0.0
        %2098 = vmatpush1.msra.mxu0 %v2025
        %2099 = vmatprep.subr.mxu0 0.0
        %2100 = vmatpush1.msra.mxu0 %v2026
        %2101 = vmatprep.subr.mxu0 0.0
        %2102 = vmatpush1.msra.mxu0 %v2027
        %2103 = vmatprep.subr.mxu0 0.0
        %2104 = vmatpush1.msra.mxu0 %v2028
        %2105 = vmatprep.subr.mxu0 0.0
        %2106 = vmatpush1.msra.mxu0 %v2029
        %2107 = vmatprep.subr.mxu0 0.0
        %2108 = vmatpush1.msra.mxu0 %v2030
        %2109 = vmatprep.subr.mxu0 0.0
        %2110 = vmatpush1.msra.mxu0 %v2031
        %2111 = vmatprep.subr.mxu0 0.0
        %2112 = vmatpush1.msra.mxu0 %v2032
        %2113 = vmatprep.mubr.f32.mxu0 %v1815
        %2114 = vmatmul.mubr.f32.gmra.mrb[0].mxu0 %v1814
        %v2115 = vpop.f32.mrb[0].mxu0
        %v2116 = vadd.f32 0.0, %v2115
        %v2117 = vpop.f32.mrb[0].mxu0
        %2118 = vmatprep.mubr.f32.mxu0 %v1818
        %2119 = vmatmul.mubr.f32.gmra.mrb[0].mxu0 %v1817
        %v2120 = vpop.f32.mrb[0].mxu0
        %v2121 = vadd.f32 0.0, %v2120
        %v2122 = vpop.f32.mrb[0].mxu0
        %2123 = vmatprep.mubr.f32.mxu0 %v1821
        %2124 = vmatmul.mubr.f32.gmra.mrb[0].mxu0 %v1820
        %v2125 = vpop.f32.mrb[0].mxu0
        %v2126 = vadd.f32 0.0, %v2125
        %v2127 = vpop.f32.mrb[0].mxu0
        %2128 = vmatprep.mubr.f32.mxu0 %v1824
        %2129 = vmatmul.mubr.f32.gmra.mrb[0].mxu0 %v1823
        %v2130 = vpop.f32.mrb[0].mxu0
        %v2131 = vadd.f32 0.0, %v2130
        %v2132 = vpop.f32.mrb[0].mxu0
        %2133 = vmatprep.mubr.f32.mxu0 %v1827
        %2134 = vmatmul.mubr.f32.gmra.mrb[0].mxu0 %v1826
        %v2135 = vpop.f32.mrb[0].mxu0
        %v2136 = vadd.f32 0.0, %v2135
        %v2137 = vpop.f32.mrb[0].mxu0
        %2138 = vmatprep.mubr.f32.mxu0 %v1830
        %2139 = vmatmul.mubr.f32.gmra.mrb[0].mxu0 %v1829
        %v2140 = vpop.f32.mrb[0].mxu0
        %v2141 = vadd.f32 0.0, %v2140
        %v2142 = vpop.f32.mrb[0].mxu0
        %2143 = vmatprep.mubr.f32.mxu0 %v1833
        %2144 = vmatmul.mubr.f32.gmra.mrb[0].mxu0 %v1832
        %v2145 = vpop.f32.mrb[0].mxu0
        %v2146 = vadd.f32 0.0, %v2145
        %v2147 = vpop.f32.mrb[0].mxu0
        %2148 = vmatprep.mubr.f32.mxu0 %v1836
        %2149 = vmatmul.mubr.f32.gmra.mrb[0].mxu0 %v1835
        %v2150 = vpop.f32.mrb[0].mxu0
        %v2151 = vadd.f32 0.0, %v2150
        %v2152 = vpop.f32.mrb[0].mxu0
        %2153 = vmatprep.mubr.f32.mxu0 %v1839
        %2154 = vmatmul.mubr.f32.gmra.mrb[0].mxu0 %v1838
        %v2155 = vpop.f32.mrb[0].mxu0
        %v2156 = vadd.f32 0.0, %v2155
        %v2157 = vpop.f32.mrb[0].mxu0
        %2158 = vmatprep.mubr.f32.mxu0 %v1842
        %2159 = vmatmul.mubr.f32.gmra.mrb[0].mxu0 %v1841
        %v2160 = vpop.f32.mrb[0].mxu0
        %v2161 = vadd.f32 0.0, %v2160
        %v2162 = vpop.f32.mrb[0].mxu0
        %2163 = vmatprep.mubr.f32.mxu0 %v1845
        %2164 = vmatmul.mubr.f32.gmra.mrb[0].mxu0 %v1844
        %v2165 = vpop.f32.mrb[0].mxu0
        %v2166 = vadd.f32 0.0, %v2165
        %v2167 = vpop.f32.mrb[0].mxu0
        %2168 = vmatprep.mubr.f32.mxu0 %v1848
        %2169 = vmatmul.mubr.f32.gmra.mrb[0].mxu0 %v1847
        %v2170 = vpop.f32.mrb[0].mxu0
        %v2171 = vadd.f32 0.0, %v2170
        %v2172 = vpop.f32.mrb[0].mxu0
        %2173 = vmatprep.mubr.f32.mxu0 %v1851
        %2174 = vmatmul.mubr.f32.gmra.mrb[0].mxu0 %v1850
        %v2175 = vpop.f32.mrb[0].mxu0
        %v2176 = vadd.f32 0.0, %v2175
        %v2177 = vpop.f32.mrb[0].mxu0
        %2178 = vmatprep.mubr.f32.mxu0 %v1854
        %2179 = vmatmul.mubr.f32.gmra.mrb[0].mxu0 %v1853
        %v2180 = vpop.f32.mrb[0].mxu0
        %v2181 = vadd.f32 0.0, %v2180
        %v2182 = vpop.f32.mrb[0].mxu0
        %2183 = vmatprep.mubr.f32.mxu0 %v1857
        %2184 = vmatmul.mubr.f32.gmra.mrb[0].mxu0 %v1856
        %v2185 = vpop.f32.mrb[0].mxu0
        %v2186 = vadd.f32 0.0, %v2185
        %v2187 = vpop.f32.mrb[0].mxu0
        %2188 = vmatprep.mubr.f32.mxu0 %v1860
        %2189 = vmatmul.mubr.f32.gmra.mrb[0].mxu0 %v1859
        %v2190 = vpop.f32.mrb[0].mxu0
        %v2191 = vadd.f32 0.0, %v2190
        %v2192 = vpop.f32.mrb[0].mxu0
        %2193 = vmatprep.mubr.f32.mxu0 %v1863
        %2194 = vmatmul.mubr.f32.gmra.mrb[0].mxu0 %v1862
        %v2195 = vpop.f32.mrb[0].mxu0
        %v2196 = vadd.f32 0.0, %v2195
        %v2197 = vpop.f32.mrb[0].mxu0
        %2198 = vmatprep.mubr.f32.mxu0 %v1866
        %2199 = vmatmul.mubr.f32.gmra.mrb[0].mxu0 %v1865
        %v2200 = vpop.f32.mrb[0].mxu0
        %v2201 = vadd.f32 0.0, %v2200
        %v2202 = vpop.f32.mrb[0].mxu0
        %2203 = vmatprep.mubr.f32.mxu0 %v1869
        %2204 = vmatmul.mubr.f32.gmra.mrb[0].mxu0 %v1868
        %v2205 = vpop.f32.mrb[0].mxu0
        %v2206 = vadd.f32 0.0, %v2205
        %v2207 = vpop.f32.mrb[0].mxu0
        %2208 = vmatprep.mubr.f32.mxu0 %v1872
        %2209 = vmatmul.mubr.f32.gmra.mrb[0].mxu0 %v1871
        %v2210 = vpop.f32.mrb[0].mxu0
        %v2211 = vadd.f32 0.0, %v2210
        %v2212 = vpop.f32.mrb[0].mxu0
        %2213 = vmatprep.mubr.f32.mxu0 %v1875
        %2214 = vmatmul.mubr.f32.gmra.mrb[0].mxu0 %v1874
        %v2215 = vpop.f32.mrb[0].mxu0
        %v2216 = vadd.f32 0.0, %v2215
        %v2217 = vpop.f32.mrb[0].mxu0
        %2218 = vmatprep.mubr.f32.mxu0 %v1878
        %2219 = vmatmul.mubr.f32.gmra.mrb[0].mxu0 %v1877
        %v2220 = vpop.f32.mrb[0].mxu0
        %v2221 = vadd.f32 0.0, %v2220
        %v2222 = vpop.f32.mrb[0].mxu0
        %2223 = vmatprep.mubr.f32.mxu0 %v1881
        %2224 = vmatmul.mubr.f32.gmra.mrb[0].mxu0 %v1880
        %v2225 = vpop.f32.mrb[0].mxu0
        %v2226 = vadd.f32 0.0, %v2225
        %v2227 = vpop.f32.mrb[0].mxu0
        %2228 = vmatprep.mubr.f32.mxu0 %v1884
        %2229 = vmatmul.mubr.f32.gmra.mrb[0].mxu0 %v1883
        %v2230 = vpop.f32.mrb[0].mxu0
        %v2231 = vadd.f32 0.0, %v2230
        %v2232 = vpop.f32.mrb[0].mxu0
        %2233 = vmatprep.mubr.f32.mxu0 %v1887
        %2234 = vmatmul.mubr.f32.gmra.mrb[0].mxu0 %v1886
        %v2235 = vpop.f32.mrb[0].mxu0
        %v2236 = vadd.f32 0.0, %v2235
        %v2237 = vpop.f32.mrb[0].mxu0
        %2238 = vmatprep.mubr.f32.mxu0 %v1890
        %2239 = vmatmul.mubr.f32.gmra.mrb[0].mxu0 %v1889
        %v2240 = vpop.f32.mrb[0].mxu0
        %v2241 = vadd.f32 0.0, %v2240
        %v2242 = vpop.f32.mrb[0].mxu0
        %2243 = vmatprep.mubr.f32.mxu0 %v1893
        %2244 = vmatmul.mubr.f32.gmra.mrb[0].mxu0 %v1892
        %v2245 = vpop.f32.mrb[0].mxu0
        %v2246 = vadd.f32 0.0, %v2245
        %v2247 = vpop.f32.mrb[0].mxu0
        %2248 = vmatprep.mubr.f32.mxu0 %v1896
        %2249 = vmatmul.mubr.f32.gmra.mrb[0].mxu0 %v1895
        %v2250 = vpop.f32.mrb[0].mxu0
        %v2251 = vadd.f32 0.0, %v2250
        %v2252 = vpop.f32.mrb[0].mxu0
        %2253 = vmatprep.mubr.f32.mxu0 %v1899
        %2254 = vmatmul.mubr.f32.gmra.mrb[0].mxu0 %v1898
        %v2255 = vpop.f32.mrb[0].mxu0
        %v2256 = vadd.f32 0.0, %v2255
        %v2257 = vpop.f32.mrb[0].mxu0
        %2258 = vmatprep.mubr.f32.mxu0 %v1902
        %2259 = vmatmul.mubr.f32.gmra.mrb[0].mxu0 %v1901
        %v2260 = vpop.f32.mrb[0].mxu0
        %v2261 = vadd.f32 0.0, %v2260
        %v2262 = vpop.f32.mrb[0].mxu0
        %2263 = vmatprep.mubr.f32.mxu0 %v1905
        %2264 = vmatmul.mubr.f32.gmra.mrb[0].mxu0 %v1904
        %v2265 = vpop.f32.mrb[0].mxu0
        %v2266 = vadd.f32 0.0, %v2265
        %v2267 = vpop.f32.mrb[0].mxu0
        %2268 = vmatprep.mubr.f32.mxu0 %v1908
        %2269 = vmatmul.mubr.f32.gmra.mrb[0].mxu0 %v1907
        %v2270 = vpop.f32.mrb[0].mxu0
        %v2271 = vadd.f32 0.0, %v2270
        %v2272 = vpop.f32.mrb[0].mxu0
        %2273 = vmatprep.mubr.f32.mxu0 %v1911
        %2274 = vmatmul.mubr.f32.gmra.mrb[0].mxu0 %v1910
        %v2275 = vpop.f32.mrb[0].mxu0
        %v2276 = vadd.f32 0.0, %v2275
        %v2277 = vpop.f32.mrb[0].mxu0
        %2278 = vmatprep.mubr.f32.mxu0 %v1914
        %2279 = vmatmul.mubr.f32.gmra.mrb[0].mxu0 %v1913
        %v2280 = vpop.f32.mrb[0].mxu0
        %v2281 = vadd.f32 0.0, %v2280
        %v2282 = vpop.f32.mrb[0].mxu0
        %2283 = vmatprep.mubr.f32.mxu0 %v1917
        %2284 = vmatmul.mubr.f32.gmra.mrb[0].mxu0 %v1916
        %v2285 = vpop.f32.mrb[0].mxu0
        %v2286 = vadd.f32 0.0, %v2285
        %v2287 = vpop.f32.mrb[0].mxu0
        %2288 = vmatprep.mubr.f32.mxu0 %v1920
        %2289 = vmatmul.mubr.f32.gmra.mrb[0].mxu0 %v1919
        %v2290 = vpop.f32.mrb[0].mxu0
        %v2291 = vadd.f32 0.0, %v2290
        %v2292 = vpop.f32.mrb[0].mxu0
        %2293 = vmatprep.mubr.f32.mxu0 %v1923
        %2294 = vmatmul.mubr.f32.gmra.mrb[0].mxu0 %v1922
        %v2295 = vpop.f32.mrb[0].mxu0
        %v2296 = vadd.f32 0.0, %v2295
        %v2297 = vpop.f32.mrb[0].mxu0
        %2298 = vmatprep.mubr.f32.mxu0 %v1926
        %2299 = vmatmul.mubr.f32.gmra.mrb[0].mxu0 %v1925
        %v2300 = vpop.f32.mrb[0].mxu0
        %v2301 = vadd.f32 0.0, %v2300
        %v2302 = vpop.f32.mrb[0].mxu0
        %2303 = vmatprep.mubr.f32.mxu0 %v1929
        %2304 = vmatmul.mubr.f32.gmra.mrb[0].mxu0 %v1928
        %v2305 = vpop.f32.mrb[0].mxu0
        %v2306 = vadd.f32 0.0, %v2305
        %v2307 = vpop.f32.mrb[0].mxu0
        %2308 = vmatprep.mubr.f32.mxu0 %v1932
        %2309 = vmatmul.mubr.f32.gmra.mrb[0].mxu0 %v1931
        %v2310 = vpop.f32.mrb[0].mxu0
        %v2311 = vadd.f32 0.0, %v2310
        %v2312 = vpop.f32.mrb[0].mxu0
        %2313 = vmatprep.mubr.f32.mxu0 %v1935
        %2314 = vmatmul.mubr.f32.gmra.mrb[0].mxu0 %v1934
        %v2315 = vpop.f32.mrb[0].mxu0
        %v2316 = vadd.f32 0.0, %v2315
        %v2317 = vpop.f32.mrb[0].mxu0
        %2318 = vmatprep.mubr.f32.mxu0 %v1938
        %2319 = vmatmul.mubr.f32.gmra.mrb[0].mxu0 %v1937
        %v2320 = vpop.f32.mrb[0].mxu0
        %v2321 = vadd.f32 0.0, %v2320
        %v2322 = vpop.f32.mrb[0].mxu0
        %2323 = vmatprep.mubr.f32.mxu0 %v1941
        %2324 = vmatmul.mubr.f32.gmra.mrb[0].mxu0 %v1940
        %v2325 = vpop.f32.mrb[0].mxu0
        %v2326 = vadd.f32 0.0, %v2325
        %v2327 = vpop.f32.mrb[0].mxu0
        %2328 = vmatprep.mubr.f32.mxu0 %v1944
        %2329 = vmatmul.mubr.f32.gmra.mrb[0].mxu0 %v1943
        %v2330 = vpop.f32.mrb[0].mxu0
        %v2331 = vadd.f32 0.0, %v2330
        %v2332 = vpop.f32.mrb[0].mxu0
        %2333 = vmatprep.mubr.f32.mxu0 %v1947
        %2334 = vmatmul.mubr.f32.gmra.mrb[0].mxu0 %v1946
        %v2335 = vpop.f32.mrb[0].mxu0
        %v2336 = vadd.f32 0.0, %v2335
        %v2337 = vpop.f32.mrb[0].mxu0
        %2338 = vmatprep.mubr.f32.mxu0 %v1950
        %2339 = vmatmul.mubr.f32.gmra.mrb[0].mxu0 %v1949
        %v2340 = vpop.f32.mrb[0].mxu0
        %v2341 = vadd.f32 0.0, %v2340
        %v2342 = vpop.f32.mrb[0].mxu0
        %2343 = vmatprep.mubr.f32.mxu0 %v1953
        %2344 = vmatmul.mubr.f32.gmra.mrb[0].mxu0 %v1952
        %v2345 = vpop.f32.mrb[0].mxu0
        %v2346 = vadd.f32 0.0, %v2345
        %v2347 = vpop.f32.mrb[0].mxu0
        %2348 = vmatprep.mubr.f32.mxu0 %v1956
        %2349 = vmatmul.mubr.f32.gmra.mrb[0].mxu0 %v1955
        %v2350 = vpop.f32.mrb[0].mxu0
        %v2351 = vadd.f32 0.0, %v2350
        %v2352 = vpop.f32.mrb[0].mxu0
        %2353 = vmatprep.mubr.f32.mxu0 %v1959
        %2354 = vmatmul.mubr.f32.gmra.mrb[0].mxu0 %v1958
        %v2355 = vpop.f32.mrb[0].mxu0
        %v2356 = vadd.f32 0.0, %v2355
        %v2357 = vpop.f32.mrb[0].mxu0
        %2358 = vmatprep.mubr.f32.mxu0 %v1962
        %2359 = vmatmul.mubr.f32.gmra.mrb[0].mxu0 %v1961
        %v2360 = vpop.f32.mrb[0].mxu0
        %v2361 = vadd.f32 0.0, %v2360
        %v2362 = vpop.f32.mrb[0].mxu0
        %2363 = vmatprep.mubr.f32.mxu0 %v1965
        %2364 = vmatmul.mubr.f32.gmra.mrb[0].mxu0 %v1964
        %v2365 = vpop.f32.mrb[0].mxu0
        %v2366 = vadd.f32 0.0, %v2365
        %v2367 = vpop.f32.mrb[0].mxu0
        %2368 = vmatprep.mubr.f32.mxu0 %v1968
        %2369 = vmatmul.mubr.f32.gmra.mrb[0].mxu0 %v1967
        %v2370 = vpop.f32.mrb[0].mxu0
        %v2371 = vadd.f32 0.0, %v2370
        %v2372 = vpop.f32.mrb[0].mxu0
        %2373 = vmatprep.mubr.f32.mxu0 %v1971
        %2374 = vmatmul.mubr.f32.gmra.mrb[0].mxu0 %v1970
        %v2375 = vpop.f32.mrb[0].mxu0
        %v2376 = vadd.f32 0.0, %v2375
        %v2377 = vpop.f32.mrb[0].mxu0
        %2378 = vmatprep.mubr.f32.mxu0 %v1974
        %2379 = vmatmul.mubr.f32.gmra.mrb[0].mxu0 %v1973
        %v2380 = vpop.f32.mrb[0].mxu0
        %v2381 = vadd.f32 0.0, %v2380
        %v2382 = vpop.f32.mrb[0].mxu0
        %2383 = vmatprep.mubr.f32.mxu0 %v1977
        %2384 = vmatmul.mubr.f32.gmra.mrb[0].mxu0 %v1976
        %v2385 = vpop.f32.mrb[0].mxu0
        %v2386 = vadd.f32 0.0, %v2385
        %v2387 = vpop.f32.mrb[0].mxu0
        %2388 = vmatprep.mubr.f32.mxu0 %v1980
        %2389 = vmatmul.mubr.f32.gmra.mrb[0].mxu0 %v1979
        %v2390 = vpop.f32.mrb[0].mxu0
        %v2391 = vadd.f32 0.0, %v2390
        %v2392 = vpop.f32.mrb[0].mxu0
        %2393 = vmatprep.mubr.f32.mxu0 %v1983
        %2394 = vmatmul.mubr.f32.gmra.mrb[0].mxu0 %v1982
        %v2395 = vpop.f32.mrb[0].mxu0
        %v2396 = vadd.f32 0.0, %v2395
        %v2397 = vpop.f32.mrb[0].mxu0
        %2398 = vmatprep.mubr.f32.mxu0 %v1986
        %2399 = vmatmul.mubr.f32.gmra.mrb[0].mxu0 %v1985
        %v2400 = vpop.f32.mrb[0].mxu0
        %v2401 = vadd.f32 0.0, %v2400
        %v2402 = vpop.f32.mrb[0].mxu0
        %2403 = vmatprep.mubr.f32.mxu0 %v1989
        %2404 = vmatmul.mubr.f32.gmra.mrb[0].mxu0 %v1988
        %v2405 = vpop.f32.mrb[0].mxu0
        %v2406 = vadd.f32 0.0, %v2405
        %v2407 = vpop.f32.mrb[0].mxu0
        %2408 = vmatprep.mubr.f32.mxu0 %v1992
        %2409 = vmatmul.mubr.f32.gmra.mrb[0].mxu0 %v1991
        %v2410 = vpop.f32.mrb[0].mxu0
        %v2411 = vadd.f32 0.0, %v2410
        %v2412 = vpop.f32.mrb[0].mxu0
        %2413 = vmatprep.mubr.f32.mxu0 %v1995
        %2414 = vmatmul.mubr.f32.gmra.mrb[0].mxu0 %v1994
        %v2415 = vpop.f32.mrb[0].mxu0
        %v2416 = vadd.f32 0.0, %v2415
        %v2417 = vpop.f32.mrb[0].mxu0
        %2418 = vmatprep.mubr.f32.mxu0 %v1998
        %2419 = vmatmul.mubr.f32.gmra.mrb[0].mxu0 %v1997
        %v2420 = vpop.f32.mrb[0].mxu0
        %v2421 = vadd.f32 0.0, %v2420
        %v2422 = vpop.f32.mrb[0].mxu0
        %2423 = vdwg.mxu0
        %2424 = vmatprep.subr.mxu0 0.0
        %2425 = vmatpush1.msra.mxu0 %v2033
        %2426 = vmatprep.subr.mxu0 0.0
        %2427 = vmatpush1.msra.mxu0 %v2034
        %2428 = vmatprep.subr.mxu0 0.0
        %2429 = vmatpush1.msra.mxu0 %v2035
        %2430 = vmatprep.subr.mxu0 0.0
        %2431 = vmatpush1.msra.mxu0 %v2036
        %2432 = vmatprep.subr.mxu0 0.0
        %2433 = vmatpush1.msra.mxu0 %v2037
        %2434 = vmatprep.subr.mxu0 0.0
        %2435 = vmatpush1.msra.mxu0 %v2038
        %2436 = vmatprep.subr.mxu0 0.0
        %2437 = vmatpush1.msra.mxu0 %v2039
        %2438 = vmatprep.subr.mxu0 0.0
        %2439 = vmatpush1.msra.mxu0 %v2040
        %2440 = vmatprep.subr.mxu0 0.0
        %2441 = vmatpush1.msra.mxu0 %v2041
        %2442 = vmatprep.subr.mxu0 0.0
        %2443 = vmatpush1.msra.mxu0 %v2042
        %2444 = vmatprep.subr.mxu0 0.0
        %2445 = vmatpush1.msra.mxu0 %v2043
        %2446 = vmatprep.subr.mxu0 0.0
        %2447 = vmatpush1.msra.mxu0 %v2044
        %2448 = vmatprep.subr.mxu0 0.0
        %2449 = vmatpush1.msra.mxu0 %v2045
        %2450 = vmatprep.subr.mxu0 0.0
        %2451 = vmatpush1.msra.mxu0 %v2046
        %2452 = vmatprep.subr.mxu0 0.0
        %2453 = vmatpush1.msra.mxu0 %v2047
        %2454 = vmatprep.subr.mxu0 0.0
        %2455 = vmatpush1.msra.mxu0 %v2048
        %2456 = vmatprep.subr.mxu0 0.0
        %2457 = vmatpush1.msra.mxu0 0.0
        %2458 = vmatprep.subr.mxu0 0.0
        %2459 = vmatpush1.msra.mxu0 0.0
        %2460 = vmatprep.subr.mxu0 0.0
        %2461 = vmatpush1.msra.mxu0 0.0
        %2462 = vmatprep.subr.mxu0 0.0
        %2463 = vmatpush1.msra.mxu0 0.0
        %2464 = vmatprep.subr.mxu0 0.0
        %2465 = vmatpush1.msra.mxu0 0.0
        %2466 = vmatprep.subr.mxu0 0.0
        %2467 = vmatpush1.msra.mxu0 0.0
        %2468 = vmatprep.subr.mxu0 0.0
        %2469 = vmatpush1.msra.mxu0 0.0
        %2470 = vmatprep.subr.mxu0 0.0
        %2471 = vmatpush1.msra.mxu0 0.0
        %2472 = vmatprep.subr.mxu0 0.0
        %2473 = vmatpush1.msra.mxu0 0.0
        %2474 = vmatprep.subr.mxu0 0.0
        %2475 = vmatpush1.msra.mxu0 0.0
        %2476 = vmatprep.subr.mxu0 0.0
        %2477 = vmatpush1.msra.mxu0 0.0
        %2478 = vmatprep.subr.mxu0 0.0
        %2479 = vmatpush1.msra.mxu0 0.0
        %2480 = vmatprep.subr.mxu0 0.0
        %2481 = vmatpush1.msra.mxu0 0.0
        %2482 = vmatprep.subr.mxu0 0.0
        %2483 = vmatpush1.msra.mxu0 0.0
        %2484 = vmatprep.subr.mxu0 0.0
        %2485 = vmatpush1.msra.mxu0 0.0
        %2486 = vmatprep.subr.mxu0 0.0
        %2487 = vmatpush1.msra.mxu0 0.0
        %2488 = vmatprep.mubr.f32.mxu0 0.0
        %2489 = vmatmul.mubr.f32.gmra.mrb[0].mxu0 %v1816
        %v2490 = vpop.f32.mrb[0].mxu0
        %v2491 = vadd.f32 %v2116, %v2490
        %v2492 = vpop.f32.mrb[0].mxu0
        %2493 = vmatprep.mubr.f32.mxu0 0.0
        %2494 = vmatmul.mubr.f32.gmra.mrb[0].mxu0 %v1819
        %v2495 = vpop.f32.mrb[0].mxu0
        %v2496 = vadd.f32 %v2121, %v2495
        %v2497 = vpop.f32.mrb[0].mxu0
        %2498 = vmatprep.mubr.f32.mxu0 0.0
        %2499 = vmatmul.mubr.f32.gmra.mrb[0].mxu0 %v1822
        %v2500 = vpop.f32.mrb[0].mxu0
        %v2501 = vadd.f32 %v2126, %v2500
        %v2502 = vpop.f32.mrb[0].mxu0
        %2503 = vmatprep.mubr.f32.mxu0 0.0
        %2504 = vmatmul.mubr.f32.gmra.mrb[0].mxu0 %v1825
        %v2505 = vpop.f32.mrb[0].mxu0
        %v2506 = vadd.f32 %v2131, %v2505
        %v2507 = vpop.f32.mrb[0].mxu0
        %2508 = vmatprep.mubr.f32.mxu0 0.0
        %2509 = vmatmul.mubr.f32.gmra.mrb[0].mxu0 %v1828
        %v2510 = vpop.f32.mrb[0].mxu0
        %v2511 = vadd.f32 %v2136, %v2510
        %v2512 = vpop.f32.mrb[0].mxu0
        %2513 = vmatprep.mubr.f32.mxu0 0.0
        %2514 = vmatmul.mubr.f32.gmra.mrb[0].mxu0 %v1831
        %v2515 = vpop.f32.mrb[0].mxu0
        %v2516 = vadd.f32 %v2141, %v2515
        %v2517 = vpop.f32.mrb[0].mxu0
        %2518 = vmatprep.mubr.f32.mxu0 0.0
        %2519 = vmatmul.mubr.f32.gmra.mrb[0].mxu0 %v1834
        %v2520 = vpop.f32.mrb[0].mxu0
        %v2521 = vadd.f32 %v2146, %v2520
        %v2522 = vpop.f32.mrb[0].mxu0
        %2523 = vmatprep.mubr.f32.mxu0 0.0
        %2524 = vmatmul.mubr.f32.gmra.mrb[0].mxu0 %v1837
        %v2525 = vpop.f32.mrb[0].mxu0
        %v2526 = vadd.f32 %v2151, %v2525
        %v2527 = vpop.f32.mrb[0].mxu0
        %2528 = vmatprep.mubr.f32.mxu0 0.0
        %2529 = vmatmul.mubr.f32.gmra.mrb[0].mxu0 %v1840
        %v2530 = vpop.f32.mrb[0].mxu0
        %v2531 = vadd.f32 %v2156, %v2530
        %v2532 = vpop.f32.mrb[0].mxu0
        %2533 = vmatprep.mubr.f32.mxu0 0.0
        %2534 = vmatmul.mubr.f32.gmra.mrb[0].mxu0 %v1843
        %v2535 = vpop.f32.mrb[0].mxu0
        %v2536 = vadd.f32 %v2161, %v2535
        %v2537 = vpop.f32.mrb[0].mxu0
        %2538 = vmatprep.mubr.f32.mxu0 0.0
        %2539 = vmatmul.mubr.f32.gmra.mrb[0].mxu0 %v1846
        %v2540 = vpop.f32.mrb[0].mxu0
        %v2541 = vadd.f32 %v2166, %v2540
        %v2542 = vpop.f32.mrb[0].mxu0
        %2543 = vmatprep.mubr.f32.mxu0 0.0
        %2544 = vmatmul.mubr.f32.gmra.mrb[0].mxu0 %v1849
        %v2545 = vpop.f32.mrb[0].mxu0
        %v2546 = vadd.f32 %v2171, %v2545
        %v2547 = vpop.f32.mrb[0].mxu0
        %2548 = vmatprep.mubr.f32.mxu0 0.0
        %2549 = vmatmul.mubr.f32.gmra.mrb[0].mxu0 %v1852
        %v2550 = vpop.f32.mrb[0].mxu0
        %v2551 = vadd.f32 %v2176, %v2550
        %v2552 = vpop.f32.mrb[0].mxu0
        %2553 = vmatprep.mubr.f32.mxu0 0.0
        %2554 = vmatmul.mubr.f32.gmra.mrb[0].mxu0 %v1855
        %v2555 = vpop.f32.mrb[0].mxu0
        %v2556 = vadd.f32 %v2181, %v2555
        %v2557 = vpop.f32.mrb[0].mxu0
        %2558 = vmatprep.mubr.f32.mxu0 0.0
        %2559 = vmatmul.mubr.f32.gmra.mrb[0].mxu0 %v1858
        %v2560 = vpop.f32.mrb[0].mxu0
        %v2561 = vadd.f32 %v2186, %v2560
        %v2562 = vpop.f32.mrb[0].mxu0
        %2563 = vmatprep.mubr.f32.mxu0 0.0
        %2564 = vmatmul.mubr.f32.gmra.mrb[0].mxu0 %v1861
        %v2565 = vpop.f32.mrb[0].mxu0
        %v2566 = vadd.f32 %v2191, %v2565
        %v2567 = vpop.f32.mrb[0].mxu0
        %2568 = vmatprep.mubr.f32.mxu0 0.0
        %2569 = vmatmul.mubr.f32.gmra.mrb[0].mxu0 %v1864
        %v2570 = vpop.f32.mrb[0].mxu0
        %v2571 = vadd.f32 %v2196, %v2570
        %v2572 = vpop.f32.mrb[0].mxu0
        %2573 = vmatprep.mubr.f32.mxu0 0.0
        %2574 = vmatmul.mubr.f32.gmra.mrb[0].mxu0 %v1867
        %v2575 = vpop.f32.mrb[0].mxu0
        %v2576 = vadd.f32 %v2201, %v2575
        %v2577 = vpop.f32.mrb[0].mxu0
        %2578 = vmatprep.mubr.f32.mxu0 0.0
        %2579 = vmatmul.mubr.f32.gmra.mrb[0].mxu0 %v1870
        %v2580 = vpop.f32.mrb[0].mxu0
        %v2581 = vadd.f32 %v2206, %v2580
        %v2582 = vpop.f32.mrb[0].mxu0
        %2583 = vmatprep.mubr.f32.mxu0 0.0
        %2584 = vmatmul.mubr.f32.gmra.mrb[0].mxu0 %v1873
        %v2585 = vpop.f32.mrb[0].mxu0
        %v2586 = vadd.f32 %v2211, %v2585
        %v2587 = vpop.f32.mrb[0].mxu0
        %2588 = vmatprep.mubr.f32.mxu0 0.0
        %2589 = vmatmul.mubr.f32.gmra.mrb[0].mxu0 %v1876
        %v2590 = vpop.f32.mrb[0].mxu0
        %v2591 = vadd.f32 %v2216, %v2590
        %v2592 = vpop.f32.mrb[0].mxu0
        %2593 = vmatprep.mubr.f32.mxu0 0.0
        %2594 = vmatmul.mubr.f32.gmra.mrb[0].mxu0 %v1879
        %v2595 = vpop.f32.mrb[0].mxu0
        %v2596 = vadd.f32 %v2221, %v2595
        %v2597 = vpop.f32.mrb[0].mxu0
        %2598 = vmatprep.mubr.f32.mxu0 0.0
        %2599 = vmatmul.mubr.f32.gmra.mrb[0].mxu0 %v1882
        %v2600 = vpop.f32.mrb[0].mxu0
        %v2601 = vadd.f32 %v2226, %v2600
        %v2602 = vpop.f32.mrb[0].mxu0
        %2603 = vmatprep.mubr.f32.mxu0 0.0
        %2604 = vmatmul.mubr.f32.gmra.mrb[0].mxu0 %v1885
        %v2605 = vpop.f32.mrb[0].mxu0
        %v2606 = vadd.f32 %v2231, %v2605
        %v2607 = vpop.f32.mrb[0].mxu0
        %2608 = vmatprep.mubr.f32.mxu0 0.0
        %2609 = vmatmul.mubr.f32.gmra.mrb[0].mxu0 %v1888
        %v2610 = vpop.f32.mrb[0].mxu0
        %v2611 = vadd.f32 %v2236, %v2610
        %v2612 = vpop.f32.mrb[0].mxu0
        %2613 = vmatprep.mubr.f32.mxu0 0.0
        %2614 = vmatmul.mubr.f32.gmra.mrb[0].mxu0 %v1891
        %v2615 = vpop.f32.mrb[0].mxu0
        %v2616 = vadd.f32 %v2241, %v2615
        %v2617 = vpop.f32.mrb[0].mxu0
        %2618 = vmatprep.mubr.f32.mxu0 0.0
        %2619 = vmatmul.mubr.f32.gmra.mrb[0].mxu0 %v1894
        %v2620 = vpop.f32.mrb[0].mxu0
        %v2621 = vadd.f32 %v2246, %v2620
        %v2622 = vpop.f32.mrb[0].mxu0
        %2623 = vmatprep.mubr.f32.mxu0 0.0
        %2624 = vmatmul.mubr.f32.gmra.mrb[0].mxu0 %v1897
        %v2625 = vpop.f32.mrb[0].mxu0
        %v2626 = vadd.f32 %v2251, %v2625
        %v2627 = vpop.f32.mrb[0].mxu0
        %2628 = vmatprep.mubr.f32.mxu0 0.0
        %2629 = vmatmul.mubr.f32.gmra.mrb[0].mxu0 %v1900
        %v2630 = vpop.f32.mrb[0].mxu0
        %v2631 = vadd.f32 %v2256, %v2630
        %v2632 = vpop.f32.mrb[0].mxu0
        %2633 = vmatprep.mubr.f32.mxu0 0.0
        %2634 = vmatmul.mubr.f32.gmra.mrb[0].mxu0 %v1903
        %v2635 = vpop.f32.mrb[0].mxu0
        %v2636 = vadd.f32 %v2261, %v2635
        %v2637 = vpop.f32.mrb[0].mxu0
        %2638 = vmatprep.mubr.f32.mxu0 0.0
        %2639 = vmatmul.mubr.f32.gmra.mrb[0].mxu0 %v1906
        %v2640 = vpop.f32.mrb[0].mxu0
        %v2641 = vadd.f32 %v2266, %v2640
        %v2642 = vpop.f32.mrb[0].mxu0
        %2643 = vmatprep.mubr.f32.mxu0 0.0
        %2644 = vmatmul.mubr.f32.gmra.mrb[0].mxu0 %v1909
        %v2645 = vpop.f32.mrb[0].mxu0
        %v2646 = vadd.f32 %v2271, %v2645
        %v2647 = vpop.f32.mrb[0].mxu0
        %2648 = vmatprep.mubr.f32.mxu0 0.0
        %2649 = vmatmul.mubr.f32.gmra.mrb[0].mxu0 %v1912
        %v2650 = vpop.f32.mrb[0].mxu0
        %v2651 = vadd.f32 %v2276, %v2650
        %v2652 = vpop.f32.mrb[0].mxu0
        %2653 = vmatprep.mubr.f32.mxu0 0.0
        %2654 = vmatmul.mubr.f32.gmra.mrb[0].mxu0 %v1915
        %v2655 = vpop.f32.mrb[0].mxu0
        %v2656 = vadd.f32 %v2281, %v2655
        %v2657 = vpop.f32.mrb[0].mxu0
        %2658 = vmatprep.mubr.f32.mxu0 0.0
        %2659 = vmatmul.mubr.f32.gmra.mrb[0].mxu0 %v1918
        %v2660 = vpop.f32.mrb[0].mxu0
        %v2661 = vadd.f32 %v2286, %v2660
        %v2662 = vpop.f32.mrb[0].mxu0
        %2663 = vmatprep.mubr.f32.mxu0 0.0
        %2664 = vmatmul.mubr.f32.gmra.mrb[0].mxu0 %v1921
        %v2665 = vpop.f32.mrb[0].mxu0
        %v2666 = vadd.f32 %v2291, %v2665
        %v2667 = vpop.f32.mrb[0].mxu0
        %2668 = vmatprep.mubr.f32.mxu0 0.0
        %2669 = vmatmul.mubr.f32.gmra.mrb[0].mxu0 %v1924
        %v2670 = vpop.f32.mrb[0].mxu0
        %v2671 = vadd.f32 %v2296, %v2670
        %v2672 = vpop.f32.mrb[0].mxu0
        %2673 = vmatprep.mubr.f32.mxu0 0.0
        %2674 = vmatmul.mubr.f32.gmra.mrb[0].mxu0 %v1927
        %v2675 = vpop.f32.mrb[0].mxu0
        %v2676 = vadd.f32 %v2301, %v2675
        %v2677 = vpop.f32.mrb[0].mxu0
        %2678 = vmatprep.mubr.f32.mxu0 0.0
        %2679 = vmatmul.mubr.f32.gmra.mrb[0].mxu0 %v1930
        %v2680 = vpop.f32.mrb[0].mxu0
        %v2681 = vadd.f32 %v2306, %v2680
        %v2682 = vpop.f32.mrb[0].mxu0
        %2683 = vmatprep.mubr.f32.mxu0 0.0
        %2684 = vmatmul.mubr.f32.gmra.mrb[0].mxu0 %v1933
        %v2685 = vpop.f32.mrb[0].mxu0
        %v2686 = vadd.f32 %v2311, %v2685
        %v2687 = vpop.f32.mrb[0].mxu0
        %2688 = vmatprep.mubr.f32.mxu0 0.0
        %2689 = vmatmul.mubr.f32.gmra.mrb[0].mxu0 %v1936
        %v2690 = vpop.f32.mrb[0].mxu0
        %v2691 = vadd.f32 %v2316, %v2690
        %v2692 = vpop.f32.mrb[0].mxu0
        %2693 = vmatprep.mubr.f32.mxu0 0.0
        %2694 = vmatmul.mubr.f32.gmra.mrb[0].mxu0 %v1939
        %v2695 = vpop.f32.mrb[0].mxu0
        %v2696 = vadd.f32 %v2321, %v2695
        %v2697 = vpop.f32.mrb[0].mxu0
        %2698 = vmatprep.mubr.f32.mxu0 0.0
        %2699 = vmatmul.mubr.f32.gmra.mrb[0].mxu0 %v1942
        %v2700 = vpop.f32.mrb[0].mxu0
        %v2701 = vadd.f32 %v2326, %v2700
        %v2702 = vpop.f32.mrb[0].mxu0
        %2703 = vmatprep.mubr.f32.mxu0 0.0
        %2704 = vmatmul.mubr.f32.gmra.mrb[0].mxu0 %v1945
        %v2705 = vpop.f32.mrb[0].mxu0
        %v2706 = vadd.f32 %v2331, %v2705
        %v2707 = vpop.f32.mrb[0].mxu0
        %2708 = vmatprep.mubr.f32.mxu0 0.0
        %2709 = vmatmul.mubr.f32.gmra.mrb[0].mxu0 %v1948
        %v2710 = vpop.f32.mrb[0].mxu0
        %v2711 = vadd.f32 %v2336, %v2710
        %v2712 = vpop.f32.mrb[0].mxu0
        %2713 = vmatprep.mubr.f32.mxu0 0.0
        %2714 = vmatmul.mubr.f32.gmra.mrb[0].mxu0 %v1951
        %v2715 = vpop.f32.mrb[0].mxu0
        %v2716 = vadd.f32 %v2341, %v2715
        %v2717 = vpop.f32.mrb[0].mxu0
        %2718 = vmatprep.mubr.f32.mxu0 0.0
        %2719 = vmatmul.mubr.f32.gmra.mrb[0].mxu0 %v1954
        %v2720 = vpop.f32.mrb[0].mxu0
        %v2721 = vadd.f32 %v2346, %v2720
        %v2722 = vpop.f32.mrb[0].mxu0
        %2723 = vmatprep.mubr.f32.mxu0 0.0
        %2724 = vmatmul.mubr.f32.gmra.mrb[0].mxu0 %v1957
        %v2725 = vpop.f32.mrb[0].mxu0
        %v2726 = vadd.f32 %v2351, %v2725
        %v2727 = vpop.f32.mrb[0].mxu0
        %2728 = vmatprep.mubr.f32.mxu0 0.0
        %2729 = vmatmul.mubr.f32.gmra.mrb[0].mxu0 %v1960
        %v2730 = vpop.f32.mrb[0].mxu0
        %v2731 = vadd.f32 %v2356, %v2730
        %v2732 = vpop.f32.mrb[0].mxu0
        %2733 = vmatprep.mubr.f32.mxu0 0.0
        %2734 = vmatmul.mubr.f32.gmra.mrb[0].mxu0 %v1963
        %v2735 = vpop.f32.mrb[0].mxu0
        %v2736 = vadd.f32 %v2361, %v2735
        %v2737 = vpop.f32.mrb[0].mxu0
        %2738 = vmatprep.mubr.f32.mxu0 0.0
        %2739 = vmatmul.mubr.f32.gmra.mrb[0].mxu0 %v1966
        %v2740 = vpop.f32.mrb[0].mxu0
        %v2741 = vadd.f32 %v2366, %v2740
        %v2742 = vpop.f32.mrb[0].mxu0
        %2743 = vmatprep.mubr.f32.mxu0 0.0
        %2744 = vmatmul.mubr.f32.gmra.mrb[0].mxu0 %v1969
        %v2745 = vpop.f32.mrb[0].mxu0
        %v2746 = vadd.f32 %v2371, %v2745
        %v2747 = vpop.f32.mrb[0].mxu0
        %2748 = vmatprep.mubr.f32.mxu0 0.0
        %2749 = vmatmul.mubr.f32.gmra.mrb[0].mxu0 %v1972
        %v2750 = vpop.f32.mrb[0].mxu0
        %v2751 = vadd.f32 %v2376, %v2750
        %v2752 = vpop.f32.mrb[0].mxu0
        %2753 = vmatprep.mubr.f32.mxu0 0.0
        %2754 = vmatmul.mubr.f32.gmra.mrb[0].mxu0 %v1975
        %v2755 = vpop.f32.mrb[0].mxu0
        %v2756 = vadd.f32 %v2381, %v2755
        %v2757 = vpop.f32.mrb[0].mxu0
        %2758 = vmatprep.mubr.f32.mxu0 0.0
        %2759 = vmatmul.mubr.f32.gmra.mrb[0].mxu0 %v1978
        %v2760 = vpop.f32.mrb[0].mxu0
        %v2761 = vadd.f32 %v2386, %v2760
        %v2762 = vpop.f32.mrb[0].mxu0
        %2763 = vmatprep.mubr.f32.mxu0 0.0
        %2764 = vmatmul.mubr.f32.gmra.mrb[0].mxu0 %v1981
        %v2765 = vpop.f32.mrb[0].mxu0
        %v2766 = vadd.f32 %v2391, %v2765
        %v2767 = vpop.f32.mrb[0].mxu0
        %2768 = vmatprep.mubr.f32.mxu0 0.0
        %2769 = vmatmul.mubr.f32.gmra.mrb[0].mxu0 %v1984
        %v2770 = vpop.f32.mrb[0].mxu0
        %v2771 = vadd.f32 %v2396, %v2770
        %v2772 = vpop.f32.mrb[0].mxu0
        %2773 = vmatprep.mubr.f32.mxu0 0.0
        %2774 = vmatmul.mubr.f32.gmra.mrb[0].mxu0 %v1987
        %v2775 = vpop.f32.mrb[0].mxu0
        %v2776 = vadd.f32 %v2401, %v2775
        %v2777 = vpop.f32.mrb[0].mxu0
        %2778 = vmatprep.mubr.f32.mxu0 0.0
        %2779 = vmatmul.mubr.f32.gmra.mrb[0].mxu0 %v1990
        %v2780 = vpop.f32.mrb[0].mxu0
        %v2781 = vadd.f32 %v2406, %v2780
        %v2782 = vpop.f32.mrb[0].mxu0
        %2783 = vmatprep.mubr.f32.mxu0 0.0
        %2784 = vmatmul.mubr.f32.gmra.mrb[0].mxu0 %v1993
        %v2785 = vpop.f32.mrb[0].mxu0
        %v2786 = vadd.f32 %v2411, %v2785
        %v2787 = vpop.f32.mrb[0].mxu0
        %2788 = vmatprep.mubr.f32.mxu0 0.0
        %2789 = vmatmul.mubr.f32.gmra.mrb[0].mxu0 %v1996
        %v2790 = vpop.f32.mrb[0].mxu0
        %v2791 = vadd.f32 %v2416, %v2790
        %v2792 = vpop.f32.mrb[0].mxu0
        %2793 = vmatprep.mubr.f32.mxu0 0.0
        %2794 = vmatmul.mubr.f32.gmra.mrb[0].mxu0 %v1999
        %v2795 = vpop.f32.mrb[0].mxu0
        %v2796 = vadd.f32 %v2421, %v2795
        %v2797 = vpop.f32.mrb[0].mxu0
        %2798 = vdwg.mxu0
        %v2799 = vld [vmem:[#allocation4] sm:$0xff]
        %v2800 = vld [vmem:[#allocation4 + $0x8] sm:$0xff]
        %v2801 = vld [vmem:[#allocation4 + $0x10] sm:$0xff]
        %v2802 = vld [vmem:[#allocation4 + $0x18] sm:$0xff]
        %v2803 = vld [vmem:[#allocation4 + $0x20] sm:$0xff]
        %v2804 = vld [vmem:[#allocation4 + $0x28] sm:$0xff]
        %v2805 = vld [vmem:[#allocation4 + $0x30] sm:$0xff]
        %v2806 = vld [vmem:[#allocation4 + $0x38] sm:$0xff]
        %v2807 = vld [vmem:[#allocation4 + $0x40] sm:$0xff]
        %v2808 = vld [vmem:[#allocation4 + $0x48] sm:$0xff]
        %v2809 = vld [vmem:[#allocation4 + $0x50] sm:$0xff]
        %v2810 = vld [vmem:[#allocation4 + $0x58] sm:$0xff]
        %v2811 = vld [vmem:[#allocation4 + $0x60] sm:$0xff]
        %v2812 = vld [vmem:[#allocation4 + $0x68] sm:$0xff]
        %v2813 = vld [vmem:[#allocation4 + $0x70] sm:$0xff]
        %v2814 = vld [vmem:[#allocation4 + $0x78] sm:$0xff]
        %v2815 = vld [vmem:[#allocation4 + $0x80] sm:$0xff]
        %v2816 = vld [vmem:[#allocation4 + $0x88] sm:$0xff]
        %v2817 = vld [vmem:[#allocation4 + $0x90] sm:$0xff]
        %v2818 = vld [vmem:[#allocation4 + $0x98] sm:$0xff]
        %v2819 = vld [vmem:[#allocation4 + $0xa0] sm:$0xff]
        %v2820 = vld [vmem:[#allocation4 + $0xa8] sm:$0xff]
        %v2821 = vld [vmem:[#allocation4 + $0xb0] sm:$0xff]
        %v2822 = vld [vmem:[#allocation4 + $0xb8] sm:$0xff]
        %v2823 = vld [vmem:[#allocation4 + $0xc0] sm:$0xff]
        %v2824 = vld [vmem:[#allocation4 + $0xc8] sm:$0xff]
        %v2825 = vld [vmem:[#allocation4 + $0xd0] sm:$0xff]
        %v2826 = vld [vmem:[#allocation4 + $0xd8] sm:$0xff]
        %v2827 = vld [vmem:[#allocation4 + $0xe0] sm:$0xff]
        %v2828 = vld [vmem:[#allocation4 + $0xe8] sm:$0xff]
        %v2829 = vld [vmem:[#allocation4 + $0xf0] sm:$0xff]
        %v2830 = vld [vmem:[#allocation4 + $0xf8] sm:$0xff]
        %v2831 = vld [vmem:[#allocation4 + $0x100] sm:$0xff]
        %v2832 = vld [vmem:[#allocation4 + $0x108] sm:$0xff]
        %v2833 = vld [vmem:[#allocation4 + $0x110] sm:$0xff]
        %v2834 = vld [vmem:[#allocation4 + $0x118] sm:$0xff]
        %v2835 = vld [vmem:[#allocation4 + $0x120] sm:$0xff]
        %v2836 = vld [vmem:[#allocation4 + $0x128] sm:$0xff]
        %v2837 = vld [vmem:[#allocation4 + $0x130] sm:$0xff]
        %v2838 = vld [vmem:[#allocation4 + $0x138] sm:$0xff]
        %v2839 = vld [vmem:[#allocation4 + $0x140] sm:$0xff]
        %v2840 = vld [vmem:[#allocation4 + $0x148] sm:$0xff]
        %v2841 = vld [vmem:[#allocation4 + $0x150] sm:$0xff]
        %v2842 = vld [vmem:[#allocation4 + $0x158] sm:$0xff]
        %v2843 = vld [vmem:[#allocation4 + $0x160] sm:$0xff]
        %v2844 = vld [vmem:[#allocation4 + $0x168] sm:$0xff]
        %v2845 = vld [vmem:[#allocation4 + $0x170] sm:$0xff]
        %v2846 = vld [vmem:[#allocation4 + $0x178] sm:$0xff]
        %v2847 = vld [vmem:[#allocation4 + $0x180] sm:$0xff]
        %v2848 = vld [vmem:[#allocation4 + $0x188] sm:$0xff]
        %v2849 = vld [vmem:[#allocation4 + $0x190] sm:$0xff]
        %v2850 = vld [vmem:[#allocation4 + $0x198] sm:$0xff]
        %v2851 = vld [vmem:[#allocation4 + $0x1a0] sm:$0xff]
        %v2852 = vld [vmem:[#allocation4 + $0x1a8] sm:$0xff]
        %v2853 = vld [vmem:[#allocation4 + $0x1b0] sm:$0xff]
        %v2854 = vld [vmem:[#allocation4 + $0x1b8] sm:$0xff]
        %v2855 = vld [vmem:[#allocation4 + $0x1c0] sm:$0xff]
        %v2856 = vld [vmem:[#allocation4 + $0x1c8] sm:$0xff]
        %v2857 = vld [vmem:[#allocation4 + $0x1d0] sm:$0xff]
        %v2858 = vld [vmem:[#allocation4 + $0x1d8] sm:$0xff]
        %v2859 = vld [vmem:[#allocation4 + $0x1e0] sm:$0xff]
        %v2860 = vld [vmem:[#allocation4 + $0x1e8] sm:$0xff]
        %v2861 = vadd.f32 %v2799, %v2491
        %v2862 = vadd.f32 %v2800, %v2496
        %v2863 = vadd.f32 %v2801, %v2501
        %v2864 = vadd.f32 %v2802, %v2506
        %v2865 = vadd.f32 %v2803, %v2511
        %v2866 = vadd.f32 %v2804, %v2516
        %v2867 = vadd.f32 %v2805, %v2521
        %v2868 = vadd.f32 %v2806, %v2526
        %v2869 = vadd.f32 %v2807, %v2531
        %v2870 = vadd.f32 %v2808, %v2536
        %v2871 = vadd.f32 %v2809, %v2541
        %v2872 = vadd.f32 %v2810, %v2546
        %v2873 = vadd.f32 %v2811, %v2551
        %v2874 = vadd.f32 %v2812, %v2556
        %v2875 = vadd.f32 %v2813, %v2561
        %v2876 = vadd.f32 %v2814, %v2566
        %v2877 = vadd.f32 %v2815, %v2571
        %v2878 = vadd.f32 %v2816, %v2576
        %v2879 = vadd.f32 %v2817, %v2581
        %v2880 = vadd.f32 %v2818, %v2586
        %v2881 = vadd.f32 %v2819, %v2591
        %v2882 = vadd.f32 %v2820, %v2596
        %v2883 = vadd.f32 %v2821, %v2601
        %v2884 = vadd.f32 %v2822, %v2606
        %v2885 = vadd.f32 %v2823, %v2611
        %v2886 = vadd.f32 %v2824, %v2616
        %v2887 = vadd.f32 %v2825, %v2621
        %v2888 = vadd.f32 %v2826, %v2626
        %v2889 = vadd.f32 %v2827, %v2631
        %v2890 = vadd.f32 %v2828, %v2636
        %v2891 = vadd.f32 %v2829, %v2641
        %v2892 = vadd.f32 %v2830, %v2646
        %v2893 = vadd.f32 %v2831, %v2651
        %v2894 = vadd.f32 %v2832, %v2656
        %v2895 = vadd.f32 %v2833, %v2661
        %v2896 = vadd.f32 %v2834, %v2666
        %v2897 = vadd.f32 %v2835, %v2671
        %v2898 = vadd.f32 %v2836, %v2676
        %v2899 = vadd.f32 %v2837, %v2681
        %v2900 = vadd.f32 %v2838, %v2686
        %v2901 = vadd.f32 %v2839, %v2691
        %v2902 = vadd.f32 %v2840, %v2696
        %v2903 = vadd.f32 %v2841, %v2701
        %v2904 = vadd.f32 %v2842, %v2706
        %v2905 = vadd.f32 %v2843, %v2711
        %v2906 = vadd.f32 %v2844, %v2716
        %v2907 = vadd.f32 %v2845, %v2721
        %v2908 = vadd.f32 %v2846, %v2726
        %v2909 = vadd.f32 %v2847, %v2731
        %v2910 = vadd.f32 %v2848, %v2736
        %v2911 = vadd.f32 %v2849, %v2741
        %v2912 = vadd.f32 %v2850, %v2746
        %v2913 = vadd.f32 %v2851, %v2751
        %v2914 = vadd.f32 %v2852, %v2756
        %v2915 = vadd.f32 %v2853, %v2761
        %v2916 = vadd.f32 %v2854, %v2766
        %v2917 = vadd.f32 %v2855, %v2771
        %v2918 = vadd.f32 %v2856, %v2776
        %v2919 = vadd.f32 %v2857, %v2781
        %v2920 = vadd.f32 %v2858, %v2786
        %v2921 = vadd.f32 %v2859, %v2791
        %v2922 = vadd.f32 %v2860, %v2796
        %2923 = vst [vmem:[#allocation4] sm:$0xff] %v2861
        %2924 = vst [vmem:[#allocation4 + $0x8] sm:$0xff] %v2862
        %2925 = vst [vmem:[#allocation4 + $0x10] sm:$0xff] %v2863
        %2926 = vst [vmem:[#allocation4 + $0x18] sm:$0xff] %v2864
        %2927 = vst [vmem:[#allocation4 + $0x20] sm:$0xff] %v2865
        %2928 = vst [vmem:[#allocation4 + $0x28] sm:$0xff] %v2866
        %2929 = vst [vmem:[#allocation4 + $0x30] sm:$0xff] %v2867
        %2930 = vst [vmem:[#allocation4 + $0x38] sm:$0xff] %v2868
        %2931 = vst [vmem:[#allocation4 + $0x40] sm:$0xff] %v2869
        %2932 = vst [vmem:[#allocation4 + $0x48] sm:$0xff] %v2870
        %2933 = vst [vmem:[#allocation4 + $0x50] sm:$0xff] %v2871
        %2934 = vst [vmem:[#allocation4 + $0x58] sm:$0xff] %v2872
        %2935 = vst [vmem:[#allocation4 + $0x60] sm:$0xff] %v2873
        %2936 = vst [vmem:[#allocation4 + $0x68] sm:$0xff] %v2874
        %2937 = vst [vmem:[#allocation4 + $0x70] sm:$0xff] %v2875
        %2938 = vst [vmem:[#allocation4 + $0x78] sm:$0xff] %v2876
        %2939 = vst [vmem:[#allocation4 + $0x80] sm:$0xff] %v2877
        %2940 = vst [vmem:[#allocation4 + $0x88] sm:$0xff] %v2878
        %2941 = vst [vmem:[#allocation4 + $0x90] sm:$0xff] %v2879
        %2942 = vst [vmem:[#allocation4 + $0x98] sm:$0xff] %v2880
        %2943 = vst [vmem:[#allocation4 + $0xa0] sm:$0xff] %v2881
        %2944 = vst [vmem:[#allocation4 + $0xa8] sm:$0xff] %v2882
        %2945 = vst [vmem:[#allocation4 + $0xb0] sm:$0xff] %v2883
        %2946 = vst [vmem:[#allocation4 + $0xb8] sm:$0xff] %v2884
        %2947 = vst [vmem:[#allocation4 + $0xc0] sm:$0xff] %v2885
        %2948 = vst [vmem:[#allocation4 + $0xc8] sm:$0xff] %v2886
        %2949 = vst [vmem:[#allocation4 + $0xd0] sm:$0xff] %v2887
        %2950 = vst [vmem:[#allocation4 + $0xd8] sm:$0xff] %v2888
        %2951 = vst [vmem:[#allocation4 + $0xe0] sm:$0xff] %v2889
        %2952 = vst [vmem:[#allocation4 + $0xe8] sm:$0xff] %v2890
        %2953 = vst [vmem:[#allocation4 + $0xf0] sm:$0xff] %v2891
        %2954 = vst [vmem:[#allocation4 + $0xf8] sm:$0xff] %v2892
        %2955 = vst [vmem:[#allocation4 + $0x100] sm:$0xff] %v2893
        %2956 = vst [vmem:[#allocation4 + $0x108] sm:$0xff] %v2894
        %2957 = vst [vmem:[#allocation4 + $0x110] sm:$0xff] %v2895
        %2958 = vst [vmem:[#allocation4 + $0x118] sm:$0xff] %v2896
        %2959 = vst [vmem:[#allocation4 + $0x120] sm:$0xff] %v2897
        %2960 = vst [vmem:[#allocation4 + $0x128] sm:$0xff] %v2898
        %2961 = vst [vmem:[#allocation4 + $0x130] sm:$0xff] %v2899
        %2962 = vst [vmem:[#allocation4 + $0x138] sm:$0xff] %v2900
        %2963 = vst [vmem:[#allocation4 + $0x140] sm:$0xff] %v2901
        %2964 = vst [vmem:[#allocation4 + $0x148] sm:$0xff] %v2902
        %2965 = vst [vmem:[#allocation4 + $0x150] sm:$0xff] %v2903
        %2966 = vst [vmem:[#allocation4 + $0x158] sm:$0xff] %v2904
        %2967 = vst [vmem:[#allocation4 + $0x160] sm:$0xff] %v2905
        %2968 = vst [vmem:[#allocation4 + $0x168] sm:$0xff] %v2906
        %2969 = vst [vmem:[#allocation4 + $0x170] sm:$0xff] %v2907
        %2970 = vst [vmem:[#allocation4 + $0x178] sm:$0xff] %v2908
        %2971 = vst [vmem:[#allocation4 + $0x180] sm:$0xff] %v2909
        %2972 = vst [vmem:[#allocation4 + $0x188] sm:$0xff] %v2910
        %2973 = vst [vmem:[#allocation4 + $0x190] sm:$0xff] %v2911
        %2974 = vst [vmem:[#allocation4 + $0x198] sm:$0xff] %v2912
        %2975 = vst [vmem:[#allocation4 + $0x1a0] sm:$0xff] %v2913
        %2976 = vst [vmem:[#allocation4 + $0x1a8] sm:$0xff] %v2914
        %2977 = vst [vmem:[#allocation4 + $0x1b0] sm:$0xff] %v2915
        %2978 = vst [vmem:[#allocation4 + $0x1b8] sm:$0xff] %v2916
        %2979 = vst [vmem:[#allocation4 + $0x1c0] sm:$0xff] %v2917
        %2980 = vst [vmem:[#allocation4 + $0x1c8] sm:$0xff] %v2918
        %2981 = vst [vmem:[#allocation4 + $0x1d0] sm:$0xff] %v2919
        %2982 = vst [vmem:[#allocation4 + $0x1d8] sm:$0xff] %v2920
        %2983 = vst [vmem:[#allocation4 + $0x1e0] sm:$0xff] %v2921
        %2984 = vst [vmem:[#allocation4 + $0x1e8] sm:$0xff] %v2922
        %v2985 = vld [vmem:[#allocation2 + $0xa8] sm:$0xff]
        %v2986 = vld [vmem:[#allocation2 + $0xb0] sm:$0xff]
        %v2987 = vld [vmem:[#allocation2 + $0xb8] sm:$0xff]
        %v2988 = vld [vmem:[#allocation2 + $0xc0] sm:$0xff]
        %v2989 = vld [vmem:[#allocation2 + $0xc8] sm:$0xff]
        %v2990 = vld [vmem:[#allocation2 + $0xd0] sm:$0xff]
        %v2991 = vld [vmem:[#allocation2 + $0xd8] sm:$0xff]
        %v2992 = vld [vmem:[#allocation2 + $0xe0] sm:$0xff]
        %v2993 = vld [vmem:[#allocation2 + $0xe8] sm:$0xff]
        %v2994 = vld [vmem:[#allocation2 + $0xf0] sm:$0xff]
        %v2995 = vld [vmem:[#allocation2 + $0xf8] sm:$0xff]
        %v2996 = vld [vmem:[#allocation2 + $0x100] sm:$0xff]
        %v2997 = vld [vmem:[#allocation2 + $0x108] sm:$0xff]
        %v2998 = vld [vmem:[#allocation2 + $0x110] sm:$0xff]
        %v2999 = vld [vmem:[#allocation2 + $0x118] sm:$0xff]
        %v3000 = vld [vmem:[#allocation2 + $0x120] sm:$0xff]
        %v3001 = vld [vmem:[#allocation2 + $0x128] sm:$0xff]
        %v3002 = vld [vmem:[#allocation2 + $0x130] sm:$0xff]
        %v3003 = vld [vmem:[#allocation2 + $0x138] sm:$0xff]
        %v3004 = vld [vmem:[#allocation2 + $0x140] sm:$0xff]
        %v3005 = vld [vmem:[#allocation2 + $0x148] sm:$0xff]
        %v3006 = vld [vmem:[#allocation2 + $0x150] sm:$0xff]
        %v3007 = vld [vmem:[#allocation2 + $0x158] sm:$0xff]
        %v3008 = vld [vmem:[#allocation2 + $0x160] sm:$0xff]
        %v3009 = vld [vmem:[#allocation2 + $0x168] sm:$0xff]
        %v3010 = vld [vmem:[#allocation2 + $0x170] sm:$0xff]
        %v3011 = vld [vmem:[#allocation2 + $0x178] sm:$0xff]
        %v3012 = vld [vmem:[#allocation2 + $0x180] sm:$0xff]
        %v3013 = vld [vmem:[#allocation2 + $0x188] sm:$0xff]
        %v3014 = vld [vmem:[#allocation2 + $0x190] sm:$0xff]
        %v3015 = vld [vmem:[#allocation2 + $0x198] sm:$0xff]
        %v3016 = vld [vmem:[#allocation2 + $0x1a0] sm:$0xff]
        %v3017 = vld [vmem:[#allocation2 + $0x1a8] sm:$0xff]
        %v3018 = vld [vmem:[#allocation2 + $0x1b0] sm:$0xff]
        %v3019 = vld [vmem:[#allocation2 + $0x1b8] sm:$0xff]
        %v3020 = vld [vmem:[#allocation2 + $0x1c0] sm:$0xff]
        %v3021 = vld [vmem:[#allocation2 + $0x1c8] sm:$0xff]
        %v3022 = vld [vmem:[#allocation2 + $0x1d0] sm:$0xff]
        %v3023 = vld [vmem:[#allocation2 + $0x1d8] sm:$0xff]
        %v3024 = vld [vmem:[#allocation2 + $0x1e0] sm:$0xff]
        %v3025 = vld [vmem:[#allocation2 + $0x1e8] sm:$0xff]
        %v3026 = vld [vmem:[#allocation2 + $0x1f0] sm:$0xff]
        %v3027 = vld [vmem:[#allocation2 + $0x1f8] sm:$0xff]
        %v3028 = vld [vmem:[#allocation2 + $0x200] sm:$0xff]
        %v3029 = vld [vmem:[#allocation2 + $0x208] sm:$0xff]
        %v3030 = vld [vmem:[#allocation2 + $0x210] sm:$0xff]
        %v3031 = vld [vmem:[#allocation2 + $0x218] sm:$0xff]
        %v3032 = vld [vmem:[#allocation2 + $0x220] sm:$0xff]
        %v3033 = vld [vmem:[#allocation2 + $0x228] sm:$0xff]
        %v3034 = vld [vmem:[#allocation2 + $0x230] sm:$0xff]
        %v3035 = vld [vmem:[#allocation2 + $0x238] sm:$0xff]
        %v3036 = vld [vmem:[#allocation2 + $0x240] sm:$0xff]
        %v3037 = vld [vmem:[#allocation2 + $0x248] sm:$0xff]
        %v3038 = vld [vmem:[#allocation2 + $0x250] sm:$0xff]
        %v3039 = vld [vmem:[#allocation2 + $0x258] sm:$0xff]
        %v3040 = vld [vmem:[#allocation2 + $0x260] sm:$0xff]
        %v3041 = vld [vmem:[#allocation2 + $0x268] sm:$0xff]
        %v3042 = vld [vmem:[#allocation2 + $0x270] sm:$0xff]
        %v3043 = vld [vmem:[#allocation2 + $0x278] sm:$0xff]
        %v3044 = vld [vmem:[#allocation2 + $0x280] sm:$0xff]
        %v3045 = vld [vmem:[#allocation2 + $0x288] sm:$0xff]
        %v3046 = vld [vmem:[#allocation2 + $0x290] sm:$0xff]
        %v3047 = vld [vmem:[#allocation2 + $0x298] sm:$0xff]
        %v3048 = vld [vmem:[#allocation2 + $0x2a0] sm:$0xff]
        %v3049 = vld [vmem:[#allocation2 + $0x2a8] sm:$0xff]
        %v3050 = vld [vmem:[#allocation2 + $0x2b0] sm:$0xff]
        %v3051 = vld [vmem:[#allocation2 + $0x2b8] sm:$0xff]
        %v3052 = vld [vmem:[#allocation2 + $0x2c0] sm:$0xff]
        %v3053 = vld [vmem:[#allocation2 + $0x2c8] sm:$0xff]
        %v3054 = vld [vmem:[#allocation2 + $0x2d0] sm:$0xff]
        %v3055 = vld [vmem:[#allocation2 + $0x2d8] sm:$0xff]
        %v3056 = vld [vmem:[#allocation2 + $0x2e0] sm:$0xff]
        %v3057 = vld [vmem:[#allocation2 + $0x2e8] sm:$0xff]
        %v3058 = vld [vmem:[#allocation2 + $0x2f0] sm:$0xff]
        %v3059 = vld [vmem:[#allocation2 + $0x2f8] sm:$0xff]
        %v3060 = vld [vmem:[#allocation2 + $0x300] sm:$0xff]
        %v3061 = vld [vmem:[#allocation2 + $0x308] sm:$0xff]
        %v3062 = vld [vmem:[#allocation2 + $0x310] sm:$0xff]
        %v3063 = vld [vmem:[#allocation2 + $0x318] sm:$0xff]
        %v3064 = vld [vmem:[#allocation2 + $0x320] sm:$0xff]
        %v3065 = vld [vmem:[#allocation2 + $0x328] sm:$0xff]
        %v3066 = vld [vmem:[#allocation2 + $0x330] sm:$0xff]
        %v3067 = vld [vmem:[#allocation2 + $0x338] sm:$0xff]
        %v3068 = vld [vmem:[#allocation2 + $0x340] sm:$0xff]
        %v3069 = vld [vmem:[#allocation2 + $0x348] sm:$0xff]
        %v3070 = vld [vmem:[#allocation2 + $0x350] sm:$0xff]
        %v3071 = vld [vmem:[#allocation2 + $0x358] sm:$0xff]
        %v3072 = vld [vmem:[#allocation2 + $0x360] sm:$0xff]
        %v3073 = vld [vmem:[#allocation2 + $0x368] sm:$0xff]
        %v3074 = vld [vmem:[#allocation2 + $0x370] sm:$0xff]
        %v3075 = vld [vmem:[#allocation2 + $0x378] sm:$0xff]
        %v3076 = vld [vmem:[#allocation2 + $0x380] sm:$0xff]
        %v3077 = vld [vmem:[#allocation2 + $0x388] sm:$0xff]
        %v3078 = vld [vmem:[#allocation2 + $0x390] sm:$0xff]
        %v3079 = vld [vmem:[#allocation2 + $0x398] sm:$0xff]
        %v3080 = vld [vmem:[#allocation2 + $0x3a0] sm:$0xff]
        %v3081 = vld [vmem:[#allocation2 + $0x3a8] sm:$0xff]
        %v3082 = vld [vmem:[#allocation2 + $0x3b0] sm:$0xff]
        %v3083 = vld [vmem:[#allocation2 + $0x3b8] sm:$0xff]
        %v3084 = vld [vmem:[#allocation2 + $0x3c0] sm:$0xff]
        %v3085 = vld [vmem:[#allocation2 + $0x3c8] sm:$0xff]
        %v3086 = vld [vmem:[#allocation2 + $0x3d0] sm:$0xff]
        %v3087 = vld [vmem:[#allocation2 + $0x3d8] sm:$0xff]
        %v3088 = vld [vmem:[#allocation2 + $0x3e0] sm:$0xff]
        %v3089 = vld [vmem:[#allocation2 + $0x3e8] sm:$0xff]
        %v3090 = vld [vmem:[#allocation2 + $0x3f0] sm:$0xff]
        %v3091 = vld [vmem:[#allocation2 + $0x3f8] sm:$0xff]
        %v3092 = vld [vmem:[#allocation2 + $0x400] sm:$0xff]
        %v3093 = vld [vmem:[#allocation2 + $0x408] sm:$0xff]
        %v3094 = vld [vmem:[#allocation2 + $0x410] sm:$0xff]
        %v3095 = vld [vmem:[#allocation2 + $0x418] sm:$0xff]
        %v3096 = vld [vmem:[#allocation2 + $0x420] sm:$0xff]
        %v3097 = vld [vmem:[#allocation2 + $0x428] sm:$0xff]
        %v3098 = vld [vmem:[#allocation2 + $0x430] sm:$0xff]
        %v3099 = vld [vmem:[#allocation2 + $0x438] sm:$0xff]
        %v3100 = vld [vmem:[#allocation2 + $0x440] sm:$0xff]
        %v3101 = vld [vmem:[#allocation2 + $0x448] sm:$0xff]
        %v3102 = vld [vmem:[#allocation2 + $0x450] sm:$0xff]
        %v3103 = vld [vmem:[#allocation2 + $0x458] sm:$0xff]
        %v3104 = vld [vmem:[#allocation2 + $0x460] sm:$0xff]
        %v3105 = vld [vmem:[#allocation2 + $0x468] sm:$0xff]
        %v3106 = vld [vmem:[#allocation2 + $0x470] sm:$0xff]
        %v3107 = vld [vmem:[#allocation2 + $0x478] sm:$0xff]
        %v3108 = vld [vmem:[#allocation2 + $0x480] sm:$0xff]
        %v3109 = vld [vmem:[#allocation2 + $0x488] sm:$0xff]
        %v3110 = vld [vmem:[#allocation2 + $0x490] sm:$0xff]
        %v3111 = vld [vmem:[#allocation2 + $0x498] sm:$0xff]
        %v3112 = vld [vmem:[#allocation2 + $0x4a0] sm:$0xff]
        %v3113 = vld [vmem:[#allocation2 + $0x4a8] sm:$0xff]
        %v3114 = vld [vmem:[#allocation2 + $0x4b0] sm:$0xff]
        %v3115 = vld [vmem:[#allocation2 + $0x4b8] sm:$0xff]
        %v3116 = vld [vmem:[#allocation2 + $0x4c0] sm:$0xff]
        %v3117 = vld [vmem:[#allocation2 + $0x4c8] sm:$0xff]
        %v3118 = vld [vmem:[#allocation2 + $0x4d0] sm:$0xff]
        %v3119 = vld [vmem:[#allocation2 + $0x4d8] sm:$0xff]
        %v3120 = vld [vmem:[#allocation2 + $0x4e0] sm:$0xff]
        %v3121 = vld [vmem:[#allocation2 + $0x4e8] sm:$0xff]
        %v3122 = vld [vmem:[#allocation2 + $0x4f0] sm:$0xff]
        %v3123 = vld [vmem:[#allocation2 + $0x4f8] sm:$0xff]
        %v3124 = vld [vmem:[#allocation2 + $0x500] sm:$0xff]
        %v3125 = vld [vmem:[#allocation2 + $0x508] sm:$0xff]
        %v3126 = vld [vmem:[#allocation2 + $0x510] sm:$0xff]
        %v3127 = vld [vmem:[#allocation2 + $0x518] sm:$0xff]
        %v3128 = vld [vmem:[#allocation2 + $0x520] sm:$0xff]
        %v3129 = vld [vmem:[#allocation2 + $0x528] sm:$0xff]
        %v3130 = vld [vmem:[#allocation2 + $0x530] sm:$0xff]
        %v3131 = vld [vmem:[#allocation2 + $0x538] sm:$0xff]
        %v3132 = vld [vmem:[#allocation2 + $0x540] sm:$0xff]
        %v3133 = vld [vmem:[#allocation2 + $0x548] sm:$0xff]
        %v3134 = vld [vmem:[#allocation2 + $0x550] sm:$0xff]
        %v3135 = vld [vmem:[#allocation2 + $0x558] sm:$0xff]
        %v3136 = vld [vmem:[#allocation2 + $0x560] sm:$0xff]
        %v3137 = vld [vmem:[#allocation2 + $0x568] sm:$0xff]
        %v3138 = vld [vmem:[#allocation2 + $0x570] sm:$0xff]
        %v3139 = vld [vmem:[#allocation2 + $0x578] sm:$0xff]
        %v3140 = vld [vmem:[#allocation2 + $0x580] sm:$0xff]
        %v3141 = vld [vmem:[#allocation2 + $0x588] sm:$0xff]
        %v3142 = vld [vmem:[#allocation2 + $0x590] sm:$0xff]
        %v3143 = vld [vmem:[#allocation2 + $0x598] sm:$0xff]
        %v3144 = vld [vmem:[#allocation2 + $0x5a0] sm:$0xff]
        %v3145 = vld [vmem:[#allocation2 + $0x5a8] sm:$0xff]
        %v3146 = vld [vmem:[#allocation2 + $0x5b0] sm:$0xff]
        %v3147 = vld [vmem:[#allocation2 + $0x5b8] sm:$0xff]
        %v3148 = vld [vmem:[#allocation2 + $0x5c0] sm:$0xff]
        %v3149 = vld [vmem:[#allocation2 + $0x5c8] sm:$0xff]
        %v3150 = vld [vmem:[#allocation2 + $0x5d0] sm:$0xff]
        %v3151 = vld [vmem:[#allocation2 + $0x5d8] sm:$0xff]
        %v3152 = vld [vmem:[#allocation2 + $0x5e0] sm:$0xff]
        %v3153 = vld [vmem:[#allocation2 + $0x5e8] sm:$0xff]
        %v3154 = vld [vmem:[#allocation2 + $0x5f0] sm:$0xff]
        %v3155 = vld [vmem:[#allocation2 + $0x5f8] sm:$0xff]
        %v3156 = vld [vmem:[#allocation2 + $0x600] sm:$0xff]
        %v3157 = vld [vmem:[#allocation2 + $0x608] sm:$0xff]
        %v3158 = vld [vmem:[#allocation2 + $0x610] sm:$0xff]
        %v3159 = vld [vmem:[#allocation2 + $0x618] sm:$0xff]
        %v3160 = vld [vmem:[#allocation2 + $0x620] sm:$0xff]
        %v3161 = vld [vmem:[#allocation2 + $0x628] sm:$0xff]
        %v3162 = vld [vmem:[#allocation2 + $0x630] sm:$0xff]
        %v3163 = vld [vmem:[#allocation2 + $0x638] sm:$0xff]
        %v3164 = vld [vmem:[#allocation2 + $0x640] sm:$0xff]
        %v3165 = vld [vmem:[#allocation2 + $0x648] sm:$0xff]
        %v3166 = vld [vmem:[#allocation2 + $0x650] sm:$0xff]
        %v3167 = vld [vmem:[#allocation2 + $0x658] sm:$0xff]
        %v3168 = vld [vmem:[#allocation2 + $0x660] sm:$0xff]
        %v3169 = vld [vmem:[#allocation2 + $0x668] sm:$0xff]
        %v3170 = vld [vmem:[#allocation2 + $0x670] sm:$0xff]
        %s3171 = scalar_lea.vmem [#allocation9], 768
        %v3172 = vld [vmem:[%s3171] sm:$0xff]
        %v3173 = vld [vmem:[%s3171 + $0x8] sm:$0xff]
        %v3174 = vld [vmem:[%s3171 + $0x10] sm:$0xff]
        %v3175 = vld [vmem:[%s3171 + $0x18] sm:$0xff]
        %v3176 = vld [vmem:[%s3171 + $0x20] sm:$0xff]
        %v3177 = vld [vmem:[%s3171 + $0x28] sm:$0xff]
        %v3178 = vld [vmem:[%s3171 + $0x30] sm:$0xff]
        %v3179 = vld [vmem:[%s3171 + $0x38] sm:$0xff]
        %v3180 = vld [vmem:[%s3171 + $0x40] sm:$0xff]
        %v3181 = vld [vmem:[%s3171 + $0x48] sm:$0xff]
        %v3182 = vld [vmem:[%s3171 + $0x50] sm:$0xff]
        %v3183 = vld [vmem:[%s3171 + $0x58] sm:$0xff]
        %v3184 = vld [vmem:[%s3171 + $0x60] sm:$0xff]
        %v3185 = vld [vmem:[%s3171 + $0x68] sm:$0xff]
        %v3186 = vld [vmem:[%s3171 + $0x70] sm:$0xff]
        %v3187 = vld [vmem:[%s3171 + $0x78] sm:$0xff]
        %v3188 = vld [vmem:[%s3171 + $0x80] sm:$0xff]
        %v3189 = vld [vmem:[%s3171 + $0x88] sm:$0xff]
        %v3190 = vld [vmem:[%s3171 + $0x90] sm:$0xff]
        %v3191 = vld [vmem:[%s3171 + $0x98] sm:$0xff]
        %v3192 = vld [vmem:[%s3171 + $0xa0] sm:$0xff]
        %v3193 = vld [vmem:[%s3171 + $0xa8] sm:$0xff]
        %v3194 = vld [vmem:[%s3171 + $0xb0] sm:$0xff]
        %v3195 = vld [vmem:[%s3171 + $0xb8] sm:$0xff]
        %v3196 = vld [vmem:[%s3171 + $0xc0] sm:$0xff]
        %v3197 = vld [vmem:[%s3171 + $0xc8] sm:$0xff]
        %v3198 = vld [vmem:[%s3171 + $0xd0] sm:$0xff]
        %v3199 = vld [vmem:[%s3171 + $0xd8] sm:$0xff]
        %v3200 = vld [vmem:[%s3171 + $0xe0] sm:$0xff]
        %v3201 = vld [vmem:[%s3171 + $0xe8] sm:$0xff]
        %v3202 = vld [vmem:[%s3171 + $0xf0] sm:$0xff]
        %v3203 = vld [vmem:[%s3171 + $0xf8] sm:$0xff]
        %v3204 = vld [vmem:[%s3171 + $0x100] sm:$0xff]
        %v3205 = vld [vmem:[%s3171 + $0x108] sm:$0xff]
        %v3206 = vld [vmem:[%s3171 + $0x110] sm:$0xff]
        %v3207 = vld [vmem:[%s3171 + $0x118] sm:$0xff]
        %v3208 = vld [vmem:[%s3171 + $0x120] sm:$0xff]
        %v3209 = vld [vmem:[%s3171 + $0x128] sm:$0xff]
        %v3210 = vld [vmem:[%s3171 + $0x130] sm:$0xff]
        %v3211 = vld [vmem:[%s3171 + $0x138] sm:$0xff]
        %v3212 = vld [vmem:[%s3171 + $0x140] sm:$0xff]
        %v3213 = vld [vmem:[%s3171 + $0x148] sm:$0xff]
        %v3214 = vld [vmem:[%s3171 + $0x150] sm:$0xff]
        %v3215 = vld [vmem:[%s3171 + $0x158] sm:$0xff]
        %v3216 = vld [vmem:[%s3171 + $0x160] sm:$0xff]
        %v3217 = vld [vmem:[%s3171 + $0x168] sm:$0xff]
        %v3218 = vld [vmem:[%s3171 + $0x170] sm:$0xff]
        %v3219 = vld [vmem:[%s3171 + $0x178] sm:$0xff]
        %3220 = vmatprep.subr.mxu0 0.0
        %3221 = vmatpush1.msra.mxu0 %v3172
        %3222 = vmatprep.subr.mxu0 0.0
        %3223 = vmatpush1.msra.mxu0 %v3173
        %3224 = vmatprep.subr.mxu0 0.0
        %3225 = vmatpush1.msra.mxu0 %v3174
        %3226 = vmatprep.subr.mxu0 0.0
        %3227 = vmatpush1.msra.mxu0 %v3175
        %3228 = vmatprep.subr.mxu0 0.0
        %3229 = vmatpush1.msra.mxu0 %v3176
        %3230 = vmatprep.subr.mxu0 0.0
        %3231 = vmatpush1.msra.mxu0 %v3177
        %3232 = vmatprep.subr.mxu0 0.0
        %3233 = vmatpush1.msra.mxu0 %v3178
        %3234 = vmatprep.subr.mxu0 0.0
        %3235 = vmatpush1.msra.mxu0 %v3179
        %3236 = vmatprep.subr.mxu0 0.0
        %3237 = vmatpush1.msra.mxu0 %v3180
        %3238 = vmatprep.subr.mxu0 0.0
        %3239 = vmatpush1.msra.mxu0 %v3181
        %3240 = vmatprep.subr.mxu0 0.0
        %3241 = vmatpush1.msra.mxu0 %v3182
        %3242 = vmatprep.subr.mxu0 0.0
        %3243 = vmatpush1.msra.mxu0 %v3183
        %3244 = vmatprep.subr.mxu0 0.0
        %3245 = vmatpush1.msra.mxu0 %v3184
        %3246 = vmatprep.subr.mxu0 0.0
        %3247 = vmatpush1.msra.mxu0 %v3185
        %3248 = vmatprep.subr.mxu0 0.0
        %3249 = vmatpush1.msra.mxu0 %v3186
        %3250 = vmatprep.subr.mxu0 0.0
        %3251 = vmatpush1.msra.mxu0 %v3187
        %3252 = vmatprep.subr.mxu0 0.0
        %3253 = vmatpush1.msra.mxu0 %v3188
        %3254 = vmatprep.subr.mxu0 0.0
        %3255 = vmatpush1.msra.mxu0 %v3189
        %3256 = vmatprep.subr.mxu0 0.0
        %3257 = vmatpush1.msra.mxu0 %v3190
        %3258 = vmatprep.subr.mxu0 0.0
        %3259 = vmatpush1.msra.mxu0 %v3191
        %3260 = vmatprep.subr.mxu0 0.0
        %3261 = vmatpush1.msra.mxu0 %v3192
        %3262 = vmatprep.subr.mxu0 0.0
        %3263 = vmatpush1.msra.mxu0 %v3193
        %3264 = vmatprep.subr.mxu0 0.0
        %3265 = vmatpush1.msra.mxu0 %v3194
        %3266 = vmatprep.subr.mxu0 0.0
        %3267 = vmatpush1.msra.mxu0 %v3195
        %3268 = vmatprep.subr.mxu0 0.0
        %3269 = vmatpush1.msra.mxu0 %v3196
        %3270 = vmatprep.subr.mxu0 0.0
        %3271 = vmatpush1.msra.mxu0 %v3197
        %3272 = vmatprep.subr.mxu0 0.0
        %3273 = vmatpush1.msra.mxu0 %v3198
        %3274 = vmatprep.subr.mxu0 0.0
        %3275 = vmatpush1.msra.mxu0 %v3199
        %3276 = vmatprep.subr.mxu0 0.0
        %3277 = vmatpush1.msra.mxu0 %v3200
        %3278 = vmatprep.subr.mxu0 0.0
        %3279 = vmatpush1.msra.mxu0 %v3201
        %3280 = vmatprep.subr.mxu0 0.0
        %3281 = vmatpush1.msra.mxu0 %v3202
        %3282 = vmatprep.subr.mxu0 0.0
        %3283 = vmatpush1.msra.mxu0 %v3203
        %3284 = vmatprep.mubr.f32.mxu0 %v2986
        %3285 = vmatmul.mubr.f32.gmra.mrb[0].mxu0 %v2985
        %v3286 = vpop.f32.mrb[0].mxu0
        %v3287 = vadd.f32 0.0, %v3286
        %v3288 = vpop.f32.mrb[0].mxu0
        %3289 = vmatprep.mubr.f32.mxu0 %v2989
        %3290 = vmatmul.mubr.f32.gmra.mrb[0].mxu0 %v2988
        %v3291 = vpop.f32.mrb[0].mxu0
        %v3292 = vadd.f32 0.0, %v3291
        %v3293 = vpop.f32.mrb[0].mxu0
        %3294 = vmatprep.mubr.f32.mxu0 %v2992
        %3295 = vmatmul.mubr.f32.gmra.mrb[0].mxu0 %v2991
        %v3296 = vpop.f32.mrb[0].mxu0
        %v3297 = vadd.f32 0.0, %v3296
        %v3298 = vpop.f32.mrb[0].mxu0
        %3299 = vmatprep.mubr.f32.mxu0 %v2995
        %3300 = vmatmul.mubr.f32.gmra.mrb[0].mxu0 %v2994
        %v3301 = vpop.f32.mrb[0].mxu0
        %v3302 = vadd.f32 0.0, %v3301
        %v3303 = vpop.f32.mrb[0].mxu0
        %3304 = vmatprep.mubr.f32.mxu0 %v2998
        %3305 = vmatmul.mubr.f32.gmra.mrb[0].mxu0 %v2997
        %v3306 = vpop.f32.mrb[0].mxu0
        %v3307 = vadd.f32 0.0, %v3306
        %v3308 = vpop.f32.mrb[0].mxu0
        %3309 = vmatprep.mubr.f32.mxu0 %v3001
        %3310 = vmatmul.mubr.f32.gmra.mrb[0].mxu0 %v3000
        %v3311 = vpop.f32.mrb[0].mxu0
        %v3312 = vadd.f32 0.0, %v3311
        %v3313 = vpop.f32.mrb[0].mxu0
        %3314 = vmatprep.mubr.f32.mxu0 %v3004
        %3315 = vmatmul.mubr.f32.gmra.mrb[0].mxu0 %v3003
        %v3316 = vpop.f32.mrb[0].mxu0
        %v3317 = vadd.f32 0.0, %v3316
        %v3318 = vpop.f32.mrb[0].mxu0
        %3319 = vmatprep.mubr.f32.mxu0 %v3007
        %3320 = vmatmul.mubr.f32.gmra.mrb[0].mxu0 %v3006
        %v3321 = vpop.f32.mrb[0].mxu0
        %v3322 = vadd.f32 0.0, %v3321
        %v3323 = vpop.f32.mrb[0].mxu0
        %3324 = vmatprep.mubr.f32.mxu0 %v3010
        %3325 = vmatmul.mubr.f32.gmra.mrb[0].mxu0 %v3009
        %v3326 = vpop.f32.mrb[0].mxu0
        %v3327 = vadd.f32 0.0, %v3326
        %v3328 = vpop.f32.mrb[0].mxu0
        %3329 = vmatprep.mubr.f32.mxu0 %v3013
        %3330 = vmatmul.mubr.f32.gmra.mrb[0].mxu0 %v3012
        %v3331 = vpop.f32.mrb[0].mxu0
        %v3332 = vadd.f32 0.0, %v3331
        %v3333 = vpop.f32.mrb[0].mxu0
        %3334 = vmatprep.mubr.f32.mxu0 %v3016
        %3335 = vmatmul.mubr.f32.gmra.mrb[0].mxu0 %v3015
        %v3336 = vpop.f32.mrb[0].mxu0
        %v3337 = vadd.f32 0.0, %v3336
        %v3338 = vpop.f32.mrb[0].mxu0
        %3339 = vmatprep.mubr.f32.mxu0 %v3019
        %3340 = vmatmul.mubr.f32.gmra.mrb[0].mxu0 %v3018
        %v3341 = vpop.f32.mrb[0].mxu0
        %v3342 = vadd.f32 0.0, %v3341
        %v3343 = vpop.f32.mrb[0].mxu0
        %3344 = vmatprep.mubr.f32.mxu0 %v3022
        %3345 = vmatmul.mubr.f32.gmra.mrb[0].mxu0 %v3021
        %v3346 = vpop.f32.mrb[0].mxu0
        %v3347 = vadd.f32 0.0, %v3346
        %v3348 = vpop.f32.mrb[0].mxu0
        %3349 = vmatprep.mubr.f32.mxu0 %v3025
        %3350 = vmatmul.mubr.f32.gmra.mrb[0].mxu0 %v3024
        %v3351 = vpop.f32.mrb[0].mxu0
        %v3352 = vadd.f32 0.0, %v3351
        %v3353 = vpop.f32.mrb[0].mxu0
        %3354 = vmatprep.mubr.f32.mxu0 %v3028
        %3355 = vmatmul.mubr.f32.gmra.mrb[0].mxu0 %v3027
        %v3356 = vpop.f32.mrb[0].mxu0
        %v3357 = vadd.f32 0.0, %v3356
        %v3358 = vpop.f32.mrb[0].mxu0
        %3359 = vmatprep.mubr.f32.mxu0 %v3031
        %3360 = vmatmul.mubr.f32.gmra.mrb[0].mxu0 %v3030
        %v3361 = vpop.f32.mrb[0].mxu0
        %v3362 = vadd.f32 0.0, %v3361
        %v3363 = vpop.f32.mrb[0].mxu0
        %3364 = vmatprep.mubr.f32.mxu0 %v3034
        %3365 = vmatmul.mubr.f32.gmra.mrb[0].mxu0 %v3033
        %v3366 = vpop.f32.mrb[0].mxu0
        %v3367 = vadd.f32 0.0, %v3366
        %v3368 = vpop.f32.mrb[0].mxu0
        %3369 = vmatprep.mubr.f32.mxu0 %v3037
        %3370 = vmatmul.mubr.f32.gmra.mrb[0].mxu0 %v3036
        %v3371 = vpop.f32.mrb[0].mxu0
        %v3372 = vadd.f32 0.0, %v3371
        %v3373 = vpop.f32.mrb[0].mxu0
        %3374 = vmatprep.mubr.f32.mxu0 %v3040
        %3375 = vmatmul.mubr.f32.gmra.mrb[0].mxu0 %v3039
        %v3376 = vpop.f32.mrb[0].mxu0
        %v3377 = vadd.f32 0.0, %v3376
        %v3378 = vpop.f32.mrb[0].mxu0
        %3379 = vmatprep.mubr.f32.mxu0 %v3043
        %3380 = vmatmul.mubr.f32.gmra.mrb[0].mxu0 %v3042
        %v3381 = vpop.f32.mrb[0].mxu0
        %v3382 = vadd.f32 0.0, %v3381
        %v3383 = vpop.f32.mrb[0].mxu0
        %3384 = vmatprep.mubr.f32.mxu0 %v3046
        %3385 = vmatmul.mubr.f32.gmra.mrb[0].mxu0 %v3045
        %v3386 = vpop.f32.mrb[0].mxu0
        %v3387 = vadd.f32 0.0, %v3386
        %v3388 = vpop.f32.mrb[0].mxu0
        %3389 = vmatprep.mubr.f32.mxu0 %v3049
        %3390 = vmatmul.mubr.f32.gmra.mrb[0].mxu0 %v3048
        %v3391 = vpop.f32.mrb[0].mxu0
        %v3392 = vadd.f32 0.0, %v3391
        %v3393 = vpop.f32.mrb[0].mxu0
        %3394 = vmatprep.mubr.f32.mxu0 %v3052
        %3395 = vmatmul.mubr.f32.gmra.mrb[0].mxu0 %v3051
        %v3396 = vpop.f32.mrb[0].mxu0
        %v3397 = vadd.f32 0.0, %v3396
        %v3398 = vpop.f32.mrb[0].mxu0
        %3399 = vmatprep.mubr.f32.mxu0 %v3055
        %3400 = vmatmul.mubr.f32.gmra.mrb[0].mxu0 %v3054
        %v3401 = vpop.f32.mrb[0].mxu0
        %v3402 = vadd.f32 0.0, %v3401
        %v3403 = vpop.f32.mrb[0].mxu0
        %3404 = vmatprep.mubr.f32.mxu0 %v3058
        %3405 = vmatmul.mubr.f32.gmra.mrb[0].mxu0 %v3057
        %v3406 = vpop.f32.mrb[0].mxu0
        %v3407 = vadd.f32 0.0, %v3406
        %v3408 = vpop.f32.mrb[0].mxu0
        %3409 = vmatprep.mubr.f32.mxu0 %v3061
        %3410 = vmatmul.mubr.f32.gmra.mrb[0].mxu0 %v3060
        %v3411 = vpop.f32.mrb[0].mxu0
        %v3412 = vadd.f32 0.0, %v3411
        %v3413 = vpop.f32.mrb[0].mxu0
        %3414 = vmatprep.mubr.f32.mxu0 %v3064
        %3415 = vmatmul.mubr.f32.gmra.mrb[0].mxu0 %v3063
        %v3416 = vpop.f32.mrb[0].mxu0
        %v3417 = vadd.f32 0.0, %v3416
        %v3418 = vpop.f32.mrb[0].mxu0
        %3419 = vmatprep.mubr.f32.mxu0 %v3067
        %3420 = vmatmul.mubr.f32.gmra.mrb[0].mxu0 %v3066
        %v3421 = vpop.f32.mrb[0].mxu0
        %v3422 = vadd.f32 0.0, %v3421
        %v3423 = vpop.f32.mrb[0].mxu0
        %3424 = vmatprep.mubr.f32.mxu0 %v3070
        %3425 = vmatmul.mubr.f32.gmra.mrb[0].mxu0 %v3069
        %v3426 = vpop.f32.mrb[0].mxu0
        %v3427 = vadd.f32 0.0, %v3426
        %v3428 = vpop.f32.mrb[0].mxu0
        %3429 = vmatprep.mubr.f32.mxu0 %v3073
        %3430 = vmatmul.mubr.f32.gmra.mrb[0].mxu0 %v3072
        %v3431 = vpop.f32.mrb[0].mxu0
        %v3432 = vadd.f32 0.0, %v3431
        %v3433 = vpop.f32.mrb[0].mxu0
        %3434 = vmatprep.mubr.f32.mxu0 %v3076
        %3435 = vmatmul.mubr.f32.gmra.mrb[0].mxu0 %v3075
        %v3436 = vpop.f32.mrb[0].mxu0
        %v3437 = vadd.f32 0.0, %v3436
        %v3438 = vpop.f32.mrb[0].mxu0
        %3439 = vmatprep.mubr.f32.mxu0 %v3079
        %3440 = vmatmul.mubr.f32.gmra.mrb[0].mxu0 %v3078
        %v3441 = vpop.f32.mrb[0].mxu0
        %v3442 = vadd.f32 0.0, %v3441
        %v3443 = vpop.f32.mrb[0].mxu0
        %3444 = vmatprep.mubr.f32.mxu0 %v3082
        %3445 = vmatmul.mubr.f32.gmra.mrb[0].mxu0 %v3081
        %v3446 = vpop.f32.mrb[0].mxu0
        %v3447 = vadd.f32 0.0, %v3446
        %v3448 = vpop.f32.mrb[0].mxu0
        %3449 = vmatprep.mubr.f32.mxu0 %v3085
        %3450 = vmatmul.mubr.f32.gmra.mrb[0].mxu0 %v3084
        %v3451 = vpop.f32.mrb[0].mxu0
        %v3452 = vadd.f32 0.0, %v3451
        %v3453 = vpop.f32.mrb[0].mxu0
        %3454 = vmatprep.mubr.f32.mxu0 %v3088
        %3455 = vmatmul.mubr.f32.gmra.mrb[0].mxu0 %v3087
        %v3456 = vpop.f32.mrb[0].mxu0
        %v3457 = vadd.f32 0.0, %v3456
        %v3458 = vpop.f32.mrb[0].mxu0
        %3459 = vmatprep.mubr.f32.mxu0 %v3091
        %3460 = vmatmul.mubr.f32.gmra.mrb[0].mxu0 %v3090
        %v3461 = vpop.f32.mrb[0].mxu0
        %v3462 = vadd.f32 0.0, %v3461
        %v3463 = vpop.f32.mrb[0].mxu0
        %3464 = vmatprep.mubr.f32.mxu0 %v3094
        %3465 = vmatmul.mubr.f32.gmra.mrb[0].mxu0 %v3093
        %v3466 = vpop.f32.mrb[0].mxu0
        %v3467 = vadd.f32 0.0, %v3466
        %v3468 = vpop.f32.mrb[0].mxu0
        %3469 = vmatprep.mubr.f32.mxu0 %v3097
        %3470 = vmatmul.mubr.f32.gmra.mrb[0].mxu0 %v3096
        %v3471 = vpop.f32.mrb[0].mxu0
        %v3472 = vadd.f32 0.0, %v3471
        %v3473 = vpop.f32.mrb[0].mxu0
        %3474 = vmatprep.mubr.f32.mxu0 %v3100
        %3475 = vmatmul.mubr.f32.gmra.mrb[0].mxu0 %v3099
        %v3476 = vpop.f32.mrb[0].mxu0
        %v3477 = vadd.f32 0.0, %v3476
        %v3478 = vpop.f32.mrb[0].mxu0
        %3479 = vmatprep.mubr.f32.mxu0 %v3103
        %3480 = vmatmul.mubr.f32.gmra.mrb[0].mxu0 %v3102
        %v3481 = vpop.f32.mrb[0].mxu0
        %v3482 = vadd.f32 0.0, %v3481
        %v3483 = vpop.f32.mrb[0].mxu0
        %3484 = vmatprep.mubr.f32.mxu0 %v3106
        %3485 = vmatmul.mubr.f32.gmra.mrb[0].mxu0 %v3105
        %v3486 = vpop.f32.mrb[0].mxu0
        %v3487 = vadd.f32 0.0, %v3486
        %v3488 = vpop.f32.mrb[0].mxu0
        %3489 = vmatprep.mubr.f32.mxu0 %v3109
        %3490 = vmatmul.mubr.f32.gmra.mrb[0].mxu0 %v3108
        %v3491 = vpop.f32.mrb[0].mxu0
        %v3492 = vadd.f32 0.0, %v3491
        %v3493 = vpop.f32.mrb[0].mxu0
        %3494 = vmatprep.mubr.f32.mxu0 %v3112
        %3495 = vmatmul.mubr.f32.gmra.mrb[0].mxu0 %v3111
        %v3496 = vpop.f32.mrb[0].mxu0
        %v3497 = vadd.f32 0.0, %v3496
        %v3498 = vpop.f32.mrb[0].mxu0
        %3499 = vmatprep.mubr.f32.mxu0 %v3115
        %3500 = vmatmul.mubr.f32.gmra.mrb[0].mxu0 %v3114
        %v3501 = vpop.f32.mrb[0].mxu0
        %v3502 = vadd.f32 0.0, %v3501
        %v3503 = vpop.f32.mrb[0].mxu0
        %3504 = vmatprep.mubr.f32.mxu0 %v3118
        %3505 = vmatmul.mubr.f32.gmra.mrb[0].mxu0 %v3117
        %v3506 = vpop.f32.mrb[0].mxu0
        %v3507 = vadd.f32 0.0, %v3506
        %v3508 = vpop.f32.mrb[0].mxu0
        %3509 = vmatprep.mubr.f32.mxu0 %v3121
        %3510 = vmatmul.mubr.f32.gmra.mrb[0].mxu0 %v3120
        %v3511 = vpop.f32.mrb[0].mxu0
        %v3512 = vadd.f32 0.0, %v3511
        %v3513 = vpop.f32.mrb[0].mxu0
        %3514 = vmatprep.mubr.f32.mxu0 %v3124
        %3515 = vmatmul.mubr.f32.gmra.mrb[0].mxu0 %v3123
        %v3516 = vpop.f32.mrb[0].mxu0
        %v3517 = vadd.f32 0.0, %v3516
        %v3518 = vpop.f32.mrb[0].mxu0
        %3519 = vmatprep.mubr.f32.mxu0 %v3127
        %3520 = vmatmul.mubr.f32.gmra.mrb[0].mxu0 %v3126
        %v3521 = vpop.f32.mrb[0].mxu0
        %v3522 = vadd.f32 0.0, %v3521
        %v3523 = vpop.f32.mrb[0].mxu0
        %3524 = vmatprep.mubr.f32.mxu0 %v3130
        %3525 = vmatmul.mubr.f32.gmra.mrb[0].mxu0 %v3129
        %v3526 = vpop.f32.mrb[0].mxu0
        %v3527 = vadd.f32 0.0, %v3526
        %v3528 = vpop.f32.mrb[0].mxu0
        %3529 = vmatprep.mubr.f32.mxu0 %v3133
        %3530 = vmatmul.mubr.f32.gmra.mrb[0].mxu0 %v3132
        %v3531 = vpop.f32.mrb[0].mxu0
        %v3532 = vadd.f32 0.0, %v3531
        %v3533 = vpop.f32.mrb[0].mxu0
        %3534 = vmatprep.mubr.f32.mxu0 %v3136
        %3535 = vmatmul.mubr.f32.gmra.mrb[0].mxu0 %v3135
        %v3536 = vpop.f32.mrb[0].mxu0
        %v3537 = vadd.f32 0.0, %v3536
        %v3538 = vpop.f32.mrb[0].mxu0
        %3539 = vmatprep.mubr.f32.mxu0 %v3139
        %3540 = vmatmul.mubr.f32.gmra.mrb[0].mxu0 %v3138
        %v3541 = vpop.f32.mrb[0].mxu0
        %v3542 = vadd.f32 0.0, %v3541
        %v3543 = vpop.f32.mrb[0].mxu0
        %3544 = vmatprep.mubr.f32.mxu0 %v3142
        %3545 = vmatmul.mubr.f32.gmra.mrb[0].mxu0 %v3141
        %v3546 = vpop.f32.mrb[0].mxu0
        %v3547 = vadd.f32 0.0, %v3546
        %v3548 = vpop.f32.mrb[0].mxu0
        %3549 = vmatprep.mubr.f32.mxu0 %v3145
        %3550 = vmatmul.mubr.f32.gmra.mrb[0].mxu0 %v3144
        %v3551 = vpop.f32.mrb[0].mxu0
        %v3552 = vadd.f32 0.0, %v3551
        %v3553 = vpop.f32.mrb[0].mxu0
        %3554 = vmatprep.mubr.f32.mxu0 %v3148
        %3555 = vmatmul.mubr.f32.gmra.mrb[0].mxu0 %v3147
        %v3556 = vpop.f32.mrb[0].mxu0
        %v3557 = vadd.f32 0.0, %v3556
        %v3558 = vpop.f32.mrb[0].mxu0
        %3559 = vmatprep.mubr.f32.mxu0 %v3151
        %3560 = vmatmul.mubr.f32.gmra.mrb[0].mxu0 %v3150
        %v3561 = vpop.f32.mrb[0].mxu0
        %v3562 = vadd.f32 0.0, %v3561
        %v3563 = vpop.f32.mrb[0].mxu0
        %3564 = vmatprep.mubr.f32.mxu0 %v3154
        %3565 = vmatmul.mubr.f32.gmra.mrb[0].mxu0 %v3153
        %v3566 = vpop.f32.mrb[0].mxu0
        %v3567 = vadd.f32 0.0, %v3566
        %v3568 = vpop.f32.mrb[0].mxu0
        %3569 = vmatprep.mubr.f32.mxu0 %v3157
        %3570 = vmatmul.mubr.f32.gmra.mrb[0].mxu0 %v3156
        %v3571 = vpop.f32.mrb[0].mxu0
        %v3572 = vadd.f32 0.0, %v3571
        %v3573 = vpop.f32.mrb[0].mxu0
        %3574 = vmatprep.mubr.f32.mxu0 %v3160
        %3575 = vmatmul.mubr.f32.gmra.mrb[0].mxu0 %v3159
        %v3576 = vpop.f32.mrb[0].mxu0
        %v3577 = vadd.f32 0.0, %v3576
        %v3578 = vpop.f32.mrb[0].mxu0
        %3579 = vmatprep.mubr.f32.mxu0 %v3163
        %3580 = vmatmul.mubr.f32.gmra.mrb[0].mxu0 %v3162
        %v3581 = vpop.f32.mrb[0].mxu0
        %v3582 = vadd.f32 0.0, %v3581
        %v3583 = vpop.f32.mrb[0].mxu0
        %3584 = vmatprep.mubr.f32.mxu0 %v3166
        %3585 = vmatmul.mubr.f32.gmra.mrb[0].mxu0 %v3165
        %v3586 = vpop.f32.mrb[0].mxu0
        %v3587 = vadd.f32 0.0, %v3586
        %v3588 = vpop.f32.mrb[0].mxu0
        %3589 = vmatprep.mubr.f32.mxu0 %v3169
        %3590 = vmatmul.mubr.f32.gmra.mrb[0].mxu0 %v3168
        %v3591 = vpop.f32.mrb[0].mxu0
        %v3592 = vadd.f32 0.0, %v3591
        %v3593 = vpop.f32.mrb[0].mxu0
        %3594 = vdwg.mxu0
        %3595 = vmatprep.subr.mxu0 0.0
        %3596 = vmatpush1.msra.mxu0 %v3204
        %3597 = vmatprep.subr.mxu0 0.0
        %3598 = vmatpush1.msra.mxu0 %v3205
        %3599 = vmatprep.subr.mxu0 0.0
        %3600 = vmatpush1.msra.mxu0 %v3206
        %3601 = vmatprep.subr.mxu0 0.0
        %3602 = vmatpush1.msra.mxu0 %v3207
        %3603 = vmatprep.subr.mxu0 0.0
        %3604 = vmatpush1.msra.mxu0 %v3208
        %3605 = vmatprep.subr.mxu0 0.0
        %3606 = vmatpush1.msra.mxu0 %v3209
        %3607 = vmatprep.subr.mxu0 0.0
        %3608 = vmatpush1.msra.mxu0 %v3210
        %3609 = vmatprep.subr.mxu0 0.0
        %3610 = vmatpush1.msra.mxu0 %v3211
        %3611 = vmatprep.subr.mxu0 0.0
        %3612 = vmatpush1.msra.mxu0 %v3212
        %3613 = vmatprep.subr.mxu0 0.0
        %3614 = vmatpush1.msra.mxu0 %v3213
        %3615 = vmatprep.subr.mxu0 0.0
        %3616 = vmatpush1.msra.mxu0 %v3214
        %3617 = vmatprep.subr.mxu0 0.0
        %3618 = vmatpush1.msra.mxu0 %v3215
        %3619 = vmatprep.subr.mxu0 0.0
        %3620 = vmatpush1.msra.mxu0 %v3216
        %3621 = vmatprep.subr.mxu0 0.0
        %3622 = vmatpush1.msra.mxu0 %v3217
        %3623 = vmatprep.subr.mxu0 0.0
        %3624 = vmatpush1.msra.mxu0 %v3218
        %3625 = vmatprep.subr.mxu0 0.0
        %3626 = vmatpush1.msra.mxu0 %v3219
        %3627 = vmatprep.subr.mxu0 0.0
        %3628 = vmatpush1.msra.mxu0 0.0
        %3629 = vmatprep.subr.mxu0 0.0
        %3630 = vmatpush1.msra.mxu0 0.0
        %3631 = vmatprep.subr.mxu0 0.0
        %3632 = vmatpush1.msra.mxu0 0.0
        %3633 = vmatprep.subr.mxu0 0.0
        %3634 = vmatpush1.msra.mxu0 0.0
        %3635 = vmatprep.subr.mxu0 0.0
        %3636 = vmatpush1.msra.mxu0 0.0
        %3637 = vmatprep.subr.mxu0 0.0
        %3638 = vmatpush1.msra.mxu0 0.0
        %3639 = vmatprep.subr.mxu0 0.0
        %3640 = vmatpush1.msra.mxu0 0.0
        %3641 = vmatprep.subr.mxu0 0.0
        %3642 = vmatpush1.msra.mxu0 0.0
        %3643 = vmatprep.subr.mxu0 0.0
        %3644 = vmatpush1.msra.mxu0 0.0
        %3645 = vmatprep.subr.mxu0 0.0
        %3646 = vmatpush1.msra.mxu0 0.0
        %3647 = vmatprep.subr.mxu0 0.0
        %3648 = vmatpush1.msra.mxu0 0.0
        %3649 = vmatprep.subr.mxu0 0.0
        %3650 = vmatpush1.msra.mxu0 0.0
        %3651 = vmatprep.subr.mxu0 0.0
        %3652 = vmatpush1.msra.mxu0 0.0
        %3653 = vmatprep.subr.mxu0 0.0
        %3654 = vmatpush1.msra.mxu0 0.0
        %3655 = vmatprep.subr.mxu0 0.0
        %3656 = vmatpush1.msra.mxu0 0.0
        %3657 = vmatprep.subr.mxu0 0.0
        %3658 = vmatpush1.msra.mxu0 0.0
        %3659 = vmatprep.mubr.f32.mxu0 0.0
        %3660 = vmatmul.mubr.f32.gmra.mrb[0].mxu0 %v2987
        %v3661 = vpop.f32.mrb[0].mxu0
        %v3662 = vadd.f32 %v3287, %v3661
        %v3663 = vpop.f32.mrb[0].mxu0
        %3664 = vmatprep.mubr.f32.mxu0 0.0
        %3665 = vmatmul.mubr.f32.gmra.mrb[0].mxu0 %v2990
        %v3666 = vpop.f32.mrb[0].mxu0
        %v3667 = vadd.f32 %v3292, %v3666
        %v3668 = vpop.f32.mrb[0].mxu0
        %3669 = vmatprep.mubr.f32.mxu0 0.0
        %3670 = vmatmul.mubr.f32.gmra.mrb[0].mxu0 %v2993
        %v3671 = vpop.f32.mrb[0].mxu0
        %v3672 = vadd.f32 %v3297, %v3671
        %v3673 = vpop.f32.mrb[0].mxu0
        %3674 = vmatprep.mubr.f32.mxu0 0.0
        %3675 = vmatmul.mubr.f32.gmra.mrb[0].mxu0 %v2996
        %v3676 = vpop.f32.mrb[0].mxu0
        %v3677 = vadd.f32 %v3302, %v3676
        %v3678 = vpop.f32.mrb[0].mxu0
        %3679 = vmatprep.mubr.f32.mxu0 0.0
        %3680 = vmatmul.mubr.f32.gmra.mrb[0].mxu0 %v2999
        %v3681 = vpop.f32.mrb[0].mxu0
        %v3682 = vadd.f32 %v3307, %v3681
        %v3683 = vpop.f32.mrb[0].mxu0
        %3684 = vmatprep.mubr.f32.mxu0 0.0
        %3685 = vmatmul.mubr.f32.gmra.mrb[0].mxu0 %v3002
        %v3686 = vpop.f32.mrb[0].mxu0
        %v3687 = vadd.f32 %v3312, %v3686
        %v3688 = vpop.f32.mrb[0].mxu0
        %3689 = vmatprep.mubr.f32.mxu0 0.0
        %3690 = vmatmul.mubr.f32.gmra.mrb[0].mxu0 %v3005
        %v3691 = vpop.f32.mrb[0].mxu0
        %v3692 = vadd.f32 %v3317, %v3691
        %v3693 = vpop.f32.mrb[0].mxu0
        %3694 = vmatprep.mubr.f32.mxu0 0.0
        %3695 = vmatmul.mubr.f32.gmra.mrb[0].mxu0 %v3008
        %v3696 = vpop.f32.mrb[0].mxu0
        %v3697 = vadd.f32 %v3322, %v3696
        %v3698 = vpop.f32.mrb[0].mxu0
        %3699 = vmatprep.mubr.f32.mxu0 0.0
        %3700 = vmatmul.mubr.f32.gmra.mrb[0].mxu0 %v3011
        %v3701 = vpop.f32.mrb[0].mxu0
        %v3702 = vadd.f32 %v3327, %v3701
        %v3703 = vpop.f32.mrb[0].mxu0
        %3704 = vmatprep.mubr.f32.mxu0 0.0
        %3705 = vmatmul.mubr.f32.gmra.mrb[0].mxu0 %v3014
        %v3706 = vpop.f32.mrb[0].mxu0
        %v3707 = vadd.f32 %v3332, %v3706
        %v3708 = vpop.f32.mrb[0].mxu0
        %3709 = vmatprep.mubr.f32.mxu0 0.0
        %3710 = vmatmul.mubr.f32.gmra.mrb[0].mxu0 %v3017
        %v3711 = vpop.f32.mrb[0].mxu0
        %v3712 = vadd.f32 %v3337, %v3711
        %v3713 = vpop.f32.mrb[0].mxu0
        %3714 = vmatprep.mubr.f32.mxu0 0.0
        %3715 = vmatmul.mubr.f32.gmra.mrb[0].mxu0 %v3020
        %v3716 = vpop.f32.mrb[0].mxu0
        %v3717 = vadd.f32 %v3342, %v3716
        %v3718 = vpop.f32.mrb[0].mxu0
        %3719 = vmatprep.mubr.f32.mxu0 0.0
        %3720 = vmatmul.mubr.f32.gmra.mrb[0].mxu0 %v3023
        %v3721 = vpop.f32.mrb[0].mxu0
        %v3722 = vadd.f32 %v3347, %v3721
        %v3723 = vpop.f32.mrb[0].mxu0
        %3724 = vmatprep.mubr.f32.mxu0 0.0
        %3725 = vmatmul.mubr.f32.gmra.mrb[0].mxu0 %v3026
        %v3726 = vpop.f32.mrb[0].mxu0
        %v3727 = vadd.f32 %v3352, %v3726
        %v3728 = vpop.f32.mrb[0].mxu0
        %3729 = vmatprep.mubr.f32.mxu0 0.0
        %3730 = vmatmul.mubr.f32.gmra.mrb[0].mxu0 %v3029
        %v3731 = vpop.f32.mrb[0].mxu0
        %v3732 = vadd.f32 %v3357, %v3731
        %v3733 = vpop.f32.mrb[0].mxu0
        %3734 = vmatprep.mubr.f32.mxu0 0.0
        %3735 = vmatmul.mubr.f32.gmra.mrb[0].mxu0 %v3032
        %v3736 = vpop.f32.mrb[0].mxu0
        %v3737 = vadd.f32 %v3362, %v3736
        %v3738 = vpop.f32.mrb[0].mxu0
        %3739 = vmatprep.mubr.f32.mxu0 0.0
        %3740 = vmatmul.mubr.f32.gmra.mrb[0].mxu0 %v3035
        %v3741 = vpop.f32.mrb[0].mxu0
        %v3742 = vadd.f32 %v3367, %v3741
        %v3743 = vpop.f32.mrb[0].mxu0
        %3744 = vmatprep.mubr.f32.mxu0 0.0
        %3745 = vmatmul.mubr.f32.gmra.mrb[0].mxu0 %v3038
        %v3746 = vpop.f32.mrb[0].mxu0
        %v3747 = vadd.f32 %v3372, %v3746
        %v3748 = vpop.f32.mrb[0].mxu0
        %3749 = vmatprep.mubr.f32.mxu0 0.0
        %3750 = vmatmul.mubr.f32.gmra.mrb[0].mxu0 %v3041
        %v3751 = vpop.f32.mrb[0].mxu0
        %v3752 = vadd.f32 %v3377, %v3751
        %v3753 = vpop.f32.mrb[0].mxu0
        %3754 = vmatprep.mubr.f32.mxu0 0.0
        %3755 = vmatmul.mubr.f32.gmra.mrb[0].mxu0 %v3044
        %v3756 = vpop.f32.mrb[0].mxu0
        %v3757 = vadd.f32 %v3382, %v3756
        %v3758 = vpop.f32.mrb[0].mxu0
        %3759 = vmatprep.mubr.f32.mxu0 0.0
        %3760 = vmatmul.mubr.f32.gmra.mrb[0].mxu0 %v3047
        %v3761 = vpop.f32.mrb[0].mxu0
        %v3762 = vadd.f32 %v3387, %v3761
        %v3763 = vpop.f32.mrb[0].mxu0
        %3764 = vmatprep.mubr.f32.mxu0 0.0
        %3765 = vmatmul.mubr.f32.gmra.mrb[0].mxu0 %v3050
        %v3766 = vpop.f32.mrb[0].mxu0
        %v3767 = vadd.f32 %v3392, %v3766
        %v3768 = vpop.f32.mrb[0].mxu0
        %3769 = vmatprep.mubr.f32.mxu0 0.0
        %3770 = vmatmul.mubr.f32.gmra.mrb[0].mxu0 %v3053
        %v3771 = vpop.f32.mrb[0].mxu0
        %v3772 = vadd.f32 %v3397, %v3771
        %v3773 = vpop.f32.mrb[0].mxu0
        %3774 = vmatprep.mubr.f32.mxu0 0.0
        %3775 = vmatmul.mubr.f32.gmra.mrb[0].mxu0 %v3056
        %v3776 = vpop.f32.mrb[0].mxu0
        %v3777 = vadd.f32 %v3402, %v3776
        %v3778 = vpop.f32.mrb[0].mxu0
        %3779 = vmatprep.mubr.f32.mxu0 0.0
        %3780 = vmatmul.mubr.f32.gmra.mrb[0].mxu0 %v3059
        %v3781 = vpop.f32.mrb[0].mxu0
        %v3782 = vadd.f32 %v3407, %v3781
        %v3783 = vpop.f32.mrb[0].mxu0
        %3784 = vmatprep.mubr.f32.mxu0 0.0
        %3785 = vmatmul.mubr.f32.gmra.mrb[0].mxu0 %v3062
        %v3786 = vpop.f32.mrb[0].mxu0
        %v3787 = vadd.f32 %v3412, %v3786
        %v3788 = vpop.f32.mrb[0].mxu0
        %3789 = vmatprep.mubr.f32.mxu0 0.0
        %3790 = vmatmul.mubr.f32.gmra.mrb[0].mxu0 %v3065
        %v3791 = vpop.f32.mrb[0].mxu0
        %v3792 = vadd.f32 %v3417, %v3791
        %v3793 = vpop.f32.mrb[0].mxu0
        %3794 = vmatprep.mubr.f32.mxu0 0.0
        %3795 = vmatmul.mubr.f32.gmra.mrb[0].mxu0 %v3068
        %v3796 = vpop.f32.mrb[0].mxu0
        %v3797 = vadd.f32 %v3422, %v3796
        %v3798 = vpop.f32.mrb[0].mxu0
        %3799 = vmatprep.mubr.f32.mxu0 0.0
        %3800 = vmatmul.mubr.f32.gmra.mrb[0].mxu0 %v3071
        %v3801 = vpop.f32.mrb[0].mxu0
        %v3802 = vadd.f32 %v3427, %v3801
        %v3803 = vpop.f32.mrb[0].mxu0
        %3804 = vmatprep.mubr.f32.mxu0 0.0
        %3805 = vmatmul.mubr.f32.gmra.mrb[0].mxu0 %v3074
        %v3806 = vpop.f32.mrb[0].mxu0
        %v3807 = vadd.f32 %v3432, %v3806
        %v3808 = vpop.f32.mrb[0].mxu0
        %3809 = vmatprep.mubr.f32.mxu0 0.0
        %3810 = vmatmul.mubr.f32.gmra.mrb[0].mxu0 %v3077
        %v3811 = vpop.f32.mrb[0].mxu0
        %v3812 = vadd.f32 %v3437, %v3811
        %v3813 = vpop.f32.mrb[0].mxu0
        %3814 = vmatprep.mubr.f32.mxu0 0.0
        %3815 = vmatmul.mubr.f32.gmra.mrb[0].mxu0 %v3080
        %v3816 = vpop.f32.mrb[0].mxu0
        %v3817 = vadd.f32 %v3442, %v3816
        %v3818 = vpop.f32.mrb[0].mxu0
        %3819 = vmatprep.mubr.f32.mxu0 0.0
        %3820 = vmatmul.mubr.f32.gmra.mrb[0].mxu0 %v3083
        %v3821 = vpop.f32.mrb[0].mxu0
        %v3822 = vadd.f32 %v3447, %v3821
        %v3823 = vpop.f32.mrb[0].mxu0
        %3824 = vmatprep.mubr.f32.mxu0 0.0
        %3825 = vmatmul.mubr.f32.gmra.mrb[0].mxu0 %v3086
        %v3826 = vpop.f32.mrb[0].mxu0
        %v3827 = vadd.f32 %v3452, %v3826
        %v3828 = vpop.f32.mrb[0].mxu0
        %3829 = vmatprep.mubr.f32.mxu0 0.0
        %3830 = vmatmul.mubr.f32.gmra.mrb[0].mxu0 %v3089
        %v3831 = vpop.f32.mrb[0].mxu0
        %v3832 = vadd.f32 %v3457, %v3831
        %v3833 = vpop.f32.mrb[0].mxu0
        %3834 = vmatprep.mubr.f32.mxu0 0.0
        %3835 = vmatmul.mubr.f32.gmra.mrb[0].mxu0 %v3092
        %v3836 = vpop.f32.mrb[0].mxu0
        %v3837 = vadd.f32 %v3462, %v3836
        %v3838 = vpop.f32.mrb[0].mxu0
        %3839 = vmatprep.mubr.f32.mxu0 0.0
        %3840 = vmatmul.mubr.f32.gmra.mrb[0].mxu0 %v3095
        %v3841 = vpop.f32.mrb[0].mxu0
        %v3842 = vadd.f32 %v3467, %v3841
        %v3843 = vpop.f32.mrb[0].mxu0
        %3844 = vmatprep.mubr.f32.mxu0 0.0
        %3845 = vmatmul.mubr.f32.gmra.mrb[0].mxu0 %v3098
        %v3846 = vpop.f32.mrb[0].mxu0
        %v3847 = vadd.f32 %v3472, %v3846
        %v3848 = vpop.f32.mrb[0].mxu0
        %3849 = vmatprep.mubr.f32.mxu0 0.0
        %3850 = vmatmul.mubr.f32.gmra.mrb[0].mxu0 %v3101
        %v3851 = vpop.f32.mrb[0].mxu0
        %v3852 = vadd.f32 %v3477, %v3851
        %v3853 = vpop.f32.mrb[0].mxu0
        %3854 = vmatprep.mubr.f32.mxu0 0.0
        %3855 = vmatmul.mubr.f32.gmra.mrb[0].mxu0 %v3104
        %v3856 = vpop.f32.mrb[0].mxu0
        %v3857 = vadd.f32 %v3482, %v3856
        %v3858 = vpop.f32.mrb[0].mxu0
        %3859 = vmatprep.mubr.f32.mxu0 0.0
        %3860 = vmatmul.mubr.f32.gmra.mrb[0].mxu0 %v3107
        %v3861 = vpop.f32.mrb[0].mxu0
        %v3862 = vadd.f32 %v3487, %v3861
        %v3863 = vpop.f32.mrb[0].mxu0
        %3864 = vmatprep.mubr.f32.mxu0 0.0
        %3865 = vmatmul.mubr.f32.gmra.mrb[0].mxu0 %v3110
        %v3866 = vpop.f32.mrb[0].mxu0
        %v3867 = vadd.f32 %v3492, %v3866
        %v3868 = vpop.f32.mrb[0].mxu0
        %3869 = vmatprep.mubr.f32.mxu0 0.0
        %3870 = vmatmul.mubr.f32.gmra.mrb[0].mxu0 %v3113
        %v3871 = vpop.f32.mrb[0].mxu0
        %v3872 = vadd.f32 %v3497, %v3871
        %v3873 = vpop.f32.mrb[0].mxu0
        %3874 = vmatprep.mubr.f32.mxu0 0.0
        %3875 = vmatmul.mubr.f32.gmra.mrb[0].mxu0 %v3116
        %v3876 = vpop.f32.mrb[0].mxu0
        %v3877 = vadd.f32 %v3502, %v3876
        %v3878 = vpop.f32.mrb[0].mxu0
        %3879 = vmatprep.mubr.f32.mxu0 0.0
        %3880 = vmatmul.mubr.f32.gmra.mrb[0].mxu0 %v3119
        %v3881 = vpop.f32.mrb[0].mxu0
        %v3882 = vadd.f32 %v3507, %v3881
        %v3883 = vpop.f32.mrb[0].mxu0
        %3884 = vmatprep.mubr.f32.mxu0 0.0
        %3885 = vmatmul.mubr.f32.gmra.mrb[0].mxu0 %v3122
        %v3886 = vpop.f32.mrb[0].mxu0
        %v3887 = vadd.f32 %v3512, %v3886
        %v3888 = vpop.f32.mrb[0].mxu0
        %3889 = vmatprep.mubr.f32.mxu0 0.0
        %3890 = vmatmul.mubr.f32.gmra.mrb[0].mxu0 %v3125
        %v3891 = vpop.f32.mrb[0].mxu0
        %v3892 = vadd.f32 %v3517, %v3891
        %v3893 = vpop.f32.mrb[0].mxu0
        %3894 = vmatprep.mubr.f32.mxu0 0.0
        %3895 = vmatmul.mubr.f32.gmra.mrb[0].mxu0 %v3128
        %v3896 = vpop.f32.mrb[0].mxu0
        %v3897 = vadd.f32 %v3522, %v3896
        %v3898 = vpop.f32.mrb[0].mxu0
        %3899 = vmatprep.mubr.f32.mxu0 0.0
        %3900 = vmatmul.mubr.f32.gmra.mrb[0].mxu0 %v3131
        %v3901 = vpop.f32.mrb[0].mxu0
        %v3902 = vadd.f32 %v3527, %v3901
        %v3903 = vpop.f32.mrb[0].mxu0
        %3904 = vmatprep.mubr.f32.mxu0 0.0
        %3905 = vmatmul.mubr.f32.gmra.mrb[0].mxu0 %v3134
        %v3906 = vpop.f32.mrb[0].mxu0
        %v3907 = vadd.f32 %v3532, %v3906
        %v3908 = vpop.f32.mrb[0].mxu0
        %3909 = vmatprep.mubr.f32.mxu0 0.0
        %3910 = vmatmul.mubr.f32.gmra.mrb[0].mxu0 %v3137
        %v3911 = vpop.f32.mrb[0].mxu0
        %v3912 = vadd.f32 %v3537, %v3911
        %v3913 = vpop.f32.mrb[0].mxu0
        %3914 = vmatprep.mubr.f32.mxu0 0.0
        %3915 = vmatmul.mubr.f32.gmra.mrb[0].mxu0 %v3140
        %v3916 = vpop.f32.mrb[0].mxu0
        %v3917 = vadd.f32 %v3542, %v3916
        %v3918 = vpop.f32.mrb[0].mxu0
        %3919 = vmatprep.mubr.f32.mxu0 0.0
        %3920 = vmatmul.mubr.f32.gmra.mrb[0].mxu0 %v3143
        %v3921 = vpop.f32.mrb[0].mxu0
        %v3922 = vadd.f32 %v3547, %v3921
        %v3923 = vpop.f32.mrb[0].mxu0
        %3924 = vmatprep.mubr.f32.mxu0 0.0
        %3925 = vmatmul.mubr.f32.gmra.mrb[0].mxu0 %v3146
        %v3926 = vpop.f32.mrb[0].mxu0
        %v3927 = vadd.f32 %v3552, %v3926
        %v3928 = vpop.f32.mrb[0].mxu0
        %3929 = vmatprep.mubr.f32.mxu0 0.0
        %3930 = vmatmul.mubr.f32.gmra.mrb[0].mxu0 %v3149
        %v3931 = vpop.f32.mrb[0].mxu0
        %v3932 = vadd.f32 %v3557, %v3931
        %v3933 = vpop.f32.mrb[0].mxu0
        %3934 = vmatprep.mubr.f32.mxu0 0.0
        %3935 = vmatmul.mubr.f32.gmra.mrb[0].mxu0 %v3152
        %v3936 = vpop.f32.mrb[0].mxu0
        %v3937 = vadd.f32 %v3562, %v3936
        %v3938 = vpop.f32.mrb[0].mxu0
        %3939 = vmatprep.mubr.f32.mxu0 0.0
        %3940 = vmatmul.mubr.f32.gmra.mrb[0].mxu0 %v3155
        %v3941 = vpop.f32.mrb[0].mxu0
        %v3942 = vadd.f32 %v3567, %v3941
        %v3943 = vpop.f32.mrb[0].mxu0
        %3944 = vmatprep.mubr.f32.mxu0 0.0
        %3945 = vmatmul.mubr.f32.gmra.mrb[0].mxu0 %v3158
        %v3946 = vpop.f32.mrb[0].mxu0
        %v3947 = vadd.f32 %v3572, %v3946
        %v3948 = vpop.f32.mrb[0].mxu0
        %3949 = vmatprep.mubr.f32.mxu0 0.0
        %3950 = vmatmul.mubr.f32.gmra.mrb[0].mxu0 %v3161
        %v3951 = vpop.f32.mrb[0].mxu0
        %v3952 = vadd.f32 %v3577, %v3951
        %v3953 = vpop.f32.mrb[0].mxu0
        %3954 = vmatprep.mubr.f32.mxu0 0.0
        %3955 = vmatmul.mubr.f32.gmra.mrb[0].mxu0 %v3164
        %v3956 = vpop.f32.mrb[0].mxu0
        %v3957 = vadd.f32 %v3582, %v3956
        %v3958 = vpop.f32.mrb[0].mxu0
        %3959 = vmatprep.mubr.f32.mxu0 0.0
        %3960 = vmatmul.mubr.f32.gmra.mrb[0].mxu0 %v3167
        %v3961 = vpop.f32.mrb[0].mxu0
        %v3962 = vadd.f32 %v3587, %v3961
        %v3963 = vpop.f32.mrb[0].mxu0
        %3964 = vmatprep.mubr.f32.mxu0 0.0
        %3965 = vmatmul.mubr.f32.gmra.mrb[0].mxu0 %v3170
        %v3966 = vpop.f32.mrb[0].mxu0
        %v3967 = vadd.f32 %v3592, %v3966
        %v3968 = vpop.f32.mrb[0].mxu0
        %3969 = vdwg.mxu0
        %v3970 = vld [vmem:[#allocation4] sm:$0xff]
        %v3971 = vld [vmem:[#allocation4 + $0x8] sm:$0xff]
        %v3972 = vld [vmem:[#allocation4 + $0x10] sm:$0xff]
        %v3973 = vld [vmem:[#allocation4 + $0x18] sm:$0xff]
        %v3974 = vld [vmem:[#allocation4 + $0x20] sm:$0xff]
        %v3975 = vld [vmem:[#allocation4 + $0x28] sm:$0xff]
        %v3976 = vld [vmem:[#allocation4 + $0x30] sm:$0xff]
        %v3977 = vld [vmem:[#allocation4 + $0x38] sm:$0xff]
        %v3978 = vld [vmem:[#allocation4 + $0x40] sm:$0xff]
        %v3979 = vld [vmem:[#allocation4 + $0x48] sm:$0xff]
        %v3980 = vld [vmem:[#allocation4 + $0x50] sm:$0xff]
        %v3981 = vld [vmem:[#allocation4 + $0x58] sm:$0xff]
        %v3982 = vld [vmem:[#allocation4 + $0x60] sm:$0xff]
        %v3983 = vld [vmem:[#allocation4 + $0x68] sm:$0xff]
        %v3984 = vld [vmem:[#allocation4 + $0x70] sm:$0xff]
        %v3985 = vld [vmem:[#allocation4 + $0x78] sm:$0xff]
        %v3986 = vld [vmem:[#allocation4 + $0x80] sm:$0xff]
        %v3987 = vld [vmem:[#allocation4 + $0x88] sm:$0xff]
        %v3988 = vld [vmem:[#allocation4 + $0x90] sm:$0xff]
        %v3989 = vld [vmem:[#allocation4 + $0x98] sm:$0xff]
        %v3990 = vld [vmem:[#allocation4 + $0xa0] sm:$0xff]
        %v3991 = vld [vmem:[#allocation4 + $0xa8] sm:$0xff]
        %v3992 = vld [vmem:[#allocation4 + $0xb0] sm:$0xff]
        %v3993 = vld [vmem:[#allocation4 + $0xb8] sm:$0xff]
        %v3994 = vld [vmem:[#allocation4 + $0xc0] sm:$0xff]
        %v3995 = vld [vmem:[#allocation4 + $0xc8] sm:$0xff]
        %v3996 = vld [vmem:[#allocation4 + $0xd0] sm:$0xff]
        %v3997 = vld [vmem:[#allocation4 + $0xd8] sm:$0xff]
        %v3998 = vld [vmem:[#allocation4 + $0xe0] sm:$0xff]
        %v3999 = vld [vmem:[#allocation4 + $0xe8] sm:$0xff]
        %v4000 = vld [vmem:[#allocation4 + $0xf0] sm:$0xff]
        %v4001 = vld [vmem:[#allocation4 + $0xf8] sm:$0xff]
        %v4002 = vld [vmem:[#allocation4 + $0x100] sm:$0xff]
        %v4003 = vld [vmem:[#allocation4 + $0x108] sm:$0xff]
        %v4004 = vld [vmem:[#allocation4 + $0x110] sm:$0xff]
        %v4005 = vld [vmem:[#allocation4 + $0x118] sm:$0xff]
        %v4006 = vld [vmem:[#allocation4 + $0x120] sm:$0xff]
        %v4007 = vld [vmem:[#allocation4 + $0x128] sm:$0xff]
        %v4008 = vld [vmem:[#allocation4 + $0x130] sm:$0xff]
        %v4009 = vld [vmem:[#allocation4 + $0x138] sm:$0xff]
        %v4010 = vld [vmem:[#allocation4 + $0x140] sm:$0xff]
        %v4011 = vld [vmem:[#allocation4 + $0x148] sm:$0xff]
        %v4012 = vld [vmem:[#allocation4 + $0x150] sm:$0xff]
        %v4013 = vld [vmem:[#allocation4 + $0x158] sm:$0xff]
        %v4014 = vld [vmem:[#allocation4 + $0x160] sm:$0xff]
        %v4015 = vld [vmem:[#allocation4 + $0x168] sm:$0xff]
        %v4016 = vld [vmem:[#allocation4 + $0x170] sm:$0xff]
        %v4017 = vld [vmem:[#allocation4 + $0x178] sm:$0xff]
        %v4018 = vld [vmem:[#allocation4 + $0x180] sm:$0xff]
        %v4019 = vld [vmem:[#allocation4 + $0x188] sm:$0xff]
        %v4020 = vld [vmem:[#allocation4 + $0x190] sm:$0xff]
        %v4021 = vld [vmem:[#allocation4 + $0x198] sm:$0xff]
        %v4022 = vld [vmem:[#allocation4 + $0x1a0] sm:$0xff]
        %v4023 = vld [vmem:[#allocation4 + $0x1a8] sm:$0xff]
        %v4024 = vld [vmem:[#allocation4 + $0x1b0] sm:$0xff]
        %v4025 = vld [vmem:[#allocation4 + $0x1b8] sm:$0xff]
        %v4026 = vld [vmem:[#allocation4 + $0x1c0] sm:$0xff]
        %v4027 = vld [vmem:[#allocation4 + $0x1c8] sm:$0xff]
        %v4028 = vld [vmem:[#allocation4 + $0x1d0] sm:$0xff]
        %v4029 = vld [vmem:[#allocation4 + $0x1d8] sm:$0xff]
        %v4030 = vld [vmem:[#allocation4 + $0x1e0] sm:$0xff]
        %v4031 = vld [vmem:[#allocation4 + $0x1e8] sm:$0xff]
        %v4032 = vadd.f32 %v3970, %v3662
        %v4033 = vadd.f32 %v3971, %v3667
        %v4034 = vadd.f32 %v3972, %v3672
        %v4035 = vadd.f32 %v3973, %v3677
        %v4036 = vadd.f32 %v3974, %v3682
        %v4037 = vadd.f32 %v3975, %v3687
        %v4038 = vadd.f32 %v3976, %v3692
        %v4039 = vadd.f32 %v3977, %v3697
        %v4040 = vadd.f32 %v3978, %v3702
        %v4041 = vadd.f32 %v3979, %v3707
        %v4042 = vadd.f32 %v3980, %v3712
        %v4043 = vadd.f32 %v3981, %v3717
        %v4044 = vadd.f32 %v3982, %v3722
        %v4045 = vadd.f32 %v3983, %v3727
        %v4046 = vadd.f32 %v3984, %v3732
        %v4047 = vadd.f32 %v3985, %v3737
        %v4048 = vadd.f32 %v3986, %v3742
        %v4049 = vadd.f32 %v3987, %v3747
        %v4050 = vadd.f32 %v3988, %v3752
        %v4051 = vadd.f32 %v3989, %v3757
        %v4052 = vadd.f32 %v3990, %v3762
        %v4053 = vadd.f32 %v3991, %v3767
        %v4054 = vadd.f32 %v3992, %v3772
        %v4055 = vadd.f32 %v3993, %v3777
        %v4056 = vadd.f32 %v3994, %v3782
        %v4057 = vadd.f32 %v3995, %v3787
        %v4058 = vadd.f32 %v3996, %v3792
        %v4059 = vadd.f32 %v3997, %v3797
        %v4060 = vadd.f32 %v3998, %v3802
        %v4061 = vadd.f32 %v3999, %v3807
        %v4062 = vadd.f32 %v4000, %v3812
        %v4063 = vadd.f32 %v4001, %v3817
        %v4064 = vadd.f32 %v4002, %v3822
        %v4065 = vadd.f32 %v4003, %v3827
        %v4066 = vadd.f32 %v4004, %v3832
        %v4067 = vadd.f32 %v4005, %v3837
        %v4068 = vadd.f32 %v4006, %v3842
        %v4069 = vadd.f32 %v4007, %v3847
        %v4070 = vadd.f32 %v4008, %v3852
        %v4071 = vadd.f32 %v4009, %v3857
        %v4072 = vadd.f32 %v4010, %v3862
        %v4073 = vadd.f32 %v4011, %v3867
        %v4074 = vadd.f32 %v4012, %v3872
        %v4075 = vadd.f32 %v4013, %v3877
        %v4076 = vadd.f32 %v4014, %v3882
        %v4077 = vadd.f32 %v4015, %v3887
        %v4078 = vadd.f32 %v4016, %v3892
        %v4079 = vadd.f32 %v4017, %v3897
        %v4080 = vadd.f32 %v4018, %v3902
        %v4081 = vadd.f32 %v4019, %v3907
        %v4082 = vadd.f32 %v4020, %v3912
        %v4083 = vadd.f32 %v4021, %v3917
        %v4084 = vadd.f32 %v4022, %v3922
        %v4085 = vadd.f32 %v4023, %v3927
        %v4086 = vadd.f32 %v4024, %v3932
        %v4087 = vadd.f32 %v4025, %v3937
        %v4088 = vadd.f32 %v4026, %v3942
        %v4089 = vadd.f32 %v4027, %v3947
        %v4090 = vadd.f32 %v4028, %v3952
        %v4091 = vadd.f32 %v4029, %v3957
        %v4092 = vadd.f32 %v4030, %v3962
        %v4093 = vadd.f32 %v4031, %v3967
        %4094 = vst [vmem:[#allocation4] sm:$0xff] %v4032
        %4095 = vst [vmem:[#allocation4 + $0x8] sm:$0xff] %v4033
        %4096 = vst [vmem:[#allocation4 + $0x10] sm:$0xff] %v4034
        %4097 = vst [vmem:[#allocation4 + $0x18] sm:$0xff] %v4035
        %4098 = vst [vmem:[#allocation4 + $0x20] sm:$0xff] %v4036
        %4099 = vst [vmem:[#allocation4 + $0x28] sm:$0xff] %v4037
        %4100 = vst [vmem:[#allocation4 + $0x30] sm:$0xff] %v4038
        %4101 = vst [vmem:[#allocation4 + $0x38] sm:$0xff] %v4039
        %4102 = vst [vmem:[#allocation4 + $0x40] sm:$0xff] %v4040
        %4103 = vst [vmem:[#allocation4 + $0x48] sm:$0xff] %v4041
        %4104 = vst [vmem:[#allocation4 + $0x50] sm:$0xff] %v4042
        %4105 = vst [vmem:[#allocation4 + $0x58] sm:$0xff] %v4043
        %4106 = vst [vmem:[#allocation4 + $0x60] sm:$0xff] %v4044
        %4107 = vst [vmem:[#allocation4 + $0x68] sm:$0xff] %v4045
        %4108 = vst [vmem:[#allocation4 + $0x70] sm:$0xff] %v4046
        %4109 = vst [vmem:[#allocation4 + $0x78] sm:$0xff] %v4047
        %4110 = vst [vmem:[#allocation4 + $0x80] sm:$0xff] %v4048
        %4111 = vst [vmem:[#allocation4 + $0x88] sm:$0xff] %v4049
        %4112 = vst [vmem:[#allocation4 + $0x90] sm:$0xff] %v4050
        %4113 = vst [vmem:[#allocation4 + $0x98] sm:$0xff] %v4051
        %4114 = vst [vmem:[#allocation4 + $0xa0] sm:$0xff] %v4052
        %4115 = vst [vmem:[#allocation4 + $0xa8] sm:$0xff] %v4053
        %4116 = vst [vmem:[#allocation4 + $0xb0] sm:$0xff] %v4054
        %4117 = vst [vmem:[#allocation4 + $0xb8] sm:$0xff] %v4055
        %4118 = vst [vmem:[#allocation4 + $0xc0] sm:$0xff] %v4056
        %4119 = vst [vmem:[#allocation4 + $0xc8] sm:$0xff] %v4057
        %4120 = vst [vmem:[#allocation4 + $0xd0] sm:$0xff] %v4058
        %4121 = vst [vmem:[#allocation4 + $0xd8] sm:$0xff] %v4059
        %4122 = vst [vmem:[#allocation4 + $0xe0] sm:$0xff] %v4060
        %4123 = vst [vmem:[#allocation4 + $0xe8] sm:$0xff] %v4061
        %4124 = vst [vmem:[#allocation4 + $0xf0] sm:$0xff] %v4062
        %4125 = vst [vmem:[#allocation4 + $0xf8] sm:$0xff] %v4063
        %4126 = vst [vmem:[#allocation4 + $0x100] sm:$0xff] %v4064
        %4127 = vst [vmem:[#allocation4 + $0x108] sm:$0xff] %v4065
        %4128 = vst [vmem:[#allocation4 + $0x110] sm:$0xff] %v4066
        %4129 = vst [vmem:[#allocation4 + $0x118] sm:$0xff] %v4067
        %4130 = vst [vmem:[#allocation4 + $0x120] sm:$0xff] %v4068
        %4131 = vst [vmem:[#allocation4 + $0x128] sm:$0xff] %v4069
        %4132 = vst [vmem:[#allocation4 + $0x130] sm:$0xff] %v4070
        %4133 = vst [vmem:[#allocation4 + $0x138] sm:$0xff] %v4071
        %4134 = vst [vmem:[#allocation4 + $0x140] sm:$0xff] %v4072
        %4135 = vst [vmem:[#allocation4 + $0x148] sm:$0xff] %v4073
        %4136 = vst [vmem:[#allocation4 + $0x150] sm:$0xff] %v4074
        %4137 = vst [vmem:[#allocation4 + $0x158] sm:$0xff] %v4075
        %4138 = vst [vmem:[#allocation4 + $0x160] sm:$0xff] %v4076
        %4139 = vst [vmem:[#allocation4 + $0x168] sm:$0xff] %v4077
        %4140 = vst [vmem:[#allocation4 + $0x170] sm:$0xff] %v4078
        %4141 = vst [vmem:[#allocation4 + $0x178] sm:$0xff] %v4079
        %4142 = vst [vmem:[#allocation4 + $0x180] sm:$0xff] %v4080
        %4143 = vst [vmem:[#allocation4 + $0x188] sm:$0xff] %v4081
        %4144 = vst [vmem:[#allocation4 + $0x190] sm:$0xff] %v4082
        %4145 = vst [vmem:[#allocation4 + $0x198] sm:$0xff] %v4083
        %4146 = vst [vmem:[#allocation4 + $0x1a0] sm:$0xff] %v4084
        %4147 = vst [vmem:[#allocation4 + $0x1a8] sm:$0xff] %v4085
        %4148 = vst [vmem:[#allocation4 + $0x1b0] sm:$0xff] %v4086
        %4149 = vst [vmem:[#allocation4 + $0x1b8] sm:$0xff] %v4087
        %4150 = vst [vmem:[#allocation4 + $0x1c0] sm:$0xff] %v4088
        %4151 = vst [vmem:[#allocation4 + $0x1c8] sm:$0xff] %v4089
        %4152 = vst [vmem:[#allocation4 + $0x1d0] sm:$0xff] %v4090
        %4153 = vst [vmem:[#allocation4 + $0x1d8] sm:$0xff] %v4091
        %4154 = vst [vmem:[#allocation4 + $0x1e0] sm:$0xff] %v4092
        %4155 = vst [vmem:[#allocation4 + $0x1e8] sm:$0xff] %v4093
        %v4156 = vlaneseq
        %v4157 = vshrl.u32 %v4156, 7
        %v4158 = vadd.s32 %v4157, 8
        %v4159 = vadd.s32 %v4157, 16
        %v4160 = vadd.s32 %v4157, 24
        %v4161 = vadd.s32 %v4157, 32
        %v4162 = vadd.s32 %v4157, 40
        %v4163 = vadd.s32 %v4157, 48
        %v4164 = vadd.s32 %v4157, 56
        %v4165 = vadd.s32 %v4157, 64
        %v4166 = vadd.s32 %v4157, 72
        %v4167 = vadd.s32 %v4157, 80
        %v4168 = vadd.s32 %v4157, 88
        %v4169 = vadd.s32 %v4157, 96
        %v4170 = vadd.s32 %v4157, 104
        %v4171 = vadd.s32 %v4157, 112
        %v4172 = vadd.s32 %v4157, 120
        %v4173 = vadd.s32 %v4157, 128
        %v4174 = vadd.s32 %v4157, 136
        %v4175 = vadd.s32 %v4157, 144
        %v4176 = vadd.s32 %v4157, 152
        %v4177 = vadd.s32 %v4157, 160
        %v4178 = vadd.s32 %v4157, 168
        %v4179 = vadd.s32 %v4157, 176
        %v4180 = vadd.s32 %v4157, 184
        %v4181 = vadd.s32 %v4157, 192
        %v4182 = vadd.s32 %v4157, 200
        %v4183 = vadd.s32 %v4157, 208
        %v4184 = vadd.s32 %v4157, 216
        %v4185 = vadd.s32 %v4157, 224
        %v4186 = vadd.s32 %v4157, 232
        %v4187 = vadd.s32 %v4157, 240
        %v4188 = vadd.s32 %v4157, 248
        %v4189 = vadd.s32 %v4157, 256
        %v4190 = vadd.s32 %v4157, 264
        %v4191 = vadd.s32 %v4157, 272
        %v4192 = vadd.s32 %v4157, 280
        %v4193 = vadd.s32 %v4157, 288
        %v4194 = vadd.s32 %v4157, 296
        %v4195 = vadd.s32 %v4157, 304
        %v4196 = vadd.s32 %v4157, 312
        %v4197 = vadd.s32 %v4157, 320
        %v4198 = vadd.s32 %v4157, 328
        %v4199 = vadd.s32 %v4157, 336
        %v4200 = vadd.s32 %v4157, 344
        %v4201 = vadd.s32 %v4157, 352
        %v4202 = vadd.s32 %v4157, 360
        %v4203 = vadd.s32 %v4157, 368
        %v4204 = vadd.s32 %v4157, 376
        %v4205 = vadd.s32 %v4157, 384
        %v4206 = vadd.s32 %v4157, 392
        %v4207 = vadd.s32 %v4157, 400
        %v4208 = vadd.s32 %v4157, 408
        %v4209 = vadd.s32 %v4157, 416
        %v4210 = vadd.s32 %v4157, 424
        %v4211 = vadd.s32 %v4157, 432
        %v4212 = vadd.s32 %v4157, 440
        %v4213 = vadd.s32 %v4157, 448
        %v4214 = vadd.s32 %v4157, 456
        %v4215 = vadd.s32 %v4157, 464
        %v4216 = vadd.s32 %v4157, 472
        %v4217 = vadd.s32 %v4157, 480
        %v4218 = vadd.s32 %v4157, 488
        %s4219 = ssub.s32 %s340, 32
        %v4220 = vstv %s4219
        %v4221 = vadd.s32 %v4220, %v4157
        %v4222 = vadd.s32 %v4220, %v4158
        %v4223 = vadd.s32 %v4220, %v4159
        %v4224 = vadd.s32 %v4220, %v4160
        %v4225 = vadd.s32 %v4220, %v4161
        %v4226 = vadd.s32 %v4220, %v4162
        %v4227 = vadd.s32 %v4220, %v4163
        %v4228 = vadd.s32 %v4220, %v4164
        %v4229 = vadd.s32 %v4220, %v4165
        %v4230 = vadd.s32 %v4220, %v4166
        %v4231 = vadd.s32 %v4220, %v4167
        %v4232 = vadd.s32 %v4220, %v4168
        %v4233 = vadd.s32 %v4220, %v4169
        %v4234 = vadd.s32 %v4220, %v4170
        %v4235 = vadd.s32 %v4220, %v4171
        %v4236 = vadd.s32 %v4220, %v4172
        %v4237 = vadd.s32 %v4220, %v4173
        %v4238 = vadd.s32 %v4220, %v4174
        %v4239 = vadd.s32 %v4220, %v4175
        %v4240 = vadd.s32 %v4220, %v4176
        %v4241 = vadd.s32 %v4220, %v4177
        %v4242 = vadd.s32 %v4220, %v4178
        %v4243 = vadd.s32 %v4220, %v4179
        %v4244 = vadd.s32 %v4220, %v4180
        %v4245 = vadd.s32 %v4220, %v4181
        %v4246 = vadd.s32 %v4220, %v4182
        %v4247 = vadd.s32 %v4220, %v4183
        %v4248 = vadd.s32 %v4220, %v4184
        %v4249 = vadd.s32 %v4220, %v4185
        %v4250 = vadd.s32 %v4220, %v4186
        %v4251 = vadd.s32 %v4220, %v4187
        %v4252 = vadd.s32 %v4220, %v4188
        %v4253 = vadd.s32 %v4220, %v4189
        %v4254 = vadd.s32 %v4220, %v4190
        %v4255 = vadd.s32 %v4220, %v4191
        %v4256 = vadd.s32 %v4220, %v4192
        %v4257 = vadd.s32 %v4220, %v4193
        %v4258 = vadd.s32 %v4220, %v4194
        %v4259 = vadd.s32 %v4220, %v4195
        %v4260 = vadd.s32 %v4220, %v4196
        %v4261 = vadd.s32 %v4220, %v4197
        %v4262 = vadd.s32 %v4220, %v4198
        %v4263 = vadd.s32 %v4220, %v4199
        %v4264 = vadd.s32 %v4220, %v4200
        %v4265 = vadd.s32 %v4220, %v4201
        %v4266 = vadd.s32 %v4220, %v4202
        %v4267 = vadd.s32 %v4220, %v4203
        %v4268 = vadd.s32 %v4220, %v4204
        %v4269 = vadd.s32 %v4220, %v4205
        %v4270 = vadd.s32 %v4220, %v4206
        %v4271 = vadd.s32 %v4220, %v4207
        %v4272 = vadd.s32 %v4220, %v4208
        %v4273 = vadd.s32 %v4220, %v4209
        %v4274 = vadd.s32 %v4220, %v4210
        %v4275 = vadd.s32 %v4220, %v4211
        %v4276 = vadd.s32 %v4220, %v4212
        %v4277 = vadd.s32 %v4220, %v4213
        %v4278 = vadd.s32 %v4220, %v4214
        %v4279 = vadd.s32 %v4220, %v4215
        %v4280 = vadd.s32 %v4220, %v4216
        %v4281 = vadd.s32 %v4220, %v4217
        %v4282 = vadd.s32 %v4220, %v4218
        %v4283 = vcvt.s32.f32 %v4221
        %v4284 = vcvt.s32.f32 %v4222
        %v4285 = vcvt.s32.f32 %v4223
        %v4286 = vcvt.s32.f32 %v4224
        %v4287 = vcvt.s32.f32 %v4225
        %v4288 = vcvt.s32.f32 %v4226
        %v4289 = vcvt.s32.f32 %v4227
        %v4290 = vcvt.s32.f32 %v4228
        %v4291 = vcvt.s32.f32 %v4229
        %v4292 = vcvt.s32.f32 %v4230
        %v4293 = vcvt.s32.f32 %v4231
        %v4294 = vcvt.s32.f32 %v4232
        %v4295 = vcvt.s32.f32 %v4233
        %v4296 = vcvt.s32.f32 %v4234
        %v4297 = vcvt.s32.f32 %v4235
        %v4298 = vcvt.s32.f32 %v4236
        %v4299 = vcvt.s32.f32 %v4237
        %v4300 = vcvt.s32.f32 %v4238
        %v4301 = vcvt.s32.f32 %v4239
        %v4302 = vcvt.s32.f32 %v4240
        %v4303 = vcvt.s32.f32 %v4241
        %v4304 = vcvt.s32.f32 %v4242
        %v4305 = vcvt.s32.f32 %v4243
        %v4306 = vcvt.s32.f32 %v4244
        %v4307 = vcvt.s32.f32 %v4245
        %v4308 = vcvt.s32.f32 %v4246
        %v4309 = vcvt.s32.f32 %v4247
        %v4310 = vcvt.s32.f32 %v4248
        %v4311 = vcvt.s32.f32 %v4249
        %v4312 = vcvt.s32.f32 %v4250
        %v4313 = vcvt.s32.f32 %v4251
        %v4314 = vcvt.s32.f32 %v4252
        %v4315 = vcvt.s32.f32 %v4253
        %v4316 = vcvt.s32.f32 %v4254
        %v4317 = vcvt.s32.f32 %v4255
        %v4318 = vcvt.s32.f32 %v4256
        %v4319 = vcvt.s32.f32 %v4257
        %v4320 = vcvt.s32.f32 %v4258
        %v4321 = vcvt.s32.f32 %v4259
        %v4322 = vcvt.s32.f32 %v4260
        %v4323 = vcvt.s32.f32 %v4261
        %v4324 = vcvt.s32.f32 %v4262
        %v4325 = vcvt.s32.f32 %v4263
        %v4326 = vcvt.s32.f32 %v4264
        %v4327 = vcvt.s32.f32 %v4265
        %v4328 = vcvt.s32.f32 %v4266
        %v4329 = vcvt.s32.f32 %v4267
        %v4330 = vcvt.s32.f32 %v4268
        %v4331 = vcvt.s32.f32 %v4269
        %v4332 = vcvt.s32.f32 %v4270
        %v4333 = vcvt.s32.f32 %v4271
        %v4334 = vcvt.s32.f32 %v4272
        %v4335 = vcvt.s32.f32 %v4273
        %v4336 = vcvt.s32.f32 %v4274
        %v4337 = vcvt.s32.f32 %v4275
        %v4338 = vcvt.s32.f32 %v4276
        %v4339 = vcvt.s32.f32 %v4277
        %v4340 = vcvt.s32.f32 %v4278
        %v4341 = vcvt.s32.f32 %v4279
        %v4342 = vcvt.s32.f32 %v4280
        %v4343 = vcvt.s32.f32 %v4281
        %v4344 = vcvt.s32.f32 %v4282
        %v4345 = vadd.f32 %v4283, 0.5
        %v4346 = vadd.f32 %v4284, 0.5
        %v4347 = vadd.f32 %v4285, 0.5
        %v4348 = vadd.f32 %v4286, 0.5
        %v4349 = vadd.f32 %v4287, 0.5
        %v4350 = vadd.f32 %v4288, 0.5
        %v4351 = vadd.f32 %v4289, 0.5
        %v4352 = vadd.f32 %v4290, 0.5
        %v4353 = vadd.f32 %v4291, 0.5
        %v4354 = vadd.f32 %v4292, 0.5
        %v4355 = vadd.f32 %v4293, 0.5
        %v4356 = vadd.f32 %v4294, 0.5
        %v4357 = vadd.f32 %v4295, 0.5
        %v4358 = vadd.f32 %v4296, 0.5
        %v4359 = vadd.f32 %v4297, 0.5
        %v4360 = vadd.f32 %v4298, 0.5
        %v4361 = vadd.f32 %v4299, 0.5
        %v4362 = vadd.f32 %v4300, 0.5
        %v4363 = vadd.f32 %v4301, 0.5
        %v4364 = vadd.f32 %v4302, 0.5
        %v4365 = vadd.f32 %v4303, 0.5
        %v4366 = vadd.f32 %v4304, 0.5
        %v4367 = vadd.f32 %v4305, 0.5
        %v4368 = vadd.f32 %v4306, 0.5
        %v4369 = vadd.f32 %v4307, 0.5
        %v4370 = vadd.f32 %v4308, 0.5
        %v4371 = vadd.f32 %v4309, 0.5
        %v4372 = vadd.f32 %v4310, 0.5
        %v4373 = vadd.f32 %v4311, 0.5
        %v4374 = vadd.f32 %v4312, 0.5
        %v4375 = vadd.f32 %v4313, 0.5
        %v4376 = vadd.f32 %v4314, 0.5
        %v4377 = vadd.f32 %v4315, 0.5
        %v4378 = vadd.f32 %v4316, 0.5
        %v4379 = vadd.f32 %v4317, 0.5
        %v4380 = vadd.f32 %v4318, 0.5
        %v4381 = vadd.f32 %v4319, 0.5
        %v4382 = vadd.f32 %v4320, 0.5
        %v4383 = vadd.f32 %v4321, 0.5
        %v4384 = vadd.f32 %v4322, 0.5
        %v4385 = vadd.f32 %v4323, 0.5
        %v4386 = vadd.f32 %v4324, 0.5
        %v4387 = vadd.f32 %v4325, 0.5
        %v4388 = vadd.f32 %v4326, 0.5
        %v4389 = vadd.f32 %v4327, 0.5
        %v4390 = vadd.f32 %v4328, 0.5
        %v4391 = vadd.f32 %v4329, 0.5
        %v4392 = vadd.f32 %v4330, 0.5
        %v4393 = vadd.f32 %v4331, 0.5
        %v4394 = vadd.f32 %v4332, 0.5
        %v4395 = vadd.f32 %v4333, 0.5
        %v4396 = vadd.f32 %v4334, 0.5
        %v4397 = vadd.f32 %v4335, 0.5
        %v4398 = vadd.f32 %v4336, 0.5
        %v4399 = vadd.f32 %v4337, 0.5
        %v4400 = vadd.f32 %v4338, 0.5
        %v4401 = vadd.f32 %v4339, 0.5
        %v4402 = vadd.f32 %v4340, 0.5
        %v4403 = vadd.f32 %v4341, 0.5
        %v4404 = vadd.f32 %v4342, 0.5
        %v4405 = vadd.f32 %v4343, 0.5
        %v4406 = vadd.f32 %v4344, 0.5
        %v4407 = vmul.f32 %v4345, 0.041666668
        %v4408 = vmul.f32 %v4346, 0.041666668
        %v4409 = vmul.f32 %v4347, 0.041666668
        %v4410 = vmul.f32 %v4348, 0.041666668
        %v4411 = vmul.f32 %v4349, 0.041666668
        %v4412 = vmul.f32 %v4350, 0.041666668
        %v4413 = vmul.f32 %v4351, 0.041666668
        %v4414 = vmul.f32 %v4352, 0.041666668
        %v4415 = vmul.f32 %v4353, 0.041666668
        %v4416 = vmul.f32 %v4354, 0.041666668
        %v4417 = vmul.f32 %v4355, 0.041666668
        %v4418 = vmul.f32 %v4356, 0.041666668
        %v4419 = vmul.f32 %v4357, 0.041666668
        %v4420 = vmul.f32 %v4358, 0.041666668
        %v4421 = vmul.f32 %v4359, 0.041666668
        %v4422 = vmul.f32 %v4360, 0.041666668
        %v4423 = vmul.f32 %v4361, 0.041666668
        %v4424 = vmul.f32 %v4362, 0.041666668
        %v4425 = vmul.f32 %v4363, 0.041666668
        %v4426 = vmul.f32 %v4364, 0.041666668
        %v4427 = vmul.f32 %v4365, 0.041666668
        %v4428 = vmul.f32 %v4366, 0.041666668
        %v4429 = vmul.f32 %v4367, 0.041666668
        %v4430 = vmul.f32 %v4368, 0.041666668
        %v4431 = vmul.f32 %v4369, 0.041666668
        %v4432 = vmul.f32 %v4370, 0.041666668
        %v4433 = vmul.f32 %v4371, 0.041666668
        %v4434 = vmul.f32 %v4372, 0.041666668
        %v4435 = vmul.f32 %v4373, 0.041666668
        %v4436 = vmul.f32 %v4374, 0.041666668
        %v4437 = vmul.f32 %v4375, 0.041666668
        %v4438 = vmul.f32 %v4376, 0.041666668
        %v4439 = vmul.f32 %v4377, 0.041666668
        %v4440 = vmul.f32 %v4378, 0.041666668
        %v4441 = vmul.f32 %v4379, 0.041666668
        %v4442 = vmul.f32 %v4380, 0.041666668
        %v4443 = vmul.f32 %v4381, 0.041666668
        %v4444 = vmul.f32 %v4382, 0.041666668
        %v4445 = vmul.f32 %v4383, 0.041666668
        %v4446 = vmul.f32 %v4384, 0.041666668
        %v4447 = vmul.f32 %v4385, 0.041666668
        %v4448 = vmul.f32 %v4386, 0.041666668
        %v4449 = vmul.f32 %v4387, 0.041666668
        %v4450 = vmul.f32 %v4388, 0.041666668
        %v4451 = vmul.f32 %v4389, 0.041666668
        %v4452 = vmul.f32 %v4390, 0.041666668
        %v4453 = vmul.f32 %v4391, 0.041666668
        %v4454 = vmul.f32 %v4392, 0.041666668
        %v4455 = vmul.f32 %v4393, 0.041666668
        %v4456 = vmul.f32 %v4394, 0.041666668
        %v4457 = vmul.f32 %v4395, 0.041666668
        %v4458 = vmul.f32 %v4396, 0.041666668
        %v4459 = vmul.f32 %v4397, 0.041666668
        %v4460 = vmul.f32 %v4398, 0.041666668
        %v4461 = vmul.f32 %v4399, 0.041666668
        %v4462 = vmul.f32 %v4400, 0.041666668
        %v4463 = vmul.f32 %v4401, 0.041666668
        %v4464 = vmul.f32 %v4402, 0.041666668
        %v4465 = vmul.f32 %v4403, 0.041666668
        %v4466 = vmul.f32 %v4404, 0.041666668
        %v4467 = vmul.f32 %v4405, 0.041666668
        %v4468 = vmul.f32 %v4406, 0.041666668
        %v4469 = vfloor.f32 %v4407
        %v4470 = vfloor.f32 %v4408
        %v4471 = vfloor.f32 %v4409
        %v4472 = vfloor.f32 %v4410
        %v4473 = vfloor.f32 %v4411
        %v4474 = vfloor.f32 %v4412
        %v4475 = vfloor.f32 %v4413
        %v4476 = vfloor.f32 %v4414
        %v4477 = vfloor.f32 %v4415
        %v4478 = vfloor.f32 %v4416
        %v4479 = vfloor.f32 %v4417
        %v4480 = vfloor.f32 %v4418
        %v4481 = vfloor.f32 %v4419
        %v4482 = vfloor.f32 %v4420
        %v4483 = vfloor.f32 %v4421
        %v4484 = vfloor.f32 %v4422
        %v4485 = vfloor.f32 %v4423
        %v4486 = vfloor.f32 %v4424
        %v4487 = vfloor.f32 %v4425
        %v4488 = vfloor.f32 %v4426
        %v4489 = vfloor.f32 %v4427
        %v4490 = vfloor.f32 %v4428
        %v4491 = vfloor.f32 %v4429
        %v4492 = vfloor.f32 %v4430
        %v4493 = vfloor.f32 %v4431
        %v4494 = vfloor.f32 %v4432
        %v4495 = vfloor.f32 %v4433
        %v4496 = vfloor.f32 %v4434
        %v4497 = vfloor.f32 %v4435
        %v4498 = vfloor.f32 %v4436
        %v4499 = vfloor.f32 %v4437
        %v4500 = vfloor.f32 %v4438
        %v4501 = vfloor.f32 %v4439
        %v4502 = vfloor.f32 %v4440
        %v4503 = vfloor.f32 %v4441
        %v4504 = vfloor.f32 %v4442
        %v4505 = vfloor.f32 %v4443
        %v4506 = vfloor.f32 %v4444
        %v4507 = vfloor.f32 %v4445
        %v4508 = vfloor.f32 %v4446
        %v4509 = vfloor.f32 %v4447
        %v4510 = vfloor.f32 %v4448
        %v4511 = vfloor.f32 %v4449
        %v4512 = vfloor.f32 %v4450
        %v4513 = vfloor.f32 %v4451
        %v4514 = vfloor.f32 %v4452
        %v4515 = vfloor.f32 %v4453
        %v4516 = vfloor.f32 %v4454
        %v4517 = vfloor.f32 %v4455
        %v4518 = vfloor.f32 %v4456
        %v4519 = vfloor.f32 %v4457
        %v4520 = vfloor.f32 %v4458
        %v4521 = vfloor.f32 %v4459
        %v4522 = vfloor.f32 %v4460
        %v4523 = vfloor.f32 %v4461
        %v4524 = vfloor.f32 %v4462
        %v4525 = vfloor.f32 %v4463
        %v4526 = vfloor.f32 %v4464
        %v4527 = vfloor.f32 %v4465
        %v4528 = vfloor.f32 %v4466
        %v4529 = vfloor.f32 %v4467
        %v4530 = vfloor.f32 %v4468
        %v4531 = vmul.f32 %v4469, 24.0
        %v4532 = vmul.f32 %v4470, 24.0
        %v4533 = vmul.f32 %v4471, 24.0
        %v4534 = vmul.f32 %v4472, 24.0
        %v4535 = vmul.f32 %v4473, 24.0
        %v4536 = vmul.f32 %v4474, 24.0
        %v4537 = vmul.f32 %v4475, 24.0
        %v4538 = vmul.f32 %v4476, 24.0
        %v4539 = vmul.f32 %v4477, 24.0
        %v4540 = vmul.f32 %v4478, 24.0
        %v4541 = vmul.f32 %v4479, 24.0
        %v4542 = vmul.f32 %v4480, 24.0
        %v4543 = vmul.f32 %v4481, 24.0
        %v4544 = vmul.f32 %v4482, 24.0
        %v4545 = vmul.f32 %v4483, 24.0
        %v4546 = vmul.f32 %v4484, 24.0
        %v4547 = vmul.f32 %v4485, 24.0
        %v4548 = vmul.f32 %v4486, 24.0
        %v4549 = vmul.f32 %v4487, 24.0
        %v4550 = vmul.f32 %v4488, 24.0
        %v4551 = vmul.f32 %v4489, 24.0
        %v4552 = vmul.f32 %v4490, 24.0
        %v4553 = vmul.f32 %v4491, 24.0
        %v4554 = vmul.f32 %v4492, 24.0
        %v4555 = vmul.f32 %v4493, 24.0
        %v4556 = vmul.f32 %v4494, 24.0
        %v4557 = vmul.f32 %v4495, 24.0
        %v4558 = vmul.f32 %v4496, 24.0
        %v4559 = vmul.f32 %v4497, 24.0
        %v4560 = vmul.f32 %v4498, 24.0
        %v4561 = vmul.f32 %v4499, 24.0
        %v4562 = vmul.f32 %v4500, 24.0
        %v4563 = vmul.f32 %v4501, 24.0
        %v4564 = vmul.f32 %v4502, 24.0
        %v4565 = vmul.f32 %v4503, 24.0
        %v4566 = vmul.f32 %v4504, 24.0
        %v4567 = vmul.f32 %v4505, 24.0
        %v4568 = vmul.f32 %v4506, 24.0
        %v4569 = vmul.f32 %v4507, 24.0
        %v4570 = vmul.f32 %v4508, 24.0
        %v4571 = vmul.f32 %v4509, 24.0
        %v4572 = vmul.f32 %v4510, 24.0
        %v4573 = vmul.f32 %v4511, 24.0
        %v4574 = vmul.f32 %v4512, 24.0
        %v4575 = vmul.f32 %v4513, 24.0
        %v4576 = vmul.f32 %v4514, 24.0
        %v4577 = vmul.f32 %v4515, 24.0
        %v4578 = vmul.f32 %v4516, 24.0
        %v4579 = vmul.f32 %v4517, 24.0
        %v4580 = vmul.f32 %v4518, 24.0
        %v4581 = vmul.f32 %v4519, 24.0
        %v4582 = vmul.f32 %v4520, 24.0
        %v4583 = vmul.f32 %v4521, 24.0
        %v4584 = vmul.f32 %v4522, 24.0
        %v4585 = vmul.f32 %v4523, 24.0
        %v4586 = vmul.f32 %v4524, 24.0
        %v4587 = vmul.f32 %v4525, 24.0
        %v4588 = vmul.f32 %v4526, 24.0
        %v4589 = vmul.f32 %v4527, 24.0
        %v4590 = vmul.f32 %v4528, 24.0
        %v4591 = vmul.f32 %v4529, 24.0
        %v4592 = vmul.f32 %v4530, 24.0
        %v4593 = vsub.f32 %v4283, %v4531
        %v4594 = vsub.f32 %v4284, %v4532
        %v4595 = vsub.f32 %v4285, %v4533
        %v4596 = vsub.f32 %v4286, %v4534
        %v4597 = vsub.f32 %v4287, %v4535
        %v4598 = vsub.f32 %v4288, %v4536
        %v4599 = vsub.f32 %v4289, %v4537
        %v4600 = vsub.f32 %v4290, %v4538
        %v4601 = vsub.f32 %v4291, %v4539
        %v4602 = vsub.f32 %v4292, %v4540
        %v4603 = vsub.f32 %v4293, %v4541
        %v4604 = vsub.f32 %v4294, %v4542
        %v4605 = vsub.f32 %v4295, %v4543
        %v4606 = vsub.f32 %v4296, %v4544
        %v4607 = vsub.f32 %v4297, %v4545
        %v4608 = vsub.f32 %v4298, %v4546
        %v4609 = vsub.f32 %v4299, %v4547
        %v4610 = vsub.f32 %v4300, %v4548
        %v4611 = vsub.f32 %v4301, %v4549
        %v4612 = vsub.f32 %v4302, %v4550
        %v4613 = vsub.f32 %v4303, %v4551
        %v4614 = vsub.f32 %v4304, %v4552
        %v4615 = vsub.f32 %v4305, %v4553
        %v4616 = vsub.f32 %v4306, %v4554
        %v4617 = vsub.f32 %v4307, %v4555
        %v4618 = vsub.f32 %v4308, %v4556
        %v4619 = vsub.f32 %v4309, %v4557
        %v4620 = vsub.f32 %v4310, %v4558
        %v4621 = vsub.f32 %v4311, %v4559
        %v4622 = vsub.f32 %v4312, %v4560
        %v4623 = vsub.f32 %v4313, %v4561
        %v4624 = vsub.f32 %v4314, %v4562
        %v4625 = vsub.f32 %v4315, %v4563
        %v4626 = vsub.f32 %v4316, %v4564
        %v4627 = vsub.f32 %v4317, %v4565
        %v4628 = vsub.f32 %v4318, %v4566
        %v4629 = vsub.f32 %v4319, %v4567
        %v4630 = vsub.f32 %v4320, %v4568
        %v4631 = vsub.f32 %v4321, %v4569
        %v4632 = vsub.f32 %v4322, %v4570
        %v4633 = vsub.f32 %v4323, %v4571
        %v4634 = vsub.f32 %v4324, %v4572
        %v4635 = vsub.f32 %v4325, %v4573
        %v4636 = vsub.f32 %v4326, %v4574
        %v4637 = vsub.f32 %v4327, %v4575
        %v4638 = vsub.f32 %v4328, %v4576
        %v4639 = vsub.f32 %v4329, %v4577
        %v4640 = vsub.f32 %v4330, %v4578
        %v4641 = vsub.f32 %v4331, %v4579
        %v4642 = vsub.f32 %v4332, %v4580
        %v4643 = vsub.f32 %v4333, %v4581
        %v4644 = vsub.f32 %v4334, %v4582
        %v4645 = vsub.f32 %v4335, %v4583
        %v4646 = vsub.f32 %v4336, %v4584
        %v4647 = vsub.f32 %v4337, %v4585
        %v4648 = vsub.f32 %v4338, %v4586
        %v4649 = vsub.f32 %v4339, %v4587
        %v4650 = vsub.f32 %v4340, %v4588
        %v4651 = vsub.f32 %v4341, %v4589
        %v4652 = vsub.f32 %v4342, %v4590
        %v4653 = vsub.f32 %v4343, %v4591
        %v4654 = vsub.f32 %v4344, %v4592
        %vm4655 = vcmp.ge.f32.partialorder %v4469, 1.0
        %vm4656 = vcmp.ge.f32.partialorder %v4470, 1.0
        %vm4657 = vcmp.ge.f32.partialorder %v4471, 1.0
        %vm4658 = vcmp.ge.f32.partialorder %v4472, 1.0
        %vm4659 = vcmp.ge.f32.partialorder %v4473, 1.0
        %vm4660 = vcmp.ge.f32.partialorder %v4474, 1.0
        %vm4661 = vcmp.ge.f32.partialorder %v4475, 1.0
        %vm4662 = vcmp.ge.f32.partialorder %v4476, 1.0
        %vm4663 = vcmp.ge.f32.partialorder %v4477, 1.0
        %vm4664 = vcmp.ge.f32.partialorder %v4478, 1.0
        %vm4665 = vcmp.ge.f32.partialorder %v4479, 1.0
        %vm4666 = vcmp.ge.f32.partialorder %v4480, 1.0
        %vm4667 = vcmp.ge.f32.partialorder %v4481, 1.0
        %vm4668 = vcmp.ge.f32.partialorder %v4482, 1.0
        %vm4669 = vcmp.ge.f32.partialorder %v4483, 1.0
        %vm4670 = vcmp.ge.f32.partialorder %v4484, 1.0
        %vm4671 = vcmp.ge.f32.partialorder %v4485, 1.0
        %vm4672 = vcmp.ge.f32.partialorder %v4486, 1.0
        %vm4673 = vcmp.ge.f32.partialorder %v4487, 1.0
        %vm4674 = vcmp.ge.f32.partialorder %v4488, 1.0
        %vm4675 = vcmp.ge.f32.partialorder %v4489, 1.0
        %vm4676 = vcmp.ge.f32.partialorder %v4490, 1.0
        %vm4677 = vcmp.ge.f32.partialorder %v4491, 1.0
        %vm4678 = vcmp.ge.f32.partialorder %v4492, 1.0
        %vm4679 = vcmp.ge.f32.partialorder %v4493, 1.0
        %vm4680 = vcmp.ge.f32.partialorder %v4494, 1.0
        %vm4681 = vcmp.ge.f32.partialorder %v4495, 1.0
        %vm4682 = vcmp.ge.f32.partialorder %v4496, 1.0
        %vm4683 = vcmp.ge.f32.partialorder %v4497, 1.0
        %vm4684 = vcmp.ge.f32.partialorder %v4498, 1.0
        %vm4685 = vcmp.ge.f32.partialorder %v4499, 1.0
        %vm4686 = vcmp.ge.f32.partialorder %v4500, 1.0
        %vm4687 = vcmp.ge.f32.partialorder %v4501, 1.0
        %vm4688 = vcmp.ge.f32.partialorder %v4502, 1.0
        %vm4689 = vcmp.ge.f32.partialorder %v4503, 1.0
        %vm4690 = vcmp.ge.f32.partialorder %v4504, 1.0
        %vm4691 = vcmp.ge.f32.partialorder %v4505, 1.0
        %vm4692 = vcmp.ge.f32.partialorder %v4506, 1.0
        %vm4693 = vcmp.ge.f32.partialorder %v4507, 1.0
        %vm4694 = vcmp.ge.f32.partialorder %v4508, 1.0
        %vm4695 = vcmp.ge.f32.partialorder %v4509, 1.0
        %vm4696 = vcmp.ge.f32.partialorder %v4510, 1.0
        %vm4697 = vcmp.ge.f32.partialorder %v4511, 1.0
        %vm4698 = vcmp.ge.f32.partialorder %v4512, 1.0
        %vm4699 = vcmp.ge.f32.partialorder %v4513, 1.0
        %vm4700 = vcmp.ge.f32.partialorder %v4514, 1.0
        %vm4701 = vcmp.ge.f32.partialorder %v4515, 1.0
        %vm4702 = vcmp.ge.f32.partialorder %v4516, 1.0
        %vm4703 = vcmp.ge.f32.partialorder %v4517, 1.0
        %vm4704 = vcmp.ge.f32.partialorder %v4518, 1.0
        %vm4705 = vcmp.ge.f32.partialorder %v4519, 1.0
        %vm4706 = vcmp.ge.f32.partialorder %v4520, 1.0
        %vm4707 = vcmp.ge.f32.partialorder %v4521, 1.0
        %vm4708 = vcmp.ge.f32.partialorder %v4522, 1.0
        %vm4709 = vcmp.ge.f32.partialorder %v4523, 1.0
        %vm4710 = vcmp.ge.f32.partialorder %v4524, 1.0
        %vm4711 = vcmp.ge.f32.partialorder %v4525, 1.0
        %vm4712 = vcmp.ge.f32.partialorder %v4526, 1.0
        %vm4713 = vcmp.ge.f32.partialorder %v4527, 1.0
        %vm4714 = vcmp.ge.f32.partialorder %v4528, 1.0
        %vm4715 = vcmp.ge.f32.partialorder %v4529, 1.0
        %vm4716 = vcmp.ge.f32.partialorder %v4530, 1.0
        %vm4717 = vcmp.le.f32.partialorder %v4469, 16.0
        %vm4718 = vcmp.le.f32.partialorder %v4470, 16.0
        %vm4719 = vcmp.le.f32.partialorder %v4471, 16.0
        %vm4720 = vcmp.le.f32.partialorder %v4472, 16.0
        %vm4721 = vcmp.le.f32.partialorder %v4473, 16.0
        %vm4722 = vcmp.le.f32.partialorder %v4474, 16.0
        %vm4723 = vcmp.le.f32.partialorder %v4475, 16.0
        %vm4724 = vcmp.le.f32.partialorder %v4476, 16.0
        %vm4725 = vcmp.le.f32.partialorder %v4477, 16.0
        %vm4726 = vcmp.le.f32.partialorder %v4478, 16.0
        %vm4727 = vcmp.le.f32.partialorder %v4479, 16.0
        %vm4728 = vcmp.le.f32.partialorder %v4480, 16.0
        %vm4729 = vcmp.le.f32.partialorder %v4481, 16.0
        %vm4730 = vcmp.le.f32.partialorder %v4482, 16.0
        %vm4731 = vcmp.le.f32.partialorder %v4483, 16.0
        %vm4732 = vcmp.le.f32.partialorder %v4484, 16.0
        %vm4733 = vcmp.le.f32.partialorder %v4485, 16.0
        %vm4734 = vcmp.le.f32.partialorder %v4486, 16.0
        %vm4735 = vcmp.le.f32.partialorder %v4487, 16.0
        %vm4736 = vcmp.le.f32.partialorder %v4488, 16.0
        %vm4737 = vcmp.le.f32.partialorder %v4489, 16.0
        %vm4738 = vcmp.le.f32.partialorder %v4490, 16.0
        %vm4739 = vcmp.le.f32.partialorder %v4491, 16.0
        %vm4740 = vcmp.le.f32.partialorder %v4492, 16.0
        %vm4741 = vcmp.le.f32.partialorder %v4493, 16.0
        %vm4742 = vcmp.le.f32.partialorder %v4494, 16.0
        %vm4743 = vcmp.le.f32.partialorder %v4495, 16.0
        %vm4744 = vcmp.le.f32.partialorder %v4496, 16.0
        %vm4745 = vcmp.le.f32.partialorder %v4497, 16.0
        %vm4746 = vcmp.le.f32.partialorder %v4498, 16.0
        %vm4747 = vcmp.le.f32.partialorder %v4499, 16.0
        %vm4748 = vcmp.le.f32.partialorder %v4500, 16.0
        %vm4749 = vcmp.le.f32.partialorder %v4501, 16.0
        %vm4750 = vcmp.le.f32.partialorder %v4502, 16.0
        %vm4751 = vcmp.le.f32.partialorder %v4503, 16.0
        %vm4752 = vcmp.le.f32.partialorder %v4504, 16.0
        %vm4753 = vcmp.le.f32.partialorder %v4505, 16.0
        %vm4754 = vcmp.le.f32.partialorder %v4506, 16.0
        %vm4755 = vcmp.le.f32.partialorder %v4507, 16.0
        %vm4756 = vcmp.le.f32.partialorder %v4508, 16.0
        %vm4757 = vcmp.le.f32.partialorder %v4509, 16.0
        %vm4758 = vcmp.le.f32.partialorder %v4510, 16.0
        %vm4759 = vcmp.le.f32.partialorder %v4511, 16.0
        %vm4760 = vcmp.le.f32.partialorder %v4512, 16.0
        %vm4761 = vcmp.le.f32.partialorder %v4513, 16.0
        %vm4762 = vcmp.le.f32.partialorder %v4514, 16.0
        %vm4763 = vcmp.le.f32.partialorder %v4515, 16.0
        %vm4764 = vcmp.le.f32.partialorder %v4516, 16.0
        %vm4765 = vcmp.le.f32.partialorder %v4517, 16.0
        %vm4766 = vcmp.le.f32.partialorder %v4518, 16.0
        %vm4767 = vcmp.le.f32.partialorder %v4519, 16.0
        %vm4768 = vcmp.le.f32.partialorder %v4520, 16.0
        %vm4769 = vcmp.le.f32.partialorder %v4521, 16.0
        %vm4770 = vcmp.le.f32.partialorder %v4522, 16.0
        %vm4771 = vcmp.le.f32.partialorder %v4523, 16.0
        %vm4772 = vcmp.le.f32.partialorder %v4524, 16.0
        %vm4773 = vcmp.le.f32.partialorder %v4525, 16.0
        %vm4774 = vcmp.le.f32.partialorder %v4526, 16.0
        %vm4775 = vcmp.le.f32.partialorder %v4527, 16.0
        %vm4776 = vcmp.le.f32.partialorder %v4528, 16.0
        %vm4777 = vcmp.le.f32.partialorder %v4529, 16.0
        %vm4778 = vcmp.le.f32.partialorder %v4530, 16.0
        %vm4779 = vmand %vm4655, %vm4717
        %vm4780 = vmand %vm4656, %vm4718
        %vm4781 = vmand %vm4657, %vm4719
        %vm4782 = vmand %vm4658, %vm4720
        %vm4783 = vmand %vm4659, %vm4721
        %vm4784 = vmand %vm4660, %vm4722
        %vm4785 = vmand %vm4661, %vm4723
        %vm4786 = vmand %vm4662, %vm4724
        %vm4787 = vmand %vm4663, %vm4725
        %vm4788 = vmand %vm4664, %vm4726
        %vm4789 = vmand %vm4665, %vm4727
        %vm4790 = vmand %vm4666, %vm4728
        %vm4791 = vmand %vm4667, %vm4729
        %vm4792 = vmand %vm4668, %vm4730
        %vm4793 = vmand %vm4669, %vm4731
        %vm4794 = vmand %vm4670, %vm4732
        %vm4795 = vmand %vm4671, %vm4733
        %vm4796 = vmand %vm4672, %vm4734
        %vm4797 = vmand %vm4673, %vm4735
        %vm4798 = vmand %vm4674, %vm4736
        %vm4799 = vmand %vm4675, %vm4737
        %vm4800 = vmand %vm4676, %vm4738
        %vm4801 = vmand %vm4677, %vm4739
        %vm4802 = vmand %vm4678, %vm4740
        %vm4803 = vmand %vm4679, %vm4741
        %vm4804 = vmand %vm4680, %vm4742
        %vm4805 = vmand %vm4681, %vm4743
        %vm4806 = vmand %vm4682, %vm4744
        %vm4807 = vmand %vm4683, %vm4745
        %vm4808 = vmand %vm4684, %vm4746
        %vm4809 = vmand %vm4685, %vm4747
        %vm4810 = vmand %vm4686, %vm4748
        %vm4811 = vmand %vm4687, %vm4749
        %vm4812 = vmand %vm4688, %vm4750
        %vm4813 = vmand %vm4689, %vm4751
        %vm4814 = vmand %vm4690, %vm4752
        %vm4815 = vmand %vm4691, %vm4753
        %vm4816 = vmand %vm4692, %vm4754
        %vm4817 = vmand %vm4693, %vm4755
        %vm4818 = vmand %vm4694, %vm4756
        %vm4819 = vmand %vm4695, %vm4757
        %vm4820 = vmand %vm4696, %vm4758
        %vm4821 = vmand %vm4697, %vm4759
        %vm4822 = vmand %vm4698, %vm4760
        %vm4823 = vmand %vm4699, %vm4761
        %vm4824 = vmand %vm4700, %vm4762
        %vm4825 = vmand %vm4701, %vm4763
        %vm4826 = vmand %vm4702, %vm4764
        %vm4827 = vmand %vm4703, %vm4765
        %vm4828 = vmand %vm4704, %vm4766
        %vm4829 = vmand %vm4705, %vm4767
        %vm4830 = vmand %vm4706, %vm4768
        %vm4831 = vmand %vm4707, %vm4769
        %vm4832 = vmand %vm4708, %vm4770
        %vm4833 = vmand %vm4709, %vm4771
        %vm4834 = vmand %vm4710, %vm4772
        %vm4835 = vmand %vm4711, %vm4773
        %vm4836 = vmand %vm4712, %vm4774
        %vm4837 = vmand %vm4713, %vm4775
        %vm4838 = vmand %vm4714, %vm4776
        %vm4839 = vmand %vm4715, %vm4777
        %vm4840 = vmand %vm4716, %vm4778
        %vm4841 = vcmp.ge.f32.partialorder %v4593, 1.0
        %vm4842 = vcmp.ge.f32.partialorder %v4594, 1.0
        %vm4843 = vcmp.ge.f32.partialorder %v4595, 1.0
        %vm4844 = vcmp.ge.f32.partialorder %v4596, 1.0
        %vm4845 = vcmp.ge.f32.partialorder %v4597, 1.0
        %vm4846 = vcmp.ge.f32.partialorder %v4598, 1.0
        %vm4847 = vcmp.ge.f32.partialorder %v4599, 1.0
        %vm4848 = vcmp.ge.f32.partialorder %v4600, 1.0
        %vm4849 = vcmp.ge.f32.partialorder %v4601, 1.0
        %vm4850 = vcmp.ge.f32.partialorder %v4602, 1.0
        %vm4851 = vcmp.ge.f32.partialorder %v4603, 1.0
        %vm4852 = vcmp.ge.f32.partialorder %v4604, 1.0
        %vm4853 = vcmp.ge.f32.partialorder %v4605, 1.0
        %vm4854 = vcmp.ge.f32.partialorder %v4606, 1.0
        %vm4855 = vcmp.ge.f32.partialorder %v4607, 1.0
        %vm4856 = vcmp.ge.f32.partialorder %v4608, 1.0
        %vm4857 = vcmp.ge.f32.partialorder %v4609, 1.0
        %vm4858 = vcmp.ge.f32.partialorder %v4610, 1.0
        %vm4859 = vcmp.ge.f32.partialorder %v4611, 1.0
        %vm4860 = vcmp.ge.f32.partialorder %v4612, 1.0
        %vm4861 = vcmp.ge.f32.partialorder %v4613, 1.0
        %vm4862 = vcmp.ge.f32.partialorder %v4614, 1.0
        %vm4863 = vcmp.ge.f32.partialorder %v4615, 1.0
        %vm4864 = vcmp.ge.f32.partialorder %v4616, 1.0
        %vm4865 = vcmp.ge.f32.partialorder %v4617, 1.0
        %vm4866 = vcmp.ge.f32.partialorder %v4618, 1.0
        %vm4867 = vcmp.ge.f32.partialorder %v4619, 1.0
        %vm4868 = vcmp.ge.f32.partialorder %v4620, 1.0
        %vm4869 = vcmp.ge.f32.partialorder %v4621, 1.0
        %vm4870 = vcmp.ge.f32.partialorder %v4622, 1.0
        %vm4871 = vcmp.ge.f32.partialorder %v4623, 1.0
        %vm4872 = vcmp.ge.f32.partialorder %v4624, 1.0
        %vm4873 = vcmp.ge.f32.partialorder %v4625, 1.0
        %vm4874 = vcmp.ge.f32.partialorder %v4626, 1.0
        %vm4875 = vcmp.ge.f32.partialorder %v4627, 1.0
        %vm4876 = vcmp.ge.f32.partialorder %v4628, 1.0
        %vm4877 = vcmp.ge.f32.partialorder %v4629, 1.0
        %vm4878 = vcmp.ge.f32.partialorder %v4630, 1.0
        %vm4879 = vcmp.ge.f32.partialorder %v4631, 1.0
        %vm4880 = vcmp.ge.f32.partialorder %v4632, 1.0
        %vm4881 = vcmp.ge.f32.partialorder %v4633, 1.0
        %vm4882 = vcmp.ge.f32.partialorder %v4634, 1.0
        %vm4883 = vcmp.ge.f32.partialorder %v4635, 1.0
        %vm4884 = vcmp.ge.f32.partialorder %v4636, 1.0
        %vm4885 = vcmp.ge.f32.partialorder %v4637, 1.0
        %vm4886 = vcmp.ge.f32.partialorder %v4638, 1.0
        %vm4887 = vcmp.ge.f32.partialorder %v4639, 1.0
        %vm4888 = vcmp.ge.f32.partialorder %v4640, 1.0
        %vm4889 = vcmp.ge.f32.partialorder %v4641, 1.0
        %vm4890 = vcmp.ge.f32.partialorder %v4642, 1.0
        %vm4891 = vcmp.ge.f32.partialorder %v4643, 1.0
        %vm4892 = vcmp.ge.f32.partialorder %v4644, 1.0
        %vm4893 = vcmp.ge.f32.partialorder %v4645, 1.0
        %vm4894 = vcmp.ge.f32.partialorder %v4646, 1.0
        %vm4895 = vcmp.ge.f32.partialorder %v4647, 1.0
        %vm4896 = vcmp.ge.f32.partialorder %v4648, 1.0
        %vm4897 = vcmp.ge.f32.partialorder %v4649, 1.0
        %vm4898 = vcmp.ge.f32.partialorder %v4650, 1.0
        %vm4899 = vcmp.ge.f32.partialorder %v4651, 1.0
        %vm4900 = vcmp.ge.f32.partialorder %v4652, 1.0
        %vm4901 = vcmp.ge.f32.partialorder %v4653, 1.0
        %vm4902 = vcmp.ge.f32.partialorder %v4654, 1.0
        %vm4903 = vmand %vm4779, %vm4841
        %vm4904 = vmand %vm4780, %vm4842
        %vm4905 = vmand %vm4781, %vm4843
        %vm4906 = vmand %vm4782, %vm4844
        %vm4907 = vmand %vm4783, %vm4845
        %vm4908 = vmand %vm4784, %vm4846
        %vm4909 = vmand %vm4785, %vm4847
        %vm4910 = vmand %vm4786, %vm4848
        %vm4911 = vmand %vm4787, %vm4849
        %vm4912 = vmand %vm4788, %vm4850
        %vm4913 = vmand %vm4789, %vm4851
        %vm4914 = vmand %vm4790, %vm4852
        %vm4915 = vmand %vm4791, %vm4853
        %vm4916 = vmand %vm4792, %vm4854
        %vm4917 = vmand %vm4793, %vm4855
        %vm4918 = vmand %vm4794, %vm4856
        %vm4919 = vmand %vm4795, %vm4857
        %vm4920 = vmand %vm4796, %vm4858
        %vm4921 = vmand %vm4797, %vm4859
        %vm4922 = vmand %vm4798, %vm4860
        %vm4923 = vmand %vm4799, %vm4861
        %vm4924 = vmand %vm4800, %vm4862
        %vm4925 = vmand %vm4801, %vm4863
        %vm4926 = vmand %vm4802, %vm4864
        %vm4927 = vmand %vm4803, %vm4865
        %vm4928 = vmand %vm4804, %vm4866
        %vm4929 = vmand %vm4805, %vm4867
        %vm4930 = vmand %vm4806, %vm4868
        %vm4931 = vmand %vm4807, %vm4869
        %vm4932 = vmand %vm4808, %vm4870
        %vm4933 = vmand %vm4809, %vm4871
        %vm4934 = vmand %vm4810, %vm4872
        %vm4935 = vmand %vm4811, %vm4873
        %vm4936 = vmand %vm4812, %vm4874
        %vm4937 = vmand %vm4813, %vm4875
        %vm4938 = vmand %vm4814, %vm4876
        %vm4939 = vmand %vm4815, %vm4877
        %vm4940 = vmand %vm4816, %vm4878
        %vm4941 = vmand %vm4817, %vm4879
        %vm4942 = vmand %vm4818, %vm4880
        %vm4943 = vmand %vm4819, %vm4881
        %vm4944 = vmand %vm4820, %vm4882
        %vm4945 = vmand %vm4821, %vm4883
        %vm4946 = vmand %vm4822, %vm4884
        %vm4947 = vmand %vm4823, %vm4885
        %vm4948 = vmand %vm4824, %vm4886
        %vm4949 = vmand %vm4825, %vm4887
        %vm4950 = vmand %vm4826, %vm4888
        %vm4951 = vmand %vm4827, %vm4889
        %vm4952 = vmand %vm4828, %vm4890
        %vm4953 = vmand %vm4829, %vm4891
        %vm4954 = vmand %vm4830, %vm4892
        %vm4955 = vmand %vm4831, %vm4893
        %vm4956 = vmand %vm4832, %vm4894
        %vm4957 = vmand %vm4833, %vm4895
        %vm4958 = vmand %vm4834, %vm4896
        %vm4959 = vmand %vm4835, %vm4897
        %vm4960 = vmand %vm4836, %vm4898
        %vm4961 = vmand %vm4837, %vm4899
        %vm4962 = vmand %vm4838, %vm4900
        %vm4963 = vmand %vm4839, %vm4901
        %vm4964 = vmand %vm4840, %vm4902
        %vm4965 = vcmp.le.f32.partialorder %v4593, 16.0
        %vm4966 = vcmp.le.f32.partialorder %v4594, 16.0
        %vm4967 = vcmp.le.f32.partialorder %v4595, 16.0
        %vm4968 = vcmp.le.f32.partialorder %v4596, 16.0
        %vm4969 = vcmp.le.f32.partialorder %v4597, 16.0
        %vm4970 = vcmp.le.f32.partialorder %v4598, 16.0
        %vm4971 = vcmp.le.f32.partialorder %v4599, 16.0
        %vm4972 = vcmp.le.f32.partialorder %v4600, 16.0
        %vm4973 = vcmp.le.f32.partialorder %v4601, 16.0
        %vm4974 = vcmp.le.f32.partialorder %v4602, 16.0
        %vm4975 = vcmp.le.f32.partialorder %v4603, 16.0
        %vm4976 = vcmp.le.f32.partialorder %v4604, 16.0
        %vm4977 = vcmp.le.f32.partialorder %v4605, 16.0
        %vm4978 = vcmp.le.f32.partialorder %v4606, 16.0
        %vm4979 = vcmp.le.f32.partialorder %v4607, 16.0
        %vm4980 = vcmp.le.f32.partialorder %v4608, 16.0
        %vm4981 = vcmp.le.f32.partialorder %v4609, 16.0
        %vm4982 = vcmp.le.f32.partialorder %v4610, 16.0
        %vm4983 = vcmp.le.f32.partialorder %v4611, 16.0
        %vm4984 = vcmp.le.f32.partialorder %v4612, 16.0
        %vm4985 = vcmp.le.f32.partialorder %v4613, 16.0
        %vm4986 = vcmp.le.f32.partialorder %v4614, 16.0
        %vm4987 = vcmp.le.f32.partialorder %v4615, 16.0
        %vm4988 = vcmp.le.f32.partialorder %v4616, 16.0
        %vm4989 = vcmp.le.f32.partialorder %v4617, 16.0
        %vm4990 = vcmp.le.f32.partialorder %v4618, 16.0
        %vm4991 = vcmp.le.f32.partialorder %v4619, 16.0
        %vm4992 = vcmp.le.f32.partialorder %v4620, 16.0
        %vm4993 = vcmp.le.f32.partialorder %v4621, 16.0
        %vm4994 = vcmp.le.f32.partialorder %v4622, 16.0
        %vm4995 = vcmp.le.f32.partialorder %v4623, 16.0
        %vm4996 = vcmp.le.f32.partialorder %v4624, 16.0
        %vm4997 = vcmp.le.f32.partialorder %v4625, 16.0
        %vm4998 = vcmp.le.f32.partialorder %v4626, 16.0
        %vm4999 = vcmp.le.f32.partialorder %v4627, 16.0
        %vm5000 = vcmp.le.f32.partialorder %v4628, 16.0
        %vm5001 = vcmp.le.f32.partialorder %v4629, 16.0
        %vm5002 = vcmp.le.f32.partialorder %v4630, 16.0
        %vm5003 = vcmp.le.f32.partialorder %v4631, 16.0
        %vm5004 = vcmp.le.f32.partialorder %v4632, 16.0
        %vm5005 = vcmp.le.f32.partialorder %v4633, 16.0
        %vm5006 = vcmp.le.f32.partialorder %v4634, 16.0
        %vm5007 = vcmp.le.f32.partialorder %v4635, 16.0
        %vm5008 = vcmp.le.f32.partialorder %v4636, 16.0
        %vm5009 = vcmp.le.f32.partialorder %v4637, 16.0
        %vm5010 = vcmp.le.f32.partialorder %v4638, 16.0
        %vm5011 = vcmp.le.f32.partialorder %v4639, 16.0
        %vm5012 = vcmp.le.f32.partialorder %v4640, 16.0
        %vm5013 = vcmp.le.f32.partialorder %v4641, 16.0
        %vm5014 = vcmp.le.f32.partialorder %v4642, 16.0
        %vm5015 = vcmp.le.f32.partialorder %v4643, 16.0
        %vm5016 = vcmp.le.f32.partialorder %v4644, 16.0
        %vm5017 = vcmp.le.f32.partialorder %v4645, 16.0
        %vm5018 = vcmp.le.f32.partialorder %v4646, 16.0
        %vm5019 = vcmp.le.f32.partialorder %v4647, 16.0
        %vm5020 = vcmp.le.f32.partialorder %v4648, 16.0
        %vm5021 = vcmp.le.f32.partialorder %v4649, 16.0
        %vm5022 = vcmp.le.f32.partialorder %v4650, 16.0
        %vm5023 = vcmp.le.f32.partialorder %v4651, 16.0
        %vm5024 = vcmp.le.f32.partialorder %v4652, 16.0
        %vm5025 = vcmp.le.f32.partialorder %v4653, 16.0
        %vm5026 = vcmp.le.f32.partialorder %v4654, 16.0
        %vm5027 = vmand %vm4903, %vm4965
        %vm5028 = vmand %vm4904, %vm4966
        %vm5029 = vmand %vm4905, %vm4967
        %vm5030 = vmand %vm4906, %vm4968
        %vm5031 = vmand %vm4907, %vm4969
        %vm5032 = vmand %vm4908, %vm4970
        %vm5033 = vmand %vm4909, %vm4971
        %vm5034 = vmand %vm4910, %vm4972
        %vm5035 = vmand %vm4911, %vm4973
        %vm5036 = vmand %vm4912, %vm4974
        %vm5037 = vmand %vm4913, %vm4975
        %vm5038 = vmand %vm4914, %vm4976
        %vm5039 = vmand %vm4915, %vm4977
        %vm5040 = vmand %vm4916, %vm4978
        %vm5041 = vmand %vm4917, %vm4979
        %vm5042 = vmand %vm4918, %vm4980
        %vm5043 = vmand %vm4919, %vm4981
        %vm5044 = vmand %vm4920, %vm4982
        %vm5045 = vmand %vm4921, %vm4983
        %vm5046 = vmand %vm4922, %vm4984
        %vm5047 = vmand %vm4923, %vm4985
        %vm5048 = vmand %vm4924, %vm4986
        %vm5049 = vmand %vm4925, %vm4987
        %vm5050 = vmand %vm4926, %vm4988
        %vm5051 = vmand %vm4927, %vm4989
        %vm5052 = vmand %vm4928, %vm4990
        %vm5053 = vmand %vm4929, %vm4991
        %vm5054 = vmand %vm4930, %vm4992
        %vm5055 = vmand %vm4931, %vm4993
        %vm5056 = vmand %vm4932, %vm4994
        %vm5057 = vmand %vm4933, %vm4995
        %vm5058 = vmand %vm4934, %vm4996
        %vm5059 = vmand %vm4935, %vm4997
        %vm5060 = vmand %vm4936, %vm4998
        %vm5061 = vmand %vm4937, %vm4999
        %vm5062 = vmand %vm4938, %vm5000
        %vm5063 = vmand %vm4939, %vm5001
        %vm5064 = vmand %vm4940, %vm5002
        %vm5065 = vmand %vm4941, %vm5003
        %vm5066 = vmand %vm4942, %vm5004
        %vm5067 = vmand %vm4943, %vm5005
        %vm5068 = vmand %vm4944, %vm5006
        %vm5069 = vmand %vm4945, %vm5007
        %vm5070 = vmand %vm4946, %vm5008
        %vm5071 = vmand %vm4947, %vm5009
        %vm5072 = vmand %vm4948, %vm5010
        %vm5073 = vmand %vm4949, %vm5011
        %vm5074 = vmand %vm4950, %vm5012
        %vm5075 = vmand %vm4951, %vm5013
        %vm5076 = vmand %vm4952, %vm5014
        %vm5077 = vmand %vm4953, %vm5015
        %vm5078 = vmand %vm4954, %vm5016
        %vm5079 = vmand %vm4955, %vm5017
        %vm5080 = vmand %vm4956, %vm5018
        %vm5081 = vmand %vm4957, %vm5019
        %vm5082 = vmand %vm4958, %vm5020
        %vm5083 = vmand %vm4959, %vm5021
        %vm5084 = vmand %vm4960, %vm5022
        %vm5085 = vmand %vm4961, %vm5023
        %vm5086 = vmand %vm4962, %vm5024
        %vm5087 = vmand %vm4963, %vm5025
        %vm5088 = vmand %vm4964, %vm5026
        %v5089 = vsel %vm5027, 1, 0
        %v5090 = vsel %vm5028, 1, 0
        %v5091 = vsel %vm5029, 1, 0
        %v5092 = vsel %vm5030, 1, 0
        %v5093 = vsel %vm5031, 1, 0
        %v5094 = vsel %vm5032, 1, 0
        %v5095 = vsel %vm5033, 1, 0
        %v5096 = vsel %vm5034, 1, 0
        %v5097 = vsel %vm5035, 1, 0
        %v5098 = vsel %vm5036, 1, 0
        %v5099 = vsel %vm5037, 1, 0
        %v5100 = vsel %vm5038, 1, 0
        %v5101 = vsel %vm5039, 1, 0
        %v5102 = vsel %vm5040, 1, 0
        %v5103 = vsel %vm5041, 1, 0
        %v5104 = vsel %vm5042, 1, 0
        %v5105 = vsel %vm5043, 1, 0
        %v5106 = vsel %vm5044, 1, 0
        %v5107 = vsel %vm5045, 1, 0
        %v5108 = vsel %vm5046, 1, 0
        %v5109 = vsel %vm5047, 1, 0
        %v5110 = vsel %vm5048, 1, 0
        %v5111 = vsel %vm5049, 1, 0
        %v5112 = vsel %vm5050, 1, 0
        %v5113 = vsel %vm5051, 1, 0
        %v5114 = vsel %vm5052, 1, 0
        %v5115 = vsel %vm5053, 1, 0
        %v5116 = vsel %vm5054, 1, 0
        %v5117 = vsel %vm5055, 1, 0
        %v5118 = vsel %vm5056, 1, 0
        %v5119 = vsel %vm5057, 1, 0
        %v5120 = vsel %vm5058, 1, 0
        %v5121 = vsel %vm5059, 1, 0
        %v5122 = vsel %vm5060, 1, 0
        %v5123 = vsel %vm5061, 1, 0
        %v5124 = vsel %vm5062, 1, 0
        %v5125 = vsel %vm5063, 1, 0
        %v5126 = vsel %vm5064, 1, 0
        %v5127 = vsel %vm5065, 1, 0
        %v5128 = vsel %vm5066, 1, 0
        %v5129 = vsel %vm5067, 1, 0
        %v5130 = vsel %vm5068, 1, 0
        %v5131 = vsel %vm5069, 1, 0
        %v5132 = vsel %vm5070, 1, 0
        %v5133 = vsel %vm5071, 1, 0
        %v5134 = vsel %vm5072, 1, 0
        %v5135 = vsel %vm5073, 1, 0
        %v5136 = vsel %vm5074, 1, 0
        %v5137 = vsel %vm5075, 1, 0
        %v5138 = vsel %vm5076, 1, 0
        %v5139 = vsel %vm5077, 1, 0
        %v5140 = vsel %vm5078, 1, 0
        %v5141 = vsel %vm5079, 1, 0
        %v5142 = vsel %vm5080, 1, 0
        %v5143 = vsel %vm5081, 1, 0
        %v5144 = vsel %vm5082, 1, 0
        %v5145 = vsel %vm5083, 1, 0
        %v5146 = vsel %vm5084, 1, 0
        %v5147 = vsel %vm5085, 1, 0
        %v5148 = vsel %vm5086, 1, 0
        %v5149 = vsel %vm5087, 1, 0
        %v5150 = vsel %vm5088, 1, 0
        %v5151 = vcvt.s32.f32 %v5089
        %v5152 = vcvt.s32.f32 %v5090
        %v5153 = vcvt.s32.f32 %v5091
        %v5154 = vcvt.s32.f32 %v5092
        %v5155 = vcvt.s32.f32 %v5093
        %v5156 = vcvt.s32.f32 %v5094
        %v5157 = vcvt.s32.f32 %v5095
        %v5158 = vcvt.s32.f32 %v5096
        %v5159 = vcvt.s32.f32 %v5097
        %v5160 = vcvt.s32.f32 %v5098
        %v5161 = vcvt.s32.f32 %v5099
        %v5162 = vcvt.s32.f32 %v5100
        %v5163 = vcvt.s32.f32 %v5101
        %v5164 = vcvt.s32.f32 %v5102
        %v5165 = vcvt.s32.f32 %v5103
        %v5166 = vcvt.s32.f32 %v5104
        %v5167 = vcvt.s32.f32 %v5105
        %v5168 = vcvt.s32.f32 %v5106
        %v5169 = vcvt.s32.f32 %v5107
        %v5170 = vcvt.s32.f32 %v5108
        %v5171 = vcvt.s32.f32 %v5109
        %v5172 = vcvt.s32.f32 %v5110
        %v5173 = vcvt.s32.f32 %v5111
        %v5174 = vcvt.s32.f32 %v5112
        %v5175 = vcvt.s32.f32 %v5113
        %v5176 = vcvt.s32.f32 %v5114
        %v5177 = vcvt.s32.f32 %v5115
        %v5178 = vcvt.s32.f32 %v5116
        %v5179 = vcvt.s32.f32 %v5117
        %v5180 = vcvt.s32.f32 %v5118
        %v5181 = vcvt.s32.f32 %v5119
        %v5182 = vcvt.s32.f32 %v5120
        %v5183 = vcvt.s32.f32 %v5121
        %v5184 = vcvt.s32.f32 %v5122
        %v5185 = vcvt.s32.f32 %v5123
        %v5186 = vcvt.s32.f32 %v5124
        %v5187 = vcvt.s32.f32 %v5125
        %v5188 = vcvt.s32.f32 %v5126
        %v5189 = vcvt.s32.f32 %v5127
        %v5190 = vcvt.s32.f32 %v5128
        %v5191 = vcvt.s32.f32 %v5129
        %v5192 = vcvt.s32.f32 %v5130
        %v5193 = vcvt.s32.f32 %v5131
        %v5194 = vcvt.s32.f32 %v5132
        %v5195 = vcvt.s32.f32 %v5133
        %v5196 = vcvt.s32.f32 %v5134
        %v5197 = vcvt.s32.f32 %v5135
        %v5198 = vcvt.s32.f32 %v5136
        %v5199 = vcvt.s32.f32 %v5137
        %v5200 = vcvt.s32.f32 %v5138
        %v5201 = vcvt.s32.f32 %v5139
        %v5202 = vcvt.s32.f32 %v5140
        %v5203 = vcvt.s32.f32 %v5141
        %v5204 = vcvt.s32.f32 %v5142
        %v5205 = vcvt.s32.f32 %v5143
        %v5206 = vcvt.s32.f32 %v5144
        %v5207 = vcvt.s32.f32 %v5145
        %v5208 = vcvt.s32.f32 %v5146
        %v5209 = vcvt.s32.f32 %v5147
        %v5210 = vcvt.s32.f32 %v5148
        %v5211 = vcvt.s32.f32 %v5149
        %v5212 = vcvt.s32.f32 %v5150
        %v5213 = vld [vmem:[#allocation4] sm:$0xff]
        %v5214 = vld [vmem:[#allocation4 + $0x8] sm:$0xff]
        %v5215 = vld [vmem:[#allocation4 + $0x10] sm:$0xff]
        %v5216 = vld [vmem:[#allocation4 + $0x18] sm:$0xff]
        %v5217 = vld [vmem:[#allocation4 + $0x20] sm:$0xff]
        %v5218 = vld [vmem:[#allocation4 + $0x28] sm:$0xff]
        %v5219 = vld [vmem:[#allocation4 + $0x30] sm:$0xff]
        %v5220 = vld [vmem:[#allocation4 + $0x38] sm:$0xff]
        %v5221 = vld [vmem:[#allocation4 + $0x40] sm:$0xff]
        %v5222 = vld [vmem:[#allocation4 + $0x48] sm:$0xff]
        %v5223 = vld [vmem:[#allocation4 + $0x50] sm:$0xff]
        %v5224 = vld [vmem:[#allocation4 + $0x58] sm:$0xff]
        %v5225 = vld [vmem:[#allocation4 + $0x60] sm:$0xff]
        %v5226 = vld [vmem:[#allocation4 + $0x68] sm:$0xff]
        %v5227 = vld [vmem:[#allocation4 + $0x70] sm:$0xff]
        %v5228 = vld [vmem:[#allocation4 + $0x78] sm:$0xff]
        %v5229 = vld [vmem:[#allocation4 + $0x80] sm:$0xff]
        %v5230 = vld [vmem:[#allocation4 + $0x88] sm:$0xff]
        %v5231 = vld [vmem:[#allocation4 + $0x90] sm:$0xff]
        %v5232 = vld [vmem:[#allocation4 + $0x98] sm:$0xff]
        %v5233 = vld [vmem:[#allocation4 + $0xa0] sm:$0xff]
        %v5234 = vld [vmem:[#allocation4 + $0xa8] sm:$0xff]
        %v5235 = vld [vmem:[#allocation4 + $0xb0] sm:$0xff]
        %v5236 = vld [vmem:[#allocation4 + $0xb8] sm:$0xff]
        %v5237 = vld [vmem:[#allocation4 + $0xc0] sm:$0xff]
        %v5238 = vld [vmem:[#allocation4 + $0xc8] sm:$0xff]
        %v5239 = vld [vmem:[#allocation4 + $0xd0] sm:$0xff]
        %v5240 = vld [vmem:[#allocation4 + $0xd8] sm:$0xff]
        %v5241 = vld [vmem:[#allocation4 + $0xe0] sm:$0xff]
        %v5242 = vld [vmem:[#allocation4 + $0xe8] sm:$0xff]
        %v5243 = vld [vmem:[#allocation4 + $0xf0] sm:$0xff]
        %v5244 = vld [vmem:[#allocation4 + $0xf8] sm:$0xff]
        %v5245 = vld [vmem:[#allocation4 + $0x100] sm:$0xff]
        %v5246 = vld [vmem:[#allocation4 + $0x108] sm:$0xff]
        %v5247 = vld [vmem:[#allocation4 + $0x110] sm:$0xff]
        %v5248 = vld [vmem:[#allocation4 + $0x118] sm:$0xff]
        %v5249 = vld [vmem:[#allocation4 + $0x120] sm:$0xff]
        %v5250 = vld [vmem:[#allocation4 + $0x128] sm:$0xff]
        %v5251 = vld [vmem:[#allocation4 + $0x130] sm:$0xff]
        %v5252 = vld [vmem:[#allocation4 + $0x138] sm:$0xff]
        %v5253 = vld [vmem:[#allocation4 + $0x140] sm:$0xff]
        %v5254 = vld [vmem:[#allocation4 + $0x148] sm:$0xff]
        %v5255 = vld [vmem:[#allocation4 + $0x150] sm:$0xff]
        %v5256 = vld [vmem:[#allocation4 + $0x158] sm:$0xff]
        %v5257 = vld [vmem:[#allocation4 + $0x160] sm:$0xff]
        %v5258 = vld [vmem:[#allocation4 + $0x168] sm:$0xff]
        %v5259 = vld [vmem:[#allocation4 + $0x170] sm:$0xff]
        %v5260 = vld [vmem:[#allocation4 + $0x178] sm:$0xff]
        %v5261 = vld [vmem:[#allocation4 + $0x180] sm:$0xff]
        %v5262 = vld [vmem:[#allocation4 + $0x188] sm:$0xff]
        %v5263 = vld [vmem:[#allocation4 + $0x190] sm:$0xff]
        %v5264 = vld [vmem:[#allocation4 + $0x198] sm:$0xff]
        %v5265 = vld [vmem:[#allocation4 + $0x1a0] sm:$0xff]
        %v5266 = vld [vmem:[#allocation4 + $0x1a8] sm:$0xff]
        %v5267 = vld [vmem:[#allocation4 + $0x1b0] sm:$0xff]
        %v5268 = vld [vmem:[#allocation4 + $0x1b8] sm:$0xff]
        %v5269 = vld [vmem:[#allocation4 + $0x1c0] sm:$0xff]
        %v5270 = vld [vmem:[#allocation4 + $0x1c8] sm:$0xff]
        %v5271 = vld [vmem:[#allocation4 + $0x1d0] sm:$0xff]
        %v5272 = vld [vmem:[#allocation4 + $0x1d8] sm:$0xff]
        %v5273 = vld [vmem:[#allocation4 + $0x1e0] sm:$0xff]
        %v5274 = vld [vmem:[#allocation4 + $0x1e8] sm:$0xff]
        %v5275 = vld [vmem:[%s2] sm:$0x1]
        %v5277 = vlaneseq
        %v5278 = vshrl.u32 %v5277, 7
        %v5279 = vsub.s32 0, %v5278
        %v5280 = vrot.slane %v5275, %v5279
        %v5282 = vmul.f32 %v5213, %v5280
        %v5283 = vmul.f32 %v5214, %v5280
        %v5284 = vmul.f32 %v5215, %v5280
        %v5285 = vmul.f32 %v5216, %v5280
        %v5286 = vmul.f32 %v5217, %v5280
        %v5287 = vmul.f32 %v5218, %v5280
        %v5288 = vmul.f32 %v5219, %v5280
        %v5289 = vmul.f32 %v5220, %v5280
        %v5290 = vmul.f32 %v5221, %v5280
        %v5291 = vmul.f32 %v5222, %v5280
        %v5292 = vmul.f32 %v5223, %v5280
        %v5293 = vmul.f32 %v5224, %v5280
        %v5294 = vmul.f32 %v5225, %v5280
        %v5295 = vmul.f32 %v5226, %v5280
        %v5296 = vmul.f32 %v5227, %v5280
        %v5297 = vmul.f32 %v5228, %v5280
        %v5298 = vmul.f32 %v5229, %v5280
        %v5299 = vmul.f32 %v5230, %v5280
        %v5300 = vmul.f32 %v5231, %v5280
        %v5301 = vmul.f32 %v5232, %v5280
        %v5302 = vmul.f32 %v5233, %v5280
        %v5303 = vmul.f32 %v5234, %v5280
        %v5304 = vmul.f32 %v5235, %v5280
        %v5305 = vmul.f32 %v5236, %v5280
        %v5306 = vmul.f32 %v5237, %v5280
        %v5307 = vmul.f32 %v5238, %v5280
        %v5308 = vmul.f32 %v5239, %v5280
        %v5309 = vmul.f32 %v5240, %v5280
        %v5310 = vmul.f32 %v5241, %v5280
        %v5311 = vmul.f32 %v5242, %v5280
        %v5312 = vmul.f32 %v5243, %v5280
        %v5313 = vmul.f32 %v5244, %v5280
        %v5314 = vmul.f32 %v5245, %v5280
        %v5315 = vmul.f32 %v5246, %v5280
        %v5316 = vmul.f32 %v5247, %v5280
        %v5317 = vmul.f32 %v5248, %v5280
        %v5318 = vmul.f32 %v5249, %v5280
        %v5319 = vmul.f32 %v5250, %v5280
        %v5320 = vmul.f32 %v5251, %v5280
        %v5321 = vmul.f32 %v5252, %v5280
        %v5322 = vmul.f32 %v5253, %v5280
        %v5323 = vmul.f32 %v5254, %v5280
        %v5324 = vmul.f32 %v5255, %v5280
        %v5325 = vmul.f32 %v5256, %v5280
        %v5326 = vmul.f32 %v5257, %v5280
        %v5327 = vmul.f32 %v5258, %v5280
        %v5328 = vmul.f32 %v5259, %v5280
        %v5329 = vmul.f32 %v5260, %v5280
        %v5330 = vmul.f32 %v5261, %v5280
        %v5331 = vmul.f32 %v5262, %v5280
        %v5332 = vmul.f32 %v5263, %v5280
        %v5333 = vmul.f32 %v5264, %v5280
        %v5334 = vmul.f32 %v5265, %v5280
        %v5335 = vmul.f32 %v5266, %v5280
        %v5336 = vmul.f32 %v5267, %v5280
        %v5337 = vmul.f32 %v5268, %v5280
        %v5338 = vmul.f32 %v5269, %v5280
        %v5339 = vmul.f32 %v5270, %v5280
        %v5340 = vmul.f32 %v5271, %v5280
        %v5341 = vmul.f32 %v5272, %v5280
        %v5342 = vmul.f32 %v5273, %v5280
        %v5343 = vmul.f32 %v5274, %v5280
        %v5344 = vld [vmem:[%s3] sm:$0x1]
        %v5346 = vlaneseq
        %v5347 = vshrl.u32 %v5346, 7
        %v5348 = vsub.s32 0, %v5347
        %v5349 = vrot.slane %v5344, %v5348
        %v5351 = vadd.f32 %v5282, %v5349
        %v5352 = vadd.f32 %v5283, %v5349
        %v5353 = vadd.f32 %v5284, %v5349
        %v5354 = vadd.f32 %v5285, %v5349
        %v5355 = vadd.f32 %v5286, %v5349
        %v5356 = vadd.f32 %v5287, %v5349
        %v5357 = vadd.f32 %v5288, %v5349
        %v5358 = vadd.f32 %v5289, %v5349
        %v5359 = vadd.f32 %v5290, %v5349
        %v5360 = vadd.f32 %v5291, %v5349
        %v5361 = vadd.f32 %v5292, %v5349
        %v5362 = vadd.f32 %v5293, %v5349
        %v5363 = vadd.f32 %v5294, %v5349
        %v5364 = vadd.f32 %v5295, %v5349
        %v5365 = vadd.f32 %v5296, %v5349
        %v5366 = vadd.f32 %v5297, %v5349
        %v5367 = vadd.f32 %v5298, %v5349
        %v5368 = vadd.f32 %v5299, %v5349
        %v5369 = vadd.f32 %v5300, %v5349
        %v5370 = vadd.f32 %v5301, %v5349
        %v5371 = vadd.f32 %v5302, %v5349
        %v5372 = vadd.f32 %v5303, %v5349
        %v5373 = vadd.f32 %v5304, %v5349
        %v5374 = vadd.f32 %v5305, %v5349
        %v5375 = vadd.f32 %v5306, %v5349
        %v5376 = vadd.f32 %v5307, %v5349
        %v5377 = vadd.f32 %v5308, %v5349
        %v5378 = vadd.f32 %v5309, %v5349
        %v5379 = vadd.f32 %v5310, %v5349
        %v5380 = vadd.f32 %v5311, %v5349
        %v5381 = vadd.f32 %v5312, %v5349
        %v5382 = vadd.f32 %v5313, %v5349
        %v5383 = vadd.f32 %v5314, %v5349
        %v5384 = vadd.f32 %v5315, %v5349
        %v5385 = vadd.f32 %v5316, %v5349
        %v5386 = vadd.f32 %v5317, %v5349
        %v5387 = vadd.f32 %v5318, %v5349
        %v5388 = vadd.f32 %v5319, %v5349
        %v5389 = vadd.f32 %v5320, %v5349
        %v5390 = vadd.f32 %v5321, %v5349
        %v5391 = vadd.f32 %v5322, %v5349
        %v5392 = vadd.f32 %v5323, %v5349
        %v5393 = vadd.f32 %v5324, %v5349
        %v5394 = vadd.f32 %v5325, %v5349
        %v5395 = vadd.f32 %v5326, %v5349
        %v5396 = vadd.f32 %v5327, %v5349
        %v5397 = vadd.f32 %v5328, %v5349
        %v5398 = vadd.f32 %v5329, %v5349
        %v5399 = vadd.f32 %v5330, %v5349
        %v5400 = vadd.f32 %v5331, %v5349
        %v5401 = vadd.f32 %v5332, %v5349
        %v5402 = vadd.f32 %v5333, %v5349
        %v5403 = vadd.f32 %v5334, %v5349
        %v5404 = vadd.f32 %v5335, %v5349
        %v5405 = vadd.f32 %v5336, %v5349
        %v5406 = vadd.f32 %v5337, %v5349
        %v5407 = vadd.f32 %v5338, %v5349
        %v5408 = vadd.f32 %v5339, %v5349
        %v5409 = vadd.f32 %v5340, %v5349
        %v5410 = vadd.f32 %v5341, %v5349
        %v5411 = vadd.f32 %v5342, %v5349
        %v5412 = vadd.f32 %v5343, %v5349
        %v5413 = vmax.f32 %v5351, 0.0
        %v5414 = vmax.f32 %v5352, 0.0
        %v5415 = vmax.f32 %v5353, 0.0
        %v5416 = vmax.f32 %v5354, 0.0
        %v5417 = vmax.f32 %v5355, 0.0
        %v5418 = vmax.f32 %v5356, 0.0
        %v5419 = vmax.f32 %v5357, 0.0
        %v5420 = vmax.f32 %v5358, 0.0
        %v5421 = vmax.f32 %v5359, 0.0
        %v5422 = vmax.f32 %v5360, 0.0
        %v5423 = vmax.f32 %v5361, 0.0
        %v5424 = vmax.f32 %v5362, 0.0
        %v5425 = vmax.f32 %v5363, 0.0
        %v5426 = vmax.f32 %v5364, 0.0
        %v5427 = vmax.f32 %v5365, 0.0
        %v5428 = vmax.f32 %v5366, 0.0
        %v5429 = vmax.f32 %v5367, 0.0
        %v5430 = vmax.f32 %v5368, 0.0
        %v5431 = vmax.f32 %v5369, 0.0
        %v5432 = vmax.f32 %v5370, 0.0
        %v5433 = vmax.f32 %v5371, 0.0
        %v5434 = vmax.f32 %v5372, 0.0
        %v5435 = vmax.f32 %v5373, 0.0
        %v5436 = vmax.f32 %v5374, 0.0
        %v5437 = vmax.f32 %v5375, 0.0
        %v5438 = vmax.f32 %v5376, 0.0
        %v5439 = vmax.f32 %v5377, 0.0
        %v5440 = vmax.f32 %v5378, 0.0
        %v5441 = vmax.f32 %v5379, 0.0
        %v5442 = vmax.f32 %v5380, 0.0
        %v5443 = vmax.f32 %v5381, 0.0
        %v5444 = vmax.f32 %v5382, 0.0
        %v5445 = vmax.f32 %v5383, 0.0
        %v5446 = vmax.f32 %v5384, 0.0
        %v5447 = vmax.f32 %v5385, 0.0
        %v5448 = vmax.f32 %v5386, 0.0
        %v5449 = vmax.f32 %v5387, 0.0
        %v5450 = vmax.f32 %v5388, 0.0
        %v5451 = vmax.f32 %v5389, 0.0
        %v5452 = vmax.f32 %v5390, 0.0
        %v5453 = vmax.f32 %v5391, 0.0
        %v5454 = vmax.f32 %v5392, 0.0
        %v5455 = vmax.f32 %v5393, 0.0
        %v5456 = vmax.f32 %v5394, 0.0
        %v5457 = vmax.f32 %v5395, 0.0
        %v5458 = vmax.f32 %v5396, 0.0
        %v5459 = vmax.f32 %v5397, 0.0
        %v5460 = vmax.f32 %v5398, 0.0
        %v5461 = vmax.f32 %v5399, 0.0
        %v5462 = vmax.f32 %v5400, 0.0
        %v5463 = vmax.f32 %v5401, 0.0
        %v5464 = vmax.f32 %v5402, 0.0
        %v5465 = vmax.f32 %v5403, 0.0
        %v5466 = vmax.f32 %v5404, 0.0
        %v5467 = vmax.f32 %v5405, 0.0
        %v5468 = vmax.f32 %v5406, 0.0
        %v5469 = vmax.f32 %v5407, 0.0
        %v5470 = vmax.f32 %v5408, 0.0
        %v5471 = vmax.f32 %v5409, 0.0
        %v5472 = vmax.f32 %v5410, 0.0
        %v5473 = vmax.f32 %v5411, 0.0
        %v5474 = vmax.f32 %v5412, 0.0
        %v5475 = vmul.f32 %v5413, %v5151
        %v5476 = vmul.f32 %v5414, %v5152
        %v5477 = vmul.f32 %v5415, %v5153
        %v5478 = vmul.f32 %v5416, %v5154
        %v5479 = vmul.f32 %v5417, %v5155
        %v5480 = vmul.f32 %v5418, %v5156
        %v5481 = vmul.f32 %v5419, %v5157
        %v5482 = vmul.f32 %v5420, %v5158
        %v5483 = vmul.f32 %v5421, %v5159
        %v5484 = vmul.f32 %v5422, %v5160
        %v5485 = vmul.f32 %v5423, %v5161
        %v5486 = vmul.f32 %v5424, %v5162
        %v5487 = vmul.f32 %v5425, %v5163
        %v5488 = vmul.f32 %v5426, %v5164
        %v5489 = vmul.f32 %v5427, %v5165
        %v5490 = vmul.f32 %v5428, %v5166
        %v5491 = vmul.f32 %v5429, %v5167
        %v5492 = vmul.f32 %v5430, %v5168
        %v5493 = vmul.f32 %v5431, %v5169
        %v5494 = vmul.f32 %v5432, %v5170
        %v5495 = vmul.f32 %v5433, %v5171
        %v5496 = vmul.f32 %v5434, %v5172
        %v5497 = vmul.f32 %v5435, %v5173
        %v5498 = vmul.f32 %v5436, %v5174
        %v5499 = vmul.f32 %v5437, %v5175
        %v5500 = vmul.f32 %v5438, %v5176
        %v5501 = vmul.f32 %v5439, %v5177
        %v5502 = vmul.f32 %v5440, %v5178
        %v5503 = vmul.f32 %v5441, %v5179
        %v5504 = vmul.f32 %v5442, %v5180
        %v5505 = vmul.f32 %v5443, %v5181
        %v5506 = vmul.f32 %v5444, %v5182
        %v5507 = vmul.f32 %v5445, %v5183
        %v5508 = vmul.f32 %v5446, %v5184
        %v5509 = vmul.f32 %v5447, %v5185
        %v5510 = vmul.f32 %v5448, %v5186
        %v5511 = vmul.f32 %v5449, %v5187
        %v5512 = vmul.f32 %v5450, %v5188
        %v5513 = vmul.f32 %v5451, %v5189
        %v5514 = vmul.f32 %v5452, %v5190
        %v5515 = vmul.f32 %v5453, %v5191
        %v5516 = vmul.f32 %v5454, %v5192
        %v5517 = vmul.f32 %v5455, %v5193
        %v5518 = vmul.f32 %v5456, %v5194
        %v5519 = vmul.f32 %v5457, %v5195
        %v5520 = vmul.f32 %v5458, %v5196
        %v5521 = vmul.f32 %v5459, %v5197
        %v5522 = vmul.f32 %v5460, %v5198
        %v5523 = vmul.f32 %v5461, %v5199
        %v5524 = vmul.f32 %v5462, %v5200
        %v5525 = vmul.f32 %v5463, %v5201
        %v5526 = vmul.f32 %v5464, %v5202
        %v5527 = vmul.f32 %v5465, %v5203
        %v5528 = vmul.f32 %v5466, %v5204
        %v5529 = vmul.f32 %v5467, %v5205
        %v5530 = vmul.f32 %v5468, %v5206
        %v5531 = vmul.f32 %v5469, %v5207
        %v5532 = vmul.f32 %v5470, %v5208
        %v5533 = vmul.f32 %v5471, %v5209
        %v5534 = vmul.f32 %v5472, %v5210
        %v5535 = vmul.f32 %v5473, %v5211
        %v5536 = vmul.f32 %v5474, %v5212
        %5537 = vst [vmem:[#allocation3 + $0x8] sm:$0xff] %v5475
        %5538 = vst [vmem:[#allocation3 + $0x20] sm:$0xff] %v5476
        %5539 = vst [vmem:[#allocation3 + $0x38] sm:$0xff] %v5477
        %5540 = vst [vmem:[#allocation3 + $0x50] sm:$0xff] %v5478
        %5541 = vst [vmem:[#allocation3 + $0x68] sm:$0xff] %v5479
        %5542 = vst [vmem:[#allocation3 + $0x80] sm:$0xff] %v5480
        %5543 = vst [vmem:[#allocation3 + $0x98] sm:$0xff] %v5481
        %5544 = vst [vmem:[#allocation3 + $0xb0] sm:$0xff] %v5482
        %5545 = vst [vmem:[#allocation3 + $0xc8] sm:$0xff] %v5483
        %5546 = vst [vmem:[#allocation3 + $0xe0] sm:$0xff] %v5484
        %5547 = vst [vmem:[#allocation3 + $0xf8] sm:$0xff] %v5485
        %5548 = vst [vmem:[#allocation3 + $0x110] sm:$0xff] %v5486
        %5549 = vst [vmem:[#allocation3 + $0x128] sm:$0xff] %v5487
        %5550 = vst [vmem:[#allocation3 + $0x140] sm:$0xff] %v5488
        %5551 = vst [vmem:[#allocation3 + $0x158] sm:$0xff] %v5489
        %5552 = vst [vmem:[#allocation3 + $0x170] sm:$0xff] %v5490
        %5553 = vst [vmem:[#allocation3 + $0x188] sm:$0xff] %v5491
        %5554 = vst [vmem:[#allocation3 + $0x1a0] sm:$0xff] %v5492
        %5555 = vst [vmem:[#allocation3 + $0x1b8] sm:$0xff] %v5493
        %5556 = vst [vmem:[#allocation3 + $0x1d0] sm:$0xff] %v5494
        %5557 = vst [vmem:[#allocation3 + $0x1e8] sm:$0xff] %v5495
        %5558 = vst [vmem:[#allocation3 + $0x200] sm:$0xff] %v5496
        %5559 = vst [vmem:[#allocation3 + $0x218] sm:$0xff] %v5497
        %5560 = vst [vmem:[#allocation3 + $0x230] sm:$0xff] %v5498
        %5561 = vst [vmem:[#allocation3 + $0x248] sm:$0xff] %v5499
        %5562 = vst [vmem:[#allocation3 + $0x260] sm:$0xff] %v5500
        %5563 = vst [vmem:[#allocation3 + $0x278] sm:$0xff] %v5501
        %5564 = vst [vmem:[#allocation3 + $0x290] sm:$0xff] %v5502
        %5565 = vst [vmem:[#allocation3 + $0x2a8] sm:$0xff] %v5503
        %5566 = vst [vmem:[#allocation3 + $0x2c0] sm:$0xff] %v5504
        %5567 = vst [vmem:[#allocation3 + $0x2d8] sm:$0xff] %v5505
        %5568 = vst [vmem:[#allocation3 + $0x2f0] sm:$0xff] %v5506
        %5569 = vst [vmem:[#allocation3 + $0x308] sm:$0xff] %v5507
        %5570 = vst [vmem:[#allocation3 + $0x320] sm:$0xff] %v5508
        %5571 = vst [vmem:[#allocation3 + $0x338] sm:$0xff] %v5509
        %5572 = vst [vmem:[#allocation3 + $0x350] sm:$0xff] %v5510
        %5573 = vst [vmem:[#allocation3 + $0x368] sm:$0xff] %v5511
        %5574 = vst [vmem:[#allocation3 + $0x380] sm:$0xff] %v5512
        %5575 = vst [vmem:[#allocation3 + $0x398] sm:$0xff] %v5513
        %5576 = vst [vmem:[#allocation3 + $0x3b0] sm:$0xff] %v5514
        %5577 = vst [vmem:[#allocation3 + $0x3c8] sm:$0xff] %v5515
        %5578 = vst [vmem:[#allocation3 + $0x3e0] sm:$0xff] %v5516
        %5579 = vst [vmem:[#allocation3 + $0x3f8] sm:$0xff] %v5517
        %5580 = vst [vmem:[#allocation3 + $0x410] sm:$0xff] %v5518
        %5581 = vst [vmem:[#allocation3 + $0x428] sm:$0xff] %v5519
        %5582 = vst [vmem:[#allocation3 + $0x440] sm:$0xff] %v5520
        %5583 = vst [vmem:[#allocation3 + $0x458] sm:$0xff] %v5521
        %5584 = vst [vmem:[#allocation3 + $0x470] sm:$0xff] %v5522
        %5585 = vst [vmem:[#allocation3 + $0x488] sm:$0xff] %v5523
        %5586 = vst [vmem:[#allocation3 + $0x4a0] sm:$0xff] %v5524
        %5587 = vst [vmem:[#allocation3 + $0x4b8] sm:$0xff] %v5525
        %5588 = vst [vmem:[#allocation3 + $0x4d0] sm:$0xff] %v5526
        %5589 = vst [vmem:[#allocation3 + $0x4e8] sm:$0xff] %v5527
        %5590 = vst [vmem:[#allocation3 + $0x500] sm:$0xff] %v5528
        %5591 = vst [vmem:[#allocation3 + $0x518] sm:$0xff] %v5529
        %5592 = vst [vmem:[#allocation3 + $0x530] sm:$0xff] %v5530
        %5593 = vst [vmem:[#allocation3 + $0x548] sm:$0xff] %v5531
        %5594 = vst [vmem:[#allocation3 + $0x560] sm:$0xff] %v5532
        %5595 = vst [vmem:[#allocation3 + $0x578] sm:$0xff] %v5533
        %5596 = vst [vmem:[#allocation3 + $0x590] sm:$0xff] %v5534
        %5597 = vst [vmem:[#allocation3 + $0x5a8] sm:$0xff] %v5535
        %5598 = vst [vmem:[#allocation3 + $0x5c0] sm:$0xff] %v5536
        %vm5661 = vcmask 1040384
        %v5662 = vrot.slane %v5475, 7
        %v5663 = vrot.slane %v5476, 7
        %v5664 = vsel %vm5661, %v5662, %v5663
        %v5665 = vrot.slane %v5477, 7
        %v5666 = vsel %vm5661, %v5663, %v5665
        %v5667 = vrot.slane %v5478, 7
        %v5668 = vsel %vm5661, %v5665, %v5667
        %v5669 = vrot.slane %v5479, 7
        %v5670 = vsel %vm5661, %v5667, %v5669
        %v5671 = vrot.slane %v5480, 7
        %v5672 = vsel %vm5661, %v5669, %v5671
        %v5673 = vrot.slane %v5481, 7
        %v5674 = vsel %vm5661, %v5671, %v5673
        %v5675 = vrot.slane %v5482, 7
        %v5676 = vsel %vm5661, %v5673, %v5675
        %v5677 = vrot.slane %v5483, 7
        %v5678 = vsel %vm5661, %v5675, %v5677
        %v5679 = vrot.slane %v5484, 7
        %v5680 = vsel %vm5661, %v5677, %v5679
        %v5681 = vrot.slane %v5485, 7
        %v5682 = vsel %vm5661, %v5679, %v5681
        %v5683 = vrot.slane %v5486, 7
        %v5684 = vsel %vm5661, %v5681, %v5683
        %v5685 = vrot.slane %v5487, 7
        %v5686 = vsel %vm5661, %v5683, %v5685
        %v5687 = vrot.slane %v5488, 7
        %v5688 = vsel %vm5661, %v5685, %v5687
        %v5689 = vrot.slane %v5489, 7
        %v5690 = vsel %vm5661, %v5687, %v5689
        %v5691 = vrot.slane %v5490, 7
        %v5692 = vsel %vm5661, %v5689, %v5691
        %v5693 = vrot.slane %v5491, 7
        %v5694 = vsel %vm5661, %v5691, %v5693
        %v5695 = vrot.slane %v5492, 7
        %v5696 = vsel %vm5661, %v5693, %v5695
        %v5697 = vrot.slane %v5493, 7
        %v5698 = vsel %vm5661, %v5695, %v5697
        %v5699 = vrot.slane %v5494, 7
        %v5700 = vsel %vm5661, %v5697, %v5699
        %v5701 = vrot.slane %v5495, 7
        %v5702 = vsel %vm5661, %v5699, %v5701
        %v5703 = vrot.slane %v5496, 7
        %v5704 = vsel %vm5661, %v5701, %v5703
        %v5705 = vrot.slane %v5497, 7
        %v5706 = vsel %vm5661, %v5703, %v5705
        %v5707 = vrot.slane %v5498, 7
        %v5708 = vsel %vm5661, %v5705, %v5707
        %v5709 = vrot.slane %v5499, 7
        %v5710 = vsel %vm5661, %v5707, %v5709
        %v5711 = vrot.slane %v5500, 7
        %v5712 = vsel %vm5661, %v5709, %v5711
        %v5713 = vrot.slane %v5501, 7
        %v5714 = vsel %vm5661, %v5711, %v5713
        %v5715 = vrot.slane %v5502, 7
        %v5716 = vsel %vm5661, %v5713, %v5715
        %v5717 = vrot.slane %v5503, 7
        %v5718 = vsel %vm5661, %v5715, %v5717
        %v5719 = vrot.slane %v5504, 7
        %v5720 = vsel %vm5661, %v5717, %v5719
        %v5721 = vrot.slane %v5505, 7
        %v5722 = vsel %vm5661, %v5719, %v5721
        %v5723 = vrot.slane %v5506, 7
        %v5724 = vsel %vm5661, %v5721, %v5723
        %v5725 = vrot.slane %v5507, 7
        %v5726 = vsel %vm5661, %v5723, %v5725
        %v5727 = vrot.slane %v5508, 7
        %v5728 = vsel %vm5661, %v5725, %v5727
        %v5729 = vrot.slane %v5509, 7
        %v5730 = vsel %vm5661, %v5727, %v5729
        %v5731 = vrot.slane %v5510, 7
        %v5732 = vsel %vm5661, %v5729, %v5731
        %v5733 = vrot.slane %v5511, 7
        %v5734 = vsel %vm5661, %v5731, %v5733
        %v5735 = vrot.slane %v5512, 7
        %v5736 = vsel %vm5661, %v5733, %v5735
        %v5737 = vrot.slane %v5513, 7
        %v5738 = vsel %vm5661, %v5735, %v5737
        %v5739 = vrot.slane %v5514, 7
        %v5740 = vsel %vm5661, %v5737, %v5739
        %v5741 = vrot.slane %v5515, 7
        %v5742 = vsel %vm5661, %v5739, %v5741
        %v5743 = vrot.slane %v5516, 7
        %v5744 = vsel %vm5661, %v5741, %v5743
        %v5745 = vrot.slane %v5517, 7
        %v5746 = vsel %vm5661, %v5743, %v5745
        %v5747 = vrot.slane %v5518, 7
        %v5748 = vsel %vm5661, %v5745, %v5747
        %v5749 = vrot.slane %v5519, 7
        %v5750 = vsel %vm5661, %v5747, %v5749
        %v5751 = vrot.slane %v5520, 7
        %v5752 = vsel %vm5661, %v5749, %v5751
        %v5753 = vrot.slane %v5521, 7
        %v5754 = vsel %vm5661, %v5751, %v5753
        %v5755 = vrot.slane %v5522, 7
        %v5756 = vsel %vm5661, %v5753, %v5755
        %v5757 = vrot.slane %v5523, 7
        %v5758 = vsel %vm5661, %v5755, %v5757
        %v5759 = vrot.slane %v5524, 7
        %v5760 = vsel %vm5661, %v5757, %v5759
        %v5761 = vrot.slane %v5525, 7
        %v5762 = vsel %vm5661, %v5759, %v5761
        %v5763 = vrot.slane %v5526, 7
        %v5764 = vsel %vm5661, %v5761, %v5763
        %v5765 = vrot.slane %v5527, 7
        %v5766 = vsel %vm5661, %v5763, %v5765
        %v5767 = vrot.slane %v5528, 7
        %v5768 = vsel %vm5661, %v5765, %v5767
        %v5769 = vrot.slane %v5529, 7
        %v5770 = vsel %vm5661, %v5767, %v5769
        %v5771 = vrot.slane %v5530, 7
        %v5772 = vsel %vm5661, %v5769, %v5771
        %v5773 = vrot.slane %v5531, 7
        %v5774 = vsel %vm5661, %v5771, %v5773
        %v5775 = vrot.slane %v5532, 7
        %v5776 = vsel %vm5661, %v5773, %v5775
        %v5777 = vrot.slane %v5533, 7
        %v5778 = vsel %vm5661, %v5775, %v5777
        %v5779 = vrot.slane %v5534, 7
        %v5780 = vsel %vm5661, %v5777, %v5779
        %v5781 = vrot.slane %v5535, 7
        %v5782 = vsel %vm5661, %v5779, %v5781
        %v5783 = vrot.slane %v5536, 7
        %v5784 = vsel %vm5661, %v5781, %v5783
        %5847 = vst [vmem:[#allocation3] sm:$0xfe] %v5662
        %5848 = vst [vmem:[#allocation3 + $0x18] sm:$0xff] %v5664
        %5849 = vst [vmem:[#allocation3 + $0x30] sm:$0xff] %v5666
        %5850 = vst [vmem:[#allocation3 + $0x48] sm:$0xff] %v5668
        %5851 = vst [vmem:[#allocation3 + $0x60] sm:$0xff] %v5670
        %5852 = vst [vmem:[#allocation3 + $0x78] sm:$0xff] %v5672
        %5853 = vst [vmem:[#allocation3 + $0x90] sm:$0xff] %v5674
        %5854 = vst [vmem:[#allocation3 + $0xa8] sm:$0xff] %v5676
        %5855 = vst [vmem:[#allocation3 + $0xc0] sm:$0xff] %v5678
        %5856 = vst [vmem:[#allocation3 + $0xd8] sm:$0xff] %v5680
        %5857 = vst [vmem:[#allocation3 + $0xf0] sm:$0xff] %v5682
        %5858 = vst [vmem:[#allocation3 + $0x108] sm:$0xff] %v5684
        %5859 = vst [vmem:[#allocation3 + $0x120] sm:$0xff] %v5686
        %5860 = vst [vmem:[#allocation3 + $0x138] sm:$0xff] %v5688
        %5861 = vst [vmem:[#allocation3 + $0x150] sm:$0xff] %v5690
        %5862 = vst [vmem:[#allocation3 + $0x168] sm:$0xff] %v5692
        %5863 = vst [vmem:[#allocation3 + $0x180] sm:$0xff] %v5694
        %5864 = vst [vmem:[#allocation3 + $0x198] sm:$0xff] %v5696
        %5865 = vst [vmem:[#allocation3 + $0x1b0] sm:$0xff] %v5698
        %5866 = vst [vmem:[#allocation3 + $0x1c8] sm:$0xff] %v5700
        %5867 = vst [vmem:[#allocation3 + $0x1e0] sm:$0xff] %v5702
        %5868 = vst [vmem:[#allocation3 + $0x1f8] sm:$0xff] %v5704
        %5869 = vst [vmem:[#allocation3 + $0x210] sm:$0xff] %v5706
        %5870 = vst [vmem:[#allocation3 + $0x228] sm:$0xff] %v5708
        %5871 = vst [vmem:[#allocation3 + $0x240] sm:$0xff] %v5710
        %5872 = vst [vmem:[#allocation3 + $0x258] sm:$0xff] %v5712
        %5873 = vst [vmem:[#allocation3 + $0x270] sm:$0xff] %v5714
        %5874 = vst [vmem:[#allocation3 + $0x288] sm:$0xff] %v5716
        %5875 = vst [vmem:[#allocation3 + $0x2a0] sm:$0xff] %v5718
        %5876 = vst [vmem:[#allocation3 + $0x2b8] sm:$0xff] %v5720
        %5877 = vst [vmem:[#allocation3 + $0x2d0] sm:$0xff] %v5722
        %5878 = vst [vmem:[#allocation3 + $0x2e8] sm:$0xff] %v5724
        %5879 = vst [vmem:[#allocation3 + $0x300] sm:$0xff] %v5726
        %5880 = vst [vmem:[#allocation3 + $0x318] sm:$0xff] %v5728
        %5881 = vst [vmem:[#allocation3 + $0x330] sm:$0xff] %v5730
        %5882 = vst [vmem:[#allocation3 + $0x348] sm:$0xff] %v5732
        %5883 = vst [vmem:[#allocation3 + $0x360] sm:$0xff] %v5734
        %5884 = vst [vmem:[#allocation3 + $0x378] sm:$0xff] %v5736
        %5885 = vst [vmem:[#allocation3 + $0x390] sm:$0xff] %v5738
        %5886 = vst [vmem:[#allocation3 + $0x3a8] sm:$0xff] %v5740
        %5887 = vst [vmem:[#allocation3 + $0x3c0] sm:$0xff] %v5742
        %5888 = vst [vmem:[#allocation3 + $0x3d8] sm:$0xff] %v5744
        %5889 = vst [vmem:[#allocation3 + $0x3f0] sm:$0xff] %v5746
        %5890 = vst [vmem:[#allocation3 + $0x408] sm:$0xff] %v5748
        %5891 = vst [vmem:[#allocation3 + $0x420] sm:$0xff] %v5750
        %5892 = vst [vmem:[#allocation3 + $0x438] sm:$0xff] %v5752
        %5893 = vst [vmem:[#allocation3 + $0x450] sm:$0xff] %v5754
        %5894 = vst [vmem:[#allocation3 + $0x468] sm:$0xff] %v5756
        %5895 = vst [vmem:[#allocation3 + $0x480] sm:$0xff] %v5758
        %5896 = vst [vmem:[#allocation3 + $0x498] sm:$0xff] %v5760
        %5897 = vst [vmem:[#allocation3 + $0x4b0] sm:$0xff] %v5762
        %5898 = vst [vmem:[#allocation3 + $0x4c8] sm:$0xff] %v5764
        %5899 = vst [vmem:[#allocation3 + $0x4e0] sm:$0xff] %v5766
        %5900 = vst [vmem:[#allocation3 + $0x4f8] sm:$0xff] %v5768
        %5901 = vst [vmem:[#allocation3 + $0x510] sm:$0xff] %v5770
        %5902 = vst [vmem:[#allocation3 + $0x528] sm:$0xff] %v5772
        %5903 = vst [vmem:[#allocation3 + $0x540] sm:$0xff] %v5774
        %5904 = vst [vmem:[#allocation3 + $0x558] sm:$0xff] %v5776
        %5905 = vst [vmem:[#allocation3 + $0x570] sm:$0xff] %v5778
        %5906 = vst [vmem:[#allocation3 + $0x588] sm:$0xff] %v5780
        %5907 = vst [vmem:[#allocation3 + $0x5a0] sm:$0xff] %v5782
        %5908 = vst [vmem:[#allocation3 + $0x5b8] sm:$0xff] %v5784
        %vm5909 = vcmask 1046528
        %v5910 = vrot.slane %v5475, 1
        %v5911 = vrot.slane %v5476, 1
        %v5912 = vsel %vm5909, %v5910, %v5911
        %v5913 = vrot.slane %v5477, 1
        %v5914 = vsel %vm5909, %v5911, %v5913
        %v5915 = vrot.slane %v5478, 1
        %v5916 = vsel %vm5909, %v5913, %v5915
        %v5917 = vrot.slane %v5479, 1
        %v5918 = vsel %vm5909, %v5915, %v5917
        %v5919 = vrot.slane %v5480, 1
        %v5920 = vsel %vm5909, %v5917, %v5919
        %v5921 = vrot.slane %v5481, 1
        %v5922 = vsel %vm5909, %v5919, %v5921
        %v5923 = vrot.slane %v5482, 1
        %v5924 = vsel %vm5909, %v5921, %v5923
        %v5925 = vrot.slane %v5483, 1
        %v5926 = vsel %vm5909, %v5923, %v5925
        %v5927 = vrot.slane %v5484, 1
        %v5928 = vsel %vm5909, %v5925, %v5927
        %v5929 = vrot.slane %v5485, 1
        %v5930 = vsel %vm5909, %v5927, %v5929
        %v5931 = vrot.slane %v5486, 1
        %v5932 = vsel %vm5909, %v5929, %v5931
        %v5933 = vrot.slane %v5487, 1
        %v5934 = vsel %vm5909, %v5931, %v5933
        %v5935 = vrot.slane %v5488, 1
        %v5936 = vsel %vm5909, %v5933, %v5935
        %v5937 = vrot.slane %v5489, 1
        %v5938 = vsel %vm5909, %v5935, %v5937
        %v5939 = vrot.slane %v5490, 1
        %v5940 = vsel %vm5909, %v5937, %v5939
        %v5941 = vrot.slane %v5491, 1
        %v5942 = vsel %vm5909, %v5939, %v5941
        %v5943 = vrot.slane %v5492, 1
        %v5944 = vsel %vm5909, %v5941, %v5943
        %v5945 = vrot.slane %v5493, 1
        %v5946 = vsel %vm5909, %v5943, %v5945
        %v5947 = vrot.slane %v5494, 1
        %v5948 = vsel %vm5909, %v5945, %v5947
        %v5949 = vrot.slane %v5495, 1
        %v5950 = vsel %vm5909, %v5947, %v5949
        %v5951 = vrot.slane %v5496, 1
        %v5952 = vsel %vm5909, %v5949, %v5951
        %v5953 = vrot.slane %v5497, 1
        %v5954 = vsel %vm5909, %v5951, %v5953
        %v5955 = vrot.slane %v5498, 1
        %v5956 = vsel %vm5909, %v5953, %v5955
        %v5957 = vrot.slane %v5499, 1
        %v5958 = vsel %vm5909, %v5955, %v5957
        %v5959 = vrot.slane %v5500, 1
        %v5960 = vsel %vm5909, %v5957, %v5959
        %v5961 = vrot.slane %v5501, 1
        %v5962 = vsel %vm5909, %v5959, %v5961
        %v5963 = vrot.slane %v5502, 1
        %v5964 = vsel %vm5909, %v5961, %v5963
        %v5965 = vrot.slane %v5503, 1
        %v5966 = vsel %vm5909, %v5963, %v5965
        %v5967 = vrot.slane %v5504, 1
        %v5968 = vsel %vm5909, %v5965, %v5967
        %v5969 = vrot.slane %v5505, 1
        %v5970 = vsel %vm5909, %v5967, %v5969
        %v5971 = vrot.slane %v5506, 1
        %v5972 = vsel %vm5909, %v5969, %v5971
        %v5973 = vrot.slane %v5507, 1
        %v5974 = vsel %vm5909, %v5971, %v5973
        %v5975 = vrot.slane %v5508, 1
        %v5976 = vsel %vm5909, %v5973, %v5975
        %v5977 = vrot.slane %v5509, 1
        %v5978 = vsel %vm5909, %v5975, %v5977
        %v5979 = vrot.slane %v5510, 1
        %v5980 = vsel %vm5909, %v5977, %v5979
        %v5981 = vrot.slane %v5511, 1
        %v5982 = vsel %vm5909, %v5979, %v5981
        %v5983 = vrot.slane %v5512, 1
        %v5984 = vsel %vm5909, %v5981, %v5983
        %v5985 = vrot.slane %v5513, 1
        %v5986 = vsel %vm5909, %v5983, %v5985
        %v5987 = vrot.slane %v5514, 1
        %v5988 = vsel %vm5909, %v5985, %v5987
        %v5989 = vrot.slane %v5515, 1
        %v5990 = vsel %vm5909, %v5987, %v5989
        %v5991 = vrot.slane %v5516, 1
        %v5992 = vsel %vm5909, %v5989, %v5991
        %v5993 = vrot.slane %v5517, 1
        %v5994 = vsel %vm5909, %v5991, %v5993
        %v5995 = vrot.slane %v5518, 1
        %v5996 = vsel %vm5909, %v5993, %v5995
        %v5997 = vrot.slane %v5519, 1
        %v5998 = vsel %vm5909, %v5995, %v5997
        %v5999 = vrot.slane %v5520, 1
        %v6000 = vsel %vm5909, %v5997, %v5999
        %v6001 = vrot.slane %v5521, 1
        %v6002 = vsel %vm5909, %v5999, %v6001
        %v6003 = vrot.slane %v5522, 1
        %v6004 = vsel %vm5909, %v6001, %v6003
        %v6005 = vrot.slane %v5523, 1
        %v6006 = vsel %vm5909, %v6003, %v6005
        %v6007 = vrot.slane %v5524, 1
        %v6008 = vsel %vm5909, %v6005, %v6007
        %v6009 = vrot.slane %v5525, 1
        %v6010 = vsel %vm5909, %v6007, %v6009
        %v6011 = vrot.slane %v5526, 1
        %v6012 = vsel %vm5909, %v6009, %v6011
        %v6013 = vrot.slane %v5527, 1
        %v6014 = vsel %vm5909, %v6011, %v6013
        %v6015 = vrot.slane %v5528, 1
        %v6016 = vsel %vm5909, %v6013, %v6015
        %v6017 = vrot.slane %v5529, 1
        %v6018 = vsel %vm5909, %v6015, %v6017
        %v6019 = vrot.slane %v5530, 1
        %v6020 = vsel %vm5909, %v6017, %v6019
        %v6021 = vrot.slane %v5531, 1
        %v6022 = vsel %vm5909, %v6019, %v6021
        %v6023 = vrot.slane %v5532, 1
        %v6024 = vsel %vm5909, %v6021, %v6023
        %v6025 = vrot.slane %v5533, 1
        %v6026 = vsel %vm5909, %v6023, %v6025
        %v6027 = vrot.slane %v5534, 1
        %v6028 = vsel %vm5909, %v6025, %v6027
        %v6029 = vrot.slane %v5535, 1
        %v6030 = vsel %vm5909, %v6027, %v6029
        %v6031 = vrot.slane %v5536, 1
        %v6032 = vsel %vm5909, %v6029, %v6031
        %6095 = vst [vmem:[#allocation3 + $0x10] sm:$0xff] %v5912
        %6096 = vst [vmem:[#allocation3 + $0x28] sm:$0xff] %v5914
        %6097 = vst [vmem:[#allocation3 + $0x40] sm:$0xff] %v5916
        %6098 = vst [vmem:[#allocation3 + $0x58] sm:$0xff] %v5918
        %6099 = vst [vmem:[#allocation3 + $0x70] sm:$0xff] %v5920
        %6100 = vst [vmem:[#allocation3 + $0x88] sm:$0xff] %v5922
        %6101 = vst [vmem:[#allocation3 + $0xa0] sm:$0xff] %v5924
        %6102 = vst [vmem:[#allocation3 + $0xb8] sm:$0xff] %v5926
        %6103 = vst [vmem:[#allocation3 + $0xd0] sm:$0xff] %v5928
        %6104 = vst [vmem:[#allocation3 + $0xe8] sm:$0xff] %v5930
        %6105 = vst [vmem:[#allocation3 + $0x100] sm:$0xff] %v5932
        %6106 = vst [vmem:[#allocation3 + $0x118] sm:$0xff] %v5934
        %6107 = vst [vmem:[#allocation3 + $0x130] sm:$0xff] %v5936
        %6108 = vst [vmem:[#allocation3 + $0x148] sm:$0xff] %v5938
        %6109 = vst [vmem:[#allocation3 + $0x160] sm:$0xff] %v5940
        %6110 = vst [vmem:[#allocation3 + $0x178] sm:$0xff] %v5942
        %6111 = vst [vmem:[#allocation3 + $0x190] sm:$0xff] %v5944
        %6112 = vst [vmem:[#allocation3 + $0x1a8] sm:$0xff] %v5946
        %6113 = vst [vmem:[#allocation3 + $0x1c0] sm:$0xff] %v5948
        %6114 = vst [vmem:[#allocation3 + $0x1d8] sm:$0xff] %v5950
        %6115 = vst [vmem:[#allocation3 + $0x1f0] sm:$0xff] %v5952
        %6116 = vst [vmem:[#allocation3 + $0x208] sm:$0xff] %v5954
        %6117 = vst [vmem:[#allocation3 + $0x220] sm:$0xff] %v5956
        %6118 = vst [vmem:[#allocation3 + $0x238] sm:$0xff] %v5958
        %6119 = vst [vmem:[#allocation3 + $0x250] sm:$0xff] %v5960
        %6120 = vst [vmem:[#allocation3 + $0x268] sm:$0xff] %v5962
        %6121 = vst [vmem:[#allocation3 + $0x280] sm:$0xff] %v5964
        %6122 = vst [vmem:[#allocation3 + $0x298] sm:$0xff] %v5966
        %6123 = vst [vmem:[#allocation3 + $0x2b0] sm:$0xff] %v5968
        %6124 = vst [vmem:[#allocation3 + $0x2c8] sm:$0xff] %v5970
        %6125 = vst [vmem:[#allocation3 + $0x2e0] sm:$0xff] %v5972
        %6126 = vst [vmem:[#allocation3 + $0x2f8] sm:$0xff] %v5974
        %6127 = vst [vmem:[#allocation3 + $0x310] sm:$0xff] %v5976
        %6128 = vst [vmem:[#allocation3 + $0x328] sm:$0xff] %v5978
        %6129 = vst [vmem:[#allocation3 + $0x340] sm:$0xff] %v5980
        %6130 = vst [vmem:[#allocation3 + $0x358] sm:$0xff] %v5982
        %6131 = vst [vmem:[#allocation3 + $0x370] sm:$0xff] %v5984
        %6132 = vst [vmem:[#allocation3 + $0x388] sm:$0xff] %v5986
        %6133 = vst [vmem:[#allocation3 + $0x3a0] sm:$0xff] %v5988
        %6134 = vst [vmem:[#allocation3 + $0x3b8] sm:$0xff] %v5990
        %6135 = vst [vmem:[#allocation3 + $0x3d0] sm:$0xff] %v5992
        %6136 = vst [vmem:[#allocation3 + $0x3e8] sm:$0xff] %v5994
        %6137 = vst [vmem:[#allocation3 + $0x400] sm:$0xff] %v5996
        %6138 = vst [vmem:[#allocation3 + $0x418] sm:$0xff] %v5998
        %6139 = vst [vmem:[#allocation3 + $0x430] sm:$0xff] %v6000
        %6140 = vst [vmem:[#allocation3 + $0x448] sm:$0xff] %v6002
        %6141 = vst [vmem:[#allocation3 + $0x460] sm:$0xff] %v6004
        %6142 = vst [vmem:[#allocation3 + $0x478] sm:$0xff] %v6006
        %6143 = vst [vmem:[#allocation3 + $0x490] sm:$0xff] %v6008
        %6144 = vst [vmem:[#allocation3 + $0x4a8] sm:$0xff] %v6010
        %6145 = vst [vmem:[#allocation3 + $0x4c0] sm:$0xff] %v6012
        %6146 = vst [vmem:[#allocation3 + $0x4d8] sm:$0xff] %v6014
        %6147 = vst [vmem:[#allocation3 + $0x4f0] sm:$0xff] %v6016
        %6148 = vst [vmem:[#allocation3 + $0x508] sm:$0xff] %v6018
        %6149 = vst [vmem:[#allocation3 + $0x520] sm:$0xff] %v6020
        %6150 = vst [vmem:[#allocation3 + $0x538] sm:$0xff] %v6022
        %6151 = vst [vmem:[#allocation3 + $0x550] sm:$0xff] %v6024
        %6152 = vst [vmem:[#allocation3 + $0x568] sm:$0xff] %v6026
        %6153 = vst [vmem:[#allocation3 + $0x580] sm:$0xff] %v6028
        %6154 = vst [vmem:[#allocation3 + $0x598] sm:$0xff] %v6030
        %6155 = vst [vmem:[#allocation3 + $0x5b0] sm:$0xff] %v6032
        %6156 = vst [vmem:[#allocation3 + $0x5c8] sm:$0x7f] %v6031
        %v6157 = vld [vmem:[#allocation3 + $0x18] sm:$0xff]
        %v6158 = vld [vmem:[#allocation3 + $0x20] sm:$0xff]
        %v6159 = vld [vmem:[#allocation3 + $0x28] sm:$0xff]
        %v6160 = vld [vmem:[#allocation3 + $0x30] sm:$0xff]
        %v6161 = vld [vmem:[#allocation3 + $0x38] sm:$0xff]
        %v6162 = vld [vmem:[#allocation3 + $0x40] sm:$0xff]
        %v6163 = vld [vmem:[#allocation3 + $0x48] sm:$0xff]
        %v6164 = vld [vmem:[#allocation3 + $0x50] sm:$0xff]
        %v6165 = vld [vmem:[#allocation3 + $0x58] sm:$0xff]
        %v6166 = vld [vmem:[#allocation3 + $0x60] sm:$0xff]
        %v6167 = vld [vmem:[#allocation3 + $0x68] sm:$0xff]
        %v6168 = vld [vmem:[#allocation3 + $0x70] sm:$0xff]
        %v6169 = vld [vmem:[#allocation3 + $0x78] sm:$0xff]
        %v6170 = vld [vmem:[#allocation3 + $0x80] sm:$0xff]
        %v6171 = vld [vmem:[#allocation3 + $0x88] sm:$0xff]
        %v6172 = vld [vmem:[#allocation3 + $0x90] sm:$0xff]
        %v6173 = vld [vmem:[#allocation3 + $0x98] sm:$0xff]
        %v6174 = vld [vmem:[#allocation3 + $0xa0] sm:$0xff]
        %v6175 = vld [vmem:[#allocation3 + $0xa8] sm:$0xff]
        %v6176 = vld [vmem:[#allocation3 + $0xb0] sm:$0xff]
        %v6177 = vld [vmem:[#allocation3 + $0xb8] sm:$0xff]
        %v6178 = vld [vmem:[#allocation3 + $0xc0] sm:$0xff]
        %v6179 = vld [vmem:[#allocation3 + $0xc8] sm:$0xff]
        %v6180 = vld [vmem:[#allocation3 + $0xd0] sm:$0xff]
        %v6181 = vld [vmem:[#allocation3 + $0xd8] sm:$0xff]
        %v6182 = vld [vmem:[#allocation3 + $0xe0] sm:$0xff]
        %v6183 = vld [vmem:[#allocation3 + $0xe8] sm:$0xff]
        %v6184 = vld [vmem:[#allocation3 + $0xf0] sm:$0xff]
        %v6185 = vld [vmem:[#allocation3 + $0xf8] sm:$0xff]
        %v6186 = vld [vmem:[#allocation3 + $0x100] sm:$0xff]
        %v6187 = vld [vmem:[#allocation3 + $0x108] sm:$0xff]
        %v6188 = vld [vmem:[#allocation3 + $0x110] sm:$0xff]
        %v6189 = vld [vmem:[#allocation3 + $0x118] sm:$0xff]
        %v6190 = vld [vmem:[#allocation3 + $0x120] sm:$0xff]
        %v6191 = vld [vmem:[#allocation3 + $0x128] sm:$0xff]
        %v6192 = vld [vmem:[#allocation3 + $0x130] sm:$0xff]
        %v6193 = vld [vmem:[#allocation3 + $0x138] sm:$0xff]
        %v6194 = vld [vmem:[#allocation3 + $0x140] sm:$0xff]
        %v6195 = vld [vmem:[#allocation3 + $0x148] sm:$0xff]
        %v6196 = vld [vmem:[#allocation3 + $0x150] sm:$0xff]
        %v6197 = vld [vmem:[#allocation3 + $0x158] sm:$0xff]
        %v6198 = vld [vmem:[#allocation3 + $0x160] sm:$0xff]
        %v6199 = vld [vmem:[#allocation3 + $0x168] sm:$0xff]
        %v6200 = vld [vmem:[#allocation3 + $0x170] sm:$0xff]
        %v6201 = vld [vmem:[#allocation3 + $0x178] sm:$0xff]
        %v6202 = vld [vmem:[#allocation3 + $0x180] sm:$0xff]
        %v6203 = vld [vmem:[#allocation3 + $0x188] sm:$0xff]
        %v6204 = vld [vmem:[#allocation3 + $0x190] sm:$0xff]
        %v6205 = vld [vmem:[#allocation3 + $0x198] sm:$0xff]
        %v6206 = vld [vmem:[#allocation3 + $0x1a0] sm:$0xff]
        %v6207 = vld [vmem:[#allocation3 + $0x1a8] sm:$0xff]
        %v6208 = vld [vmem:[#allocation3 + $0x1b0] sm:$0xff]
        %v6209 = vld [vmem:[#allocation3 + $0x1b8] sm:$0xff]
        %v6210 = vld [vmem:[#allocation3 + $0x1c0] sm:$0xff]
        %v6211 = vld [vmem:[#allocation3 + $0x1c8] sm:$0xff]
        %v6212 = vld [vmem:[#allocation3 + $0x1d0] sm:$0xff]
        %v6213 = vld [vmem:[#allocation3 + $0x1d8] sm:$0xff]
        %v6214 = vld [vmem:[#allocation3 + $0x1e0] sm:$0xff]
        %v6215 = vld [vmem:[#allocation3 + $0x1e8] sm:$0xff]
        %v6216 = vld [vmem:[#allocation3 + $0x1f0] sm:$0xff]
        %v6217 = vld [vmem:[#allocation3 + $0x1f8] sm:$0xff]
        %v6218 = vld [vmem:[#allocation3 + $0x200] sm:$0xff]
        %v6219 = vld [vmem:[#allocation3 + $0x208] sm:$0xff]
        %v6220 = vld [vmem:[#allocation3 + $0x210] sm:$0xff]
        %v6221 = vld [vmem:[#allocation3 + $0x218] sm:$0xff]
        %v6222 = vld [vmem:[#allocation3 + $0x220] sm:$0xff]
        %v6223 = vld [vmem:[#allocation3 + $0x228] sm:$0xff]
        %v6224 = vld [vmem:[#allocation3 + $0x230] sm:$0xff]
        %v6225 = vld [vmem:[#allocation3 + $0x238] sm:$0xff]
        %v6226 = vld [vmem:[#allocation3 + $0x240] sm:$0xff]
        %v6227 = vld [vmem:[#allocation3 + $0x248] sm:$0xff]
        %v6228 = vld [vmem:[#allocation3 + $0x250] sm:$0xff]
        %v6229 = vld [vmem:[#allocation3 + $0x258] sm:$0xff]
        %v6230 = vld [vmem:[#allocation3 + $0x260] sm:$0xff]
        %v6231 = vld [vmem:[#allocation3 + $0x268] sm:$0xff]
        %v6232 = vld [vmem:[#allocation3 + $0x270] sm:$0xff]
        %v6233 = vld [vmem:[#allocation3 + $0x278] sm:$0xff]
        %v6234 = vld [vmem:[#allocation3 + $0x280] sm:$0xff]
        %v6235 = vld [vmem:[#allocation3 + $0x288] sm:$0xff]
        %v6236 = vld [vmem:[#allocation3 + $0x290] sm:$0xff]
        %v6237 = vld [vmem:[#allocation3 + $0x298] sm:$0xff]
        %v6238 = vld [vmem:[#allocation3 + $0x2a0] sm:$0xff]
        %v6239 = vld [vmem:[#allocation3 + $0x2a8] sm:$0xff]
        %v6240 = vld [vmem:[#allocation3 + $0x2b0] sm:$0xff]
        %v6241 = vld [vmem:[#allocation3 + $0x2b8] sm:$0xff]
        %v6242 = vld [vmem:[#allocation3 + $0x2c0] sm:$0xff]
        %v6243 = vld [vmem:[#allocation3 + $0x2c8] sm:$0xff]
        %v6244 = vld [vmem:[#allocation3 + $0x2d0] sm:$0xff]
        %v6245 = vld [vmem:[#allocation3 + $0x2d8] sm:$0xff]
        %v6246 = vld [vmem:[#allocation3 + $0x2e0] sm:$0xff]
        %v6247 = vld [vmem:[#allocation3 + $0x2e8] sm:$0xff]
        %v6248 = vld [vmem:[#allocation3 + $0x2f0] sm:$0xff]
        %v6249 = vld [vmem:[#allocation3 + $0x2f8] sm:$0xff]
        %v6250 = vld [vmem:[#allocation3 + $0x300] sm:$0xff]
        %v6251 = vld [vmem:[#allocation3 + $0x308] sm:$0xff]
        %v6252 = vld [vmem:[#allocation3 + $0x310] sm:$0xff]
        %v6253 = vld [vmem:[#allocation3 + $0x318] sm:$0xff]
        %v6254 = vld [vmem:[#allocation3 + $0x320] sm:$0xff]
        %v6255 = vld [vmem:[#allocation3 + $0x328] sm:$0xff]
        %v6256 = vld [vmem:[#allocation3 + $0x330] sm:$0xff]
        %v6257 = vld [vmem:[#allocation3 + $0x338] sm:$0xff]
        %v6258 = vld [vmem:[#allocation3 + $0x340] sm:$0xff]
        %v6259 = vld [vmem:[#allocation3 + $0x348] sm:$0xff]
        %v6260 = vld [vmem:[#allocation3 + $0x350] sm:$0xff]
        %v6261 = vld [vmem:[#allocation3 + $0x358] sm:$0xff]
        %v6262 = vld [vmem:[#allocation3 + $0x360] sm:$0xff]
        %v6263 = vld [vmem:[#allocation3 + $0x368] sm:$0xff]
        %v6264 = vld [vmem:[#allocation3 + $0x370] sm:$0xff]
        %v6265 = vld [vmem:[#allocation3 + $0x378] sm:$0xff]
        %v6266 = vld [vmem:[#allocation3 + $0x380] sm:$0xff]
        %v6267 = vld [vmem:[#allocation3 + $0x388] sm:$0xff]
        %v6268 = vld [vmem:[#allocation3 + $0x390] sm:$0xff]
        %v6269 = vld [vmem:[#allocation3 + $0x398] sm:$0xff]
        %v6270 = vld [vmem:[#allocation3 + $0x3a0] sm:$0xff]
        %v6271 = vld [vmem:[#allocation3 + $0x3a8] sm:$0xff]
        %v6272 = vld [vmem:[#allocation3 + $0x3b0] sm:$0xff]
        %v6273 = vld [vmem:[#allocation3 + $0x3b8] sm:$0xff]
        %v6274 = vld [vmem:[#allocation3 + $0x3c0] sm:$0xff]
        %v6275 = vld [vmem:[#allocation3 + $0x3c8] sm:$0xff]
        %v6276 = vld [vmem:[#allocation3 + $0x3d0] sm:$0xff]
        %v6277 = vld [vmem:[#allocation3 + $0x3d8] sm:$0xff]
        %v6278 = vld [vmem:[#allocation3 + $0x3e0] sm:$0xff]
        %v6279 = vld [vmem:[#allocation3 + $0x3e8] sm:$0xff]
        %v6280 = vld [vmem:[#allocation3 + $0x3f0] sm:$0xff]
        %v6281 = vld [vmem:[#allocation3 + $0x3f8] sm:$0xff]
        %v6282 = vld [vmem:[#allocation3 + $0x400] sm:$0xff]
        %v6283 = vld [vmem:[#allocation3 + $0x408] sm:$0xff]
        %v6284 = vld [vmem:[#allocation3 + $0x410] sm:$0xff]
        %v6285 = vld [vmem:[#allocation3 + $0x418] sm:$0xff]
        %v6286 = vld [vmem:[#allocation3 + $0x420] sm:$0xff]
        %v6287 = vld [vmem:[#allocation3 + $0x428] sm:$0xff]
        %v6288 = vld [vmem:[#allocation3 + $0x430] sm:$0xff]
        %v6289 = vld [vmem:[#allocation3 + $0x438] sm:$0xff]
        %v6290 = vld [vmem:[#allocation3 + $0x440] sm:$0xff]
        %v6291 = vld [vmem:[#allocation3 + $0x448] sm:$0xff]
        %v6292 = vld [vmem:[#allocation3 + $0x450] sm:$0xff]
        %v6293 = vld [vmem:[#allocation3 + $0x458] sm:$0xff]
        %v6294 = vld [vmem:[#allocation3 + $0x460] sm:$0xff]
        %v6295 = vld [vmem:[#allocation3 + $0x468] sm:$0xff]
        %v6296 = vld [vmem:[#allocation3 + $0x470] sm:$0xff]
        %v6297 = vld [vmem:[#allocation3 + $0x478] sm:$0xff]
        %v6298 = vld [vmem:[#allocation3 + $0x480] sm:$0xff]
        %v6299 = vld [vmem:[#allocation3 + $0x488] sm:$0xff]
        %v6300 = vld [vmem:[#allocation3 + $0x490] sm:$0xff]
        %v6301 = vld [vmem:[#allocation3 + $0x498] sm:$0xff]
        %v6302 = vld [vmem:[#allocation3 + $0x4a0] sm:$0xff]
        %v6303 = vld [vmem:[#allocation3 + $0x4a8] sm:$0xff]
        %v6304 = vld [vmem:[#allocation3 + $0x4b0] sm:$0xff]
        %v6305 = vld [vmem:[#allocation3 + $0x4b8] sm:$0xff]
        %v6306 = vld [vmem:[#allocation3 + $0x4c0] sm:$0xff]
        %v6307 = vld [vmem:[#allocation3 + $0x4c8] sm:$0xff]
        %v6308 = vld [vmem:[#allocation3 + $0x4d0] sm:$0xff]
        %v6309 = vld [vmem:[#allocation3 + $0x4d8] sm:$0xff]
        %v6310 = vld [vmem:[#allocation3 + $0x4e0] sm:$0xff]
        %v6311 = vld [vmem:[#allocation3 + $0x4e8] sm:$0xff]
        %v6312 = vld [vmem:[#allocation3 + $0x4f0] sm:$0xff]
        %v6313 = vld [vmem:[#allocation3 + $0x4f8] sm:$0xff]
        %v6314 = vld [vmem:[#allocation3 + $0x500] sm:$0xff]
        %v6315 = vld [vmem:[#allocation3 + $0x508] sm:$0xff]
        %v6316 = vld [vmem:[#allocation3 + $0x510] sm:$0xff]
        %v6317 = vld [vmem:[#allocation3 + $0x518] sm:$0xff]
        %v6318 = vld [vmem:[#allocation3 + $0x520] sm:$0xff]
        %v6319 = vld [vmem:[#allocation11] sm:$0xff]
        %v6320 = vld [vmem:[#allocation11 + $0x8] sm:$0xff]
        %v6321 = vld [vmem:[#allocation11 + $0x10] sm:$0xff]
        %v6322 = vld [vmem:[#allocation11 + $0x18] sm:$0xff]
        %v6323 = vld [vmem:[#allocation11 + $0x20] sm:$0xff]
        %v6324 = vld [vmem:[#allocation11 + $0x28] sm:$0xff]
        %v6325 = vld [vmem:[#allocation11 + $0x30] sm:$0xff]
        %v6326 = vld [vmem:[#allocation11 + $0x38] sm:$0xff]
        %v6327 = vld [vmem:[#allocation11 + $0x40] sm:$0xff]
        %v6328 = vld [vmem:[#allocation11 + $0x48] sm:$0xff]
        %v6329 = vld [vmem:[#allocation11 + $0x50] sm:$0xff]
        %v6330 = vld [vmem:[#allocation11 + $0x58] sm:$0xff]
        %v6331 = vld [vmem:[#allocation11 + $0x60] sm:$0xff]
        %v6332 = vld [vmem:[#allocation11 + $0x68] sm:$0xff]
        %v6333 = vld [vmem:[#allocation11 + $0x70] sm:$0xff]
        %v6334 = vld [vmem:[#allocation11 + $0x78] sm:$0xff]
        %v6335 = vld [vmem:[#allocation11 + $0x80] sm:$0xff]
        %v6336 = vld [vmem:[#allocation11 + $0x88] sm:$0xff]
        %v6337 = vld [vmem:[#allocation11 + $0x90] sm:$0xff]
        %v6338 = vld [vmem:[#allocation11 + $0x98] sm:$0xff]
        %v6339 = vld [vmem:[#allocation11 + $0xa0] sm:$0xff]
        %v6340 = vld [vmem:[#allocation11 + $0xa8] sm:$0xff]
        %v6341 = vld [vmem:[#allocation11 + $0xb0] sm:$0xff]
        %v6342 = vld [vmem:[#allocation11 + $0xb8] sm:$0xff]
        %v6343 = vld [vmem:[#allocation11 + $0xc0] sm:$0xff]
        %v6344 = vld [vmem:[#allocation11 + $0xc8] sm:$0xff]
        %v6345 = vld [vmem:[#allocation11 + $0xd0] sm:$0xff]
        %v6346 = vld [vmem:[#allocation11 + $0xd8] sm:$0xff]
        %v6347 = vld [vmem:[#allocation11 + $0xe0] sm:$0xff]
        %v6348 = vld [vmem:[#allocation11 + $0xe8] sm:$0xff]
        %v6349 = vld [vmem:[#allocation11 + $0xf0] sm:$0xff]
        %v6350 = vld [vmem:[#allocation11 + $0xf8] sm:$0xff]
        %v6351 = vld [vmem:[#allocation11 + $0x100] sm:$0xff]
        %v6352 = vld [vmem:[#allocation11 + $0x108] sm:$0xff]
        %v6353 = vld [vmem:[#allocation11 + $0x110] sm:$0xff]
        %v6354 = vld [vmem:[#allocation11 + $0x118] sm:$0xff]
        %v6355 = vld [vmem:[#allocation11 + $0x120] sm:$0xff]
        %v6356 = vld [vmem:[#allocation11 + $0x128] sm:$0xff]
        %v6357 = vld [vmem:[#allocation11 + $0x130] sm:$0xff]
        %v6358 = vld [vmem:[#allocation11 + $0x138] sm:$0xff]
        %v6359 = vld [vmem:[#allocation11 + $0x140] sm:$0xff]
        %v6360 = vld [vmem:[#allocation11 + $0x148] sm:$0xff]
        %v6361 = vld [vmem:[#allocation11 + $0x150] sm:$0xff]
        %v6362 = vld [vmem:[#allocation11 + $0x158] sm:$0xff]
        %v6363 = vld [vmem:[#allocation11 + $0x160] sm:$0xff]
        %v6364 = vld [vmem:[#allocation11 + $0x168] sm:$0xff]
        %v6365 = vld [vmem:[#allocation11 + $0x170] sm:$0xff]
        %v6366 = vld [vmem:[#allocation11 + $0x178] sm:$0xff]
        %6367 = vmatprep.subr.mxu0 0.0
        %6368 = vmatpush1.msra.mxu0 %v6319
        %6369 = vmatprep.subr.mxu0 0.0
        %6370 = vmatpush1.msra.mxu0 %v6320
        %6371 = vmatprep.subr.mxu0 0.0
        %6372 = vmatpush1.msra.mxu0 %v6321
        %6373 = vmatprep.subr.mxu0 0.0
        %6374 = vmatpush1.msra.mxu0 %v6322
        %6375 = vmatprep.subr.mxu0 0.0
        %6376 = vmatpush1.msra.mxu0 %v6323
        %6377 = vmatprep.subr.mxu0 0.0
        %6378 = vmatpush1.msra.mxu0 %v6324
        %6379 = vmatprep.subr.mxu0 0.0
        %6380 = vmatpush1.msra.mxu0 %v6325
        %6381 = vmatprep.subr.mxu0 0.0
        %6382 = vmatpush1.msra.mxu0 %v6326
        %6383 = vmatprep.subr.mxu0 0.0
        %6384 = vmatpush1.msra.mxu0 %v6327
        %6385 = vmatprep.subr.mxu0 0.0
        %6386 = vmatpush1.msra.mxu0 %v6328
        %6387 = vmatprep.subr.mxu0 0.0
        %6388 = vmatpush1.msra.mxu0 %v6329
        %6389 = vmatprep.subr.mxu0 0.0
        %6390 = vmatpush1.msra.mxu0 %v6330
        %6391 = vmatprep.subr.mxu0 0.0
        %6392 = vmatpush1.msra.mxu0 %v6331
        %6393 = vmatprep.subr.mxu0 0.0
        %6394 = vmatpush1.msra.mxu0 %v6332
        %6395 = vmatprep.subr.mxu0 0.0
        %6396 = vmatpush1.msra.mxu0 %v6333
        %6397 = vmatprep.subr.mxu0 0.0
        %6398 = vmatpush1.msra.mxu0 %v6334
        %6399 = vmatprep.subr.mxu0 0.0
        %6400 = vmatpush1.msra.mxu0 %v6335
        %6401 = vmatprep.subr.mxu0 0.0
        %6402 = vmatpush1.msra.mxu0 %v6336
        %6403 = vmatprep.subr.mxu0 0.0
        %6404 = vmatpush1.msra.mxu0 %v6337
        %6405 = vmatprep.subr.mxu0 0.0
        %6406 = vmatpush1.msra.mxu0 %v6338
        %6407 = vmatprep.subr.mxu0 0.0
        %6408 = vmatpush1.msra.mxu0 %v6339
        %6409 = vmatprep.subr.mxu0 0.0
        %6410 = vmatpush1.msra.mxu0 %v6340
        %6411 = vmatprep.subr.mxu0 0.0
        %6412 = vmatpush1.msra.mxu0 %v6341
        %6413 = vmatprep.subr.mxu0 0.0
        %6414 = vmatpush1.msra.mxu0 %v6342
        %6415 = vmatprep.subr.mxu0 0.0
        %6416 = vmatpush1.msra.mxu0 %v6343
        %6417 = vmatprep.subr.mxu0 0.0
        %6418 = vmatpush1.msra.mxu0 %v6344
        %6419 = vmatprep.subr.mxu0 0.0
        %6420 = vmatpush1.msra.mxu0 %v6345
        %6421 = vmatprep.subr.mxu0 0.0
        %6422 = vmatpush1.msra.mxu0 %v6346
        %6423 = vmatprep.subr.mxu0 0.0
        %6424 = vmatpush1.msra.mxu0 %v6347
        %6425 = vmatprep.subr.mxu0 0.0
        %6426 = vmatpush1.msra.mxu0 %v6348
        %6427 = vmatprep.subr.mxu0 0.0
        %6428 = vmatpush1.msra.mxu0 %v6349
        %6429 = vmatprep.subr.mxu0 0.0
        %6430 = vmatpush1.msra.mxu0 %v6350
        %6431 = vmatprep.mubr.f32.mxu0 %v6158
        %6432 = vmatmul.mubr.f32.gmra.mrb[0].mxu0 %v6157
        %v6433 = vpop.f32.mrb[0].mxu0
        %v6434 = vadd.f32 0.0, %v6433
        %v6435 = vpop.f32.mrb[0].mxu0
        %6436 = vmatprep.mubr.f32.mxu0 %v6161
        %6437 = vmatmul.mubr.f32.gmra.mrb[0].mxu0 %v6160
        %v6438 = vpop.f32.mrb[0].mxu0
        %v6439 = vadd.f32 0.0, %v6438
        %v6440 = vpop.f32.mrb[0].mxu0
        %6441 = vmatprep.mubr.f32.mxu0 %v6164
        %6442 = vmatmul.mubr.f32.gmra.mrb[0].mxu0 %v6163
        %v6443 = vpop.f32.mrb[0].mxu0
        %v6444 = vadd.f32 0.0, %v6443
        %v6445 = vpop.f32.mrb[0].mxu0
        %6446 = vmatprep.mubr.f32.mxu0 %v6167
        %6447 = vmatmul.mubr.f32.gmra.mrb[0].mxu0 %v6166
        %v6448 = vpop.f32.mrb[0].mxu0
        %v6449 = vadd.f32 0.0, %v6448
        %v6450 = vpop.f32.mrb[0].mxu0
        %6451 = vmatprep.mubr.f32.mxu0 %v6170
        %6452 = vmatmul.mubr.f32.gmra.mrb[0].mxu0 %v6169
        %v6453 = vpop.f32.mrb[0].mxu0
        %v6454 = vadd.f32 0.0, %v6453
        %v6455 = vpop.f32.mrb[0].mxu0
        %6456 = vmatprep.mubr.f32.mxu0 %v6173
        %6457 = vmatmul.mubr.f32.gmra.mrb[0].mxu0 %v6172
        %v6458 = vpop.f32.mrb[0].mxu0
        %v6459 = vadd.f32 0.0, %v6458
        %v6460 = vpop.f32.mrb[0].mxu0
        %6461 = vmatprep.mubr.f32.mxu0 %v6176
        %6462 = vmatmul.mubr.f32.gmra.mrb[0].mxu0 %v6175
        %v6463 = vpop.f32.mrb[0].mxu0
        %v6464 = vadd.f32 0.0, %v6463
        %v6465 = vpop.f32.mrb[0].mxu0
        %6466 = vmatprep.mubr.f32.mxu0 %v6179
        %6467 = vmatmul.mubr.f32.gmra.mrb[0].mxu0 %v6178
        %v6468 = vpop.f32.mrb[0].mxu0
        %v6469 = vadd.f32 0.0, %v6468
        %v6470 = vpop.f32.mrb[0].mxu0
        %6471 = vmatprep.mubr.f32.mxu0 %v6182
        %6472 = vmatmul.mubr.f32.gmra.mrb[0].mxu0 %v6181
        %v6473 = vpop.f32.mrb[0].mxu0
        %v6474 = vadd.f32 0.0, %v6473
        %v6475 = vpop.f32.mrb[0].mxu0
        %6476 = vmatprep.mubr.f32.mxu0 %v6185
        %6477 = vmatmul.mubr.f32.gmra.mrb[0].mxu0 %v6184
        %v6478 = vpop.f32.mrb[0].mxu0
        %v6479 = vadd.f32 0.0, %v6478
        %v6480 = vpop.f32.mrb[0].mxu0
        %6481 = vmatprep.mubr.f32.mxu0 %v6188
        %6482 = vmatmul.mubr.f32.gmra.mrb[0].mxu0 %v6187
        %v6483 = vpop.f32.mrb[0].mxu0
        %v6484 = vadd.f32 0.0, %v6483
        %v6485 = vpop.f32.mrb[0].mxu0
        %6486 = vmatprep.mubr.f32.mxu0 %v6191
        %6487 = vmatmul.mubr.f32.gmra.mrb[0].mxu0 %v6190
        %v6488 = vpop.f32.mrb[0].mxu0
        %v6489 = vadd.f32 0.0, %v6488
        %v6490 = vpop.f32.mrb[0].mxu0
        %6491 = vmatprep.mubr.f32.mxu0 %v6194
        %6492 = vmatmul.mubr.f32.gmra.mrb[0].mxu0 %v6193
        %v6493 = vpop.f32.mrb[0].mxu0
        %v6494 = vadd.f32 0.0, %v6493
        %v6495 = vpop.f32.mrb[0].mxu0
        %6496 = vmatprep.mubr.f32.mxu0 %v6197
        %6497 = vmatmul.mubr.f32.gmra.mrb[0].mxu0 %v6196
        %v6498 = vpop.f32.mrb[0].mxu0
        %v6499 = vadd.f32 0.0, %v6498
        %v6500 = vpop.f32.mrb[0].mxu0
        %6501 = vmatprep.mubr.f32.mxu0 %v6200
        %6502 = vmatmul.mubr.f32.gmra.mrb[0].mxu0 %v6199
        %v6503 = vpop.f32.mrb[0].mxu0
        %v6504 = vadd.f32 0.0, %v6503
        %v6505 = vpop.f32.mrb[0].mxu0
        %6506 = vmatprep.mubr.f32.mxu0 %v6203
        %6507 = vmatmul.mubr.f32.gmra.mrb[0].mxu0 %v6202
        %v6508 = vpop.f32.mrb[0].mxu0
        %v6509 = vadd.f32 0.0, %v6508
        %v6510 = vpop.f32.mrb[0].mxu0
        %6511 = vmatprep.mubr.f32.mxu0 %v6206
        %6512 = vmatmul.mubr.f32.gmra.mrb[0].mxu0 %v6205
        %v6513 = vpop.f32.mrb[0].mxu0
        %v6514 = vadd.f32 0.0, %v6513
        %v6515 = vpop.f32.mrb[0].mxu0
        %6516 = vmatprep.mubr.f32.mxu0 %v6209
        %6517 = vmatmul.mubr.f32.gmra.mrb[0].mxu0 %v6208
        %v6518 = vpop.f32.mrb[0].mxu0
        %v6519 = vadd.f32 0.0, %v6518
        %v6520 = vpop.f32.mrb[0].mxu0
        %6521 = vmatprep.mubr.f32.mxu0 %v6212
        %6522 = vmatmul.mubr.f32.gmra.mrb[0].mxu0 %v6211
        %v6523 = vpop.f32.mrb[0].mxu0
        %v6524 = vadd.f32 0.0, %v6523
        %v6525 = vpop.f32.mrb[0].mxu0
        %6526 = vmatprep.mubr.f32.mxu0 %v6215
        %6527 = vmatmul.mubr.f32.gmra.mrb[0].mxu0 %v6214
        %v6528 = vpop.f32.mrb[0].mxu0
        %v6529 = vadd.f32 0.0, %v6528
        %v6530 = vpop.f32.mrb[0].mxu0
        %6531 = vmatprep.mubr.f32.mxu0 %v6218
        %6532 = vmatmul.mubr.f32.gmra.mrb[0].mxu0 %v6217
        %v6533 = vpop.f32.mrb[0].mxu0
        %v6534 = vadd.f32 0.0, %v6533
        %v6535 = vpop.f32.mrb[0].mxu0
        %6536 = vmatprep.mubr.f32.mxu0 %v6221
        %6537 = vmatmul.mubr.f32.gmra.mrb[0].mxu0 %v6220
        %v6538 = vpop.f32.mrb[0].mxu0
        %v6539 = vadd.f32 0.0, %v6538
        %v6540 = vpop.f32.mrb[0].mxu0
        %6541 = vmatprep.mubr.f32.mxu0 %v6224
        %6542 = vmatmul.mubr.f32.gmra.mrb[0].mxu0 %v6223
        %v6543 = vpop.f32.mrb[0].mxu0
        %v6544 = vadd.f32 0.0, %v6543
        %v6545 = vpop.f32.mrb[0].mxu0
        %6546 = vmatprep.mubr.f32.mxu0 %v6227
        %6547 = vmatmul.mubr.f32.gmra.mrb[0].mxu0 %v6226
        %v6548 = vpop.f32.mrb[0].mxu0
        %v6549 = vadd.f32 0.0, %v6548
        %v6550 = vpop.f32.mrb[0].mxu0
        %6551 = vmatprep.mubr.f32.mxu0 %v6230
        %6552 = vmatmul.mubr.f32.gmra.mrb[0].mxu0 %v6229
        %v6553 = vpop.f32.mrb[0].mxu0
        %v6554 = vadd.f32 0.0, %v6553
        %v6555 = vpop.f32.mrb[0].mxu0
        %6556 = vmatprep.mubr.f32.mxu0 %v6233
        %6557 = vmatmul.mubr.f32.gmra.mrb[0].mxu0 %v6232
        %v6558 = vpop.f32.mrb[0].mxu0
        %v6559 = vadd.f32 0.0, %v6558
        %v6560 = vpop.f32.mrb[0].mxu0
        %6561 = vmatprep.mubr.f32.mxu0 %v6236
        %6562 = vmatmul.mubr.f32.gmra.mrb[0].mxu0 %v6235
        %v6563 = vpop.f32.mrb[0].mxu0
        %v6564 = vadd.f32 0.0, %v6563
        %v6565 = vpop.f32.mrb[0].mxu0
        %6566 = vmatprep.mubr.f32.mxu0 %v6239
        %6567 = vmatmul.mubr.f32.gmra.mrb[0].mxu0 %v6238
        %v6568 = vpop.f32.mrb[0].mxu0
        %v6569 = vadd.f32 0.0, %v6568
        %v6570 = vpop.f32.mrb[0].mxu0
        %6571 = vmatprep.mubr.f32.mxu0 %v6242
        %6572 = vmatmul.mubr.f32.gmra.mrb[0].mxu0 %v6241
        %v6573 = vpop.f32.mrb[0].mxu0
        %v6574 = vadd.f32 0.0, %v6573
        %v6575 = vpop.f32.mrb[0].mxu0
        %6576 = vmatprep.mubr.f32.mxu0 %v6245
        %6577 = vmatmul.mubr.f32.gmra.mrb[0].mxu0 %v6244
        %v6578 = vpop.f32.mrb[0].mxu0
        %v6579 = vadd.f32 0.0, %v6578
        %v6580 = vpop.f32.mrb[0].mxu0
        %6581 = vmatprep.mubr.f32.mxu0 %v6248
        %6582 = vmatmul.mubr.f32.gmra.mrb[0].mxu0 %v6247
        %v6583 = vpop.f32.mrb[0].mxu0
        %v6584 = vadd.f32 0.0, %v6583
        %v6585 = vpop.f32.mrb[0].mxu0
        %6586 = vmatprep.mubr.f32.mxu0 %v6251
        %6587 = vmatmul.mubr.f32.gmra.mrb[0].mxu0 %v6250
        %v6588 = vpop.f32.mrb[0].mxu0
        %v6589 = vadd.f32 0.0, %v6588
        %v6590 = vpop.f32.mrb[0].mxu0
        %6591 = vmatprep.mubr.f32.mxu0 %v6254
        %6592 = vmatmul.mubr.f32.gmra.mrb[0].mxu0 %v6253
        %v6593 = vpop.f32.mrb[0].mxu0
        %v6594 = vadd.f32 0.0, %v6593
        %v6595 = vpop.f32.mrb[0].mxu0
        %6596 = vmatprep.mubr.f32.mxu0 %v6257
        %6597 = vmatmul.mubr.f32.gmra.mrb[0].mxu0 %v6256
        %v6598 = vpop.f32.mrb[0].mxu0
        %v6599 = vadd.f32 0.0, %v6598
        %v6600 = vpop.f32.mrb[0].mxu0
        %6601 = vmatprep.mubr.f32.mxu0 %v6260
        %6602 = vmatmul.mubr.f32.gmra.mrb[0].mxu0 %v6259
        %v6603 = vpop.f32.mrb[0].mxu0
        %v6604 = vadd.f32 0.0, %v6603
        %v6605 = vpop.f32.mrb[0].mxu0
        %6606 = vmatprep.mubr.f32.mxu0 %v6263
        %6607 = vmatmul.mubr.f32.gmra.mrb[0].mxu0 %v6262
        %v6608 = vpop.f32.mrb[0].mxu0
        %v6609 = vadd.f32 0.0, %v6608
        %v6610 = vpop.f32.mrb[0].mxu0
        %6611 = vmatprep.mubr.f32.mxu0 %v6266
        %6612 = vmatmul.mubr.f32.gmra.mrb[0].mxu0 %v6265
        %v6613 = vpop.f32.mrb[0].mxu0
        %v6614 = vadd.f32 0.0, %v6613
        %v6615 = vpop.f32.mrb[0].mxu0
        %6616 = vmatprep.mubr.f32.mxu0 %v6269
        %6617 = vmatmul.mubr.f32.gmra.mrb[0].mxu0 %v6268
        %v6618 = vpop.f32.mrb[0].mxu0
        %v6619 = vadd.f32 0.0, %v6618
        %v6620 = vpop.f32.mrb[0].mxu0
        %6621 = vmatprep.mubr.f32.mxu0 %v6272
        %6622 = vmatmul.mubr.f32.gmra.mrb[0].mxu0 %v6271
        %v6623 = vpop.f32.mrb[0].mxu0
        %v6624 = vadd.f32 0.0, %v6623
        %v6625 = vpop.f32.mrb[0].mxu0
        %6626 = vmatprep.mubr.f32.mxu0 %v6275
        %6627 = vmatmul.mubr.f32.gmra.mrb[0].mxu0 %v6274
        %v6628 = vpop.f32.mrb[0].mxu0
        %v6629 = vadd.f32 0.0, %v6628
        %v6630 = vpop.f32.mrb[0].mxu0
        %6631 = vmatprep.mubr.f32.mxu0 %v6278
        %6632 = vmatmul.mubr.f32.gmra.mrb[0].mxu0 %v6277
        %v6633 = vpop.f32.mrb[0].mxu0
        %v6634 = vadd.f32 0.0, %v6633
        %v6635 = vpop.f32.mrb[0].mxu0
        %6636 = vmatprep.mubr.f32.mxu0 %v6281
        %6637 = vmatmul.mubr.f32.gmra.mrb[0].mxu0 %v6280
        %v6638 = vpop.f32.mrb[0].mxu0
        %v6639 = vadd.f32 0.0, %v6638
        %v6640 = vpop.f32.mrb[0].mxu0
        %6641 = vmatprep.mubr.f32.mxu0 %v6284
        %6642 = vmatmul.mubr.f32.gmra.mrb[0].mxu0 %v6283
        %v6643 = vpop.f32.mrb[0].mxu0
        %v6644 = vadd.f32 0.0, %v6643
        %v6645 = vpop.f32.mrb[0].mxu0
        %6646 = vmatprep.mubr.f32.mxu0 %v6287
        %6647 = vmatmul.mubr.f32.gmra.mrb[0].mxu0 %v6286
        %v6648 = vpop.f32.mrb[0].mxu0
        %v6649 = vadd.f32 0.0, %v6648
        %v6650 = vpop.f32.mrb[0].mxu0
        %6651 = vmatprep.mubr.f32.mxu0 %v6290
        %6652 = vmatmul.mubr.f32.gmra.mrb[0].mxu0 %v6289
        %v6653 = vpop.f32.mrb[0].mxu0
        %v6654 = vadd.f32 0.0, %v6653
        %v6655 = vpop.f32.mrb[0].mxu0
        %6656 = vmatprep.mubr.f32.mxu0 %v6293
        %6657 = vmatmul.mubr.f32.gmra.mrb[0].mxu0 %v6292
        %v6658 = vpop.f32.mrb[0].mxu0
        %v6659 = vadd.f32 0.0, %v6658
        %v6660 = vpop.f32.mrb[0].mxu0
        %6661 = vmatprep.mubr.f32.mxu0 %v6296
        %6662 = vmatmul.mubr.f32.gmra.mrb[0].mxu0 %v6295
        %v6663 = vpop.f32.mrb[0].mxu0
        %v6664 = vadd.f32 0.0, %v6663
        %v6665 = vpop.f32.mrb[0].mxu0
        %6666 = vmatprep.mubr.f32.mxu0 %v6299
        %6667 = vmatmul.mubr.f32.gmra.mrb[0].mxu0 %v6298
        %v6668 = vpop.f32.mrb[0].mxu0
        %v6669 = vadd.f32 0.0, %v6668
        %v6670 = vpop.f32.mrb[0].mxu0
        %6671 = vmatprep.mubr.f32.mxu0 %v6302
        %6672 = vmatmul.mubr.f32.gmra.mrb[0].mxu0 %v6301
        %v6673 = vpop.f32.mrb[0].mxu0
        %v6674 = vadd.f32 0.0, %v6673
        %v6675 = vpop.f32.mrb[0].mxu0
        %6676 = vmatprep.mubr.f32.mxu0 %v6305
        %6677 = vmatmul.mubr.f32.gmra.mrb[0].mxu0 %v6304
        %v6678 = vpop.f32.mrb[0].mxu0
        %v6679 = vadd.f32 0.0, %v6678
        %v6680 = vpop.f32.mrb[0].mxu0
        %6681 = vmatprep.mubr.f32.mxu0 %v6308
        %6682 = vmatmul.mubr.f32.gmra.mrb[0].mxu0 %v6307
        %v6683 = vpop.f32.mrb[0].mxu0
        %v6684 = vadd.f32 0.0, %v6683
        %v6685 = vpop.f32.mrb[0].mxu0
        %6686 = vmatprep.mubr.f32.mxu0 %v6311
        %6687 = vmatmul.mubr.f32.gmra.mrb[0].mxu0 %v6310
        %v6688 = vpop.f32.mrb[0].mxu0
        %v6689 = vadd.f32 0.0, %v6688
        %v6690 = vpop.f32.mrb[0].mxu0
        %6691 = vmatprep.mubr.f32.mxu0 %v6314
        %6692 = vmatmul.mubr.f32.gmra.mrb[0].mxu0 %v6313
        %v6693 = vpop.f32.mrb[0].mxu0
        %v6694 = vadd.f32 0.0, %v6693
        %v6695 = vpop.f32.mrb[0].mxu0
        %6696 = vmatprep.mubr.f32.mxu0 %v6317
        %6697 = vmatmul.mubr.f32.gmra.mrb[0].mxu0 %v6316
        %v6698 = vpop.f32.mrb[0].mxu0
        %v6699 = vadd.f32 0.0, %v6698
        %v6700 = vpop.f32.mrb[0].mxu0
        %6701 = vdwg.mxu0
        %6702 = vmatprep.subr.mxu0 0.0
        %6703 = vmatpush1.msra.mxu0 %v6351
        %6704 = vmatprep.subr.mxu0 0.0
        %6705 = vmatpush1.msra.mxu0 %v6352
        %6706 = vmatprep.subr.mxu0 0.0
        %6707 = vmatpush1.msra.mxu0 %v6353
        %6708 = vmatprep.subr.mxu0 0.0
        %6709 = vmatpush1.msra.mxu0 %v6354
        %6710 = vmatprep.subr.mxu0 0.0
        %6711 = vmatpush1.msra.mxu0 %v6355
        %6712 = vmatprep.subr.mxu0 0.0
        %6713 = vmatpush1.msra.mxu0 %v6356
        %6714 = vmatprep.subr.mxu0 0.0
        %6715 = vmatpush1.msra.mxu0 %v6357
        %6716 = vmatprep.subr.mxu0 0.0
        %6717 = vmatpush1.msra.mxu0 %v6358
        %6718 = vmatprep.subr.mxu0 0.0
        %6719 = vmatpush1.msra.mxu0 %v6359
        %6720 = vmatprep.subr.mxu0 0.0
        %6721 = vmatpush1.msra.mxu0 %v6360
        %6722 = vmatprep.subr.mxu0 0.0
        %6723 = vmatpush1.msra.mxu0 %v6361
        %6724 = vmatprep.subr.mxu0 0.0
        %6725 = vmatpush1.msra.mxu0 %v6362
        %6726 = vmatprep.subr.mxu0 0.0
        %6727 = vmatpush1.msra.mxu0 %v6363
        %6728 = vmatprep.subr.mxu0 0.0
        %6729 = vmatpush1.msra.mxu0 %v6364
        %6730 = vmatprep.subr.mxu0 0.0
        %6731 = vmatpush1.msra.mxu0 %v6365
        %6732 = vmatprep.subr.mxu0 0.0
        %6733 = vmatpush1.msra.mxu0 %v6366
        %6734 = vmatprep.subr.mxu0 0.0
        %6735 = vmatpush1.msra.mxu0 0.0
        %6736 = vmatprep.subr.mxu0 0.0
        %6737 = vmatpush1.msra.mxu0 0.0
        %6738 = vmatprep.subr.mxu0 0.0
        %6739 = vmatpush1.msra.mxu0 0.0
        %6740 = vmatprep.subr.mxu0 0.0
        %6741 = vmatpush1.msra.mxu0 0.0
        %6742 = vmatprep.subr.mxu0 0.0
        %6743 = vmatpush1.msra.mxu0 0.0
        %6744 = vmatprep.subr.mxu0 0.0
        %6745 = vmatpush1.msra.mxu0 0.0
        %6746 = vmatprep.subr.mxu0 0.0
        %6747 = vmatpush1.msra.mxu0 0.0
        %6748 = vmatprep.subr.mxu0 0.0
        %6749 = vmatpush1.msra.mxu0 0.0
        %6750 = vmatprep.subr.mxu0 0.0
        %6751 = vmatpush1.msra.mxu0 0.0
        %6752 = vmatprep.subr.mxu0 0.0
        %6753 = vmatpush1.msra.mxu0 0.0
        %6754 = vmatprep.subr.mxu0 0.0
        %6755 = vmatpush1.msra.mxu0 0.0
        %6756 = vmatprep.subr.mxu0 0.0
        %6757 = vmatpush1.msra.mxu0 0.0
        %6758 = vmatprep.subr.mxu0 0.0
        %6759 = vmatpush1.msra.mxu0 0.0
        %6760 = vmatprep.subr.mxu0 0.0
        %6761 = vmatpush1.msra.mxu0 0.0
        %6762 = vmatprep.subr.mxu0 0.0
        %6763 = vmatpush1.msra.mxu0 0.0
        %6764 = vmatprep.subr.mxu0 0.0
        %6765 = vmatpush1.msra.mxu0 0.0
        %6766 = vmatprep.mubr.f32.mxu0 0.0
        %6767 = vmatmul.mubr.f32.gmra.mrb[0].mxu0 %v6159
        %v6768 = vpop.f32.mrb[0].mxu0
        %v6769 = vadd.f32 %v6434, %v6768
        %v6770 = vpop.f32.mrb[0].mxu0
        %6771 = vmatprep.mubr.f32.mxu0 0.0
        %6772 = vmatmul.mubr.f32.gmra.mrb[0].mxu0 %v6162
        %v6773 = vpop.f32.mrb[0].mxu0
        %v6774 = vadd.f32 %v6439, %v6773
        %v6775 = vpop.f32.mrb[0].mxu0
        %6776 = vmatprep.mubr.f32.mxu0 0.0
        %6777 = vmatmul.mubr.f32.gmra.mrb[0].mxu0 %v6165
        %v6778 = vpop.f32.mrb[0].mxu0
        %v6779 = vadd.f32 %v6444, %v6778
        %v6780 = vpop.f32.mrb[0].mxu0
        %6781 = vmatprep.mubr.f32.mxu0 0.0
        %6782 = vmatmul.mubr.f32.gmra.mrb[0].mxu0 %v6168
        %v6783 = vpop.f32.mrb[0].mxu0
        %v6784 = vadd.f32 %v6449, %v6783
        %v6785 = vpop.f32.mrb[0].mxu0
        %6786 = vmatprep.mubr.f32.mxu0 0.0
        %6787 = vmatmul.mubr.f32.gmra.mrb[0].mxu0 %v6171
        %v6788 = vpop.f32.mrb[0].mxu0
        %v6789 = vadd.f32 %v6454, %v6788
        %v6790 = vpop.f32.mrb[0].mxu0
        %6791 = vmatprep.mubr.f32.mxu0 0.0
        %6792 = vmatmul.mubr.f32.gmra.mrb[0].mxu0 %v6174
        %v6793 = vpop.f32.mrb[0].mxu0
        %v6794 = vadd.f32 %v6459, %v6793
        %v6795 = vpop.f32.mrb[0].mxu0
        %6796 = vmatprep.mubr.f32.mxu0 0.0
        %6797 = vmatmul.mubr.f32.gmra.mrb[0].mxu0 %v6177
        %v6798 = vpop.f32.mrb[0].mxu0
        %v6799 = vadd.f32 %v6464, %v6798
        %v6800 = vpop.f32.mrb[0].mxu0
        %6801 = vmatprep.mubr.f32.mxu0 0.0
        %6802 = vmatmul.mubr.f32.gmra.mrb[0].mxu0 %v6180
        %v6803 = vpop.f32.mrb[0].mxu0
        %v6804 = vadd.f32 %v6469, %v6803
        %v6805 = vpop.f32.mrb[0].mxu0
        %6806 = vmatprep.mubr.f32.mxu0 0.0
        %6807 = vmatmul.mubr.f32.gmra.mrb[0].mxu0 %v6183
        %v6808 = vpop.f32.mrb[0].mxu0
        %v6809 = vadd.f32 %v6474, %v6808
        %v6810 = vpop.f32.mrb[0].mxu0
        %6811 = vmatprep.mubr.f32.mxu0 0.0
        %6812 = vmatmul.mubr.f32.gmra.mrb[0].mxu0 %v6186
        %v6813 = vpop.f32.mrb[0].mxu0
        %v6814 = vadd.f32 %v6479, %v6813
        %v6815 = vpop.f32.mrb[0].mxu0
        %6816 = vmatprep.mubr.f32.mxu0 0.0
        %6817 = vmatmul.mubr.f32.gmra.mrb[0].mxu0 %v6189
        %v6818 = vpop.f32.mrb[0].mxu0
        %v6819 = vadd.f32 %v6484, %v6818
        %v6820 = vpop.f32.mrb[0].mxu0
        %6821 = vmatprep.mubr.f32.mxu0 0.0
        %6822 = vmatmul.mubr.f32.gmra.mrb[0].mxu0 %v6192
        %v6823 = vpop.f32.mrb[0].mxu0
        %v6824 = vadd.f32 %v6489, %v6823
        %v6825 = vpop.f32.mrb[0].mxu0
        %6826 = vmatprep.mubr.f32.mxu0 0.0
        %6827 = vmatmul.mubr.f32.gmra.mrb[0].mxu0 %v6195
        %v6828 = vpop.f32.mrb[0].mxu0
        %v6829 = vadd.f32 %v6494, %v6828
        %v6830 = vpop.f32.mrb[0].mxu0
        %6831 = vmatprep.mubr.f32.mxu0 0.0
        %6832 = vmatmul.mubr.f32.gmra.mrb[0].mxu0 %v6198
        %v6833 = vpop.f32.mrb[0].mxu0
        %v6834 = vadd.f32 %v6499, %v6833
        %v6835 = vpop.f32.mrb[0].mxu0
        %6836 = vmatprep.mubr.f32.mxu0 0.0
        %6837 = vmatmul.mubr.f32.gmra.mrb[0].mxu0 %v6201
        %v6838 = vpop.f32.mrb[0].mxu0
        %v6839 = vadd.f32 %v6504, %v6838
        %v6840 = vpop.f32.mrb[0].mxu0
        %6841 = vmatprep.mubr.f32.mxu0 0.0
        %6842 = vmatmul.mubr.f32.gmra.mrb[0].mxu0 %v6204
        %v6843 = vpop.f32.mrb[0].mxu0
        %v6844 = vadd.f32 %v6509, %v6843
        %v6845 = vpop.f32.mrb[0].mxu0
        %6846 = vmatprep.mubr.f32.mxu0 0.0
        %6847 = vmatmul.mubr.f32.gmra.mrb[0].mxu0 %v6207
        %v6848 = vpop.f32.mrb[0].mxu0
        %v6849 = vadd.f32 %v6514, %v6848
        %v6850 = vpop.f32.mrb[0].mxu0
        %6851 = vmatprep.mubr.f32.mxu0 0.0
        %6852 = vmatmul.mubr.f32.gmra.mrb[0].mxu0 %v6210
        %v6853 = vpop.f32.mrb[0].mxu0
        %v6854 = vadd.f32 %v6519, %v6853
        %v6855 = vpop.f32.mrb[0].mxu0
        %6856 = vmatprep.mubr.f32.mxu0 0.0
        %6857 = vmatmul.mubr.f32.gmra.mrb[0].mxu0 %v6213
        %v6858 = vpop.f32.mrb[0].mxu0
        %v6859 = vadd.f32 %v6524, %v6858
        %v6860 = vpop.f32.mrb[0].mxu0
        %6861 = vmatprep.mubr.f32.mxu0 0.0
        %6862 = vmatmul.mubr.f32.gmra.mrb[0].mxu0 %v6216
        %v6863 = vpop.f32.mrb[0].mxu0
        %v6864 = vadd.f32 %v6529, %v6863
        %v6865 = vpop.f32.mrb[0].mxu0
        %6866 = vmatprep.mubr.f32.mxu0 0.0
        %6867 = vmatmul.mubr.f32.gmra.mrb[0].mxu0 %v6219
        %v6868 = vpop.f32.mrb[0].mxu0
        %v6869 = vadd.f32 %v6534, %v6868
        %v6870 = vpop.f32.mrb[0].mxu0
        %6871 = vmatprep.mubr.f32.mxu0 0.0
        %6872 = vmatmul.mubr.f32.gmra.mrb[0].mxu0 %v6222
        %v6873 = vpop.f32.mrb[0].mxu0
        %v6874 = vadd.f32 %v6539, %v6873
        %v6875 = vpop.f32.mrb[0].mxu0
        %6876 = vmatprep.mubr.f32.mxu0 0.0
        %6877 = vmatmul.mubr.f32.gmra.mrb[0].mxu0 %v6225
        %v6878 = vpop.f32.mrb[0].mxu0
        %v6879 = vadd.f32 %v6544, %v6878
        %v6880 = vpop.f32.mrb[0].mxu0
        %6881 = vmatprep.mubr.f32.mxu0 0.0
        %6882 = vmatmul.mubr.f32.gmra.mrb[0].mxu0 %v6228
        %v6883 = vpop.f32.mrb[0].mxu0
        %v6884 = vadd.f32 %v6549, %v6883
        %v6885 = vpop.f32.mrb[0].mxu0
        %6886 = vmatprep.mubr.f32.mxu0 0.0
        %6887 = vmatmul.mubr.f32.gmra.mrb[0].mxu0 %v6231
        %v6888 = vpop.f32.mrb[0].mxu0
        %v6889 = vadd.f32 %v6554, %v6888
        %v6890 = vpop.f32.mrb[0].mxu0
        %6891 = vmatprep.mubr.f32.mxu0 0.0
        %6892 = vmatmul.mubr.f32.gmra.mrb[0].mxu0 %v6234
        %v6893 = vpop.f32.mrb[0].mxu0
        %v6894 = vadd.f32 %v6559, %v6893
        %v6895 = vpop.f32.mrb[0].mxu0
        %6896 = vmatprep.mubr.f32.mxu0 0.0
        %6897 = vmatmul.mubr.f32.gmra.mrb[0].mxu0 %v6237
        %v6898 = vpop.f32.mrb[0].mxu0
        %v6899 = vadd.f32 %v6564, %v6898
        %v6900 = vpop.f32.mrb[0].mxu0
        %6901 = vmatprep.mubr.f32.mxu0 0.0
        %6902 = vmatmul.mubr.f32.gmra.mrb[0].mxu0 %v6240
        %v6903 = vpop.f32.mrb[0].mxu0
        %v6904 = vadd.f32 %v6569, %v6903
        %v6905 = vpop.f32.mrb[0].mxu0
        %6906 = vmatprep.mubr.f32.mxu0 0.0
        %6907 = vmatmul.mubr.f32.gmra.mrb[0].mxu0 %v6243
        %v6908 = vpop.f32.mrb[0].mxu0
        %v6909 = vadd.f32 %v6574, %v6908
        %v6910 = vpop.f32.mrb[0].mxu0
        %6911 = vmatprep.mubr.f32.mxu0 0.0
        %6912 = vmatmul.mubr.f32.gmra.mrb[0].mxu0 %v6246
        %v6913 = vpop.f32.mrb[0].mxu0
        %v6914 = vadd.f32 %v6579, %v6913
        %v6915 = vpop.f32.mrb[0].mxu0
        %6916 = vmatprep.mubr.f32.mxu0 0.0
        %6917 = vmatmul.mubr.f32.gmra.mrb[0].mxu0 %v6249
        %v6918 = vpop.f32.mrb[0].mxu0
        %v6919 = vadd.f32 %v6584, %v6918
        %v6920 = vpop.f32.mrb[0].mxu0
        %6921 = vmatprep.mubr.f32.mxu0 0.0
        %6922 = vmatmul.mubr.f32.gmra.mrb[0].mxu0 %v6252
        %v6923 = vpop.f32.mrb[0].mxu0
        %v6924 = vadd.f32 %v6589, %v6923
        %v6925 = vpop.f32.mrb[0].mxu0
        %6926 = vmatprep.mubr.f32.mxu0 0.0
        %6927 = vmatmul.mubr.f32.gmra.mrb[0].mxu0 %v6255
        %v6928 = vpop.f32.mrb[0].mxu0
        %v6929 = vadd.f32 %v6594, %v6928
        %v6930 = vpop.f32.mrb[0].mxu0
        %6931 = vmatprep.mubr.f32.mxu0 0.0
        %6932 = vmatmul.mubr.f32.gmra.mrb[0].mxu0 %v6258
        %v6933 = vpop.f32.mrb[0].mxu0
        %v6934 = vadd.f32 %v6599, %v6933
        %v6935 = vpop.f32.mrb[0].mxu0
        %6936 = vmatprep.mubr.f32.mxu0 0.0
        %6937 = vmatmul.mubr.f32.gmra.mrb[0].mxu0 %v6261
        %v6938 = vpop.f32.mrb[0].mxu0
        %v6939 = vadd.f32 %v6604, %v6938
        %v6940 = vpop.f32.mrb[0].mxu0
        %6941 = vmatprep.mubr.f32.mxu0 0.0
        %6942 = vmatmul.mubr.f32.gmra.mrb[0].mxu0 %v6264
        %v6943 = vpop.f32.mrb[0].mxu0
        %v6944 = vadd.f32 %v6609, %v6943
        %v6945 = vpop.f32.mrb[0].mxu0
        %6946 = vmatprep.mubr.f32.mxu0 0.0
        %6947 = vmatmul.mubr.f32.gmra.mrb[0].mxu0 %v6267
        %v6948 = vpop.f32.mrb[0].mxu0
        %v6949 = vadd.f32 %v6614, %v6948
        %v6950 = vpop.f32.mrb[0].mxu0
        %6951 = vmatprep.mubr.f32.mxu0 0.0
        %6952 = vmatmul.mubr.f32.gmra.mrb[0].mxu0 %v6270
        %v6953 = vpop.f32.mrb[0].mxu0
        %v6954 = vadd.f32 %v6619, %v6953
        %v6955 = vpop.f32.mrb[0].mxu0
        %6956 = vmatprep.mubr.f32.mxu0 0.0
        %6957 = vmatmul.mubr.f32.gmra.mrb[0].mxu0 %v6273
        %v6958 = vpop.f32.mrb[0].mxu0
        %v6959 = vadd.f32 %v6624, %v6958
        %v6960 = vpop.f32.mrb[0].mxu0
        %6961 = vmatprep.mubr.f32.mxu0 0.0
        %6962 = vmatmul.mubr.f32.gmra.mrb[0].mxu0 %v6276
        %v6963 = vpop.f32.mrb[0].mxu0
        %v6964 = vadd.f32 %v6629, %v6963
        %v6965 = vpop.f32.mrb[0].mxu0
        %6966 = vmatprep.mubr.f32.mxu0 0.0
        %6967 = vmatmul.mubr.f32.gmra.mrb[0].mxu0 %v6279
        %v6968 = vpop.f32.mrb[0].mxu0
        %v6969 = vadd.f32 %v6634, %v6968
        %v6970 = vpop.f32.mrb[0].mxu0
        %6971 = vmatprep.mubr.f32.mxu0 0.0
        %6972 = vmatmul.mubr.f32.gmra.mrb[0].mxu0 %v6282
        %v6973 = vpop.f32.mrb[0].mxu0
        %v6974 = vadd.f32 %v6639, %v6973
        %v6975 = vpop.f32.mrb[0].mxu0
        %6976 = vmatprep.mubr.f32.mxu0 0.0
        %6977 = vmatmul.mubr.f32.gmra.mrb[0].mxu0 %v6285
        %v6978 = vpop.f32.mrb[0].mxu0
        %v6979 = vadd.f32 %v6644, %v6978
        %v6980 = vpop.f32.mrb[0].mxu0
        %6981 = vmatprep.mubr.f32.mxu0 0.0
        %6982 = vmatmul.mubr.f32.gmra.mrb[0].mxu0 %v6288
        %v6983 = vpop.f32.mrb[0].mxu0
        %v6984 = vadd.f32 %v6649, %v6983
        %v6985 = vpop.f32.mrb[0].mxu0
        %6986 = vmatprep.mubr.f32.mxu0 0.0
        %6987 = vmatmul.mubr.f32.gmra.mrb[0].mxu0 %v6291
        %v6988 = vpop.f32.mrb[0].mxu0
        %v6989 = vadd.f32 %v6654, %v6988
        %v6990 = vpop.f32.mrb[0].mxu0
        %6991 = vmatprep.mubr.f32.mxu0 0.0
        %6992 = vmatmul.mubr.f32.gmra.mrb[0].mxu0 %v6294
        %v6993 = vpop.f32.mrb[0].mxu0
        %v6994 = vadd.f32 %v6659, %v6993
        %v6995 = vpop.f32.mrb[0].mxu0
        %6996 = vmatprep.mubr.f32.mxu0 0.0
        %6997 = vmatmul.mubr.f32.gmra.mrb[0].mxu0 %v6297
        %v6998 = vpop.f32.mrb[0].mxu0
        %v6999 = vadd.f32 %v6664, %v6998
        %v7000 = vpop.f32.mrb[0].mxu0
        %7001 = vmatprep.mubr.f32.mxu0 0.0
        %7002 = vmatmul.mubr.f32.gmra.mrb[0].mxu0 %v6300
        %v7003 = vpop.f32.mrb[0].mxu0
        %v7004 = vadd.f32 %v6669, %v7003
        %v7005 = vpop.f32.mrb[0].mxu0
        %7006 = vmatprep.mubr.f32.mxu0 0.0
        %7007 = vmatmul.mubr.f32.gmra.mrb[0].mxu0 %v6303
        %v7008 = vpop.f32.mrb[0].mxu0
        %v7009 = vadd.f32 %v6674, %v7008
        %v7010 = vpop.f32.mrb[0].mxu0
        %7011 = vmatprep.mubr.f32.mxu0 0.0
        %7012 = vmatmul.mubr.f32.gmra.mrb[0].mxu0 %v6306
        %v7013 = vpop.f32.mrb[0].mxu0
        %v7014 = vadd.f32 %v6679, %v7013
        %v7015 = vpop.f32.mrb[0].mxu0
        %7016 = vmatprep.mubr.f32.mxu0 0.0
        %7017 = vmatmul.mubr.f32.gmra.mrb[0].mxu0 %v6309
        %v7018 = vpop.f32.mrb[0].mxu0
        %v7019 = vadd.f32 %v6684, %v7018
        %v7020 = vpop.f32.mrb[0].mxu0
        %7021 = vmatprep.mubr.f32.mxu0 0.0
        %7022 = vmatmul.mubr.f32.gmra.mrb[0].mxu0 %v6312
        %v7023 = vpop.f32.mrb[0].mxu0
        %v7024 = vadd.f32 %v6689, %v7023
        %v7025 = vpop.f32.mrb[0].mxu0
        %7026 = vmatprep.mubr.f32.mxu0 0.0
        %7027 = vmatmul.mubr.f32.gmra.mrb[0].mxu0 %v6315
        %v7028 = vpop.f32.mrb[0].mxu0
        %v7029 = vadd.f32 %v6694, %v7028
        %v7030 = vpop.f32.mrb[0].mxu0
        %7031 = vmatprep.mubr.f32.mxu0 0.0
        %7032 = vmatmul.mubr.f32.gmra.mrb[0].mxu0 %v6318
        %v7033 = vpop.f32.mrb[0].mxu0
        %v7034 = vadd.f32 %v6699, %v7033
        %v7035 = vpop.f32.mrb[0].mxu0
        %7036 = vdwg.mxu0
        %7037 = vst [vmem:[#allocation5] sm:$0xff] %v6769
        %7038 = vst [vmem:[#allocation5 + $0x8] sm:$0xff] %v6774
        %7039 = vst [vmem:[#allocation5 + $0x10] sm:$0xff] %v6779
        %7040 = vst [vmem:[#allocation5 + $0x18] sm:$0xff] %v6784
        %7041 = vst [vmem:[#allocation5 + $0x20] sm:$0xff] %v6789
        %7042 = vst [vmem:[#allocation5 + $0x28] sm:$0xff] %v6794
        %7043 = vst [vmem:[#allocation5 + $0x30] sm:$0xff] %v6799
        %7044 = vst [vmem:[#allocation5 + $0x38] sm:$0xff] %v6804
        %7045 = vst [vmem:[#allocation5 + $0x40] sm:$0xff] %v6809
        %7046 = vst [vmem:[#allocation5 + $0x48] sm:$0xff] %v6814
        %7047 = vst [vmem:[#allocation5 + $0x50] sm:$0xff] %v6819
        %7048 = vst [vmem:[#allocation5 + $0x58] sm:$0xff] %v6824
        %7049 = vst [vmem:[#allocation5 + $0x60] sm:$0xff] %v6829
        %7050 = vst [vmem:[#allocation5 + $0x68] sm:$0xff] %v6834
        %7051 = vst [vmem:[#allocation5 + $0x70] sm:$0xff] %v6839
        %7052 = vst [vmem:[#allocation5 + $0x78] sm:$0xff] %v6844
        %7053 = vst [vmem:[#allocation5 + $0x80] sm:$0xff] %v6849
        %7054 = vst [vmem:[#allocation5 + $0x88] sm:$0xff] %v6854
        %7055 = vst [vmem:[#allocation5 + $0x90] sm:$0xff] %v6859
        %7056 = vst [vmem:[#allocation5 + $0x98] sm:$0xff] %v6864
        %7057 = vst [vmem:[#allocation5 + $0xa0] sm:$0xff] %v6869
        %7058 = vst [vmem:[#allocation5 + $0xa8] sm:$0xff] %v6874
        %7059 = vst [vmem:[#allocation5 + $0xb0] sm:$0xff] %v6879
        %7060 = vst [vmem:[#allocation5 + $0xb8] sm:$0xff] %v6884
        %7061 = vst [vmem:[#allocation5 + $0xc0] sm:$0xff] %v6889
        %7062 = vst [vmem:[#allocation5 + $0xc8] sm:$0xff] %v6894
        %7063 = vst [vmem:[#allocation5 + $0xd0] sm:$0xff] %v6899
        %7064 = vst [vmem:[#allocation5 + $0xd8] sm:$0xff] %v6904
        %7065 = vst [vmem:[#allocation5 + $0xe0] sm:$0xff] %v6909
        %7066 = vst [vmem:[#allocation5 + $0xe8] sm:$0xff] %v6914
        %7067 = vst [vmem:[#allocation5 + $0xf0] sm:$0xff] %v6919
        %7068 = vst [vmem:[#allocation5 + $0xf8] sm:$0xff] %v6924
        %7069 = vst [vmem:[#allocation5 + $0x100] sm:$0xff] %v6929
        %7070 = vst [vmem:[#allocation5 + $0x108] sm:$0xff] %v6934
        %7071 = vst [vmem:[#allocation5 + $0x110] sm:$0xff] %v6939
        %7072 = vst [vmem:[#allocation5 + $0x118] sm:$0xff] %v6944
        %7073 = vst [vmem:[#allocation5 + $0x120] sm:$0xff] %v6949
        %7074 = vst [vmem:[#allocation5 + $0x128] sm:$0xff] %v6954
        %7075 = vst [vmem:[#allocation5 + $0x130] sm:$0xff] %v6959
        %7076 = vst [vmem:[#allocation5 + $0x138] sm:$0xff] %v6964
        %7077 = vst [vmem:[#allocation5 + $0x140] sm:$0xff] %v6969
        %7078 = vst [vmem:[#allocation5 + $0x148] sm:$0xff] %v6974
        %7079 = vst [vmem:[#allocation5 + $0x150] sm:$0xff] %v6979
        %7080 = vst [vmem:[#allocation5 + $0x158] sm:$0xff] %v6984
        %7081 = vst [vmem:[#allocation5 + $0x160] sm:$0xff] %v6989
        %7082 = vst [vmem:[#allocation5 + $0x168] sm:$0xff] %v6994
        %7083 = vst [vmem:[#allocation5 + $0x170] sm:$0xff] %v6999
        %7084 = vst [vmem:[#allocation5 + $0x178] sm:$0xff] %v7004
        %7085 = vst [vmem:[#allocation5 + $0x180] sm:$0xff] %v7009
        %7086 = vst [vmem:[#allocation5 + $0x188] sm:$0xff] %v7014
        %7087 = vst [vmem:[#allocation5 + $0x190] sm:$0xff] %v7019
        %7088 = vst [vmem:[#allocation5 + $0x198] sm:$0xff] %v7024
        %7089 = vst [vmem:[#allocation5 + $0x1a0] sm:$0xff] %v7029
        %7090 = vst [vmem:[#allocation5 + $0x1a8] sm:$0xff] %v7034
        %v7091 = vld [vmem:[#allocation3 + $0x60] sm:$0xff]
        %v7092 = vld [vmem:[#allocation3 + $0x68] sm:$0xff]
        %v7093 = vld [vmem:[#allocation3 + $0x70] sm:$0xff]
        %v7094 = vld [vmem:[#allocation3 + $0x78] sm:$0xff]
        %v7095 = vld [vmem:[#allocation3 + $0x80] sm:$0xff]
        %v7096 = vld [vmem:[#allocation3 + $0x88] sm:$0xff]
        %v7097 = vld [vmem:[#allocation3 + $0x90] sm:$0xff]
        %v7098 = vld [vmem:[#allocation3 + $0x98] sm:$0xff]
        %v7099 = vld [vmem:[#allocation3 + $0xa0] sm:$0xff]
        %v7100 = vld [vmem:[#allocation3 + $0xa8] sm:$0xff]
        %v7101 = vld [vmem:[#allocation3 + $0xb0] sm:$0xff]
        %v7102 = vld [vmem:[#allocation3 + $0xb8] sm:$0xff]
        %v7103 = vld [vmem:[#allocation3 + $0xc0] sm:$0xff]
        %v7104 = vld [vmem:[#allocation3 + $0xc8] sm:$0xff]
        %v7105 = vld [vmem:[#allocation3 + $0xd0] sm:$0xff]
        %v7106 = vld [vmem:[#allocation3 + $0xd8] sm:$0xff]
        %v7107 = vld [vmem:[#allocation3 + $0xe0] sm:$0xff]
        %v7108 = vld [vmem:[#allocation3 + $0xe8] sm:$0xff]
        %v7109 = vld [vmem:[#allocation3 + $0xf0] sm:$0xff]
        %v7110 = vld [vmem:[#allocation3 + $0xf8] sm:$0xff]
        %v7111 = vld [vmem:[#allocation3 + $0x100] sm:$0xff]
        %v7112 = vld [vmem:[#allocation3 + $0x108] sm:$0xff]
        %v7113 = vld [vmem:[#allocation3 + $0x110] sm:$0xff]
        %v7114 = vld [vmem:[#allocation3 + $0x118] sm:$0xff]
        %v7115 = vld [vmem:[#allocation3 + $0x120] sm:$0xff]
        %v7116 = vld [vmem:[#allocation3 + $0x128] sm:$0xff]
        %v7117 = vld [vmem:[#allocation3 + $0x130] sm:$0xff]
        %v7118 = vld [vmem:[#allocation3 + $0x138] sm:$0xff]
        %v7119 = vld [vmem:[#allocation3 + $0x140] sm:$0xff]
        %v7120 = vld [vmem:[#allocation3 + $0x148] sm:$0xff]
        %v7121 = vld [vmem:[#allocation3 + $0x150] sm:$0xff]
        %v7122 = vld [vmem:[#allocation3 + $0x158] sm:$0xff]
        %v7123 = vld [vmem:[#allocation3 + $0x160] sm:$0xff]
        %v7124 = vld [vmem:[#allocation3 + $0x168] sm:$0xff]
        %v7125 = vld [vmem:[#allocation3 + $0x170] sm:$0xff]
        %v7126 = vld [vmem:[#allocation3 + $0x178] sm:$0xff]
        %v7127 = vld [vmem:[#allocation3 + $0x180] sm:$0xff]
        %v7128 = vld [vmem:[#allocation3 + $0x188] sm:$0xff]
        %v7129 = vld [vmem:[#allocation3 + $0x190] sm:$0xff]
        %v7130 = vld [vmem:[#allocation3 + $0x198] sm:$0xff]
        %v7131 = vld [vmem:[#allocation3 + $0x1a0] sm:$0xff]
        %v7132 = vld [vmem:[#allocation3 + $0x1a8] sm:$0xff]
        %v7133 = vld [vmem:[#allocation3 + $0x1b0] sm:$0xff]
        %v7134 = vld [vmem:[#allocation3 + $0x1b8] sm:$0xff]
        %v7135 = vld [vmem:[#allocation3 + $0x1c0] sm:$0xff]
        %v7136 = vld [vmem:[#allocation3 + $0x1c8] sm:$0xff]
        %v7137 = vld [vmem:[#allocation3 + $0x1d0] sm:$0xff]
        %v7138 = vld [vmem:[#allocation3 + $0x1d8] sm:$0xff]
        %v7139 = vld [vmem:[#allocation3 + $0x1e0] sm:$0xff]
        %v7140 = vld [vmem:[#allocation3 + $0x1e8] sm:$0xff]
        %v7141 = vld [vmem:[#allocation3 + $0x1f0] sm:$0xff]
        %v7142 = vld [vmem:[#allocation3 + $0x1f8] sm:$0xff]
        %v7143 = vld [vmem:[#allocation3 + $0x200] sm:$0xff]
        %v7144 = vld [vmem:[#allocation3 + $0x208] sm:$0xff]
        %v7145 = vld [vmem:[#allocation3 + $0x210] sm:$0xff]
        %v7146 = vld [vmem:[#allocation3 + $0x218] sm:$0xff]
        %v7147 = vld [vmem:[#allocation3 + $0x220] sm:$0xff]
        %v7148 = vld [vmem:[#allocation3 + $0x228] sm:$0xff]
        %v7149 = vld [vmem:[#allocation3 + $0x230] sm:$0xff]
        %v7150 = vld [vmem:[#allocation3 + $0x238] sm:$0xff]
        %v7151 = vld [vmem:[#allocation3 + $0x240] sm:$0xff]
        %v7152 = vld [vmem:[#allocation3 + $0x248] sm:$0xff]
        %v7153 = vld [vmem:[#allocation3 + $0x250] sm:$0xff]
        %v7154 = vld [vmem:[#allocation3 + $0x258] sm:$0xff]
        %v7155 = vld [vmem:[#allocation3 + $0x260] sm:$0xff]
        %v7156 = vld [vmem:[#allocation3 + $0x268] sm:$0xff]
        %v7157 = vld [vmem:[#allocation3 + $0x270] sm:$0xff]
        %v7158 = vld [vmem:[#allocation3 + $0x278] sm:$0xff]
        %v7159 = vld [vmem:[#allocation3 + $0x280] sm:$0xff]
        %v7160 = vld [vmem:[#allocation3 + $0x288] sm:$0xff]
        %v7161 = vld [vmem:[#allocation3 + $0x290] sm:$0xff]
        %v7162 = vld [vmem:[#allocation3 + $0x298] sm:$0xff]
        %v7163 = vld [vmem:[#allocation3 + $0x2a0] sm:$0xff]
        %v7164 = vld [vmem:[#allocation3 + $0x2a8] sm:$0xff]
        %v7165 = vld [vmem:[#allocation3 + $0x2b0] sm:$0xff]
        %v7166 = vld [vmem:[#allocation3 + $0x2b8] sm:$0xff]
        %v7167 = vld [vmem:[#allocation3 + $0x2c0] sm:$0xff]
        %v7168 = vld [vmem:[#allocation3 + $0x2c8] sm:$0xff]
        %v7169 = vld [vmem:[#allocation3 + $0x2d0] sm:$0xff]
        %v7170 = vld [vmem:[#allocation3 + $0x2d8] sm:$0xff]
        %v7171 = vld [vmem:[#allocation3 + $0x2e0] sm:$0xff]
        %v7172 = vld [vmem:[#allocation3 + $0x2e8] sm:$0xff]
        %v7173 = vld [vmem:[#allocation3 + $0x2f0] sm:$0xff]
        %v7174 = vld [vmem:[#allocation3 + $0x2f8] sm:$0xff]
        %v7175 = vld [vmem:[#allocation3 + $0x300] sm:$0xff]
        %v7176 = vld [vmem:[#allocation3 + $0x308] sm:$0xff]
        %v7177 = vld [vmem:[#allocation3 + $0x310] sm:$0xff]
        %v7178 = vld [vmem:[#allocation3 + $0x318] sm:$0xff]
        %v7179 = vld [vmem:[#allocation3 + $0x320] sm:$0xff]
        %v7180 = vld [vmem:[#allocation3 + $0x328] sm:$0xff]
        %v7181 = vld [vmem:[#allocation3 + $0x330] sm:$0xff]
        %v7182 = vld [vmem:[#allocation3 + $0x338] sm:$0xff]
        %v7183 = vld [vmem:[#allocation3 + $0x340] sm:$0xff]
        %v7184 = vld [vmem:[#allocation3 + $0x348] sm:$0xff]
        %v7185 = vld [vmem:[#allocation3 + $0x350] sm:$0xff]
        %v7186 = vld [vmem:[#allocation3 + $0x358] sm:$0xff]
        %v7187 = vld [vmem:[#allocation3 + $0x360] sm:$0xff]
        %v7188 = vld [vmem:[#allocation3 + $0x368] sm:$0xff]
        %v7189 = vld [vmem:[#allocation3 + $0x370] sm:$0xff]
        %v7190 = vld [vmem:[#allocation3 + $0x378] sm:$0xff]
        %v7191 = vld [vmem:[#allocation3 + $0x380] sm:$0xff]
        %v7192 = vld [vmem:[#allocation3 + $0x388] sm:$0xff]
        %v7193 = vld [vmem:[#allocation3 + $0x390] sm:$0xff]
        %v7194 = vld [vmem:[#allocation3 + $0x398] sm:$0xff]
        %v7195 = vld [vmem:[#allocation3 + $0x3a0] sm:$0xff]
        %v7196 = vld [vmem:[#allocation3 + $0x3a8] sm:$0xff]
        %v7197 = vld [vmem:[#allocation3 + $0x3b0] sm:$0xff]
        %v7198 = vld [vmem:[#allocation3 + $0x3b8] sm:$0xff]
        %v7199 = vld [vmem:[#allocation3 + $0x3c0] sm:$0xff]
        %v7200 = vld [vmem:[#allocation3 + $0x3c8] sm:$0xff]
        %v7201 = vld [vmem:[#allocation3 + $0x3d0] sm:$0xff]
        %v7202 = vld [vmem:[#allocation3 + $0x3d8] sm:$0xff]
        %v7203 = vld [vmem:[#allocation3 + $0x3e0] sm:$0xff]
        %v7204 = vld [vmem:[#allocation3 + $0x3e8] sm:$0xff]
        %v7205 = vld [vmem:[#allocation3 + $0x3f0] sm:$0xff]
        %v7206 = vld [vmem:[#allocation3 + $0x3f8] sm:$0xff]
        %v7207 = vld [vmem:[#allocation3 + $0x400] sm:$0xff]
        %v7208 = vld [vmem:[#allocation3 + $0x408] sm:$0xff]
        %v7209 = vld [vmem:[#allocation3 + $0x410] sm:$0xff]
        %v7210 = vld [vmem:[#allocation3 + $0x418] sm:$0xff]
        %v7211 = vld [vmem:[#allocation3 + $0x420] sm:$0xff]
        %v7212 = vld [vmem:[#allocation3 + $0x428] sm:$0xff]
        %v7213 = vld [vmem:[#allocation3 + $0x430] sm:$0xff]
        %v7214 = vld [vmem:[#allocation3 + $0x438] sm:$0xff]
        %v7215 = vld [vmem:[#allocation3 + $0x440] sm:$0xff]
        %v7216 = vld [vmem:[#allocation3 + $0x448] sm:$0xff]
        %v7217 = vld [vmem:[#allocation3 + $0x450] sm:$0xff]
        %v7218 = vld [vmem:[#allocation3 + $0x458] sm:$0xff]
        %v7219 = vld [vmem:[#allocation3 + $0x460] sm:$0xff]
        %v7220 = vld [vmem:[#allocation3 + $0x468] sm:$0xff]
        %v7221 = vld [vmem:[#allocation3 + $0x470] sm:$0xff]
        %v7222 = vld [vmem:[#allocation3 + $0x478] sm:$0xff]
        %v7223 = vld [vmem:[#allocation3 + $0x480] sm:$0xff]
        %v7224 = vld [vmem:[#allocation3 + $0x488] sm:$0xff]
        %v7225 = vld [vmem:[#allocation3 + $0x490] sm:$0xff]
        %v7226 = vld [vmem:[#allocation3 + $0x498] sm:$0xff]
        %v7227 = vld [vmem:[#allocation3 + $0x4a0] sm:$0xff]
        %v7228 = vld [vmem:[#allocation3 + $0x4a8] sm:$0xff]
        %v7229 = vld [vmem:[#allocation3 + $0x4b0] sm:$0xff]
        %v7230 = vld [vmem:[#allocation3 + $0x4b8] sm:$0xff]
        %v7231 = vld [vmem:[#allocation3 + $0x4c0] sm:$0xff]
        %v7232 = vld [vmem:[#allocation3 + $0x4c8] sm:$0xff]
        %v7233 = vld [vmem:[#allocation3 + $0x4d0] sm:$0xff]
        %v7234 = vld [vmem:[#allocation3 + $0x4d8] sm:$0xff]
        %v7235 = vld [vmem:[#allocation3 + $0x4e0] sm:$0xff]
        %v7236 = vld [vmem:[#allocation3 + $0x4e8] sm:$0xff]
        %v7237 = vld [vmem:[#allocation3 + $0x4f0] sm:$0xff]
        %v7238 = vld [vmem:[#allocation3 + $0x4f8] sm:$0xff]
        %v7239 = vld [vmem:[#allocation3 + $0x500] sm:$0xff]
        %v7240 = vld [vmem:[#allocation3 + $0x508] sm:$0xff]
        %v7241 = vld [vmem:[#allocation3 + $0x510] sm:$0xff]
        %v7242 = vld [vmem:[#allocation3 + $0x518] sm:$0xff]
        %v7243 = vld [vmem:[#allocation3 + $0x520] sm:$0xff]
        %v7244 = vld [vmem:[#allocation3 + $0x528] sm:$0xff]
        %v7245 = vld [vmem:[#allocation3 + $0x530] sm:$0xff]
        %v7246 = vld [vmem:[#allocation3 + $0x538] sm:$0xff]
        %v7247 = vld [vmem:[#allocation3 + $0x540] sm:$0xff]
        %v7248 = vld [vmem:[#allocation3 + $0x548] sm:$0xff]
        %v7249 = vld [vmem:[#allocation3 + $0x550] sm:$0xff]
        %v7250 = vld [vmem:[#allocation3 + $0x558] sm:$0xff]
        %v7251 = vld [vmem:[#allocation3 + $0x560] sm:$0xff]
        %v7252 = vld [vmem:[#allocation3 + $0x568] sm:$0xff]
        %s7253 = scalar_lea.vmem [#allocation11], 384
        %v7254 = vld [vmem:[%s7253] sm:$0xff]
        %v7255 = vld [vmem:[%s7253 + $0x8] sm:$0xff]
        %v7256 = vld [vmem:[%s7253 + $0x10] sm:$0xff]
        %v7257 = vld [vmem:[%s7253 + $0x18] sm:$0xff]
        %v7258 = vld [vmem:[%s7253 + $0x20] sm:$0xff]
        %v7259 = vld [vmem:[%s7253 + $0x28] sm:$0xff]
        %v7260 = vld [vmem:[%s7253 + $0x30] sm:$0xff]
        %v7261 = vld [vmem:[%s7253 + $0x38] sm:$0xff]
        %v7262 = vld [vmem:[%s7253 + $0x40] sm:$0xff]
        %v7263 = vld [vmem:[%s7253 + $0x48] sm:$0xff]
        %v7264 = vld [vmem:[%s7253 + $0x50] sm:$0xff]
        %v7265 = vld [vmem:[%s7253 + $0x58] sm:$0xff]
        %v7266 = vld [vmem:[%s7253 + $0x60] sm:$0xff]
        %v7267 = vld [vmem:[%s7253 + $0x68] sm:$0xff]
        %v7268 = vld [vmem:[%s7253 + $0x70] sm:$0xff]
        %v7269 = vld [vmem:[%s7253 + $0x78] sm:$0xff]
        %v7270 = vld [vmem:[%s7253 + $0x80] sm:$0xff]
        %v7271 = vld [vmem:[%s7253 + $0x88] sm:$0xff]
        %v7272 = vld [vmem:[%s7253 + $0x90] sm:$0xff]
        %v7273 = vld [vmem:[%s7253 + $0x98] sm:$0xff]
        %v7274 = vld [vmem:[%s7253 + $0xa0] sm:$0xff]
        %v7275 = vld [vmem:[%s7253 + $0xa8] sm:$0xff]
        %v7276 = vld [vmem:[%s7253 + $0xb0] sm:$0xff]
        %v7277 = vld [vmem:[%s7253 + $0xb8] sm:$0xff]
        %v7278 = vld [vmem:[%s7253 + $0xc0] sm:$0xff]
        %v7279 = vld [vmem:[%s7253 + $0xc8] sm:$0xff]
        %v7280 = vld [vmem:[%s7253 + $0xd0] sm:$0xff]
        %v7281 = vld [vmem:[%s7253 + $0xd8] sm:$0xff]
        %v7282 = vld [vmem:[%s7253 + $0xe0] sm:$0xff]
        %v7283 = vld [vmem:[%s7253 + $0xe8] sm:$0xff]
        %v7284 = vld [vmem:[%s7253 + $0xf0] sm:$0xff]
        %v7285 = vld [vmem:[%s7253 + $0xf8] sm:$0xff]
        %v7286 = vld [vmem:[%s7253 + $0x100] sm:$0xff]
        %v7287 = vld [vmem:[%s7253 + $0x108] sm:$0xff]
        %v7288 = vld [vmem:[%s7253 + $0x110] sm:$0xff]
        %v7289 = vld [vmem:[%s7253 + $0x118] sm:$0xff]
        %v7290 = vld [vmem:[%s7253 + $0x120] sm:$0xff]
        %v7291 = vld [vmem:[%s7253 + $0x128] sm:$0xff]
        %v7292 = vld [vmem:[%s7253 + $0x130] sm:$0xff]
        %v7293 = vld [vmem:[%s7253 + $0x138] sm:$0xff]
        %v7294 = vld [vmem:[%s7253 + $0x140] sm:$0xff]
        %v7295 = vld [vmem:[%s7253 + $0x148] sm:$0xff]
        %v7296 = vld [vmem:[%s7253 + $0x150] sm:$0xff]
        %v7297 = vld [vmem:[%s7253 + $0x158] sm:$0xff]
        %v7298 = vld [vmem:[%s7253 + $0x160] sm:$0xff]
        %v7299 = vld [vmem:[%s7253 + $0x168] sm:$0xff]
        %v7300 = vld [vmem:[%s7253 + $0x170] sm:$0xff]
        %v7301 = vld [vmem:[%s7253 + $0x178] sm:$0xff]
        %7302 = vmatprep.subr.mxu0 0.0
        %7303 = vmatpush1.msra.mxu0 %v7254
        %7304 = vmatprep.subr.mxu0 0.0
        %7305 = vmatpush1.msra.mxu0 %v7255
        %7306 = vmatprep.subr.mxu0 0.0
        %7307 = vmatpush1.msra.mxu0 %v7256
        %7308 = vmatprep.subr.mxu0 0.0
        %7309 = vmatpush1.msra.mxu0 %v7257
        %7310 = vmatprep.subr.mxu0 0.0
        %7311 = vmatpush1.msra.mxu0 %v7258
        %7312 = vmatprep.subr.mxu0 0.0
        %7313 = vmatpush1.msra.mxu0 %v7259
        %7314 = vmatprep.subr.mxu0 0.0
        %7315 = vmatpush1.msra.mxu0 %v7260
        %7316 = vmatprep.subr.mxu0 0.0
        %7317 = vmatpush1.msra.mxu0 %v7261
        %7318 = vmatprep.subr.mxu0 0.0
        %7319 = vmatpush1.msra.mxu0 %v7262
        %7320 = vmatprep.subr.mxu0 0.0
        %7321 = vmatpush1.msra.mxu0 %v7263
        %7322 = vmatprep.subr.mxu0 0.0
        %7323 = vmatpush1.msra.mxu0 %v7264
        %7324 = vmatprep.subr.mxu0 0.0
        %7325 = vmatpush1.msra.mxu0 %v7265
        %7326 = vmatprep.subr.mxu0 0.0
        %7327 = vmatpush1.msra.mxu0 %v7266
        %7328 = vmatprep.subr.mxu0 0.0
        %7329 = vmatpush1.msra.mxu0 %v7267
        %7330 = vmatprep.subr.mxu0 0.0
        %7331 = vmatpush1.msra.mxu0 %v7268
        %7332 = vmatprep.subr.mxu0 0.0
        %7333 = vmatpush1.msra.mxu0 %v7269
        %7334 = vmatprep.subr.mxu0 0.0
        %7335 = vmatpush1.msra.mxu0 %v7270
        %7336 = vmatprep.subr.mxu0 0.0
        %7337 = vmatpush1.msra.mxu0 %v7271
        %7338 = vmatprep.subr.mxu0 0.0
        %7339 = vmatpush1.msra.mxu0 %v7272
        %7340 = vmatprep.subr.mxu0 0.0
        %7341 = vmatpush1.msra.mxu0 %v7273
        %7342 = vmatprep.subr.mxu0 0.0
        %7343 = vmatpush1.msra.mxu0 %v7274
        %7344 = vmatprep.subr.mxu0 0.0
        %7345 = vmatpush1.msra.mxu0 %v7275
        %7346 = vmatprep.subr.mxu0 0.0
        %7347 = vmatpush1.msra.mxu0 %v7276
        %7348 = vmatprep.subr.mxu0 0.0
        %7349 = vmatpush1.msra.mxu0 %v7277
        %7350 = vmatprep.subr.mxu0 0.0
        %7351 = vmatpush1.msra.mxu0 %v7278
        %7352 = vmatprep.subr.mxu0 0.0
        %7353 = vmatpush1.msra.mxu0 %v7279
        %7354 = vmatprep.subr.mxu0 0.0
        %7355 = vmatpush1.msra.mxu0 %v7280
        %7356 = vmatprep.subr.mxu0 0.0
        %7357 = vmatpush1.msra.mxu0 %v7281
        %7358 = vmatprep.subr.mxu0 0.0
        %7359 = vmatpush1.msra.mxu0 %v7282
        %7360 = vmatprep.subr.mxu0 0.0
        %7361 = vmatpush1.msra.mxu0 %v7283
        %7362 = vmatprep.subr.mxu0 0.0
        %7363 = vmatpush1.msra.mxu0 %v7284
        %7364 = vmatprep.subr.mxu0 0.0
        %7365 = vmatpush1.msra.mxu0 %v7285
        %7366 = vmatprep.mubr.f32.mxu0 %v7092
        %7367 = vmatmul.mubr.f32.gmra.mrb[0].mxu0 %v7091
        %v7368 = vpop.f32.mrb[0].mxu0
        %v7369 = vadd.f32 0.0, %v7368
        %v7370 = vpop.f32.mrb[0].mxu0
        %7371 = vmatprep.mubr.f32.mxu0 %v7095
        %7372 = vmatmul.mubr.f32.gmra.mrb[0].mxu0 %v7094
        %v7373 = vpop.f32.mrb[0].mxu0
        %v7374 = vadd.f32 0.0, %v7373
        %v7375 = vpop.f32.mrb[0].mxu0
        %7376 = vmatprep.mubr.f32.mxu0 %v7098
        %7377 = vmatmul.mubr.f32.gmra.mrb[0].mxu0 %v7097
        %v7378 = vpop.f32.mrb[0].mxu0
        %v7379 = vadd.f32 0.0, %v7378
        %v7380 = vpop.f32.mrb[0].mxu0
        %7381 = vmatprep.mubr.f32.mxu0 %v7101
        %7382 = vmatmul.mubr.f32.gmra.mrb[0].mxu0 %v7100
        %v7383 = vpop.f32.mrb[0].mxu0
        %v7384 = vadd.f32 0.0, %v7383
        %v7385 = vpop.f32.mrb[0].mxu0
        %7386 = vmatprep.mubr.f32.mxu0 %v7104
        %7387 = vmatmul.mubr.f32.gmra.mrb[0].mxu0 %v7103
        %v7388 = vpop.f32.mrb[0].mxu0
        %v7389 = vadd.f32 0.0, %v7388
        %v7390 = vpop.f32.mrb[0].mxu0
        %7391 = vmatprep.mubr.f32.mxu0 %v7107
        %7392 = vmatmul.mubr.f32.gmra.mrb[0].mxu0 %v7106
        %v7393 = vpop.f32.mrb[0].mxu0
        %v7394 = vadd.f32 0.0, %v7393
        %v7395 = vpop.f32.mrb[0].mxu0
        %7396 = vmatprep.mubr.f32.mxu0 %v7110
        %7397 = vmatmul.mubr.f32.gmra.mrb[0].mxu0 %v7109
        %v7398 = vpop.f32.mrb[0].mxu0
        %v7399 = vadd.f32 0.0, %v7398
        %v7400 = vpop.f32.mrb[0].mxu0
        %7401 = vmatprep.mubr.f32.mxu0 %v7113
        %7402 = vmatmul.mubr.f32.gmra.mrb[0].mxu0 %v7112
        %v7403 = vpop.f32.mrb[0].mxu0
        %v7404 = vadd.f32 0.0, %v7403
        %v7405 = vpop.f32.mrb[0].mxu0
        %7406 = vmatprep.mubr.f32.mxu0 %v7116
        %7407 = vmatmul.mubr.f32.gmra.mrb[0].mxu0 %v7115
        %v7408 = vpop.f32.mrb[0].mxu0
        %v7409 = vadd.f32 0.0, %v7408
        %v7410 = vpop.f32.mrb[0].mxu0
        %7411 = vmatprep.mubr.f32.mxu0 %v7119
        %7412 = vmatmul.mubr.f32.gmra.mrb[0].mxu0 %v7118
        %v7413 = vpop.f32.mrb[0].mxu0
        %v7414 = vadd.f32 0.0, %v7413
        %v7415 = vpop.f32.mrb[0].mxu0
        %7416 = vmatprep.mubr.f32.mxu0 %v7122
        %7417 = vmatmul.mubr.f32.gmra.mrb[0].mxu0 %v7121
        %v7418 = vpop.f32.mrb[0].mxu0
        %v7419 = vadd.f32 0.0, %v7418
        %v7420 = vpop.f32.mrb[0].mxu0
        %7421 = vmatprep.mubr.f32.mxu0 %v7125
        %7422 = vmatmul.mubr.f32.gmra.mrb[0].mxu0 %v7124
        %v7423 = vpop.f32.mrb[0].mxu0
        %v7424 = vadd.f32 0.0, %v7423
        %v7425 = vpop.f32.mrb[0].mxu0
        %7426 = vmatprep.mubr.f32.mxu0 %v7128
        %7427 = vmatmul.mubr.f32.gmra.mrb[0].mxu0 %v7127
        %v7428 = vpop.f32.mrb[0].mxu0
        %v7429 = vadd.f32 0.0, %v7428
        %v7430 = vpop.f32.mrb[0].mxu0
        %7431 = vmatprep.mubr.f32.mxu0 %v7131
        %7432 = vmatmul.mubr.f32.gmra.mrb[0].mxu0 %v7130
        %v7433 = vpop.f32.mrb[0].mxu0
        %v7434 = vadd.f32 0.0, %v7433
        %v7435 = vpop.f32.mrb[0].mxu0
        %7436 = vmatprep.mubr.f32.mxu0 %v7134
        %7437 = vmatmul.mubr.f32.gmra.mrb[0].mxu0 %v7133
        %v7438 = vpop.f32.mrb[0].mxu0
        %v7439 = vadd.f32 0.0, %v7438
        %v7440 = vpop.f32.mrb[0].mxu0
        %7441 = vmatprep.mubr.f32.mxu0 %v7137
        %7442 = vmatmul.mubr.f32.gmra.mrb[0].mxu0 %v7136
        %v7443 = vpop.f32.mrb[0].mxu0
        %v7444 = vadd.f32 0.0, %v7443
        %v7445 = vpop.f32.mrb[0].mxu0
        %7446 = vmatprep.mubr.f32.mxu0 %v7140
        %7447 = vmatmul.mubr.f32.gmra.mrb[0].mxu0 %v7139
        %v7448 = vpop.f32.mrb[0].mxu0
        %v7449 = vadd.f32 0.0, %v7448
        %v7450 = vpop.f32.mrb[0].mxu0
        %7451 = vmatprep.mubr.f32.mxu0 %v7143
        %7452 = vmatmul.mubr.f32.gmra.mrb[0].mxu0 %v7142
        %v7453 = vpop.f32.mrb[0].mxu0
        %v7454 = vadd.f32 0.0, %v7453
        %v7455 = vpop.f32.mrb[0].mxu0
        %7456 = vmatprep.mubr.f32.mxu0 %v7146
        %7457 = vmatmul.mubr.f32.gmra.mrb[0].mxu0 %v7145
        %v7458 = vpop.f32.mrb[0].mxu0
        %v7459 = vadd.f32 0.0, %v7458
        %v7460 = vpop.f32.mrb[0].mxu0
        %7461 = vmatprep.mubr.f32.mxu0 %v7149
        %7462 = vmatmul.mubr.f32.gmra.mrb[0].mxu0 %v7148
        %v7463 = vpop.f32.mrb[0].mxu0
        %v7464 = vadd.f32 0.0, %v7463
        %v7465 = vpop.f32.mrb[0].mxu0
        %7466 = vmatprep.mubr.f32.mxu0 %v7152
        %7467 = vmatmul.mubr.f32.gmra.mrb[0].mxu0 %v7151
        %v7468 = vpop.f32.mrb[0].mxu0
        %v7469 = vadd.f32 0.0, %v7468
        %v7470 = vpop.f32.mrb[0].mxu0
        %7471 = vmatprep.mubr.f32.mxu0 %v7155
        %7472 = vmatmul.mubr.f32.gmra.mrb[0].mxu0 %v7154
        %v7473 = vpop.f32.mrb[0].mxu0
        %v7474 = vadd.f32 0.0, %v7473
        %v7475 = vpop.f32.mrb[0].mxu0
        %7476 = vmatprep.mubr.f32.mxu0 %v7158
        %7477 = vmatmul.mubr.f32.gmra.mrb[0].mxu0 %v7157
        %v7478 = vpop.f32.mrb[0].mxu0
        %v7479 = vadd.f32 0.0, %v7478
        %v7480 = vpop.f32.mrb[0].mxu0
        %7481 = vmatprep.mubr.f32.mxu0 %v7161
        %7482 = vmatmul.mubr.f32.gmra.mrb[0].mxu0 %v7160
        %v7483 = vpop.f32.mrb[0].mxu0
        %v7484 = vadd.f32 0.0, %v7483
        %v7485 = vpop.f32.mrb[0].mxu0
        %7486 = vmatprep.mubr.f32.mxu0 %v7164
        %7487 = vmatmul.mubr.f32.gmra.mrb[0].mxu0 %v7163
        %v7488 = vpop.f32.mrb[0].mxu0
        %v7489 = vadd.f32 0.0, %v7488
        %v7490 = vpop.f32.mrb[0].mxu0
        %7491 = vmatprep.mubr.f32.mxu0 %v7167
        %7492 = vmatmul.mubr.f32.gmra.mrb[0].mxu0 %v7166
        %v7493 = vpop.f32.mrb[0].mxu0
        %v7494 = vadd.f32 0.0, %v7493
        %v7495 = vpop.f32.mrb[0].mxu0
        %7496 = vmatprep.mubr.f32.mxu0 %v7170
        %7497 = vmatmul.mubr.f32.gmra.mrb[0].mxu0 %v7169
        %v7498 = vpop.f32.mrb[0].mxu0
        %v7499 = vadd.f32 0.0, %v7498
        %v7500 = vpop.f32.mrb[0].mxu0
        %7501 = vmatprep.mubr.f32.mxu0 %v7173
        %7502 = vmatmul.mubr.f32.gmra.mrb[0].mxu0 %v7172
        %v7503 = vpop.f32.mrb[0].mxu0
        %v7504 = vadd.f32 0.0, %v7503
        %v7505 = vpop.f32.mrb[0].mxu0
        %7506 = vmatprep.mubr.f32.mxu0 %v7176
        %7507 = vmatmul.mubr.f32.gmra.mrb[0].mxu0 %v7175
        %v7508 = vpop.f32.mrb[0].mxu0
        %v7509 = vadd.f32 0.0, %v7508
        %v7510 = vpop.f32.mrb[0].mxu0
        %7511 = vmatprep.mubr.f32.mxu0 %v7179
        %7512 = vmatmul.mubr.f32.gmra.mrb[0].mxu0 %v7178
        %v7513 = vpop.f32.mrb[0].mxu0
        %v7514 = vadd.f32 0.0, %v7513
        %v7515 = vpop.f32.mrb[0].mxu0
        %7516 = vmatprep.mubr.f32.mxu0 %v7182
        %7517 = vmatmul.mubr.f32.gmra.mrb[0].mxu0 %v7181
        %v7518 = vpop.f32.mrb[0].mxu0
        %v7519 = vadd.f32 0.0, %v7518
        %v7520 = vpop.f32.mrb[0].mxu0
        %7521 = vmatprep.mubr.f32.mxu0 %v7185
        %7522 = vmatmul.mubr.f32.gmra.mrb[0].mxu0 %v7184
        %v7523 = vpop.f32.mrb[0].mxu0
        %v7524 = vadd.f32 0.0, %v7523
        %v7525 = vpop.f32.mrb[0].mxu0
        %7526 = vmatprep.mubr.f32.mxu0 %v7188
        %7527 = vmatmul.mubr.f32.gmra.mrb[0].mxu0 %v7187
        %v7528 = vpop.f32.mrb[0].mxu0
        %v7529 = vadd.f32 0.0, %v7528
        %v7530 = vpop.f32.mrb[0].mxu0
        %7531 = vmatprep.mubr.f32.mxu0 %v7191
        %7532 = vmatmul.mubr.f32.gmra.mrb[0].mxu0 %v7190
        %v7533 = vpop.f32.mrb[0].mxu0
        %v7534 = vadd.f32 0.0, %v7533
        %v7535 = vpop.f32.mrb[0].mxu0
        %7536 = vmatprep.mubr.f32.mxu0 %v7194
        %7537 = vmatmul.mubr.f32.gmra.mrb[0].mxu0 %v7193
        %v7538 = vpop.f32.mrb[0].mxu0
        %v7539 = vadd.f32 0.0, %v7538
        %v7540 = vpop.f32.mrb[0].mxu0
        %7541 = vmatprep.mubr.f32.mxu0 %v7197
        %7542 = vmatmul.mubr.f32.gmra.mrb[0].mxu0 %v7196
        %v7543 = vpop.f32.mrb[0].mxu0
        %v7544 = vadd.f32 0.0, %v7543
        %v7545 = vpop.f32.mrb[0].mxu0
        %7546 = vmatprep.mubr.f32.mxu0 %v7200
        %7547 = vmatmul.mubr.f32.gmra.mrb[0].mxu0 %v7199
        %v7548 = vpop.f32.mrb[0].mxu0
        %v7549 = vadd.f32 0.0, %v7548
        %v7550 = vpop.f32.mrb[0].mxu0
        %7551 = vmatprep.mubr.f32.mxu0 %v7203
        %7552 = vmatmul.mubr.f32.gmra.mrb[0].mxu0 %v7202
        %v7553 = vpop.f32.mrb[0].mxu0
        %v7554 = vadd.f32 0.0, %v7553
        %v7555 = vpop.f32.mrb[0].mxu0
        %7556 = vmatprep.mubr.f32.mxu0 %v7206
        %7557 = vmatmul.mubr.f32.gmra.mrb[0].mxu0 %v7205
        %v7558 = vpop.f32.mrb[0].mxu0
        %v7559 = vadd.f32 0.0, %v7558
        %v7560 = vpop.f32.mrb[0].mxu0
        %7561 = vmatprep.mubr.f32.mxu0 %v7209
        %7562 = vmatmul.mubr.f32.gmra.mrb[0].mxu0 %v7208
        %v7563 = vpop.f32.mrb[0].mxu0
        %v7564 = vadd.f32 0.0, %v7563
        %v7565 = vpop.f32.mrb[0].mxu0
        %7566 = vmatprep.mubr.f32.mxu0 %v7212
        %7567 = vmatmul.mubr.f32.gmra.mrb[0].mxu0 %v7211
        %v7568 = vpop.f32.mrb[0].mxu0
        %v7569 = vadd.f32 0.0, %v7568
        %v7570 = vpop.f32.mrb[0].mxu0
        %7571 = vmatprep.mubr.f32.mxu0 %v7215
        %7572 = vmatmul.mubr.f32.gmra.mrb[0].mxu0 %v7214
        %v7573 = vpop.f32.mrb[0].mxu0
        %v7574 = vadd.f32 0.0, %v7573
        %v7575 = vpop.f32.mrb[0].mxu0
        %7576 = vmatprep.mubr.f32.mxu0 %v7218
        %7577 = vmatmul.mubr.f32.gmra.mrb[0].mxu0 %v7217
        %v7578 = vpop.f32.mrb[0].mxu0
        %v7579 = vadd.f32 0.0, %v7578
        %v7580 = vpop.f32.mrb[0].mxu0
        %7581 = vmatprep.mubr.f32.mxu0 %v7221
        %7582 = vmatmul.mubr.f32.gmra.mrb[0].mxu0 %v7220
        %v7583 = vpop.f32.mrb[0].mxu0
        %v7584 = vadd.f32 0.0, %v7583
        %v7585 = vpop.f32.mrb[0].mxu0
        %7586 = vmatprep.mubr.f32.mxu0 %v7224
        %7587 = vmatmul.mubr.f32.gmra.mrb[0].mxu0 %v7223
        %v7588 = vpop.f32.mrb[0].mxu0
        %v7589 = vadd.f32 0.0, %v7588
        %v7590 = vpop.f32.mrb[0].mxu0
        %7591 = vmatprep.mubr.f32.mxu0 %v7227
        %7592 = vmatmul.mubr.f32.gmra.mrb[0].mxu0 %v7226
        %v7593 = vpop.f32.mrb[0].mxu0
        %v7594 = vadd.f32 0.0, %v7593
        %v7595 = vpop.f32.mrb[0].mxu0
        %7596 = vmatprep.mubr.f32.mxu0 %v7230
        %7597 = vmatmul.mubr.f32.gmra.mrb[0].mxu0 %v7229
        %v7598 = vpop.f32.mrb[0].mxu0
        %v7599 = vadd.f32 0.0, %v7598
        %v7600 = vpop.f32.mrb[0].mxu0
        %7601 = vmatprep.mubr.f32.mxu0 %v7233
        %7602 = vmatmul.mubr.f32.gmra.mrb[0].mxu0 %v7232
        %v7603 = vpop.f32.mrb[0].mxu0
        %v7604 = vadd.f32 0.0, %v7603
        %v7605 = vpop.f32.mrb[0].mxu0
        %7606 = vmatprep.mubr.f32.mxu0 %v7236
        %7607 = vmatmul.mubr.f32.gmra.mrb[0].mxu0 %v7235
        %v7608 = vpop.f32.mrb[0].mxu0
        %v7609 = vadd.f32 0.0, %v7608
        %v7610 = vpop.f32.mrb[0].mxu0
        %7611 = vmatprep.mubr.f32.mxu0 %v7239
        %7612 = vmatmul.mubr.f32.gmra.mrb[0].mxu0 %v7238
        %v7613 = vpop.f32.mrb[0].mxu0
        %v7614 = vadd.f32 0.0, %v7613
        %v7615 = vpop.f32.mrb[0].mxu0
        %7616 = vmatprep.mubr.f32.mxu0 %v7242
        %7617 = vmatmul.mubr.f32.gmra.mrb[0].mxu0 %v7241
        %v7618 = vpop.f32.mrb[0].mxu0
        %v7619 = vadd.f32 0.0, %v7618
        %v7620 = vpop.f32.mrb[0].mxu0
        %7621 = vmatprep.mubr.f32.mxu0 %v7245
        %7622 = vmatmul.mubr.f32.gmra.mrb[0].mxu0 %v7244
        %v7623 = vpop.f32.mrb[0].mxu0
        %v7624 = vadd.f32 0.0, %v7623
        %v7625 = vpop.f32.mrb[0].mxu0
        %7626 = vmatprep.mubr.f32.mxu0 %v7248
        %7627 = vmatmul.mubr.f32.gmra.mrb[0].mxu0 %v7247
        %v7628 = vpop.f32.mrb[0].mxu0
        %v7629 = vadd.f32 0.0, %v7628
        %v7630 = vpop.f32.mrb[0].mxu0
        %7631 = vmatprep.mubr.f32.mxu0 %v7251
        %7632 = vmatmul.mubr.f32.gmra.mrb[0].mxu0 %v7250
        %v7633 = vpop.f32.mrb[0].mxu0
        %v7634 = vadd.f32 0.0, %v7633
        %v7635 = vpop.f32.mrb[0].mxu0
        %7636 = vdwg.mxu0
        %7637 = vmatprep.subr.mxu0 0.0
        %7638 = vmatpush1.msra.mxu0 %v7286
        %7639 = vmatprep.subr.mxu0 0.0
        %7640 = vmatpush1.msra.mxu0 %v7287
        %7641 = vmatprep.subr.mxu0 0.0
        %7642 = vmatpush1.msra.mxu0 %v7288
        %7643 = vmatprep.subr.mxu0 0.0
        %7644 = vmatpush1.msra.mxu0 %v7289
        %7645 = vmatprep.subr.mxu0 0.0
        %7646 = vmatpush1.msra.mxu0 %v7290
        %7647 = vmatprep.subr.mxu0 0.0
        %7648 = vmatpush1.msra.mxu0 %v7291
        %7649 = vmatprep.subr.mxu0 0.0
        %7650 = vmatpush1.msra.mxu0 %v7292
        %7651 = vmatprep.subr.mxu0 0.0
        %7652 = vmatpush1.msra.mxu0 %v7293
        %7653 = vmatprep.subr.mxu0 0.0
        %7654 = vmatpush1.msra.mxu0 %v7294
        %7655 = vmatprep.subr.mxu0 0.0
        %7656 = vmatpush1.msra.mxu0 %v7295
        %7657 = vmatprep.subr.mxu0 0.0
        %7658 = vmatpush1.msra.mxu0 %v7296
        %7659 = vmatprep.subr.mxu0 0.0
        %7660 = vmatpush1.msra.mxu0 %v7297
        %7661 = vmatprep.subr.mxu0 0.0
        %7662 = vmatpush1.msra.mxu0 %v7298
        %7663 = vmatprep.subr.mxu0 0.0
        %7664 = vmatpush1.msra.mxu0 %v7299
        %7665 = vmatprep.subr.mxu0 0.0
        %7666 = vmatpush1.msra.mxu0 %v7300
        %7667 = vmatprep.subr.mxu0 0.0
        %7668 = vmatpush1.msra.mxu0 %v7301
        %7669 = vmatprep.subr.mxu0 0.0
        %7670 = vmatpush1.msra.mxu0 0.0
        %7671 = vmatprep.subr.mxu0 0.0
        %7672 = vmatpush1.msra.mxu0 0.0
        %7673 = vmatprep.subr.mxu0 0.0
        %7674 = vmatpush1.msra.mxu0 0.0
        %7675 = vmatprep.subr.mxu0 0.0
        %7676 = vmatpush1.msra.mxu0 0.0
        %7677 = vmatprep.subr.mxu0 0.0
        %7678 = vmatpush1.msra.mxu0 0.0
        %7679 = vmatprep.subr.mxu0 0.0
        %7680 = vmatpush1.msra.mxu0 0.0
        %7681 = vmatprep.subr.mxu0 0.0
        %7682 = vmatpush1.msra.mxu0 0.0
        %7683 = vmatprep.subr.mxu0 0.0
        %7684 = vmatpush1.msra.mxu0 0.0
        %7685 = vmatprep.subr.mxu0 0.0
        %7686 = vmatpush1.msra.mxu0 0.0
        %7687 = vmatprep.subr.mxu0 0.0
        %7688 = vmatpush1.msra.mxu0 0.0
        %7689 = vmatprep.subr.mxu0 0.0
        %7690 = vmatpush1.msra.mxu0 0.0
        %7691 = vmatprep.subr.mxu0 0.0
        %7692 = vmatpush1.msra.mxu0 0.0
        %7693 = vmatprep.subr.mxu0 0.0
        %7694 = vmatpush1.msra.mxu0 0.0
        %7695 = vmatprep.subr.mxu0 0.0
        %7696 = vmatpush1.msra.mxu0 0.0
        %7697 = vmatprep.subr.mxu0 0.0
        %7698 = vmatpush1.msra.mxu0 0.0
        %7699 = vmatprep.subr.mxu0 0.0
        %7700 = vmatpush1.msra.mxu0 0.0
        %7701 = vmatprep.mubr.f32.mxu0 0.0
        %7702 = vmatmul.mubr.f32.gmra.mrb[0].mxu0 %v7093
        %v7703 = vpop.f32.mrb[0].mxu0
        %v7704 = vadd.f32 %v7369, %v7703
        %v7705 = vpop.f32.mrb[0].mxu0
        %7706 = vmatprep.mubr.f32.mxu0 0.0
        %7707 = vmatmul.mubr.f32.gmra.mrb[0].mxu0 %v7096
        %v7708 = vpop.f32.mrb[0].mxu0
        %v7709 = vadd.f32 %v7374, %v7708
        %v7710 = vpop.f32.mrb[0].mxu0
        %7711 = vmatprep.mubr.f32.mxu0 0.0
        %7712 = vmatmul.mubr.f32.gmra.mrb[0].mxu0 %v7099
        %v7713 = vpop.f32.mrb[0].mxu0
        %v7714 = vadd.f32 %v7379, %v7713
        %v7715 = vpop.f32.mrb[0].mxu0
        %7716 = vmatprep.mubr.f32.mxu0 0.0
        %7717 = vmatmul.mubr.f32.gmra.mrb[0].mxu0 %v7102
        %v7718 = vpop.f32.mrb[0].mxu0
        %v7719 = vadd.f32 %v7384, %v7718
        %v7720 = vpop.f32.mrb[0].mxu0
        %7721 = vmatprep.mubr.f32.mxu0 0.0
        %7722 = vmatmul.mubr.f32.gmra.mrb[0].mxu0 %v7105
        %v7723 = vpop.f32.mrb[0].mxu0
        %v7724 = vadd.f32 %v7389, %v7723
        %v7725 = vpop.f32.mrb[0].mxu0
        %7726 = vmatprep.mubr.f32.mxu0 0.0
        %7727 = vmatmul.mubr.f32.gmra.mrb[0].mxu0 %v7108
        %v7728 = vpop.f32.mrb[0].mxu0
        %v7729 = vadd.f32 %v7394, %v7728
        %v7730 = vpop.f32.mrb[0].mxu0
        %7731 = vmatprep.mubr.f32.mxu0 0.0
        %7732 = vmatmul.mubr.f32.gmra.mrb[0].mxu0 %v7111
        %v7733 = vpop.f32.mrb[0].mxu0
        %v7734 = vadd.f32 %v7399, %v7733
        %v7735 = vpop.f32.mrb[0].mxu0
        %7736 = vmatprep.mubr.f32.mxu0 0.0
        %7737 = vmatmul.mubr.f32.gmra.mrb[0].mxu0 %v7114
        %v7738 = vpop.f32.mrb[0].mxu0
        %v7739 = vadd.f32 %v7404, %v7738
        %v7740 = vpop.f32.mrb[0].mxu0
        %7741 = vmatprep.mubr.f32.mxu0 0.0
        %7742 = vmatmul.mubr.f32.gmra.mrb[0].mxu0 %v7117
        %v7743 = vpop.f32.mrb[0].mxu0
        %v7744 = vadd.f32 %v7409, %v7743
        %v7745 = vpop.f32.mrb[0].mxu0
        %7746 = vmatprep.mubr.f32.mxu0 0.0
        %7747 = vmatmul.mubr.f32.gmra.mrb[0].mxu0 %v7120
        %v7748 = vpop.f32.mrb[0].mxu0
        %v7749 = vadd.f32 %v7414, %v7748
        %v7750 = vpop.f32.mrb[0].mxu0
        %7751 = vmatprep.mubr.f32.mxu0 0.0
        %7752 = vmatmul.mubr.f32.gmra.mrb[0].mxu0 %v7123
        %v7753 = vpop.f32.mrb[0].mxu0
        %v7754 = vadd.f32 %v7419, %v7753
        %v7755 = vpop.f32.mrb[0].mxu0
        %7756 = vmatprep.mubr.f32.mxu0 0.0
        %7757 = vmatmul.mubr.f32.gmra.mrb[0].mxu0 %v7126
        %v7758 = vpop.f32.mrb[0].mxu0
        %v7759 = vadd.f32 %v7424, %v7758
        %v7760 = vpop.f32.mrb[0].mxu0
        %7761 = vmatprep.mubr.f32.mxu0 0.0
        %7762 = vmatmul.mubr.f32.gmra.mrb[0].mxu0 %v7129
        %v7763 = vpop.f32.mrb[0].mxu0
        %v7764 = vadd.f32 %v7429, %v7763
        %v7765 = vpop.f32.mrb[0].mxu0
        %7766 = vmatprep.mubr.f32.mxu0 0.0
        %7767 = vmatmul.mubr.f32.gmra.mrb[0].mxu0 %v7132
        %v7768 = vpop.f32.mrb[0].mxu0
        %v7769 = vadd.f32 %v7434, %v7768
        %v7770 = vpop.f32.mrb[0].mxu0
        %7771 = vmatprep.mubr.f32.mxu0 0.0
        %7772 = vmatmul.mubr.f32.gmra.mrb[0].mxu0 %v7135
        %v7773 = vpop.f32.mrb[0].mxu0
        %v7774 = vadd.f32 %v7439, %v7773
        %v7775 = vpop.f32.mrb[0].mxu0
        %7776 = vmatprep.mubr.f32.mxu0 0.0
        %7777 = vmatmul.mubr.f32.gmra.mrb[0].mxu0 %v7138
        %v7778 = vpop.f32.mrb[0].mxu0
        %v7779 = vadd.f32 %v7444, %v7778
        %v7780 = vpop.f32.mrb[0].mxu0
        %7781 = vmatprep.mubr.f32.mxu0 0.0
        %7782 = vmatmul.mubr.f32.gmra.mrb[0].mxu0 %v7141
        %v7783 = vpop.f32.mrb[0].mxu0
        %v7784 = vadd.f32 %v7449, %v7783
        %v7785 = vpop.f32.mrb[0].mxu0
        %7786 = vmatprep.mubr.f32.mxu0 0.0
        %7787 = vmatmul.mubr.f32.gmra.mrb[0].mxu0 %v7144
        %v7788 = vpop.f32.mrb[0].mxu0
        %v7789 = vadd.f32 %v7454, %v7788
        %v7790 = vpop.f32.mrb[0].mxu0
        %7791 = vmatprep.mubr.f32.mxu0 0.0
        %7792 = vmatmul.mubr.f32.gmra.mrb[0].mxu0 %v7147
        %v7793 = vpop.f32.mrb[0].mxu0
        %v7794 = vadd.f32 %v7459, %v7793
        %v7795 = vpop.f32.mrb[0].mxu0
        %7796 = vmatprep.mubr.f32.mxu0 0.0
        %7797 = vmatmul.mubr.f32.gmra.mrb[0].mxu0 %v7150
        %v7798 = vpop.f32.mrb[0].mxu0
        %v7799 = vadd.f32 %v7464, %v7798
        %v7800 = vpop.f32.mrb[0].mxu0
        %7801 = vmatprep.mubr.f32.mxu0 0.0
        %7802 = vmatmul.mubr.f32.gmra.mrb[0].mxu0 %v7153
        %v7803 = vpop.f32.mrb[0].mxu0
        %v7804 = vadd.f32 %v7469, %v7803
        %v7805 = vpop.f32.mrb[0].mxu0
        %7806 = vmatprep.mubr.f32.mxu0 0.0
        %7807 = vmatmul.mubr.f32.gmra.mrb[0].mxu0 %v7156
        %v7808 = vpop.f32.mrb[0].mxu0
        %v7809 = vadd.f32 %v7474, %v7808
        %v7810 = vpop.f32.mrb[0].mxu0
        %7811 = vmatprep.mubr.f32.mxu0 0.0
        %7812 = vmatmul.mubr.f32.gmra.mrb[0].mxu0 %v7159
        %v7813 = vpop.f32.mrb[0].mxu0
        %v7814 = vadd.f32 %v7479, %v7813
        %v7815 = vpop.f32.mrb[0].mxu0
        %7816 = vmatprep.mubr.f32.mxu0 0.0
        %7817 = vmatmul.mubr.f32.gmra.mrb[0].mxu0 %v7162
        %v7818 = vpop.f32.mrb[0].mxu0
        %v7819 = vadd.f32 %v7484, %v7818
        %v7820 = vpop.f32.mrb[0].mxu0
        %7821 = vmatprep.mubr.f32.mxu0 0.0
        %7822 = vmatmul.mubr.f32.gmra.mrb[0].mxu0 %v7165
        %v7823 = vpop.f32.mrb[0].mxu0
        %v7824 = vadd.f32 %v7489, %v7823
        %v7825 = vpop.f32.mrb[0].mxu0
        %7826 = vmatprep.mubr.f32.mxu0 0.0
        %7827 = vmatmul.mubr.f32.gmra.mrb[0].mxu0 %v7168
        %v7828 = vpop.f32.mrb[0].mxu0
        %v7829 = vadd.f32 %v7494, %v7828
        %v7830 = vpop.f32.mrb[0].mxu0
        %7831 = vmatprep.mubr.f32.mxu0 0.0
        %7832 = vmatmul.mubr.f32.gmra.mrb[0].mxu0 %v7171
        %v7833 = vpop.f32.mrb[0].mxu0
        %v7834 = vadd.f32 %v7499, %v7833
        %v7835 = vpop.f32.mrb[0].mxu0
        %7836 = vmatprep.mubr.f32.mxu0 0.0
        %7837 = vmatmul.mubr.f32.gmra.mrb[0].mxu0 %v7174
        %v7838 = vpop.f32.mrb[0].mxu0
        %v7839 = vadd.f32 %v7504, %v7838
        %v7840 = vpop.f32.mrb[0].mxu0
        %7841 = vmatprep.mubr.f32.mxu0 0.0
        %7842 = vmatmul.mubr.f32.gmra.mrb[0].mxu0 %v7177
        %v7843 = vpop.f32.mrb[0].mxu0
        %v7844 = vadd.f32 %v7509, %v7843
        %v7845 = vpop.f32.mrb[0].mxu0
        %7846 = vmatprep.mubr.f32.mxu0 0.0
        %7847 = vmatmul.mubr.f32.gmra.mrb[0].mxu0 %v7180
        %v7848 = vpop.f32.mrb[0].mxu0
        %v7849 = vadd.f32 %v7514, %v7848
        %v7850 = vpop.f32.mrb[0].mxu0
        %7851 = vmatprep.mubr.f32.mxu0 0.0
        %7852 = vmatmul.mubr.f32.gmra.mrb[0].mxu0 %v7183
        %v7853 = vpop.f32.mrb[0].mxu0
        %v7854 = vadd.f32 %v7519, %v7853
        %v7855 = vpop.f32.mrb[0].mxu0
        %7856 = vmatprep.mubr.f32.mxu0 0.0
        %7857 = vmatmul.mubr.f32.gmra.mrb[0].mxu0 %v7186
        %v7858 = vpop.f32.mrb[0].mxu0
        %v7859 = vadd.f32 %v7524, %v7858
        %v7860 = vpop.f32.mrb[0].mxu0
        %7861 = vmatprep.mubr.f32.mxu0 0.0
        %7862 = vmatmul.mubr.f32.gmra.mrb[0].mxu0 %v7189
        %v7863 = vpop.f32.mrb[0].mxu0
        %v7864 = vadd.f32 %v7529, %v7863
        %v7865 = vpop.f32.mrb[0].mxu0
        %7866 = vmatprep.mubr.f32.mxu0 0.0
        %7867 = vmatmul.mubr.f32.gmra.mrb[0].mxu0 %v7192
        %v7868 = vpop.f32.mrb[0].mxu0
        %v7869 = vadd.f32 %v7534, %v7868
        %v7870 = vpop.f32.mrb[0].mxu0
        %7871 = vmatprep.mubr.f32.mxu0 0.0
        %7872 = vmatmul.mubr.f32.gmra.mrb[0].mxu0 %v7195
        %v7873 = vpop.f32.mrb[0].mxu0
        %v7874 = vadd.f32 %v7539, %v7873
        %v7875 = vpop.f32.mrb[0].mxu0
        %7876 = vmatprep.mubr.f32.mxu0 0.0
        %7877 = vmatmul.mubr.f32.gmra.mrb[0].mxu0 %v7198
        %v7878 = vpop.f32.mrb[0].mxu0
        %v7879 = vadd.f32 %v7544, %v7878
        %v7880 = vpop.f32.mrb[0].mxu0
        %7881 = vmatprep.mubr.f32.mxu0 0.0
        %7882 = vmatmul.mubr.f32.gmra.mrb[0].mxu0 %v7201
        %v7883 = vpop.f32.mrb[0].mxu0
        %v7884 = vadd.f32 %v7549, %v7883
        %v7885 = vpop.f32.mrb[0].mxu0
        %7886 = vmatprep.mubr.f32.mxu0 0.0
        %7887 = vmatmul.mubr.f32.gmra.mrb[0].mxu0 %v7204
        %v7888 = vpop.f32.mrb[0].mxu0
        %v7889 = vadd.f32 %v7554, %v7888
        %v7890 = vpop.f32.mrb[0].mxu0
        %7891 = vmatprep.mubr.f32.mxu0 0.0
        %7892 = vmatmul.mubr.f32.gmra.mrb[0].mxu0 %v7207
        %v7893 = vpop.f32.mrb[0].mxu0
        %v7894 = vadd.f32 %v7559, %v7893
        %v7895 = vpop.f32.mrb[0].mxu0
        %7896 = vmatprep.mubr.f32.mxu0 0.0
        %7897 = vmatmul.mubr.f32.gmra.mrb[0].mxu0 %v7210
        %v7898 = vpop.f32.mrb[0].mxu0
        %v7899 = vadd.f32 %v7564, %v7898
        %v7900 = vpop.f32.mrb[0].mxu0
        %7901 = vmatprep.mubr.f32.mxu0 0.0
        %7902 = vmatmul.mubr.f32.gmra.mrb[0].mxu0 %v7213
        %v7903 = vpop.f32.mrb[0].mxu0
        %v7904 = vadd.f32 %v7569, %v7903
        %v7905 = vpop.f32.mrb[0].mxu0
        %7906 = vmatprep.mubr.f32.mxu0 0.0
        %7907 = vmatmul.mubr.f32.gmra.mrb[0].mxu0 %v7216
        %v7908 = vpop.f32.mrb[0].mxu0
        %v7909 = vadd.f32 %v7574, %v7908
        %v7910 = vpop.f32.mrb[0].mxu0
        %7911 = vmatprep.mubr.f32.mxu0 0.0
        %7912 = vmatmul.mubr.f32.gmra.mrb[0].mxu0 %v7219
        %v7913 = vpop.f32.mrb[0].mxu0
        %v7914 = vadd.f32 %v7579, %v7913
        %v7915 = vpop.f32.mrb[0].mxu0
        %7916 = vmatprep.mubr.f32.mxu0 0.0
        %7917 = vmatmul.mubr.f32.gmra.mrb[0].mxu0 %v7222
        %v7918 = vpop.f32.mrb[0].mxu0
        %v7919 = vadd.f32 %v7584, %v7918
        %v7920 = vpop.f32.mrb[0].mxu0
        %7921 = vmatprep.mubr.f32.mxu0 0.0
        %7922 = vmatmul.mubr.f32.gmra.mrb[0].mxu0 %v7225
        %v7923 = vpop.f32.mrb[0].mxu0
        %v7924 = vadd.f32 %v7589, %v7923
        %v7925 = vpop.f32.mrb[0].mxu0
        %7926 = vmatprep.mubr.f32.mxu0 0.0
        %7927 = vmatmul.mubr.f32.gmra.mrb[0].mxu0 %v7228
        %v7928 = vpop.f32.mrb[0].mxu0
        %v7929 = vadd.f32 %v7594, %v7928
        %v7930 = vpop.f32.mrb[0].mxu0
        %7931 = vmatprep.mubr.f32.mxu0 0.0
        %7932 = vmatmul.mubr.f32.gmra.mrb[0].mxu0 %v7231
        %v7933 = vpop.f32.mrb[0].mxu0
        %v7934 = vadd.f32 %v7599, %v7933
        %v7935 = vpop.f32.mrb[0].mxu0
        %7936 = vmatprep.mubr.f32.mxu0 0.0
        %7937 = vmatmul.mubr.f32.gmra.mrb[0].mxu0 %v7234
        %v7938 = vpop.f32.mrb[0].mxu0
        %v7939 = vadd.f32 %v7604, %v7938
        %v7940 = vpop.f32.mrb[0].mxu0
        %7941 = vmatprep.mubr.f32.mxu0 0.0
        %7942 = vmatmul.mubr.f32.gmra.mrb[0].mxu0 %v7237
        %v7943 = vpop.f32.mrb[0].mxu0
        %v7944 = vadd.f32 %v7609, %v7943
        %v7945 = vpop.f32.mrb[0].mxu0
        %7946 = vmatprep.mubr.f32.mxu0 0.0
        %7947 = vmatmul.mubr.f32.gmra.mrb[0].mxu0 %v7240
        %v7948 = vpop.f32.mrb[0].mxu0
        %v7949 = vadd.f32 %v7614, %v7948
        %v7950 = vpop.f32.mrb[0].mxu0
        %7951 = vmatprep.mubr.f32.mxu0 0.0
        %7952 = vmatmul.mubr.f32.gmra.mrb[0].mxu0 %v7243
        %v7953 = vpop.f32.mrb[0].mxu0
        %v7954 = vadd.f32 %v7619, %v7953
        %v7955 = vpop.f32.mrb[0].mxu0
        %7956 = vmatprep.mubr.f32.mxu0 0.0
        %7957 = vmatmul.mubr.f32.gmra.mrb[0].mxu0 %v7246
        %v7958 = vpop.f32.mrb[0].mxu0
        %v7959 = vadd.f32 %v7624, %v7958
        %v7960 = vpop.f32.mrb[0].mxu0
        %7961 = vmatprep.mubr.f32.mxu0 0.0
        %7962 = vmatmul.mubr.f32.gmra.mrb[0].mxu0 %v7249
        %v7963 = vpop.f32.mrb[0].mxu0
        %v7964 = vadd.f32 %v7629, %v7963
        %v7965 = vpop.f32.mrb[0].mxu0
        %7966 = vmatprep.mubr.f32.mxu0 0.0
        %7967 = vmatmul.mubr.f32.gmra.mrb[0].mxu0 %v7252
        %v7968 = vpop.f32.mrb[0].mxu0
        %v7969 = vadd.f32 %v7634, %v7968
        %v7970 = vpop.f32.mrb[0].mxu0
        %7971 = vdwg.mxu0
        %v7972 = vld [vmem:[#allocation5] sm:$0xff]
        %v7973 = vld [vmem:[#allocation5 + $0x8] sm:$0xff]
        %v7974 = vld [vmem:[#allocation5 + $0x10] sm:$0xff]
        %v7975 = vld [vmem:[#allocation5 + $0x18] sm:$0xff]
        %v7976 = vld [vmem:[#allocation5 + $0x20] sm:$0xff]
        %v7977 = vld [vmem:[#allocation5 + $0x28] sm:$0xff]
        %v7978 = vld [vmem:[#allocation5 + $0x30] sm:$0xff]
        %v7979 = vld [vmem:[#allocation5 + $0x38] sm:$0xff]
        %v7980 = vld [vmem:[#allocation5 + $0x40] sm:$0xff]
        %v7981 = vld [vmem:[#allocation5 + $0x48] sm:$0xff]
        %v7982 = vld [vmem:[#allocation5 + $0x50] sm:$0xff]
        %v7983 = vld [vmem:[#allocation5 + $0x58] sm:$0xff]
        %v7984 = vld [vmem:[#allocation5 + $0x60] sm:$0xff]
        %v7985 = vld [vmem:[#allocation5 + $0x68] sm:$0xff]
        %v7986 = vld [vmem:[#allocation5 + $0x70] sm:$0xff]
        %v7987 = vld [vmem:[#allocation5 + $0x78] sm:$0xff]
        %v7988 = vld [vmem:[#allocation5 + $0x80] sm:$0xff]
        %v7989 = vld [vmem:[#allocation5 + $0x88] sm:$0xff]
        %v7990 = vld [vmem:[#allocation5 + $0x90] sm:$0xff]
        %v7991 = vld [vmem:[#allocation5 + $0x98] sm:$0xff]
        %v7992 = vld [vmem:[#allocation5 + $0xa0] sm:$0xff]
        %v7993 = vld [vmem:[#allocation5 + $0xa8] sm:$0xff]
        %v7994 = vld [vmem:[#allocation5 + $0xb0] sm:$0xff]
        %v7995 = vld [vmem:[#allocation5 + $0xb8] sm:$0xff]
        %v7996 = vld [vmem:[#allocation5 + $0xc0] sm:$0xff]
        %v7997 = vld [vmem:[#allocation5 + $0xc8] sm:$0xff]
        %v7998 = vld [vmem:[#allocation5 + $0xd0] sm:$0xff]
        %v7999 = vld [vmem:[#allocation5 + $0xd8] sm:$0xff]
        %v8000 = vld [vmem:[#allocation5 + $0xe0] sm:$0xff]
        %v8001 = vld [vmem:[#allocation5 + $0xe8] sm:$0xff]
        %v8002 = vld [vmem:[#allocation5 + $0xf0] sm:$0xff]
        %v8003 = vld [vmem:[#allocation5 + $0xf8] sm:$0xff]
        %v8004 = vld [vmem:[#allocation5 + $0x100] sm:$0xff]
        %v8005 = vld [vmem:[#allocation5 + $0x108] sm:$0xff]
        %v8006 = vld [vmem:[#allocation5 + $0x110] sm:$0xff]
        %v8007 = vld [vmem:[#allocation5 + $0x118] sm:$0xff]
        %v8008 = vld [vmem:[#allocation5 + $0x120] sm:$0xff]
        %v8009 = vld [vmem:[#allocation5 + $0x128] sm:$0xff]
        %v8010 = vld [vmem:[#allocation5 + $0x130] sm:$0xff]
        %v8011 = vld [vmem:[#allocation5 + $0x138] sm:$0xff]
        %v8012 = vld [vmem:[#allocation5 + $0x140] sm:$0xff]
        %v8013 = vld [vmem:[#allocation5 + $0x148] sm:$0xff]
        %v8014 = vld [vmem:[#allocation5 + $0x150] sm:$0xff]
        %v8015 = vld [vmem:[#allocation5 + $0x158] sm:$0xff]
        %v8016 = vld [vmem:[#allocation5 + $0x160] sm:$0xff]
        %v8017 = vld [vmem:[#allocation5 + $0x168] sm:$0xff]
        %v8018 = vld [vmem:[#allocation5 + $0x170] sm:$0xff]
        %v8019 = vld [vmem:[#allocation5 + $0x178] sm:$0xff]
        %v8020 = vld [vmem:[#allocation5 + $0x180] sm:$0xff]
        %v8021 = vld [vmem:[#allocation5 + $0x188] sm:$0xff]
        %v8022 = vld [vmem:[#allocation5 + $0x190] sm:$0xff]
        %v8023 = vld [vmem:[#allocation5 + $0x198] sm:$0xff]
        %v8024 = vld [vmem:[#allocation5 + $0x1a0] sm:$0xff]
        %v8025 = vld [vmem:[#allocation5 + $0x1a8] sm:$0xff]
        %v8026 = vadd.f32 %v7972, %v7704
        %v8027 = vadd.f32 %v7973, %v7709
        %v8028 = vadd.f32 %v7974, %v7714
        %v8029 = vadd.f32 %v7975, %v7719
        %v8030 = vadd.f32 %v7976, %v7724
        %v8031 = vadd.f32 %v7977, %v7729
        %v8032 = vadd.f32 %v7978, %v7734
        %v8033 = vadd.f32 %v7979, %v7739
        %v8034 = vadd.f32 %v7980, %v7744
        %v8035 = vadd.f32 %v7981, %v7749
        %v8036 = vadd.f32 %v7982, %v7754
        %v8037 = vadd.f32 %v7983, %v7759
        %v8038 = vadd.f32 %v7984, %v7764
        %v8039 = vadd.f32 %v7985, %v7769
        %v8040 = vadd.f32 %v7986, %v7774
        %v8041 = vadd.f32 %v7987, %v7779
        %v8042 = vadd.f32 %v7988, %v7784
        %v8043 = vadd.f32 %v7989, %v7789
        %v8044 = vadd.f32 %v7990, %v7794
        %v8045 = vadd.f32 %v7991, %v7799
        %v8046 = vadd.f32 %v7992, %v7804
        %v8047 = vadd.f32 %v7993, %v7809
        %v8048 = vadd.f32 %v7994, %v7814
        %v8049 = vadd.f32 %v7995, %v7819
        %v8050 = vadd.f32 %v7996, %v7824
        %v8051 = vadd.f32 %v7997, %v7829
        %v8052 = vadd.f32 %v7998, %v7834
        %v8053 = vadd.f32 %v7999, %v7839
        %v8054 = vadd.f32 %v8000, %v7844
        %v8055 = vadd.f32 %v8001, %v7849
        %v8056 = vadd.f32 %v8002, %v7854
        %v8057 = vadd.f32 %v8003, %v7859
        %v8058 = vadd.f32 %v8004, %v7864
        %v8059 = vadd.f32 %v8005, %v7869
        %v8060 = vadd.f32 %v8006, %v7874
        %v8061 = vadd.f32 %v8007, %v7879
        %v8062 = vadd.f32 %v8008, %v7884
        %v8063 = vadd.f32 %v8009, %v7889
        %v8064 = vadd.f32 %v8010, %v7894
        %v8065 = vadd.f32 %v8011, %v7899
        %v8066 = vadd.f32 %v8012, %v7904
        %v8067 = vadd.f32 %v8013, %v7909
        %v8068 = vadd.f32 %v8014, %v7914
        %v8069 = vadd.f32 %v8015, %v7919
        %v8070 = vadd.f32 %v8016, %v7924
        %v8071 = vadd.f32 %v8017, %v7929
        %v8072 = vadd.f32 %v8018, %v7934
        %v8073 = vadd.f32 %v8019, %v7939
        %v8074 = vadd.f32 %v8020, %v7944
        %v8075 = vadd.f32 %v8021, %v7949
        %v8076 = vadd.f32 %v8022, %v7954
        %v8077 = vadd.f32 %v8023, %v7959
        %v8078 = vadd.f32 %v8024, %v7964
        %v8079 = vadd.f32 %v8025, %v7969
        %8080 = vst [vmem:[#allocation5] sm:$0xff] %v8026
        %8081 = vst [vmem:[#allocation5 + $0x8] sm:$0xff] %v8027
        %8082 = vst [vmem:[#allocation5 + $0x10] sm:$0xff] %v8028
        %8083 = vst [vmem:[#allocation5 + $0x18] sm:$0xff] %v8029
        %8084 = vst [vmem:[#allocation5 + $0x20] sm:$0xff] %v8030
        %8085 = vst [vmem:[#allocation5 + $0x28] sm:$0xff] %v8031
        %8086 = vst [vmem:[#allocation5 + $0x30] sm:$0xff] %v8032
        %8087 = vst [vmem:[#allocation5 + $0x38] sm:$0xff] %v8033
        %8088 = vst [vmem:[#allocation5 + $0x40] sm:$0xff] %v8034
        %8089 = vst [vmem:[#allocation5 + $0x48] sm:$0xff] %v8035
        %8090 = vst [vmem:[#allocation5 + $0x50] sm:$0xff] %v8036
        %8091 = vst [vmem:[#allocation5 + $0x58] sm:$0xff] %v8037
        %8092 = vst [vmem:[#allocation5 + $0x60] sm:$0xff] %v8038
        %8093 = vst [vmem:[#allocation5 + $0x68] sm:$0xff] %v8039
        %8094 = vst [vmem:[#allocation5 + $0x70] sm:$0xff] %v8040
        %8095 = vst [vmem:[#allocation5 + $0x78] sm:$0xff] %v8041
        %8096 = vst [vmem:[#allocation5 + $0x80] sm:$0xff] %v8042
        %8097 = vst [vmem:[#allocation5 + $0x88] sm:$0xff] %v8043
        %8098 = vst [vmem:[#allocation5 + $0x90] sm:$0xff] %v8044
        %8099 = vst [vmem:[#allocation5 + $0x98] sm:$0xff] %v8045
        %8100 = vst [vmem:[#allocation5 + $0xa0] sm:$0xff] %v8046
        %8101 = vst [vmem:[#allocation5 + $0xa8] sm:$0xff] %v8047
        %8102 = vst [vmem:[#allocation5 + $0xb0] sm:$0xff] %v8048
        %8103 = vst [vmem:[#allocation5 + $0xb8] sm:$0xff] %v8049
        %8104 = vst [vmem:[#allocation5 + $0xc0] sm:$0xff] %v8050
        %8105 = vst [vmem:[#allocation5 + $0xc8] sm:$0xff] %v8051
        %8106 = vst [vmem:[#allocation5 + $0xd0] sm:$0xff] %v8052
        %8107 = vst [vmem:[#allocation5 + $0xd8] sm:$0xff] %v8053
        %8108 = vst [vmem:[#allocation5 + $0xe0] sm:$0xff] %v8054
        %8109 = vst [vmem:[#allocation5 + $0xe8] sm:$0xff] %v8055
        %8110 = vst [vmem:[#allocation5 + $0xf0] sm:$0xff] %v8056
        %8111 = vst [vmem:[#allocation5 + $0xf8] sm:$0xff] %v8057
        %8112 = vst [vmem:[#allocation5 + $0x100] sm:$0xff] %v8058
        %8113 = vst [vmem:[#allocation5 + $0x108] sm:$0xff] %v8059
        %8114 = vst [vmem:[#allocation5 + $0x110] sm:$0xff] %v8060
        %8115 = vst [vmem:[#allocation5 + $0x118] sm:$0xff] %v8061
        %8116 = vst [vmem:[#allocation5 + $0x120] sm:$0xff] %v8062
        %8117 = vst [vmem:[#allocation5 + $0x128] sm:$0xff] %v8063
        %8118 = vst [vmem:[#allocation5 + $0x130] sm:$0xff] %v8064
        %8119 = vst [vmem:[#allocation5 + $0x138] sm:$0xff] %v8065
        %8120 = vst [vmem:[#allocation5 + $0x140] sm:$0xff] %v8066
        %8121 = vst [vmem:[#allocation5 + $0x148] sm:$0xff] %v8067
        %8122 = vst [vmem:[#allocation5 + $0x150] sm:$0xff] %v8068
        %8123 = vst [vmem:[#allocation5 + $0x158] sm:$0xff] %v8069
        %8124 = vst [vmem:[#allocation5 + $0x160] sm:$0xff] %v8070
        %8125 = vst [vmem:[#allocation5 + $0x168] sm:$0xff] %v8071
        %8126 = vst [vmem:[#allocation5 + $0x170] sm:$0xff] %v8072
        %8127 = vst [vmem:[#allocation5 + $0x178] sm:$0xff] %v8073
        %8128 = vst [vmem:[#allocation5 + $0x180] sm:$0xff] %v8074
        %8129 = vst [vmem:[#allocation5 + $0x188] sm:$0xff] %v8075
        %8130 = vst [vmem:[#allocation5 + $0x190] sm:$0xff] %v8076
        %8131 = vst [vmem:[#allocation5 + $0x198] sm:$0xff] %v8077
        %8132 = vst [vmem:[#allocation5 + $0x1a0] sm:$0xff] %v8078
        %8133 = vst [vmem:[#allocation5 + $0x1a8] sm:$0xff] %v8079
        %v8134 = vld [vmem:[#allocation3 + $0xa8] sm:$0xff]
        %v8135 = vld [vmem:[#allocation3 + $0xb0] sm:$0xff]
        %v8136 = vld [vmem:[#allocation3 + $0xb8] sm:$0xff]
        %v8137 = vld [vmem:[#allocation3 + $0xc0] sm:$0xff]
        %v8138 = vld [vmem:[#allocation3 + $0xc8] sm:$0xff]
        %v8139 = vld [vmem:[#allocation3 + $0xd0] sm:$0xff]
        %v8140 = vld [vmem:[#allocation3 + $0xd8] sm:$0xff]
        %v8141 = vld [vmem:[#allocation3 + $0xe0] sm:$0xff]
        %v8142 = vld [vmem:[#allocation3 + $0xe8] sm:$0xff]
        %v8143 = vld [vmem:[#allocation3 + $0xf0] sm:$0xff]
        %v8144 = vld [vmem:[#allocation3 + $0xf8] sm:$0xff]
        %v8145 = vld [vmem:[#allocation3 + $0x100] sm:$0xff]
        %v8146 = vld [vmem:[#allocation3 + $0x108] sm:$0xff]
        %v8147 = vld [vmem:[#allocation3 + $0x110] sm:$0xff]
        %v8148 = vld [vmem:[#allocation3 + $0x118] sm:$0xff]
        %v8149 = vld [vmem:[#allocation3 + $0x120] sm:$0xff]
        %v8150 = vld [vmem:[#allocation3 + $0x128] sm:$0xff]
        %v8151 = vld [vmem:[#allocation3 + $0x130] sm:$0xff]
        %v8152 = vld [vmem:[#allocation3 + $0x138] sm:$0xff]
        %v8153 = vld [vmem:[#allocation3 + $0x140] sm:$0xff]
        %v8154 = vld [vmem:[#allocation3 + $0x148] sm:$0xff]
        %v8155 = vld [vmem:[#allocation3 + $0x150] sm:$0xff]
        %v8156 = vld [vmem:[#allocation3 + $0x158] sm:$0xff]
        %v8157 = vld [vmem:[#allocation3 + $0x160] sm:$0xff]
        %v8158 = vld [vmem:[#allocation3 + $0x168] sm:$0xff]
        %v8159 = vld [vmem:[#allocation3 + $0x170] sm:$0xff]
        %v8160 = vld [vmem:[#allocation3 + $0x178] sm:$0xff]
        %v8161 = vld [vmem:[#allocation3 + $0x180] sm:$0xff]
        %v8162 = vld [vmem:[#allocation3 + $0x188] sm:$0xff]
        %v8163 = vld [vmem:[#allocation3 + $0x190] sm:$0xff]
        %v8164 = vld [vmem:[#allocation3 + $0x198] sm:$0xff]
        %v8165 = vld [vmem:[#allocation3 + $0x1a0] sm:$0xff]
        %v8166 = vld [vmem:[#allocation3 + $0x1a8] sm:$0xff]
        %v8167 = vld [vmem:[#allocation3 + $0x1b0] sm:$0xff]
        %v8168 = vld [vmem:[#allocation3 + $0x1b8] sm:$0xff]
        %v8169 = vld [vmem:[#allocation3 + $0x1c0] sm:$0xff]
        %v8170 = vld [vmem:[#allocation3 + $0x1c8] sm:$0xff]
        %v8171 = vld [vmem:[#allocation3 + $0x1d0] sm:$0xff]
        %v8172 = vld [vmem:[#allocation3 + $0x1d8] sm:$0xff]
        %v8173 = vld [vmem:[#allocation3 + $0x1e0] sm:$0xff]
        %v8174 = vld [vmem:[#allocation3 + $0x1e8] sm:$0xff]
        %v8175 = vld [vmem:[#allocation3 + $0x1f0] sm:$0xff]
        %v8176 = vld [vmem:[#allocation3 + $0x1f8] sm:$0xff]
        %v8177 = vld [vmem:[#allocation3 + $0x200] sm:$0xff]
        %v8178 = vld [vmem:[#allocation3 + $0x208] sm:$0xff]
        %v8179 = vld [vmem:[#allocation3 + $0x210] sm:$0xff]
        %v8180 = vld [vmem:[#allocation3 + $0x218] sm:$0xff]
        %v8181 = vld [vmem:[#allocation3 + $0x220] sm:$0xff]
        %v8182 = vld [vmem:[#allocation3 + $0x228] sm:$0xff]
        %v8183 = vld [vmem:[#allocation3 + $0x230] sm:$0xff]
        %v8184 = vld [vmem:[#allocation3 + $0x238] sm:$0xff]
        %v8185 = vld [vmem:[#allocation3 + $0x240] sm:$0xff]
        %v8186 = vld [vmem:[#allocation3 + $0x248] sm:$0xff]
        %v8187 = vld [vmem:[#allocation3 + $0x250] sm:$0xff]
        %v8188 = vld [vmem:[#allocation3 + $0x258] sm:$0xff]
        %v8189 = vld [vmem:[#allocation3 + $0x260] sm:$0xff]
        %v8190 = vld [vmem:[#allocation3 + $0x268] sm:$0xff]
        %v8191 = vld [vmem:[#allocation3 + $0x270] sm:$0xff]
        %v8192 = vld [vmem:[#allocation3 + $0x278] sm:$0xff]
        %v8193 = vld [vmem:[#allocation3 + $0x280] sm:$0xff]
        %v8194 = vld [vmem:[#allocation3 + $0x288] sm:$0xff]
        %v8195 = vld [vmem:[#allocation3 + $0x290] sm:$0xff]
        %v8196 = vld [vmem:[#allocation3 + $0x298] sm:$0xff]
        %v8197 = vld [vmem:[#allocation3 + $0x2a0] sm:$0xff]
        %v8198 = vld [vmem:[#allocation3 + $0x2a8] sm:$0xff]
        %v8199 = vld [vmem:[#allocation3 + $0x2b0] sm:$0xff]
        %v8200 = vld [vmem:[#allocation3 + $0x2b8] sm:$0xff]
        %v8201 = vld [vmem:[#allocation3 + $0x2c0] sm:$0xff]
        %v8202 = vld [vmem:[#allocation3 + $0x2c8] sm:$0xff]
        %v8203 = vld [vmem:[#allocation3 + $0x2d0] sm:$0xff]
        %v8204 = vld [vmem:[#allocation3 + $0x2d8] sm:$0xff]
        %v8205 = vld [vmem:[#allocation3 + $0x2e0] sm:$0xff]
        %v8206 = vld [vmem:[#allocation3 + $0x2e8] sm:$0xff]
        %v8207 = vld [vmem:[#allocation3 + $0x2f0] sm:$0xff]
        %v8208 = vld [vmem:[#allocation3 + $0x2f8] sm:$0xff]
        %v8209 = vld [vmem:[#allocation3 + $0x300] sm:$0xff]
        %v8210 = vld [vmem:[#allocation3 + $0x308] sm:$0xff]
        %v8211 = vld [vmem:[#allocation3 + $0x310] sm:$0xff]
        %v8212 = vld [vmem:[#allocation3 + $0x318] sm:$0xff]
        %v8213 = vld [vmem:[#allocation3 + $0x320] sm:$0xff]
        %v8214 = vld [vmem:[#allocation3 + $0x328] sm:$0xff]
        %v8215 = vld [vmem:[#allocation3 + $0x330] sm:$0xff]
        %v8216 = vld [vmem:[#allocation3 + $0x338] sm:$0xff]
        %v8217 = vld [vmem:[#allocation3 + $0x340] sm:$0xff]
        %v8218 = vld [vmem:[#allocation3 + $0x348] sm:$0xff]
        %v8219 = vld [vmem:[#allocation3 + $0x350] sm:$0xff]
        %v8220 = vld [vmem:[#allocation3 + $0x358] sm:$0xff]
        %v8221 = vld [vmem:[#allocation3 + $0x360] sm:$0xff]
        %v8222 = vld [vmem:[#allocation3 + $0x368] sm:$0xff]
        %v8223 = vld [vmem:[#allocation3 + $0x370] sm:$0xff]
        %v8224 = vld [vmem:[#allocation3 + $0x378] sm:$0xff]
        %v8225 = vld [vmem:[#allocation3 + $0x380] sm:$0xff]
        %v8226 = vld [vmem:[#allocation3 + $0x388] sm:$0xff]
        %v8227 = vld [vmem:[#allocation3 + $0x390] sm:$0xff]
        %v8228 = vld [vmem:[#allocation3 + $0x398] sm:$0xff]
        %v8229 = vld [vmem:[#allocation3 + $0x3a0] sm:$0xff]
        %v8230 = vld [vmem:[#allocation3 + $0x3a8] sm:$0xff]
        %v8231 = vld [vmem:[#allocation3 + $0x3b0] sm:$0xff]
        %v8232 = vld [vmem:[#allocation3 + $0x3b8] sm:$0xff]
        %v8233 = vld [vmem:[#allocation3 + $0x3c0] sm:$0xff]
        %v8234 = vld [vmem:[#allocation3 + $0x3c8] sm:$0xff]
        %v8235 = vld [vmem:[#allocation3 + $0x3d0] sm:$0xff]
        %v8236 = vld [vmem:[#allocation3 + $0x3d8] sm:$0xff]
        %v8237 = vld [vmem:[#allocation3 + $0x3e0] sm:$0xff]
        %v8238 = vld [vmem:[#allocation3 + $0x3e8] sm:$0xff]
        %v8239 = vld [vmem:[#allocation3 + $0x3f0] sm:$0xff]
        %v8240 = vld [vmem:[#allocation3 + $0x3f8] sm:$0xff]
        %v8241 = vld [vmem:[#allocation3 + $0x400] sm:$0xff]
        %v8242 = vld [vmem:[#allocation3 + $0x408] sm:$0xff]
        %v8243 = vld [vmem:[#allocation3 + $0x410] sm:$0xff]
        %v8244 = vld [vmem:[#allocation3 + $0x418] sm:$0xff]
        %v8245 = vld [vmem:[#allocation3 + $0x420] sm:$0xff]
        %v8246 = vld [vmem:[#allocation3 + $0x428] sm:$0xff]
        %v8247 = vld [vmem:[#allocation3 + $0x430] sm:$0xff]
        %v8248 = vld [vmem:[#allocation3 + $0x438] sm:$0xff]
        %v8249 = vld [vmem:[#allocation3 + $0x440] sm:$0xff]
        %v8250 = vld [vmem:[#allocation3 + $0x448] sm:$0xff]
        %v8251 = vld [vmem:[#allocation3 + $0x450] sm:$0xff]
        %v8252 = vld [vmem:[#allocation3 + $0x458] sm:$0xff]
        %v8253 = vld [vmem:[#allocation3 + $0x460] sm:$0xff]
        %v8254 = vld [vmem:[#allocation3 + $0x468] sm:$0xff]
        %v8255 = vld [vmem:[#allocation3 + $0x470] sm:$0xff]
        %v8256 = vld [vmem:[#allocation3 + $0x478] sm:$0xff]
        %v8257 = vld [vmem:[#allocation3 + $0x480] sm:$0xff]
        %v8258 = vld [vmem:[#allocation3 + $0x488] sm:$0xff]
        %v8259 = vld [vmem:[#allocation3 + $0x490] sm:$0xff]
        %v8260 = vld [vmem:[#allocation3 + $0x498] sm:$0xff]
        %v8261 = vld [vmem:[#allocation3 + $0x4a0] sm:$0xff]
        %v8262 = vld [vmem:[#allocation3 + $0x4a8] sm:$0xff]
        %v8263 = vld [vmem:[#allocation3 + $0x4b0] sm:$0xff]
        %v8264 = vld [vmem:[#allocation3 + $0x4b8] sm:$0xff]
        %v8265 = vld [vmem:[#allocation3 + $0x4c0] sm:$0xff]
        %v8266 = vld [vmem:[#allocation3 + $0x4c8] sm:$0xff]
        %v8267 = vld [vmem:[#allocation3 + $0x4d0] sm:$0xff]
        %v8268 = vld [vmem:[#allocation3 + $0x4d8] sm:$0xff]
        %v8269 = vld [vmem:[#allocation3 + $0x4e0] sm:$0xff]
        %v8270 = vld [vmem:[#allocation3 + $0x4e8] sm:$0xff]
        %v8271 = vld [vmem:[#allocation3 + $0x4f0] sm:$0xff]
        %v8272 = vld [vmem:[#allocation3 + $0x4f8] sm:$0xff]
        %v8273 = vld [vmem:[#allocation3 + $0x500] sm:$0xff]
        %v8274 = vld [vmem:[#allocation3 + $0x508] sm:$0xff]
        %v8275 = vld [vmem:[#allocation3 + $0x510] sm:$0xff]
        %v8276 = vld [vmem:[#allocation3 + $0x518] sm:$0xff]
        %v8277 = vld [vmem:[#allocation3 + $0x520] sm:$0xff]
        %v8278 = vld [vmem:[#allocation3 + $0x528] sm:$0xff]
        %v8279 = vld [vmem:[#allocation3 + $0x530] sm:$0xff]
        %v8280 = vld [vmem:[#allocation3 + $0x538] sm:$0xff]
        %v8281 = vld [vmem:[#allocation3 + $0x540] sm:$0xff]
        %v8282 = vld [vmem:[#allocation3 + $0x548] sm:$0xff]
        %v8283 = vld [vmem:[#allocation3 + $0x550] sm:$0xff]
        %v8284 = vld [vmem:[#allocation3 + $0x558] sm:$0xff]
        %v8285 = vld [vmem:[#allocation3 + $0x560] sm:$0xff]
        %v8286 = vld [vmem:[#allocation3 + $0x568] sm:$0xff]
        %v8287 = vld [vmem:[#allocation3 + $0x570] sm:$0xff]
        %v8288 = vld [vmem:[#allocation3 + $0x578] sm:$0xff]
        %v8289 = vld [vmem:[#allocation3 + $0x580] sm:$0xff]
        %v8290 = vld [vmem:[#allocation3 + $0x588] sm:$0xff]
        %v8291 = vld [vmem:[#allocation3 + $0x590] sm:$0xff]
        %v8292 = vld [vmem:[#allocation3 + $0x598] sm:$0xff]
        %v8293 = vld [vmem:[#allocation3 + $0x5a0] sm:$0xff]
        %v8294 = vld [vmem:[#allocation3 + $0x5a8] sm:$0xff]
        %v8295 = vld [vmem:[#allocation3 + $0x5b0] sm:$0xff]
        %s8296 = scalar_lea.vmem [#allocation11], 768
        %v8297 = vld [vmem:[%s8296] sm:$0xff]
        %v8298 = vld [vmem:[%s8296 + $0x8] sm:$0xff]
        %v8299 = vld [vmem:[%s8296 + $0x10] sm:$0xff]
        %v8300 = vld [vmem:[%s8296 + $0x18] sm:$0xff]
        %v8301 = vld [vmem:[%s8296 + $0x20] sm:$0xff]
        %v8302 = vld [vmem:[%s8296 + $0x28] sm:$0xff]
        %v8303 = vld [vmem:[%s8296 + $0x30] sm:$0xff]
        %v8304 = vld [vmem:[%s8296 + $0x38] sm:$0xff]
        %v8305 = vld [vmem:[%s8296 + $0x40] sm:$0xff]
        %v8306 = vld [vmem:[%s8296 + $0x48] sm:$0xff]
        %v8307 = vld [vmem:[%s8296 + $0x50] sm:$0xff]
        %v8308 = vld [vmem:[%s8296 + $0x58] sm:$0xff]
        %v8309 = vld [vmem:[%s8296 + $0x60] sm:$0xff]
        %v8310 = vld [vmem:[%s8296 + $0x68] sm:$0xff]
        %v8311 = vld [vmem:[%s8296 + $0x70] sm:$0xff]
        %v8312 = vld [vmem:[%s8296 + $0x78] sm:$0xff]
        %v8313 = vld [vmem:[%s8296 + $0x80] sm:$0xff]
        %v8314 = vld [vmem:[%s8296 + $0x88] sm:$0xff]
        %v8315 = vld [vmem:[%s8296 + $0x90] sm:$0xff]
        %v8316 = vld [vmem:[%s8296 + $0x98] sm:$0xff]
        %v8317 = vld [vmem:[%s8296 + $0xa0] sm:$0xff]
        %v8318 = vld [vmem:[%s8296 + $0xa8] sm:$0xff]
        %v8319 = vld [vmem:[%s8296 + $0xb0] sm:$0xff]
        %v8320 = vld [vmem:[%s8296 + $0xb8] sm:$0xff]
        %v8321 = vld [vmem:[%s8296 + $0xc0] sm:$0xff]
        %v8322 = vld [vmem:[%s8296 + $0xc8] sm:$0xff]
        %v8323 = vld [vmem:[%s8296 + $0xd0] sm:$0xff]
        %v8324 = vld [vmem:[%s8296 + $0xd8] sm:$0xff]
        %v8325 = vld [vmem:[%s8296 + $0xe0] sm:$0xff]
        %v8326 = vld [vmem:[%s8296 + $0xe8] sm:$0xff]
        %v8327 = vld [vmem:[%s8296 + $0xf0] sm:$0xff]
        %v8328 = vld [vmem:[%s8296 + $0xf8] sm:$0xff]
        %v8329 = vld [vmem:[%s8296 + $0x100] sm:$0xff]
        %v8330 = vld [vmem:[%s8296 + $0x108] sm:$0xff]
        %v8331 = vld [vmem:[%s8296 + $0x110] sm:$0xff]
        %v8332 = vld [vmem:[%s8296 + $0x118] sm:$0xff]
        %v8333 = vld [vmem:[%s8296 + $0x120] sm:$0xff]
        %v8334 = vld [vmem:[%s8296 + $0x128] sm:$0xff]
        %v8335 = vld [vmem:[%s8296 + $0x130] sm:$0xff]
        %v8336 = vld [vmem:[%s8296 + $0x138] sm:$0xff]
        %v8337 = vld [vmem:[%s8296 + $0x140] sm:$0xff]
        %v8338 = vld [vmem:[%s8296 + $0x148] sm:$0xff]
        %v8339 = vld [vmem:[%s8296 + $0x150] sm:$0xff]
        %v8340 = vld [vmem:[%s8296 + $0x158] sm:$0xff]
        %v8341 = vld [vmem:[%s8296 + $0x160] sm:$0xff]
        %v8342 = vld [vmem:[%s8296 + $0x168] sm:$0xff]
        %v8343 = vld [vmem:[%s8296 + $0x170] sm:$0xff]
        %v8344 = vld [vmem:[%s8296 + $0x178] sm:$0xff]
        %8345 = vmatprep.subr.mxu0 0.0
        %8346 = vmatpush1.msra.mxu0 %v8297
        %8347 = vmatprep.subr.mxu0 0.0
        %8348 = vmatpush1.msra.mxu0 %v8298
        %8349 = vmatprep.subr.mxu0 0.0
        %8350 = vmatpush1.msra.mxu0 %v8299
        %8351 = vmatprep.subr.mxu0 0.0
        %8352 = vmatpush1.msra.mxu0 %v8300
        %8353 = vmatprep.subr.mxu0 0.0
        %8354 = vmatpush1.msra.mxu0 %v8301
        %8355 = vmatprep.subr.mxu0 0.0
        %8356 = vmatpush1.msra.mxu0 %v8302
        %8357 = vmatprep.subr.mxu0 0.0
        %8358 = vmatpush1.msra.mxu0 %v8303
        %8359 = vmatprep.subr.mxu0 0.0
        %8360 = vmatpush1.msra.mxu0 %v8304
        %8361 = vmatprep.subr.mxu0 0.0
        %8362 = vmatpush1.msra.mxu0 %v8305
        %8363 = vmatprep.subr.mxu0 0.0
        %8364 = vmatpush1.msra.mxu0 %v8306
        %8365 = vmatprep.subr.mxu0 0.0
        %8366 = vmatpush1.msra.mxu0 %v8307
        %8367 = vmatprep.subr.mxu0 0.0
        %8368 = vmatpush1.msra.mxu0 %v8308
        %8369 = vmatprep.subr.mxu0 0.0
        %8370 = vmatpush1.msra.mxu0 %v8309
        %8371 = vmatprep.subr.mxu0 0.0
        %8372 = vmatpush1.msra.mxu0 %v8310
        %8373 = vmatprep.subr.mxu0 0.0
        %8374 = vmatpush1.msra.mxu0 %v8311
        %8375 = vmatprep.subr.mxu0 0.0
        %8376 = vmatpush1.msra.mxu0 %v8312
        %8377 = vmatprep.subr.mxu0 0.0
        %8378 = vmatpush1.msra.mxu0 %v8313
        %8379 = vmatprep.subr.mxu0 0.0
        %8380 = vmatpush1.msra.mxu0 %v8314
        %8381 = vmatprep.subr.mxu0 0.0
        %8382 = vmatpush1.msra.mxu0 %v8315
        %8383 = vmatprep.subr.mxu0 0.0
        %8384 = vmatpush1.msra.mxu0 %v8316
        %8385 = vmatprep.subr.mxu0 0.0
        %8386 = vmatpush1.msra.mxu0 %v8317
        %8387 = vmatprep.subr.mxu0 0.0
        %8388 = vmatpush1.msra.mxu0 %v8318
        %8389 = vmatprep.subr.mxu0 0.0
        %8390 = vmatpush1.msra.mxu0 %v8319
        %8391 = vmatprep.subr.mxu0 0.0
        %8392 = vmatpush1.msra.mxu0 %v8320
        %8393 = vmatprep.subr.mxu0 0.0
        %8394 = vmatpush1.msra.mxu0 %v8321
        %8395 = vmatprep.subr.mxu0 0.0
        %8396 = vmatpush1.msra.mxu0 %v8322
        %8397 = vmatprep.subr.mxu0 0.0
        %8398 = vmatpush1.msra.mxu0 %v8323
        %8399 = vmatprep.subr.mxu0 0.0
        %8400 = vmatpush1.msra.mxu0 %v8324
        %8401 = vmatprep.subr.mxu0 0.0
        %8402 = vmatpush1.msra.mxu0 %v8325
        %8403 = vmatprep.subr.mxu0 0.0
        %8404 = vmatpush1.msra.mxu0 %v8326
        %8405 = vmatprep.subr.mxu0 0.0
        %8406 = vmatpush1.msra.mxu0 %v8327
        %8407 = vmatprep.subr.mxu0 0.0
        %8408 = vmatpush1.msra.mxu0 %v8328
        %8409 = vmatprep.mubr.f32.mxu0 %v8135
        %8410 = vmatmul.mubr.f32.gmra.mrb[0].mxu0 %v8134
        %v8411 = vpop.f32.mrb[0].mxu0
        %v8412 = vadd.f32 0.0, %v8411
        %v8413 = vpop.f32.mrb[0].mxu0
        %8414 = vmatprep.mubr.f32.mxu0 %v8138
        %8415 = vmatmul.mubr.f32.gmra.mrb[0].mxu0 %v8137
        %v8416 = vpop.f32.mrb[0].mxu0
        %v8417 = vadd.f32 0.0, %v8416
        %v8418 = vpop.f32.mrb[0].mxu0
        %8419 = vmatprep.mubr.f32.mxu0 %v8141
        %8420 = vmatmul.mubr.f32.gmra.mrb[0].mxu0 %v8140
        %v8421 = vpop.f32.mrb[0].mxu0
        %v8422 = vadd.f32 0.0, %v8421
        %v8423 = vpop.f32.mrb[0].mxu0
        %8424 = vmatprep.mubr.f32.mxu0 %v8144
        %8425 = vmatmul.mubr.f32.gmra.mrb[0].mxu0 %v8143
        %v8426 = vpop.f32.mrb[0].mxu0
        %v8427 = vadd.f32 0.0, %v8426
        %v8428 = vpop.f32.mrb[0].mxu0
        %8429 = vmatprep.mubr.f32.mxu0 %v8147
        %8430 = vmatmul.mubr.f32.gmra.mrb[0].mxu0 %v8146
        %v8431 = vpop.f32.mrb[0].mxu0
        %v8432 = vadd.f32 0.0, %v8431
        %v8433 = vpop.f32.mrb[0].mxu0
        %8434 = vmatprep.mubr.f32.mxu0 %v8150
        %8435 = vmatmul.mubr.f32.gmra.mrb[0].mxu0 %v8149
        %v8436 = vpop.f32.mrb[0].mxu0
        %v8437 = vadd.f32 0.0, %v8436
        %v8438 = vpop.f32.mrb[0].mxu0
        %8439 = vmatprep.mubr.f32.mxu0 %v8153
        %8440 = vmatmul.mubr.f32.gmra.mrb[0].mxu0 %v8152
        %v8441 = vpop.f32.mrb[0].mxu0
        %v8442 = vadd.f32 0.0, %v8441
        %v8443 = vpop.f32.mrb[0].mxu0
        %8444 = vmatprep.mubr.f32.mxu0 %v8156
        %8445 = vmatmul.mubr.f32.gmra.mrb[0].mxu0 %v8155
        %v8446 = vpop.f32.mrb[0].mxu0
        %v8447 = vadd.f32 0.0, %v8446
        %v8448 = vpop.f32.mrb[0].mxu0
        %8449 = vmatprep.mubr.f32.mxu0 %v8159
        %8450 = vmatmul.mubr.f32.gmra.mrb[0].mxu0 %v8158
        %v8451 = vpop.f32.mrb[0].mxu0
        %v8452 = vadd.f32 0.0, %v8451
        %v8453 = vpop.f32.mrb[0].mxu0
        %8454 = vmatprep.mubr.f32.mxu0 %v8162
        %8455 = vmatmul.mubr.f32.gmra.mrb[0].mxu0 %v8161
        %v8456 = vpop.f32.mrb[0].mxu0
        %v8457 = vadd.f32 0.0, %v8456
        %v8458 = vpop.f32.mrb[0].mxu0
        %8459 = vmatprep.mubr.f32.mxu0 %v8165
        %8460 = vmatmul.mubr.f32.gmra.mrb[0].mxu0 %v8164
        %v8461 = vpop.f32.mrb[0].mxu0
        %v8462 = vadd.f32 0.0, %v8461
        %v8463 = vpop.f32.mrb[0].mxu0
        %8464 = vmatprep.mubr.f32.mxu0 %v8168
        %8465 = vmatmul.mubr.f32.gmra.mrb[0].mxu0 %v8167
        %v8466 = vpop.f32.mrb[0].mxu0
        %v8467 = vadd.f32 0.0, %v8466
        %v8468 = vpop.f32.mrb[0].mxu0
        %8469 = vmatprep.mubr.f32.mxu0 %v8171
        %8470 = vmatmul.mubr.f32.gmra.mrb[0].mxu0 %v8170
        %v8471 = vpop.f32.mrb[0].mxu0
        %v8472 = vadd.f32 0.0, %v8471
        %v8473 = vpop.f32.mrb[0].mxu0
        %8474 = vmatprep.mubr.f32.mxu0 %v8174
        %8475 = vmatmul.mubr.f32.gmra.mrb[0].mxu0 %v8173
        %v8476 = vpop.f32.mrb[0].mxu0
        %v8477 = vadd.f32 0.0, %v8476
        %v8478 = vpop.f32.mrb[0].mxu0
        %8479 = vmatprep.mubr.f32.mxu0 %v8177
        %8480 = vmatmul.mubr.f32.gmra.mrb[0].mxu0 %v8176
        %v8481 = vpop.f32.mrb[0].mxu0
        %v8482 = vadd.f32 0.0, %v8481
        %v8483 = vpop.f32.mrb[0].mxu0
        %8484 = vmatprep.mubr.f32.mxu0 %v8180
        %8485 = vmatmul.mubr.f32.gmra.mrb[0].mxu0 %v8179
        %v8486 = vpop.f32.mrb[0].mxu0
        %v8487 = vadd.f32 0.0, %v8486
        %v8488 = vpop.f32.mrb[0].mxu0
        %8489 = vmatprep.mubr.f32.mxu0 %v8183
        %8490 = vmatmul.mubr.f32.gmra.mrb[0].mxu0 %v8182
        %v8491 = vpop.f32.mrb[0].mxu0
        %v8492 = vadd.f32 0.0, %v8491
        %v8493 = vpop.f32.mrb[0].mxu0
        %8494 = vmatprep.mubr.f32.mxu0 %v8186
        %8495 = vmatmul.mubr.f32.gmra.mrb[0].mxu0 %v8185
        %v8496 = vpop.f32.mrb[0].mxu0
        %v8497 = vadd.f32 0.0, %v8496
        %v8498 = vpop.f32.mrb[0].mxu0
        %8499 = vmatprep.mubr.f32.mxu0 %v8189
        %8500 = vmatmul.mubr.f32.gmra.mrb[0].mxu0 %v8188
        %v8501 = vpop.f32.mrb[0].mxu0
        %v8502 = vadd.f32 0.0, %v8501
        %v8503 = vpop.f32.mrb[0].mxu0
        %8504 = vmatprep.mubr.f32.mxu0 %v8192
        %8505 = vmatmul.mubr.f32.gmra.mrb[0].mxu0 %v8191
        %v8506 = vpop.f32.mrb[0].mxu0
        %v8507 = vadd.f32 0.0, %v8506
        %v8508 = vpop.f32.mrb[0].mxu0
        %8509 = vmatprep.mubr.f32.mxu0 %v8195
        %8510 = vmatmul.mubr.f32.gmra.mrb[0].mxu0 %v8194
        %v8511 = vpop.f32.mrb[0].mxu0
        %v8512 = vadd.f32 0.0, %v8511
        %v8513 = vpop.f32.mrb[0].mxu0
        %8514 = vmatprep.mubr.f32.mxu0 %v8198
        %8515 = vmatmul.mubr.f32.gmra.mrb[0].mxu0 %v8197
        %v8516 = vpop.f32.mrb[0].mxu0
        %v8517 = vadd.f32 0.0, %v8516
        %v8518 = vpop.f32.mrb[0].mxu0
        %8519 = vmatprep.mubr.f32.mxu0 %v8201
        %8520 = vmatmul.mubr.f32.gmra.mrb[0].mxu0 %v8200
        %v8521 = vpop.f32.mrb[0].mxu0
        %v8522 = vadd.f32 0.0, %v8521
        %v8523 = vpop.f32.mrb[0].mxu0
        %8524 = vmatprep.mubr.f32.mxu0 %v8204
        %8525 = vmatmul.mubr.f32.gmra.mrb[0].mxu0 %v8203
        %v8526 = vpop.f32.mrb[0].mxu0
        %v8527 = vadd.f32 0.0, %v8526
        %v8528 = vpop.f32.mrb[0].mxu0
        %8529 = vmatprep.mubr.f32.mxu0 %v8207
        %8530 = vmatmul.mubr.f32.gmra.mrb[0].mxu0 %v8206
        %v8531 = vpop.f32.mrb[0].mxu0
        %v8532 = vadd.f32 0.0, %v8531
        %v8533 = vpop.f32.mrb[0].mxu0
        %8534 = vmatprep.mubr.f32.mxu0 %v8210
        %8535 = vmatmul.mubr.f32.gmra.mrb[0].mxu0 %v8209
        %v8536 = vpop.f32.mrb[0].mxu0
        %v8537 = vadd.f32 0.0, %v8536
        %v8538 = vpop.f32.mrb[0].mxu0
        %8539 = vmatprep.mubr.f32.mxu0 %v8213
        %8540 = vmatmul.mubr.f32.gmra.mrb[0].mxu0 %v8212
        %v8541 = vpop.f32.mrb[0].mxu0
        %v8542 = vadd.f32 0.0, %v8541
        %v8543 = vpop.f32.mrb[0].mxu0
        %8544 = vmatprep.mubr.f32.mxu0 %v8216
        %8545 = vmatmul.mubr.f32.gmra.mrb[0].mxu0 %v8215
        %v8546 = vpop.f32.mrb[0].mxu0
        %v8547 = vadd.f32 0.0, %v8546
        %v8548 = vpop.f32.mrb[0].mxu0
        %8549 = vmatprep.mubr.f32.mxu0 %v8219
        %8550 = vmatmul.mubr.f32.gmra.mrb[0].mxu0 %v8218
        %v8551 = vpop.f32.mrb[0].mxu0
        %v8552 = vadd.f32 0.0, %v8551
        %v8553 = vpop.f32.mrb[0].mxu0
        %8554 = vmatprep.mubr.f32.mxu0 %v8222
        %8555 = vmatmul.mubr.f32.gmra.mrb[0].mxu0 %v8221
        %v8556 = vpop.f32.mrb[0].mxu0
        %v8557 = vadd.f32 0.0, %v8556
        %v8558 = vpop.f32.mrb[0].mxu0
        %8559 = vmatprep.mubr.f32.mxu0 %v8225
        %8560 = vmatmul.mubr.f32.gmra.mrb[0].mxu0 %v8224
        %v8561 = vpop.f32.mrb[0].mxu0
        %v8562 = vadd.f32 0.0, %v8561
        %v8563 = vpop.f32.mrb[0].mxu0
        %8564 = vmatprep.mubr.f32.mxu0 %v8228
        %8565 = vmatmul.mubr.f32.gmra.mrb[0].mxu0 %v8227
        %v8566 = vpop.f32.mrb[0].mxu0
        %v8567 = vadd.f32 0.0, %v8566
        %v8568 = vpop.f32.mrb[0].mxu0
        %8569 = vmatprep.mubr.f32.mxu0 %v8231
        %8570 = vmatmul.mubr.f32.gmra.mrb[0].mxu0 %v8230
        %v8571 = vpop.f32.mrb[0].mxu0
        %v8572 = vadd.f32 0.0, %v8571
        %v8573 = vpop.f32.mrb[0].mxu0
        %8574 = vmatprep.mubr.f32.mxu0 %v8234
        %8575 = vmatmul.mubr.f32.gmra.mrb[0].mxu0 %v8233
        %v8576 = vpop.f32.mrb[0].mxu0
        %v8577 = vadd.f32 0.0, %v8576
        %v8578 = vpop.f32.mrb[0].mxu0
        %8579 = vmatprep.mubr.f32.mxu0 %v8237
        %8580 = vmatmul.mubr.f32.gmra.mrb[0].mxu0 %v8236
        %v8581 = vpop.f32.mrb[0].mxu0
        %v8582 = vadd.f32 0.0, %v8581
        %v8583 = vpop.f32.mrb[0].mxu0
        %8584 = vmatprep.mubr.f32.mxu0 %v8240
        %8585 = vmatmul.mubr.f32.gmra.mrb[0].mxu0 %v8239
        %v8586 = vpop.f32.mrb[0].mxu0
        %v8587 = vadd.f32 0.0, %v8586
        %v8588 = vpop.f32.mrb[0].mxu0
        %8589 = vmatprep.mubr.f32.mxu0 %v8243
        %8590 = vmatmul.mubr.f32.gmra.mrb[0].mxu0 %v8242
        %v8591 = vpop.f32.mrb[0].mxu0
        %v8592 = vadd.f32 0.0, %v8591
        %v8593 = vpop.f32.mrb[0].mxu0
        %8594 = vmatprep.mubr.f32.mxu0 %v8246
        %8595 = vmatmul.mubr.f32.gmra.mrb[0].mxu0 %v8245
        %v8596 = vpop.f32.mrb[0].mxu0
        %v8597 = vadd.f32 0.0, %v8596
        %v8598 = vpop.f32.mrb[0].mxu0
        %8599 = vmatprep.mubr.f32.mxu0 %v8249
        %8600 = vmatmul.mubr.f32.gmra.mrb[0].mxu0 %v8248
        %v8601 = vpop.f32.mrb[0].mxu0
        %v8602 = vadd.f32 0.0, %v8601
        %v8603 = vpop.f32.mrb[0].mxu0
        %8604 = vmatprep.mubr.f32.mxu0 %v8252
        %8605 = vmatmul.mubr.f32.gmra.mrb[0].mxu0 %v8251
        %v8606 = vpop.f32.mrb[0].mxu0
        %v8607 = vadd.f32 0.0, %v8606
        %v8608 = vpop.f32.mrb[0].mxu0
        %8609 = vmatprep.mubr.f32.mxu0 %v8255
        %8610 = vmatmul.mubr.f32.gmra.mrb[0].mxu0 %v8254
        %v8611 = vpop.f32.mrb[0].mxu0
        %v8612 = vadd.f32 0.0, %v8611
        %v8613 = vpop.f32.mrb[0].mxu0
        %8614 = vmatprep.mubr.f32.mxu0 %v8258
        %8615 = vmatmul.mubr.f32.gmra.mrb[0].mxu0 %v8257
        %v8616 = vpop.f32.mrb[0].mxu0
        %v8617 = vadd.f32 0.0, %v8616
        %v8618 = vpop.f32.mrb[0].mxu0
        %8619 = vmatprep.mubr.f32.mxu0 %v8261
        %8620 = vmatmul.mubr.f32.gmra.mrb[0].mxu0 %v8260
        %v8621 = vpop.f32.mrb[0].mxu0
        %v8622 = vadd.f32 0.0, %v8621
        %v8623 = vpop.f32.mrb[0].mxu0
        %8624 = vmatprep.mubr.f32.mxu0 %v8264
        %8625 = vmatmul.mubr.f32.gmra.mrb[0].mxu0 %v8263
        %v8626 = vpop.f32.mrb[0].mxu0
        %v8627 = vadd.f32 0.0, %v8626
        %v8628 = vpop.f32.mrb[0].mxu0
        %8629 = vmatprep.mubr.f32.mxu0 %v8267
        %8630 = vmatmul.mubr.f32.gmra.mrb[0].mxu0 %v8266
        %v8631 = vpop.f32.mrb[0].mxu0
        %v8632 = vadd.f32 0.0, %v8631
        %v8633 = vpop.f32.mrb[0].mxu0
        %8634 = vmatprep.mubr.f32.mxu0 %v8270
        %8635 = vmatmul.mubr.f32.gmra.mrb[0].mxu0 %v8269
        %v8636 = vpop.f32.mrb[0].mxu0
        %v8637 = vadd.f32 0.0, %v8636
        %v8638 = vpop.f32.mrb[0].mxu0
        %8639 = vmatprep.mubr.f32.mxu0 %v8273
        %8640 = vmatmul.mubr.f32.gmra.mrb[0].mxu0 %v8272
        %v8641 = vpop.f32.mrb[0].mxu0
        %v8642 = vadd.f32 0.0, %v8641
        %v8643 = vpop.f32.mrb[0].mxu0
        %8644 = vmatprep.mubr.f32.mxu0 %v8276
        %8645 = vmatmul.mubr.f32.gmra.mrb[0].mxu0 %v8275
        %v8646 = vpop.f32.mrb[0].mxu0
        %v8647 = vadd.f32 0.0, %v8646
        %v8648 = vpop.f32.mrb[0].mxu0
        %8649 = vmatprep.mubr.f32.mxu0 %v8279
        %8650 = vmatmul.mubr.f32.gmra.mrb[0].mxu0 %v8278
        %v8651 = vpop.f32.mrb[0].mxu0
        %v8652 = vadd.f32 0.0, %v8651
        %v8653 = vpop.f32.mrb[0].mxu0
        %8654 = vmatprep.mubr.f32.mxu0 %v8282
        %8655 = vmatmul.mubr.f32.gmra.mrb[0].mxu0 %v8281
        %v8656 = vpop.f32.mrb[0].mxu0
        %v8657 = vadd.f32 0.0, %v8656
        %v8658 = vpop.f32.mrb[0].mxu0
        %8659 = vmatprep.mubr.f32.mxu0 %v8285
        %8660 = vmatmul.mubr.f32.gmra.mrb[0].mxu0 %v8284
        %v8661 = vpop.f32.mrb[0].mxu0
        %v8662 = vadd.f32 0.0, %v8661
        %v8663 = vpop.f32.mrb[0].mxu0
        %8664 = vmatprep.mubr.f32.mxu0 %v8288
        %8665 = vmatmul.mubr.f32.gmra.mrb[0].mxu0 %v8287
        %v8666 = vpop.f32.mrb[0].mxu0
        %v8667 = vadd.f32 0.0, %v8666
        %v8668 = vpop.f32.mrb[0].mxu0
        %8669 = vmatprep.mubr.f32.mxu0 %v8291
        %8670 = vmatmul.mubr.f32.gmra.mrb[0].mxu0 %v8290
        %v8671 = vpop.f32.mrb[0].mxu0
        %v8672 = vadd.f32 0.0, %v8671
        %v8673 = vpop.f32.mrb[0].mxu0
        %8674 = vmatprep.mubr.f32.mxu0 %v8294
        %8675 = vmatmul.mubr.f32.gmra.mrb[0].mxu0 %v8293
        %v8676 = vpop.f32.mrb[0].mxu0
        %v8677 = vadd.f32 0.0, %v8676
        %v8678 = vpop.f32.mrb[0].mxu0
        %8679 = vdwg.mxu0
        %8680 = vmatprep.subr.mxu0 0.0
        %8681 = vmatpush1.msra.mxu0 %v8329
        %8682 = vmatprep.subr.mxu0 0.0
        %8683 = vmatpush1.msra.mxu0 %v8330
        %8684 = vmatprep.subr.mxu0 0.0
        %8685 = vmatpush1.msra.mxu0 %v8331
        %8686 = vmatprep.subr.mxu0 0.0
        %8687 = vmatpush1.msra.mxu0 %v8332
        %8688 = vmatprep.subr.mxu0 0.0
        %8689 = vmatpush1.msra.mxu0 %v8333
        %8690 = vmatprep.subr.mxu0 0.0
        %8691 = vmatpush1.msra.mxu0 %v8334
        %8692 = vmatprep.subr.mxu0 0.0
        %8693 = vmatpush1.msra.mxu0 %v8335
        %8694 = vmatprep.subr.mxu0 0.0
        %8695 = vmatpush1.msra.mxu0 %v8336
        %8696 = vmatprep.subr.mxu0 0.0
        %8697 = vmatpush1.msra.mxu0 %v8337
        %8698 = vmatprep.subr.mxu0 0.0
        %8699 = vmatpush1.msra.mxu0 %v8338
        %8700 = vmatprep.subr.mxu0 0.0
        %8701 = vmatpush1.msra.mxu0 %v8339
        %8702 = vmatprep.subr.mxu0 0.0
        %8703 = vmatpush1.msra.mxu0 %v8340
        %8704 = vmatprep.subr.mxu0 0.0
        %8705 = vmatpush1.msra.mxu0 %v8341
        %8706 = vmatprep.subr.mxu0 0.0
        %8707 = vmatpush1.msra.mxu0 %v8342
        %8708 = vmatprep.subr.mxu0 0.0
        %8709 = vmatpush1.msra.mxu0 %v8343
        %8710 = vmatprep.subr.mxu0 0.0
        %8711 = vmatpush1.msra.mxu0 %v8344
        %8712 = vmatprep.subr.mxu0 0.0
        %8713 = vmatpush1.msra.mxu0 0.0
        %8714 = vmatprep.subr.mxu0 0.0
        %8715 = vmatpush1.msra.mxu0 0.0
        %8716 = vmatprep.subr.mxu0 0.0
        %8717 = vmatpush1.msra.mxu0 0.0
        %8718 = vmatprep.subr.mxu0 0.0
        %8719 = vmatpush1.msra.mxu0 0.0
        %8720 = vmatprep.subr.mxu0 0.0
        %8721 = vmatpush1.msra.mxu0 0.0
        %8722 = vmatprep.subr.mxu0 0.0
        %8723 = vmatpush1.msra.mxu0 0.0
        %8724 = vmatprep.subr.mxu0 0.0
        %8725 = vmatpush1.msra.mxu0 0.0
        %8726 = vmatprep.subr.mxu0 0.0
        %8727 = vmatpush1.msra.mxu0 0.0
        %8728 = vmatprep.subr.mxu0 0.0
        %8729 = vmatpush1.msra.mxu0 0.0
        %8730 = vmatprep.subr.mxu0 0.0
        %8731 = vmatpush1.msra.mxu0 0.0
        %8732 = vmatprep.subr.mxu0 0.0
        %8733 = vmatpush1.msra.mxu0 0.0
        %8734 = vmatprep.subr.mxu0 0.0
        %8735 = vmatpush1.msra.mxu0 0.0
        %8736 = vmatprep.subr.mxu0 0.0
        %8737 = vmatpush1.msra.mxu0 0.0
        %8738 = vmatprep.subr.mxu0 0.0
        %8739 = vmatpush1.msra.mxu0 0.0
        %8740 = vmatprep.subr.mxu0 0.0
        %8741 = vmatpush1.msra.mxu0 0.0
        %8742 = vmatprep.subr.mxu0 0.0
        %8743 = vmatpush1.msra.mxu0 0.0
        %8744 = vmatprep.mubr.f32.mxu0 0.0
        %8745 = vmatmul.mubr.f32.gmra.mrb[0].mxu0 %v8136
        %v8746 = vpop.f32.mrb[0].mxu0
        %v8747 = vadd.f32 %v8412, %v8746
        %v8748 = vpop.f32.mrb[0].mxu0
        %8749 = vmatprep.mubr.f32.mxu0 0.0
        %8750 = vmatmul.mubr.f32.gmra.mrb[0].mxu0 %v8139
        %v8751 = vpop.f32.mrb[0].mxu0
        %v8752 = vadd.f32 %v8417, %v8751
        %v8753 = vpop.f32.mrb[0].mxu0
        %8754 = vmatprep.mubr.f32.mxu0 0.0
        %8755 = vmatmul.mubr.f32.gmra.mrb[0].mxu0 %v8142
        %v8756 = vpop.f32.mrb[0].mxu0
        %v8757 = vadd.f32 %v8422, %v8756
        %v8758 = vpop.f32.mrb[0].mxu0
        %8759 = vmatprep.mubr.f32.mxu0 0.0
        %8760 = vmatmul.mubr.f32.gmra.mrb[0].mxu0 %v8145
        %v8761 = vpop.f32.mrb[0].mxu0
        %v8762 = vadd.f32 %v8427, %v8761
        %v8763 = vpop.f32.mrb[0].mxu0
        %8764 = vmatprep.mubr.f32.mxu0 0.0
        %8765 = vmatmul.mubr.f32.gmra.mrb[0].mxu0 %v8148
        %v8766 = vpop.f32.mrb[0].mxu0
        %v8767 = vadd.f32 %v8432, %v8766
        %v8768 = vpop.f32.mrb[0].mxu0
        %8769 = vmatprep.mubr.f32.mxu0 0.0
        %8770 = vmatmul.mubr.f32.gmra.mrb[0].mxu0 %v8151
        %v8771 = vpop.f32.mrb[0].mxu0
        %v8772 = vadd.f32 %v8437, %v8771
        %v8773 = vpop.f32.mrb[0].mxu0
        %8774 = vmatprep.mubr.f32.mxu0 0.0
        %8775 = vmatmul.mubr.f32.gmra.mrb[0].mxu0 %v8154
        %v8776 = vpop.f32.mrb[0].mxu0
        %v8777 = vadd.f32 %v8442, %v8776
        %v8778 = vpop.f32.mrb[0].mxu0
        %8779 = vmatprep.mubr.f32.mxu0 0.0
        %8780 = vmatmul.mubr.f32.gmra.mrb[0].mxu0 %v8157
        %v8781 = vpop.f32.mrb[0].mxu0
        %v8782 = vadd.f32 %v8447, %v8781
        %v8783 = vpop.f32.mrb[0].mxu0
        %8784 = vmatprep.mubr.f32.mxu0 0.0
        %8785 = vmatmul.mubr.f32.gmra.mrb[0].mxu0 %v8160
        %v8786 = vpop.f32.mrb[0].mxu0
        %v8787 = vadd.f32 %v8452, %v8786
        %v8788 = vpop.f32.mrb[0].mxu0
        %8789 = vmatprep.mubr.f32.mxu0 0.0
        %8790 = vmatmul.mubr.f32.gmra.mrb[0].mxu0 %v8163
        %v8791 = vpop.f32.mrb[0].mxu0
        %v8792 = vadd.f32 %v8457, %v8791
        %v8793 = vpop.f32.mrb[0].mxu0
        %8794 = vmatprep.mubr.f32.mxu0 0.0
        %8795 = vmatmul.mubr.f32.gmra.mrb[0].mxu0 %v8166
        %v8796 = vpop.f32.mrb[0].mxu0
        %v8797 = vadd.f32 %v8462, %v8796
        %v8798 = vpop.f32.mrb[0].mxu0
        %8799 = vmatprep.mubr.f32.mxu0 0.0
        %8800 = vmatmul.mubr.f32.gmra.mrb[0].mxu0 %v8169
        %v8801 = vpop.f32.mrb[0].mxu0
        %v8802 = vadd.f32 %v8467, %v8801
        %v8803 = vpop.f32.mrb[0].mxu0
        %8804 = vmatprep.mubr.f32.mxu0 0.0
        %8805 = vmatmul.mubr.f32.gmra.mrb[0].mxu0 %v8172
        %v8806 = vpop.f32.mrb[0].mxu0
        %v8807 = vadd.f32 %v8472, %v8806
        %v8808 = vpop.f32.mrb[0].mxu0
        %8809 = vmatprep.mubr.f32.mxu0 0.0
        %8810 = vmatmul.mubr.f32.gmra.mrb[0].mxu0 %v8175
        %v8811 = vpop.f32.mrb[0].mxu0
        %v8812 = vadd.f32 %v8477, %v8811
        %v8813 = vpop.f32.mrb[0].mxu0
        %8814 = vmatprep.mubr.f32.mxu0 0.0
        %8815 = vmatmul.mubr.f32.gmra.mrb[0].mxu0 %v8178
        %v8816 = vpop.f32.mrb[0].mxu0
        %v8817 = vadd.f32 %v8482, %v8816
        %v8818 = vpop.f32.mrb[0].mxu0
        %8819 = vmatprep.mubr.f32.mxu0 0.0
        %8820 = vmatmul.mubr.f32.gmra.mrb[0].mxu0 %v8181
        %v8821 = vpop.f32.mrb[0].mxu0
        %v8822 = vadd.f32 %v8487, %v8821
        %v8823 = vpop.f32.mrb[0].mxu0
        %8824 = vmatprep.mubr.f32.mxu0 0.0
        %8825 = vmatmul.mubr.f32.gmra.mrb[0].mxu0 %v8184
        %v8826 = vpop.f32.mrb[0].mxu0
        %v8827 = vadd.f32 %v8492, %v8826
        %v8828 = vpop.f32.mrb[0].mxu0
        %8829 = vmatprep.mubr.f32.mxu0 0.0
        %8830 = vmatmul.mubr.f32.gmra.mrb[0].mxu0 %v8187
        %v8831 = vpop.f32.mrb[0].mxu0
        %v8832 = vadd.f32 %v8497, %v8831
        %v8833 = vpop.f32.mrb[0].mxu0
        %8834 = vmatprep.mubr.f32.mxu0 0.0
        %8835 = vmatmul.mubr.f32.gmra.mrb[0].mxu0 %v8190
        %v8836 = vpop.f32.mrb[0].mxu0
        %v8837 = vadd.f32 %v8502, %v8836
        %v8838 = vpop.f32.mrb[0].mxu0
        %8839 = vmatprep.mubr.f32.mxu0 0.0
        %8840 = vmatmul.mubr.f32.gmra.mrb[0].mxu0 %v8193
        %v8841 = vpop.f32.mrb[0].mxu0
        %v8842 = vadd.f32 %v8507, %v8841
        %v8843 = vpop.f32.mrb[0].mxu0
        %8844 = vmatprep.mubr.f32.mxu0 0.0
        %8845 = vmatmul.mubr.f32.gmra.mrb[0].mxu0 %v8196
        %v8846 = vpop.f32.mrb[0].mxu0
        %v8847 = vadd.f32 %v8512, %v8846
        %v8848 = vpop.f32.mrb[0].mxu0
        %8849 = vmatprep.mubr.f32.mxu0 0.0
        %8850 = vmatmul.mubr.f32.gmra.mrb[0].mxu0 %v8199
        %v8851 = vpop.f32.mrb[0].mxu0
        %v8852 = vadd.f32 %v8517, %v8851
        %v8853 = vpop.f32.mrb[0].mxu0
        %8854 = vmatprep.mubr.f32.mxu0 0.0
        %8855 = vmatmul.mubr.f32.gmra.mrb[0].mxu0 %v8202
        %v8856 = vpop.f32.mrb[0].mxu0
        %v8857 = vadd.f32 %v8522, %v8856
        %v8858 = vpop.f32.mrb[0].mxu0
        %8859 = vmatprep.mubr.f32.mxu0 0.0
        %8860 = vmatmul.mubr.f32.gmra.mrb[0].mxu0 %v8205
        %v8861 = vpop.f32.mrb[0].mxu0
        %v8862 = vadd.f32 %v8527, %v8861
        %v8863 = vpop.f32.mrb[0].mxu0
        %8864 = vmatprep.mubr.f32.mxu0 0.0
        %8865 = vmatmul.mubr.f32.gmra.mrb[0].mxu0 %v8208
        %v8866 = vpop.f32.mrb[0].mxu0
        %v8867 = vadd.f32 %v8532, %v8866
        %v8868 = vpop.f32.mrb[0].mxu0
        %8869 = vmatprep.mubr.f32.mxu0 0.0
        %8870 = vmatmul.mubr.f32.gmra.mrb[0].mxu0 %v8211
        %v8871 = vpop.f32.mrb[0].mxu0
        %v8872 = vadd.f32 %v8537, %v8871
        %v8873 = vpop.f32.mrb[0].mxu0
        %8874 = vmatprep.mubr.f32.mxu0 0.0
        %8875 = vmatmul.mubr.f32.gmra.mrb[0].mxu0 %v8214
        %v8876 = vpop.f32.mrb[0].mxu0
        %v8877 = vadd.f32 %v8542, %v8876
        %v8878 = vpop.f32.mrb[0].mxu0
        %8879 = vmatprep.mubr.f32.mxu0 0.0
        %8880 = vmatmul.mubr.f32.gmra.mrb[0].mxu0 %v8217
        %v8881 = vpop.f32.mrb[0].mxu0
        %v8882 = vadd.f32 %v8547, %v8881
        %v8883 = vpop.f32.mrb[0].mxu0
        %8884 = vmatprep.mubr.f32.mxu0 0.0
        %8885 = vmatmul.mubr.f32.gmra.mrb[0].mxu0 %v8220
        %v8886 = vpop.f32.mrb[0].mxu0
        %v8887 = vadd.f32 %v8552, %v8886
        %v8888 = vpop.f32.mrb[0].mxu0
        %8889 = vmatprep.mubr.f32.mxu0 0.0
        %8890 = vmatmul.mubr.f32.gmra.mrb[0].mxu0 %v8223
        %v8891 = vpop.f32.mrb[0].mxu0
        %v8892 = vadd.f32 %v8557, %v8891
        %v8893 = vpop.f32.mrb[0].mxu0
        %8894 = vmatprep.mubr.f32.mxu0 0.0
        %8895 = vmatmul.mubr.f32.gmra.mrb[0].mxu0 %v8226
        %v8896 = vpop.f32.mrb[0].mxu0
        %v8897 = vadd.f32 %v8562, %v8896
        %v8898 = vpop.f32.mrb[0].mxu0
        %8899 = vmatprep.mubr.f32.mxu0 0.0
        %8900 = vmatmul.mubr.f32.gmra.mrb[0].mxu0 %v8229
        %v8901 = vpop.f32.mrb[0].mxu0
        %v8902 = vadd.f32 %v8567, %v8901
        %v8903 = vpop.f32.mrb[0].mxu0
        %8904 = vmatprep.mubr.f32.mxu0 0.0
        %8905 = vmatmul.mubr.f32.gmra.mrb[0].mxu0 %v8232
        %v8906 = vpop.f32.mrb[0].mxu0
        %v8907 = vadd.f32 %v8572, %v8906
        %v8908 = vpop.f32.mrb[0].mxu0
        %8909 = vmatprep.mubr.f32.mxu0 0.0
        %8910 = vmatmul.mubr.f32.gmra.mrb[0].mxu0 %v8235
        %v8911 = vpop.f32.mrb[0].mxu0
        %v8912 = vadd.f32 %v8577, %v8911
        %v8913 = vpop.f32.mrb[0].mxu0
        %8914 = vmatprep.mubr.f32.mxu0 0.0
        %8915 = vmatmul.mubr.f32.gmra.mrb[0].mxu0 %v8238
        %v8916 = vpop.f32.mrb[0].mxu0
        %v8917 = vadd.f32 %v8582, %v8916
        %v8918 = vpop.f32.mrb[0].mxu0
        %8919 = vmatprep.mubr.f32.mxu0 0.0
        %8920 = vmatmul.mubr.f32.gmra.mrb[0].mxu0 %v8241
        %v8921 = vpop.f32.mrb[0].mxu0
        %v8922 = vadd.f32 %v8587, %v8921
        %v8923 = vpop.f32.mrb[0].mxu0
        %8924 = vmatprep.mubr.f32.mxu0 0.0
        %8925 = vmatmul.mubr.f32.gmra.mrb[0].mxu0 %v8244
        %v8926 = vpop.f32.mrb[0].mxu0
        %v8927 = vadd.f32 %v8592, %v8926
        %v8928 = vpop.f32.mrb[0].mxu0
        %8929 = vmatprep.mubr.f32.mxu0 0.0
        %8930 = vmatmul.mubr.f32.gmra.mrb[0].mxu0 %v8247
        %v8931 = vpop.f32.mrb[0].mxu0
        %v8932 = vadd.f32 %v8597, %v8931
        %v8933 = vpop.f32.mrb[0].mxu0
        %8934 = vmatprep.mubr.f32.mxu0 0.0
        %8935 = vmatmul.mubr.f32.gmra.mrb[0].mxu0 %v8250
        %v8936 = vpop.f32.mrb[0].mxu0
        %v8937 = vadd.f32 %v8602, %v8936
        %v8938 = vpop.f32.mrb[0].mxu0
        %8939 = vmatprep.mubr.f32.mxu0 0.0
        %8940 = vmatmul.mubr.f32.gmra.mrb[0].mxu0 %v8253
        %v8941 = vpop.f32.mrb[0].mxu0
        %v8942 = vadd.f32 %v8607, %v8941
        %v8943 = vpop.f32.mrb[0].mxu0
        %8944 = vmatprep.mubr.f32.mxu0 0.0
        %8945 = vmatmul.mubr.f32.gmra.mrb[0].mxu0 %v8256
        %v8946 = vpop.f32.mrb[0].mxu0
        %v8947 = vadd.f32 %v8612, %v8946
        %v8948 = vpop.f32.mrb[0].mxu0
        %8949 = vmatprep.mubr.f32.mxu0 0.0
        %8950 = vmatmul.mubr.f32.gmra.mrb[0].mxu0 %v8259
        %v8951 = vpop.f32.mrb[0].mxu0
        %v8952 = vadd.f32 %v8617, %v8951
        %v8953 = vpop.f32.mrb[0].mxu0
        %8954 = vmatprep.mubr.f32.mxu0 0.0
        %8955 = vmatmul.mubr.f32.gmra.mrb[0].mxu0 %v8262
        %v8956 = vpop.f32.mrb[0].mxu0
        %v8957 = vadd.f32 %v8622, %v8956
        %v8958 = vpop.f32.mrb[0].mxu0
        %8959 = vmatprep.mubr.f32.mxu0 0.0
        %8960 = vmatmul.mubr.f32.gmra.mrb[0].mxu0 %v8265
        %v8961 = vpop.f32.mrb[0].mxu0
        %v8962 = vadd.f32 %v8627, %v8961
        %v8963 = vpop.f32.mrb[0].mxu0
        %8964 = vmatprep.mubr.f32.mxu0 0.0
        %8965 = vmatmul.mubr.f32.gmra.mrb[0].mxu0 %v8268
        %v8966 = vpop.f32.mrb[0].mxu0
        %v8967 = vadd.f32 %v8632, %v8966
        %v8968 = vpop.f32.mrb[0].mxu0
        %8969 = vmatprep.mubr.f32.mxu0 0.0
        %8970 = vmatmul.mubr.f32.gmra.mrb[0].mxu0 %v8271
        %v8971 = vpop.f32.mrb[0].mxu0
        %v8972 = vadd.f32 %v8637, %v8971
        %v8973 = vpop.f32.mrb[0].mxu0
        %8974 = vmatprep.mubr.f32.mxu0 0.0
        %8975 = vmatmul.mubr.f32.gmra.mrb[0].mxu0 %v8274
        %v8976 = vpop.f32.mrb[0].mxu0
        %v8977 = vadd.f32 %v8642, %v8976
        %v8978 = vpop.f32.mrb[0].mxu0
        %8979 = vmatprep.mubr.f32.mxu0 0.0
        %8980 = vmatmul.mubr.f32.gmra.mrb[0].mxu0 %v8277
        %v8981 = vpop.f32.mrb[0].mxu0
        %v8982 = vadd.f32 %v8647, %v8981
        %v8983 = vpop.f32.mrb[0].mxu0
        %8984 = vmatprep.mubr.f32.mxu0 0.0
        %8985 = vmatmul.mubr.f32.gmra.mrb[0].mxu0 %v8280
        %v8986 = vpop.f32.mrb[0].mxu0
        %v8987 = vadd.f32 %v8652, %v8986
        %v8988 = vpop.f32.mrb[0].mxu0
        %8989 = vmatprep.mubr.f32.mxu0 0.0
        %8990 = vmatmul.mubr.f32.gmra.mrb[0].mxu0 %v8283
        %v8991 = vpop.f32.mrb[0].mxu0
        %v8992 = vadd.f32 %v8657, %v8991
        %v8993 = vpop.f32.mrb[0].mxu0
        %8994 = vmatprep.mubr.f32.mxu0 0.0
        %8995 = vmatmul.mubr.f32.gmra.mrb[0].mxu0 %v8286
        %v8996 = vpop.f32.mrb[0].mxu0
        %v8997 = vadd.f32 %v8662, %v8996
        %v8998 = vpop.f32.mrb[0].mxu0
        %8999 = vmatprep.mubr.f32.mxu0 0.0
        %9000 = vmatmul.mubr.f32.gmra.mrb[0].mxu0 %v8289
        %v9001 = vpop.f32.mrb[0].mxu0
        %v9002 = vadd.f32 %v8667, %v9001
        %v9003 = vpop.f32.mrb[0].mxu0
        %9004 = vmatprep.mubr.f32.mxu0 0.0
        %9005 = vmatmul.mubr.f32.gmra.mrb[0].mxu0 %v8292
        %v9006 = vpop.f32.mrb[0].mxu0
        %v9007 = vadd.f32 %v8672, %v9006
        %v9008 = vpop.f32.mrb[0].mxu0
        %9009 = vmatprep.mubr.f32.mxu0 0.0
        %9010 = vmatmul.mubr.f32.gmra.mrb[0].mxu0 %v8295
        %v9011 = vpop.f32.mrb[0].mxu0
        %v9012 = vadd.f32 %v8677, %v9011
        %v9013 = vpop.f32.mrb[0].mxu0
        %9014 = vdwg.mxu0
        %v9015 = vld [vmem:[#allocation5] sm:$0xff]
        %v9016 = vld [vmem:[#allocation5 + $0x8] sm:$0xff]
        %v9017 = vld [vmem:[#allocation5 + $0x10] sm:$0xff]
        %v9018 = vld [vmem:[#allocation5 + $0x18] sm:$0xff]
        %v9019 = vld [vmem:[#allocation5 + $0x20] sm:$0xff]
        %v9020 = vld [vmem:[#allocation5 + $0x28] sm:$0xff]
        %v9021 = vld [vmem:[#allocation5 + $0x30] sm:$0xff]
        %v9022 = vld [vmem:[#allocation5 + $0x38] sm:$0xff]
        %v9023 = vld [vmem:[#allocation5 + $0x40] sm:$0xff]
        %v9024 = vld [vmem:[#allocation5 + $0x48] sm:$0xff]
        %v9025 = vld [vmem:[#allocation5 + $0x50] sm:$0xff]
        %v9026 = vld [vmem:[#allocation5 + $0x58] sm:$0xff]
        %v9027 = vld [vmem:[#allocation5 + $0x60] sm:$0xff]
        %v9028 = vld [vmem:[#allocation5 + $0x68] sm:$0xff]
        %v9029 = vld [vmem:[#allocation5 + $0x70] sm:$0xff]
        %v9030 = vld [vmem:[#allocation5 + $0x78] sm:$0xff]
        %v9031 = vld [vmem:[#allocation5 + $0x80] sm:$0xff]
        %v9032 = vld [vmem:[#allocation5 + $0x88] sm:$0xff]
        %v9033 = vld [vmem:[#allocation5 + $0x90] sm:$0xff]
        %v9034 = vld [vmem:[#allocation5 + $0x98] sm:$0xff]
        %v9035 = vld [vmem:[#allocation5 + $0xa0] sm:$0xff]
        %v9036 = vld [vmem:[#allocation5 + $0xa8] sm:$0xff]
        %v9037 = vld [vmem:[#allocation5 + $0xb0] sm:$0xff]
        %v9038 = vld [vmem:[#allocation5 + $0xb8] sm:$0xff]
        %v9039 = vld [vmem:[#allocation5 + $0xc0] sm:$0xff]
        %v9040 = vld [vmem:[#allocation5 + $0xc8] sm:$0xff]
        %v9041 = vld [vmem:[#allocation5 + $0xd0] sm:$0xff]
        %v9042 = vld [vmem:[#allocation5 + $0xd8] sm:$0xff]
        %v9043 = vld [vmem:[#allocation5 + $0xe0] sm:$0xff]
        %v9044 = vld [vmem:[#allocation5 + $0xe8] sm:$0xff]
        %v9045 = vld [vmem:[#allocation5 + $0xf0] sm:$0xff]
        %v9046 = vld [vmem:[#allocation5 + $0xf8] sm:$0xff]
        %v9047 = vld [vmem:[#allocation5 + $0x100] sm:$0xff]
        %v9048 = vld [vmem:[#allocation5 + $0x108] sm:$0xff]
        %v9049 = vld [vmem:[#allocation5 + $0x110] sm:$0xff]
        %v9050 = vld [vmem:[#allocation5 + $0x118] sm:$0xff]
        %v9051 = vld [vmem:[#allocation5 + $0x120] sm:$0xff]
        %v9052 = vld [vmem:[#allocation5 + $0x128] sm:$0xff]
        %v9053 = vld [vmem:[#allocation5 + $0x130] sm:$0xff]
        %v9054 = vld [vmem:[#allocation5 + $0x138] sm:$0xff]
        %v9055 = vld [vmem:[#allocation5 + $0x140] sm:$0xff]
        %v9056 = vld [vmem:[#allocation5 + $0x148] sm:$0xff]
        %v9057 = vld [vmem:[#allocation5 + $0x150] sm:$0xff]
        %v9058 = vld [vmem:[#allocation5 + $0x158] sm:$0xff]
        %v9059 = vld [vmem:[#allocation5 + $0x160] sm:$0xff]
        %v9060 = vld [vmem:[#allocation5 + $0x168] sm:$0xff]
        %v9061 = vld [vmem:[#allocation5 + $0x170] sm:$0xff]
        %v9062 = vld [vmem:[#allocation5 + $0x178] sm:$0xff]
        %v9063 = vld [vmem:[#allocation5 + $0x180] sm:$0xff]
        %v9064 = vld [vmem:[#allocation5 + $0x188] sm:$0xff]
        %v9065 = vld [vmem:[#allocation5 + $0x190] sm:$0xff]
        %v9066 = vld [vmem:[#allocation5 + $0x198] sm:$0xff]
        %v9067 = vld [vmem:[#allocation5 + $0x1a0] sm:$0xff]
        %v9068 = vld [vmem:[#allocation5 + $0x1a8] sm:$0xff]
        %v9069 = vadd.f32 %v9015, %v8747
        %v9070 = vadd.f32 %v9016, %v8752
        %v9071 = vadd.f32 %v9017, %v8757
        %v9072 = vadd.f32 %v9018, %v8762
        %v9073 = vadd.f32 %v9019, %v8767
        %v9074 = vadd.f32 %v9020, %v8772
        %v9075 = vadd.f32 %v9021, %v8777
        %v9076 = vadd.f32 %v9022, %v8782
        %v9077 = vadd.f32 %v9023, %v8787
        %v9078 = vadd.f32 %v9024, %v8792
        %v9079 = vadd.f32 %v9025, %v8797
        %v9080 = vadd.f32 %v9026, %v8802
        %v9081 = vadd.f32 %v9027, %v8807
        %v9082 = vadd.f32 %v9028, %v8812
        %v9083 = vadd.f32 %v9029, %v8817
        %v9084 = vadd.f32 %v9030, %v8822
        %v9085 = vadd.f32 %v9031, %v8827
        %v9086 = vadd.f32 %v9032, %v8832
        %v9087 = vadd.f32 %v9033, %v8837
        %v9088 = vadd.f32 %v9034, %v8842
        %v9089 = vadd.f32 %v9035, %v8847
        %v9090 = vadd.f32 %v9036, %v8852
        %v9091 = vadd.f32 %v9037, %v8857
        %v9092 = vadd.f32 %v9038, %v8862
        %v9093 = vadd.f32 %v9039, %v8867
        %v9094 = vadd.f32 %v9040, %v8872
        %v9095 = vadd.f32 %v9041, %v8877
        %v9096 = vadd.f32 %v9042, %v8882
        %v9097 = vadd.f32 %v9043, %v8887
        %v9098 = vadd.f32 %v9044, %v8892
        %v9099 = vadd.f32 %v9045, %v8897
        %v9100 = vadd.f32 %v9046, %v8902
        %v9101 = vadd.f32 %v9047, %v8907
        %v9102 = vadd.f32 %v9048, %v8912
        %v9103 = vadd.f32 %v9049, %v8917
        %v9104 = vadd.f32 %v9050, %v8922
        %v9105 = vadd.f32 %v9051, %v8927
        %v9106 = vadd.f32 %v9052, %v8932
        %v9107 = vadd.f32 %v9053, %v8937
        %v9108 = vadd.f32 %v9054, %v8942
        %v9109 = vadd.f32 %v9055, %v8947
        %v9110 = vadd.f32 %v9056, %v8952
        %v9111 = vadd.f32 %v9057, %v8957
        %v9112 = vadd.f32 %v9058, %v8962
        %v9113 = vadd.f32 %v9059, %v8967
        %v9114 = vadd.f32 %v9060, %v8972
        %v9115 = vadd.f32 %v9061, %v8977
        %v9116 = vadd.f32 %v9062, %v8982
        %v9117 = vadd.f32 %v9063, %v8987
        %v9118 = vadd.f32 %v9064, %v8992
        %v9119 = vadd.f32 %v9065, %v8997
        %v9120 = vadd.f32 %v9066, %v9002
        %v9121 = vadd.f32 %v9067, %v9007
        %v9122 = vadd.f32 %v9068, %v9012
        %9123 = vst [vmem:[#allocation5] sm:$0xff] %v9069
        %9124 = vst [vmem:[#allocation5 + $0x8] sm:$0xff] %v9070
        %9125 = vst [vmem:[#allocation5 + $0x10] sm:$0xff] %v9071
        %9126 = vst [vmem:[#allocation5 + $0x18] sm:$0xff] %v9072
        %9127 = vst [vmem:[#allocation5 + $0x20] sm:$0xff] %v9073
        %9128 = vst [vmem:[#allocation5 + $0x28] sm:$0xff] %v9074
        %9129 = vst [vmem:[#allocation5 + $0x30] sm:$0xff] %v9075
        %9130 = vst [vmem:[#allocation5 + $0x38] sm:$0xff] %v9076
        %9131 = vst [vmem:[#allocation5 + $0x40] sm:$0xff] %v9077
        %9132 = vst [vmem:[#allocation5 + $0x48] sm:$0xff] %v9078
        %9133 = vst [vmem:[#allocation5 + $0x50] sm:$0xff] %v9079
        %9134 = vst [vmem:[#allocation5 + $0x58] sm:$0xff] %v9080
        %9135 = vst [vmem:[#allocation5 + $0x60] sm:$0xff] %v9081
        %9136 = vst [vmem:[#allocation5 + $0x68] sm:$0xff] %v9082
        %9137 = vst [vmem:[#allocation5 + $0x70] sm:$0xff] %v9083
        %9138 = vst [vmem:[#allocation5 + $0x78] sm:$0xff] %v9084
        %9139 = vst [vmem:[#allocation5 + $0x80] sm:$0xff] %v9085
        %9140 = vst [vmem:[#allocation5 + $0x88] sm:$0xff] %v9086
        %9141 = vst [vmem:[#allocation5 + $0x90] sm:$0xff] %v9087
        %9142 = vst [vmem:[#allocation5 + $0x98] sm:$0xff] %v9088
        %9143 = vst [vmem:[#allocation5 + $0xa0] sm:$0xff] %v9089
        %9144 = vst [vmem:[#allocation5 + $0xa8] sm:$0xff] %v9090
        %9145 = vst [vmem:[#allocation5 + $0xb0] sm:$0xff] %v9091
        %9146 = vst [vmem:[#allocation5 + $0xb8] sm:$0xff] %v9092
        %9147 = vst [vmem:[#allocation5 + $0xc0] sm:$0xff] %v9093
        %9148 = vst [vmem:[#allocation5 + $0xc8] sm:$0xff] %v9094
        %9149 = vst [vmem:[#allocation5 + $0xd0] sm:$0xff] %v9095
        %9150 = vst [vmem:[#allocation5 + $0xd8] sm:$0xff] %v9096
        %9151 = vst [vmem:[#allocation5 + $0xe0] sm:$0xff] %v9097
        %9152 = vst [vmem:[#allocation5 + $0xe8] sm:$0xff] %v9098
        %9153 = vst [vmem:[#allocation5 + $0xf0] sm:$0xff] %v9099
        %9154 = vst [vmem:[#allocation5 + $0xf8] sm:$0xff] %v9100
        %9155 = vst [vmem:[#allocation5 + $0x100] sm:$0xff] %v9101
        %9156 = vst [vmem:[#allocation5 + $0x108] sm:$0xff] %v9102
        %9157 = vst [vmem:[#allocation5 + $0x110] sm:$0xff] %v9103
        %9158 = vst [vmem:[#allocation5 + $0x118] sm:$0xff] %v9104
        %9159 = vst [vmem:[#allocation5 + $0x120] sm:$0xff] %v9105
        %9160 = vst [vmem:[#allocation5 + $0x128] sm:$0xff] %v9106
        %9161 = vst [vmem:[#allocation5 + $0x130] sm:$0xff] %v9107
        %9162 = vst [vmem:[#allocation5 + $0x138] sm:$0xff] %v9108
        %9163 = vst [vmem:[#allocation5 + $0x140] sm:$0xff] %v9109
        %9164 = vst [vmem:[#allocation5 + $0x148] sm:$0xff] %v9110
        %9165 = vst [vmem:[#allocation5 + $0x150] sm:$0xff] %v9111
        %9166 = vst [vmem:[#allocation5 + $0x158] sm:$0xff] %v9112
        %9167 = vst [vmem:[#allocation5 + $0x160] sm:$0xff] %v9113
        %9168 = vst [vmem:[#allocation5 + $0x168] sm:$0xff] %v9114
        %9169 = vst [vmem:[#allocation5 + $0x170] sm:$0xff] %v9115
        %9170 = vst [vmem:[#allocation5 + $0x178] sm:$0xff] %v9116
        %9171 = vst [vmem:[#allocation5 + $0x180] sm:$0xff] %v9117
        %9172 = vst [vmem:[#allocation5 + $0x188] sm:$0xff] %v9118
        %9173 = vst [vmem:[#allocation5 + $0x190] sm:$0xff] %v9119
        %9174 = vst [vmem:[#allocation5 + $0x198] sm:$0xff] %v9120
        %9175 = vst [vmem:[#allocation5 + $0x1a0] sm:$0xff] %v9121
        %9176 = vst [vmem:[#allocation5 + $0x1a8] sm:$0xff] %v9122
        %s9177 = scalar_lea.vmem %s301, %s341 [#allocation6]
        %v9178 = vld [vmem:[%s9177] sm:$0xff]
        %v9179 = vld [vmem:[%s9177 + $0x8] sm:$0xff]
        %v9180 = vld [vmem:[%s9177 + $0x10] sm:$0xff]
        %v9181 = vld [vmem:[%s9177 + $0x18] sm:$0xff]
        %v9182 = vld [vmem:[%s9177 + $0x20] sm:$0xff]
        %v9183 = vld [vmem:[%s9177 + $0x28] sm:$0xff]
        %v9184 = vld [vmem:[%s9177 + $0x30] sm:$0xff]
        %v9185 = vld [vmem:[%s9177 + $0x38] sm:$0xff]
        %v9186 = vld [vmem:[%s9177 + $0x40] sm:$0xff]
        %v9187 = vld [vmem:[%s9177 + $0x48] sm:$0xff]
        %v9188 = vld [vmem:[%s9177 + $0x50] sm:$0xff]
        %v9189 = vld [vmem:[%s9177 + $0x58] sm:$0xff]
        %v9190 = vld [vmem:[%s9177 + $0x60] sm:$0xff]
        %v9191 = vld [vmem:[%s9177 + $0x68] sm:$0xff]
        %v9192 = vld [vmem:[%s9177 + $0x70] sm:$0xff]
        %v9193 = vld [vmem:[%s9177 + $0x78] sm:$0xff]
        %v9194 = vld [vmem:[%s9177 + $0x80] sm:$0xff]
        %v9195 = vld [vmem:[%s9177 + $0x88] sm:$0xff]
        %v9196 = vld [vmem:[%s9177 + $0x90] sm:$0xff]
        %v9197 = vld [vmem:[%s9177 + $0x98] sm:$0xff]
        %v9198 = vld [vmem:[%s9177 + $0xa0] sm:$0xff]
        %v9199 = vld [vmem:[%s9177 + $0xa8] sm:$0xff]
        %v9200 = vld [vmem:[%s9177 + $0xb0] sm:$0xff]
        %v9201 = vld [vmem:[%s9177 + $0xb8] sm:$0xff]
        %v9202 = vld [vmem:[%s9177 + $0xc0] sm:$0xff]
        %v9203 = vld [vmem:[%s9177 + $0xc8] sm:$0xff]
        %v9204 = vld [vmem:[%s9177 + $0xd0] sm:$0xff]
        %v9205 = vld [vmem:[%s9177 + $0xd8] sm:$0xff]
        %v9206 = vld [vmem:[%s9177 + $0xe0] sm:$0xff]
        %v9207 = vld [vmem:[%s9177 + $0xe8] sm:$0xff]
        %v9208 = vld [vmem:[%s9177 + $0xf0] sm:$0xff]
        %v9209 = vld [vmem:[%s9177 + $0xf8] sm:$0xff]
        %v9210 = vld [vmem:[%s9177 + $0x100] sm:$0xff]
        %v9211 = vld [vmem:[%s9177 + $0x108] sm:$0xff]
        %v9212 = vld [vmem:[%s9177 + $0x110] sm:$0xff]
        %v9213 = vld [vmem:[%s9177 + $0x118] sm:$0xff]
        %v9214 = vld [vmem:[%s9177 + $0x120] sm:$0xff]
        %v9215 = vld [vmem:[%s9177 + $0x128] sm:$0xff]
        %v9216 = vld [vmem:[%s9177 + $0x130] sm:$0xff]
        %v9217 = vld [vmem:[%s9177 + $0x138] sm:$0xff]
        %v9218 = vld [vmem:[%s9177 + $0x140] sm:$0xff]
        %v9219 = vld [vmem:[%s9177 + $0x148] sm:$0xff]
        %v9220 = vld [vmem:[%s9177 + $0x150] sm:$0xff]
        %v9221 = vld [vmem:[%s9177 + $0x158] sm:$0xff]
        %v9222 = vld [vmem:[%s9177 + $0x160] sm:$0xff]
        %v9223 = vld [vmem:[%s9177 + $0x168] sm:$0xff]
        %v9224 = vld [vmem:[%s9177 + $0x170] sm:$0xff]
        %v9225 = vld [vmem:[%s9177 + $0x178] sm:$0xff]
        %v9226 = vld [vmem:[%s9177 + $0x180] sm:$0xff]
        %v9227 = vld [vmem:[%s9177 + $0x188] sm:$0xff]
        %v9228 = vld [vmem:[%s9177 + $0x190] sm:$0xff]
        %v9229 = vld [vmem:[%s9177 + $0x198] sm:$0xff]
        %v9230 = vld [vmem:[%s9177 + $0x1a0] sm:$0xff]
        %v9231 = vld [vmem:[%s9177 + $0x1a8] sm:$0xff]
        %v9232 = vld [vmem:[#allocation5] sm:$0xff]
        %v9233 = vld [vmem:[#allocation5 + $0x8] sm:$0xff]
        %v9234 = vld [vmem:[#allocation5 + $0x10] sm:$0xff]
        %v9235 = vld [vmem:[#allocation5 + $0x18] sm:$0xff]
        %v9236 = vld [vmem:[#allocation5 + $0x20] sm:$0xff]
        %v9237 = vld [vmem:[#allocation5 + $0x28] sm:$0xff]
        %v9238 = vld [vmem:[#allocation5 + $0x30] sm:$0xff]
        %v9239 = vld [vmem:[#allocation5 + $0x38] sm:$0xff]
        %v9240 = vld [vmem:[#allocation5 + $0x40] sm:$0xff]
        %v9241 = vld [vmem:[#allocation5 + $0x48] sm:$0xff]
        %v9242 = vld [vmem:[#allocation5 + $0x50] sm:$0xff]
        %v9243 = vld [vmem:[#allocation5 + $0x58] sm:$0xff]
        %v9244 = vld [vmem:[#allocation5 + $0x60] sm:$0xff]
        %v9245 = vld [vmem:[#allocation5 + $0x68] sm:$0xff]
        %v9246 = vld [vmem:[#allocation5 + $0x70] sm:$0xff]
        %v9247 = vld [vmem:[#allocation5 + $0x78] sm:$0xff]
        %v9248 = vld [vmem:[#allocation5 + $0x80] sm:$0xff]
        %v9249 = vld [vmem:[#allocation5 + $0x88] sm:$0xff]
        %v9250 = vld [vmem:[#allocation5 + $0x90] sm:$0xff]
        %v9251 = vld [vmem:[#allocation5 + $0x98] sm:$0xff]
        %v9252 = vld [vmem:[#allocation5 + $0xa0] sm:$0xff]
        %v9253 = vld [vmem:[#allocation5 + $0xa8] sm:$0xff]
        %v9254 = vld [vmem:[#allocation5 + $0xb0] sm:$0xff]
        %v9255 = vld [vmem:[#allocation5 + $0xb8] sm:$0xff]
        %v9256 = vld [vmem:[#allocation5 + $0xc0] sm:$0xff]
        %v9257 = vld [vmem:[#allocation5 + $0xc8] sm:$0xff]
        %v9258 = vld [vmem:[#allocation5 + $0xd0] sm:$0xff]
        %v9259 = vld [vmem:[#allocation5 + $0xd8] sm:$0xff]
        %v9260 = vld [vmem:[#allocation5 + $0xe0] sm:$0xff]
        %v9261 = vld [vmem:[#allocation5 + $0xe8] sm:$0xff]
        %v9262 = vld [vmem:[#allocation5 + $0xf0] sm:$0xff]
        %v9263 = vld [vmem:[#allocation5 + $0xf8] sm:$0xff]
        %v9264 = vld [vmem:[#allocation5 + $0x100] sm:$0xff]
        %v9265 = vld [vmem:[#allocation5 + $0x108] sm:$0xff]
        %v9266 = vld [vmem:[#allocation5 + $0x110] sm:$0xff]
        %v9267 = vld [vmem:[#allocation5 + $0x118] sm:$0xff]
        %v9268 = vld [vmem:[#allocation5 + $0x120] sm:$0xff]
        %v9269 = vld [vmem:[#allocation5 + $0x128] sm:$0xff]
        %v9270 = vld [vmem:[#allocation5 + $0x130] sm:$0xff]
        %v9271 = vld [vmem:[#allocation5 + $0x138] sm:$0xff]
        %v9272 = vld [vmem:[#allocation5 + $0x140] sm:$0xff]
        %v9273 = vld [vmem:[#allocation5 + $0x148] sm:$0xff]
        %v9274 = vld [vmem:[#allocation5 + $0x150] sm:$0xff]
        %v9275 = vld [vmem:[#allocation5 + $0x158] sm:$0xff]
        %v9276 = vld [vmem:[#allocation5 + $0x160] sm:$0xff]
        %v9277 = vld [vmem:[#allocation5 + $0x168] sm:$0xff]
        %v9278 = vld [vmem:[#allocation5 + $0x170] sm:$0xff]
        %v9279 = vld [vmem:[#allocation5 + $0x178] sm:$0xff]
        %v9280 = vld [vmem:[#allocation5 + $0x180] sm:$0xff]
        %v9281 = vld [vmem:[#allocation5 + $0x188] sm:$0xff]
        %v9282 = vld [vmem:[#allocation5 + $0x190] sm:$0xff]
        %v9283 = vld [vmem:[#allocation5 + $0x198] sm:$0xff]
        %v9284 = vld [vmem:[#allocation5 + $0x1a0] sm:$0xff]
        %v9285 = vld [vmem:[#allocation5 + $0x1a8] sm:$0xff]
        %v9286 = vld [vmem:[%s5] sm:$0x1]
        %v9288 = vlaneseq
        %v9289 = vshrl.u32 %v9288, 7
        %v9290 = vsub.s32 0, %v9289
        %v9291 = vrot.slane %v9286, %v9290
        %v9293 = vmul.f32 %v9232, %v9291
        %v9294 = vmul.f32 %v9233, %v9291
        %v9295 = vmul.f32 %v9234, %v9291
        %v9296 = vmul.f32 %v9235, %v9291
        %v9297 = vmul.f32 %v9236, %v9291
        %v9298 = vmul.f32 %v9237, %v9291
        %v9299 = vmul.f32 %v9238, %v9291
        %v9300 = vmul.f32 %v9239, %v9291
        %v9301 = vmul.f32 %v9240, %v9291
        %v9302 = vmul.f32 %v9241, %v9291
        %v9303 = vmul.f32 %v9242, %v9291
        %v9304 = vmul.f32 %v9243, %v9291
        %v9305 = vmul.f32 %v9244, %v9291
        %v9306 = vmul.f32 %v9245, %v9291
        %v9307 = vmul.f32 %v9246, %v9291
        %v9308 = vmul.f32 %v9247, %v9291
        %v9309 = vmul.f32 %v9248, %v9291
        %v9310 = vmul.f32 %v9249, %v9291
        %v9311 = vmul.f32 %v9250, %v9291
        %v9312 = vmul.f32 %v9251, %v9291
        %v9313 = vmul.f32 %v9252, %v9291
        %v9314 = vmul.f32 %v9253, %v9291
        %v9315 = vmul.f32 %v9254, %v9291
        %v9316 = vmul.f32 %v9255, %v9291
        %v9317 = vmul.f32 %v9256, %v9291
        %v9318 = vmul.f32 %v9257, %v9291
        %v9319 = vmul.f32 %v9258, %v9291
        %v9320 = vmul.f32 %v9259, %v9291
        %v9321 = vmul.f32 %v9260, %v9291
        %v9322 = vmul.f32 %v9261, %v9291
        %v9323 = vmul.f32 %v9262, %v9291
        %v9324 = vmul.f32 %v9263, %v9291
        %v9325 = vmul.f32 %v9264, %v9291
        %v9326 = vmul.f32 %v9265, %v9291
        %v9327 = vmul.f32 %v9266, %v9291
        %v9328 = vmul.f32 %v9267, %v9291
        %v9329 = vmul.f32 %v9268, %v9291
        %v9330 = vmul.f32 %v9269, %v9291
        %v9331 = vmul.f32 %v9270, %v9291
        %v9332 = vmul.f32 %v9271, %v9291
        %v9333 = vmul.f32 %v9272, %v9291
        %v9334 = vmul.f32 %v9273, %v9291
        %v9335 = vmul.f32 %v9274, %v9291
        %v9336 = vmul.f32 %v9275, %v9291
        %v9337 = vmul.f32 %v9276, %v9291
        %v9338 = vmul.f32 %v9277, %v9291
        %v9339 = vmul.f32 %v9278, %v9291
        %v9340 = vmul.f32 %v9279, %v9291
        %v9341 = vmul.f32 %v9280, %v9291
        %v9342 = vmul.f32 %v9281, %v9291
        %v9343 = vmul.f32 %v9282, %v9291
        %v9344 = vmul.f32 %v9283, %v9291
        %v9345 = vmul.f32 %v9284, %v9291
        %v9346 = vmul.f32 %v9285, %v9291
        %v9347 = vld [vmem:[%s6] sm:$0x1]
        %v9349 = vlaneseq
        %v9350 = vshrl.u32 %v9349, 7
        %v9351 = vsub.s32 0, %v9350
        %v9352 = vrot.slane %v9347, %v9351
        %v9354 = vadd.f32 %v9293, %v9352
        %v9355 = vadd.f32 %v9294, %v9352
        %v9356 = vadd.f32 %v9295, %v9352
        %v9357 = vadd.f32 %v9296, %v9352
        %v9358 = vadd.f32 %v9297, %v9352
        %v9359 = vadd.f32 %v9298, %v9352
        %v9360 = vadd.f32 %v9299, %v9352
        %v9361 = vadd.f32 %v9300, %v9352
        %v9362 = vadd.f32 %v9301, %v9352
        %v9363 = vadd.f32 %v9302, %v9352
        %v9364 = vadd.f32 %v9303, %v9352
        %v9365 = vadd.f32 %v9304, %v9352
        %v9366 = vadd.f32 %v9305, %v9352
        %v9367 = vadd.f32 %v9306, %v9352
        %v9368 = vadd.f32 %v9307, %v9352
        %v9369 = vadd.f32 %v9308, %v9352
        %v9370 = vadd.f32 %v9309, %v9352
        %v9371 = vadd.f32 %v9310, %v9352
        %v9372 = vadd.f32 %v9311, %v9352
        %v9373 = vadd.f32 %v9312, %v9352
        %v9374 = vadd.f32 %v9313, %v9352
        %v9375 = vadd.f32 %v9314, %v9352
        %v9376 = vadd.f32 %v9315, %v9352
        %v9377 = vadd.f32 %v9316, %v9352
        %v9378 = vadd.f32 %v9317, %v9352
        %v9379 = vadd.f32 %v9318, %v9352
        %v9380 = vadd.f32 %v9319, %v9352
        %v9381 = vadd.f32 %v9320, %v9352
        %v9382 = vadd.f32 %v9321, %v9352
        %v9383 = vadd.f32 %v9322, %v9352
        %v9384 = vadd.f32 %v9323, %v9352
        %v9385 = vadd.f32 %v9324, %v9352
        %v9386 = vadd.f32 %v9325, %v9352
        %v9387 = vadd.f32 %v9326, %v9352
        %v9388 = vadd.f32 %v9327, %v9352
        %v9389 = vadd.f32 %v9328, %v9352
        %v9390 = vadd.f32 %v9329, %v9352
        %v9391 = vadd.f32 %v9330, %v9352
        %v9392 = vadd.f32 %v9331, %v9352
        %v9393 = vadd.f32 %v9332, %v9352
        %v9394 = vadd.f32 %v9333, %v9352
        %v9395 = vadd.f32 %v9334, %v9352
        %v9396 = vadd.f32 %v9335, %v9352
        %v9397 = vadd.f32 %v9336, %v9352
        %v9398 = vadd.f32 %v9337, %v9352
        %v9399 = vadd.f32 %v9338, %v9352
        %v9400 = vadd.f32 %v9339, %v9352
        %v9401 = vadd.f32 %v9340, %v9352
        %v9402 = vadd.f32 %v9341, %v9352
        %v9403 = vadd.f32 %v9342, %v9352
        %v9404 = vadd.f32 %v9343, %v9352
        %v9405 = vadd.f32 %v9344, %v9352
        %v9406 = vadd.f32 %v9345, %v9352
        %v9407 = vadd.f32 %v9346, %v9352
        %v9408 = vadd.f32 %v9354, %v9178
        %v9409 = vadd.f32 %v9355, %v9179
        %v9410 = vadd.f32 %v9356, %v9180
        %v9411 = vadd.f32 %v9357, %v9181
        %v9412 = vadd.f32 %v9358, %v9182
        %v9413 = vadd.f32 %v9359, %v9183
        %v9414 = vadd.f32 %v9360, %v9184
        %v9415 = vadd.f32 %v9361, %v9185
        %v9416 = vadd.f32 %v9362, %v9186
        %v9417 = vadd.f32 %v9363, %v9187
        %v9418 = vadd.f32 %v9364, %v9188
        %v9419 = vadd.f32 %v9365, %v9189
        %v9420 = vadd.f32 %v9366, %v9190
        %v9421 = vadd.f32 %v9367, %v9191
        %v9422 = vadd.f32 %v9368, %v9192
        %v9423 = vadd.f32 %v9369, %v9193
        %v9424 = vadd.f32 %v9370, %v9194
        %v9425 = vadd.f32 %v9371, %v9195
        %v9426 = vadd.f32 %v9372, %v9196
        %v9427 = vadd.f32 %v9373, %v9197
        %v9428 = vadd.f32 %v9374, %v9198
        %v9429 = vadd.f32 %v9375, %v9199
        %v9430 = vadd.f32 %v9376, %v9200
        %v9431 = vadd.f32 %v9377, %v9201
        %v9432 = vadd.f32 %v9378, %v9202
        %v9433 = vadd.f32 %v9379, %v9203
        %v9434 = vadd.f32 %v9380, %v9204
        %v9435 = vadd.f32 %v9381, %v9205
        %v9436 = vadd.f32 %v9382, %v9206
        %v9437 = vadd.f32 %v9383, %v9207
        %v9438 = vadd.f32 %v9384, %v9208
        %v9439 = vadd.f32 %v9385, %v9209
        %v9440 = vadd.f32 %v9386, %v9210
        %v9441 = vadd.f32 %v9387, %v9211
        %v9442 = vadd.f32 %v9388, %v9212
        %v9443 = vadd.f32 %v9389, %v9213
        %v9444 = vadd.f32 %v9390, %v9214
        %v9445 = vadd.f32 %v9391, %v9215
        %v9446 = vadd.f32 %v9392, %v9216
        %v9447 = vadd.f32 %v9393, %v9217
        %v9448 = vadd.f32 %v9394, %v9218
        %v9449 = vadd.f32 %v9395, %v9219
        %v9450 = vadd.f32 %v9396, %v9220
        %v9451 = vadd.f32 %v9397, %v9221
        %v9452 = vadd.f32 %v9398, %v9222
        %v9453 = vadd.f32 %v9399, %v9223
        %v9454 = vadd.f32 %v9400, %v9224
        %v9455 = vadd.f32 %v9401, %v9225
        %v9456 = vadd.f32 %v9402, %v9226
        %v9457 = vadd.f32 %v9403, %v9227
        %v9458 = vadd.f32 %v9404, %v9228
        %v9459 = vadd.f32 %v9405, %v9229
        %v9460 = vadd.f32 %v9406, %v9230
        %v9461 = vadd.f32 %v9407, %v9231
        %v9462 = vmax.f32 %v9408, 0.0
        %v9463 = vmax.f32 %v9409, 0.0
        %v9464 = vmax.f32 %v9410, 0.0
        %v9465 = vmax.f32 %v9411, 0.0
        %v9466 = vmax.f32 %v9412, 0.0
        %v9467 = vmax.f32 %v9413, 0.0
        %v9468 = vmax.f32 %v9414, 0.0
        %v9469 = vmax.f32 %v9415, 0.0
        %v9470 = vmax.f32 %v9416, 0.0
        %v9471 = vmax.f32 %v9417, 0.0
        %v9472 = vmax.f32 %v9418, 0.0
        %v9473 = vmax.f32 %v9419, 0.0
        %v9474 = vmax.f32 %v9420, 0.0
        %v9475 = vmax.f32 %v9421, 0.0
        %v9476 = vmax.f32 %v9422, 0.0
        %v9477 = vmax.f32 %v9423, 0.0
        %v9478 = vmax.f32 %v9424, 0.0
        %v9479 = vmax.f32 %v9425, 0.0
        %v9480 = vmax.f32 %v9426, 0.0
        %v9481 = vmax.f32 %v9427, 0.0
        %v9482 = vmax.f32 %v9428, 0.0
        %v9483 = vmax.f32 %v9429, 0.0
        %v9484 = vmax.f32 %v9430, 0.0
        %v9485 = vmax.f32 %v9431, 0.0
        %v9486 = vmax.f32 %v9432, 0.0
        %v9487 = vmax.f32 %v9433, 0.0
        %v9488 = vmax.f32 %v9434, 0.0
        %v9489 = vmax.f32 %v9435, 0.0
        %v9490 = vmax.f32 %v9436, 0.0
        %v9491 = vmax.f32 %v9437, 0.0
        %v9492 = vmax.f32 %v9438, 0.0
        %v9493 = vmax.f32 %v9439, 0.0
        %v9494 = vmax.f32 %v9440, 0.0
        %v9495 = vmax.f32 %v9441, 0.0
        %v9496 = vmax.f32 %v9442, 0.0
        %v9497 = vmax.f32 %v9443, 0.0
        %v9498 = vmax.f32 %v9444, 0.0
        %v9499 = vmax.f32 %v9445, 0.0
        %v9500 = vmax.f32 %v9446, 0.0
        %v9501 = vmax.f32 %v9447, 0.0
        %v9502 = vmax.f32 %v9448, 0.0
        %v9503 = vmax.f32 %v9449, 0.0
        %v9504 = vmax.f32 %v9450, 0.0
        %v9505 = vmax.f32 %v9451, 0.0
        %v9506 = vmax.f32 %v9452, 0.0
        %v9507 = vmax.f32 %v9453, 0.0
        %v9508 = vmax.f32 %v9454, 0.0
        %v9509 = vmax.f32 %v9455, 0.0
        %v9510 = vmax.f32 %v9456, 0.0
        %v9511 = vmax.f32 %v9457, 0.0
        %v9512 = vmax.f32 %v9458, 0.0
        %v9513 = vmax.f32 %v9459, 0.0
        %v9514 = vmax.f32 %v9460, 0.0
        %v9515 = vmax.f32 %v9461, 0.0
        %9516 = vst [vmem:[%s339] sm:$0xff] %v9462
        %9517 = vst [vmem:[%s339 + $0x8] sm:$0xff] %v9463
        %9518 = vst [vmem:[%s339 + $0x10] sm:$0xff] %v9464
        %9519 = vst [vmem:[%s339 + $0x18] sm:$0xff] %v9465
        %9520 = vst [vmem:[%s339 + $0x20] sm:$0xff] %v9466
        %9521 = vst [vmem:[%s339 + $0x28] sm:$0xff] %v9467
        %9522 = vst [vmem:[%s339 + $0x30] sm:$0xff] %v9468
        %9523 = vst [vmem:[%s339 + $0x38] sm:$0xff] %v9469
        %9524 = vst [vmem:[%s339 + $0x40] sm:$0xff] %v9470
        %9525 = vst [vmem:[%s339 + $0x48] sm:$0xff] %v9471
        %9526 = vst [vmem:[%s339 + $0x50] sm:$0xff] %v9472
        %9527 = vst [vmem:[%s339 + $0x58] sm:$0xff] %v9473
        %9528 = vst [vmem:[%s339 + $0x60] sm:$0xff] %v9474
        %9529 = vst [vmem:[%s339 + $0x68] sm:$0xff] %v9475
        %9530 = vst [vmem:[%s339 + $0x70] sm:$0xff] %v9476
        %9531 = vst [vmem:[%s339 + $0x78] sm:$0xff] %v9477
        %9532 = vst [vmem:[%s339 + $0x80] sm:$0xff] %v9478
        %9533 = vst [vmem:[%s339 + $0x88] sm:$0xff] %v9479
        %9534 = vst [vmem:[%s339 + $0x90] sm:$0xff] %v9480
        %9535 = vst [vmem:[%s339 + $0x98] sm:$0xff] %v9481
        %9536 = vst [vmem:[%s339 + $0xa0] sm:$0xff] %v9482
        %9537 = vst [vmem:[%s339 + $0xa8] sm:$0xff] %v9483
        %9538 = vst [vmem:[%s339 + $0xb0] sm:$0xff] %v9484
        %9539 = vst [vmem:[%s339 + $0xb8] sm:$0xff] %v9485
        %9540 = vst [vmem:[%s339 + $0xc0] sm:$0xff] %v9486
        %9541 = vst [vmem:[%s339 + $0xc8] sm:$0xff] %v9487
        %9542 = vst [vmem:[%s339 + $0xd0] sm:$0xff] %v9488
        %9543 = vst [vmem:[%s339 + $0xd8] sm:$0xff] %v9489
        %9544 = vst [vmem:[%s339 + $0xe0] sm:$0xff] %v9490
        %9545 = vst [vmem:[%s339 + $0xe8] sm:$0xff] %v9491
        %9546 = vst [vmem:[%s339 + $0xf0] sm:$0xff] %v9492
        %9547 = vst [vmem:[%s339 + $0xf8] sm:$0xff] %v9493
        %9548 = vst [vmem:[%s339 + $0x100] sm:$0xff] %v9494
        %9549 = vst [vmem:[%s339 + $0x108] sm:$0xff] %v9495
        %9550 = vst [vmem:[%s339 + $0x110] sm:$0xff] %v9496
        %9551 = vst [vmem:[%s339 + $0x118] sm:$0xff] %v9497
        %9552 = vst [vmem:[%s339 + $0x120] sm:$0xff] %v9498
        %9553 = vst [vmem:[%s339 + $0x128] sm:$0xff] %v9499
        %9554 = vst [vmem:[%s339 + $0x130] sm:$0xff] %v9500
        %9555 = vst [vmem:[%s339 + $0x138] sm:$0xff] %v9501
        %9556 = vst [vmem:[%s339 + $0x140] sm:$0xff] %v9502
        %9557 = vst [vmem:[%s339 + $0x148] sm:$0xff] %v9503
        %9558 = vst [vmem:[%s339 + $0x150] sm:$0xff] %v9504
        %9559 = vst [vmem:[%s339 + $0x158] sm:$0xff] %v9505
        %9560 = vst [vmem:[%s339 + $0x160] sm:$0xff] %v9506
        %9561 = vst [vmem:[%s339 + $0x168] sm:$0xff] %v9507
        %9562 = vst [vmem:[%s339 + $0x170] sm:$0xff] %v9508
        %9563 = vst [vmem:[%s339 + $0x178] sm:$0xff] %v9509
        %9564 = vst [vmem:[%s339 + $0x180] sm:$0xff] %v9510
        %9565 = vst [vmem:[%s339 + $0x188] sm:$0xff] %v9511
        %9566 = vst [vmem:[%s339 + $0x190] sm:$0xff] %v9512
        %9567 = vst [vmem:[%s339 + $0x198] sm:$0xff] %v9513
        %9568 = vst [vmem:[%s339 + $0x1a0] sm:$0xff] %v9514
        %9569 = vst [vmem:[%s339 + $0x1a8] sm:$0xff] %v9515
        %s9570 = sand.u32 %s199, 1
        %s9571 = scalar_lea.sflag [#allocation8], %s9570
        %s9572 = sand.u32 %s199, 1
        %s9573 = smul.addr %s9572, 432
        %s9574 = scalar_lea.vmem [#allocation12], %s9573
        // Predicated region
        $region61: #{tpu_custom_call.1} parent=47 // pred_check
          %p9575 = pneg %p209
        $region62: #{tpu_custom_call.1} parent=47 // pred_check_branch
          %9577 = sbr.rel (%p9575) target = $region64
        $region63: #{tpu_custom_call.1} parent=47 // pred_region
          %s9579 = ssub.s32 6912, 6912
          %9580 = vsyncadd %s9571, %s9579
          %s9581 = smul.addr %s30, 54
          %s9582 = smul.addr %s29, 54
          %s9583 = sadd.s32 %s9581, %s9582
          %s9584 = smul.addr %s9583, 128
          %s9585 = scalar_lea.hbm %s7, %s9584
          %s9586 = sshll.u32 %s9574, 4
          %s9587 = int_to_ptr.vmem [resolvable:$true] %s9586
          %9592 = dma.vmem_to_hbm [thread:$0]  %s9587, 6912, %s9585, %s9571, 128, 128, 8
        $region64: #{tpu_custom_call.1} parent=47 // pred_fallthru
          _
      $region48: #{tpu_custom_call.1} parent=5 // pred_fallthru
        _
      %p9593 = scmp.le.s32.totalorder 2, %s20
      // Predicated region
      $region65: #{tpu_custom_call.1} parent=5 // pred_check
        %p9594 = pneg %p9593
      $region66: #{tpu_custom_call.1} parent=5 // pred_check_branch
        %9596 = sbr.rel (%p9594) target = $region68
      $region67: #{tpu_custom_call.1} parent=5 // pred_region
        %s9597 = ssub.s32 %s20, 2
        // Predicated region
        $region69: #{tpu_custom_call.1} parent=67 // pred_check
          %p9598 = pneg %p215
        $region70: #{tpu_custom_call.1} parent=67 // pred_check_branch
          %9600 = sbr.rel (%p9598) target = $region72
        $region71: #{tpu_custom_call.1} parent=67 // pred_region
          %s9601 = sand.u32 %s200, 1
          %s9602 = scalar_lea.sflag [#allocation8], %s9601
          %s9603 = sand.u32 %s200, 1
          %s9604 = smul.addr %s9603, 432
          %s9605 = scalar_lea.vmem [#allocation12], %s9604
          %9606 = dma.done %s9602, 6912
        $region72: #{tpu_custom_call.1} parent=67 // pred_fallthru
          _
      $region68: #{tpu_custom_call.1} parent=5 // pred_fallthru
        _
    $region6: #{tpu_custom_call.1} parent=1 // loop_footer
      %s24 = sadd.s32 1, %s20
    $region7: #{tpu_custom_call.1} parent=1 // loop_footer_branch
      %19 = sbr.rel target = $region3
    $region8: #{tpu_custom_call.1} parent=1 // loop_exit
      _
    %9607 = vsyncpa [#allocation7], 1
    %s9608 = scalar_lea.sflag [#allocation7], 1
    %9609 = vsyncpa %s9608, 1
    %9610 = vsyncpa [#allocation10], 1
    %9611 = vsyncpa [#allocation8], 1
    %s9612 = scalar_lea.sflag [#allocation8], 1
    %9613 = vsyncpa %s9612, 1

</llo_original>
